<compile_context>
chip_gen: v6e
topology: v6e:2x2x1
jax: 0.10.0
libtpu: 0.0.40
codegen_flags: <defaults>
</compile_context>

<pallas_src>
import functools
import math

import numpy as np

import jax
import jax.numpy as jnp
from jax.experimental import pallas as pl
from jax.experimental.pallas import tpu as pltpu


CONFIG = dict(
    target_dim=16,
    cond_length=32,
    time_emb_dim=16,
    residual_layers=8,
    residual_channels=8,
    dilation_cycle_length=2,
    residual_hidden=64,
    padding=2,
    max_steps=100,
)

# Fused (kernel-side) parameter order.
FUSED_PARAM_ORDER = (
    "w_in", "b_in",
    "w_de1", "b_de1", "w_de2", "b_de2",
    "w_cu1", "b_cu1", "w_cu2p", "b_cu2p",
    "w_g", "w_f", "w_op", "b_op",
    "w_sp", "b_sp", "w_out", "b_out",
)


def leaky_relu(x, slope=0.4):
    # max(x, s*x) == leaky_relu for 0 < s < 1; saves a compare+select on the VPU.
    return jnp.maximum(x, slope * x)


def silu(x):
    return x * jax.nn.sigmoid(x)


def _round_up(n, m):
    return ((n + m - 1) // m) * m


# ---------------------------------------------------------------------------
# Raw (un-fused) parameters — used to build the fused kernel weights and by the
# pure-JAX reference.  Deterministic, synthetic; PyTorch init values are not
# reproduced (the zero-init of the final conv is replaced by random values so
# the kernel output is non-trivial).
# ---------------------------------------------------------------------------
def init_params(key, cfg):
    C = cfg["residual_channels"]
    H = cfg["residual_hidden"]
    NL = cfg["residual_layers"]
    Tdim = cfg["target_dim"]
    CL = cfg["cond_length"]
    TED = cfg["time_emb_dim"]
    pad = cfg["padding"]
    L = Tdim + 2 * pad

    shapes = [
        ("ip_w", (C, 1), 1), ("ip_b", (C, 1), 1),
        ("de_w1", (2 * TED, H), 2 * TED), ("de_b1", (1, H), 2 * TED),
        ("de_w2", (H, H), H), ("de_b2", (1, H), H),
        ("cu_w1", (CL, Tdim // 2), CL), ("cu_b1", (1, Tdim // 2), CL),
        ("cu_w2", (Tdim // 2, Tdim), Tdim // 2), ("cu_b2", (1, Tdim), Tdim // 2),
        ("dp_w", (NL, C, H), H), ("dp_b", (NL, C, 1), H),
        ("dcw0", (NL, 2 * C, C), 3 * C), ("dcw1", (NL, 2 * C, C), 3 * C),
        ("dcw2", (NL, 2 * C, C), 3 * C), ("dc_b", (NL, 2 * C, 1), 3 * C),
        ("cp_w", (NL, 2 * C, 1), 1), ("cp_b", (NL, 2 * C, 1), 1),
        ("op_w", (NL, 2 * C, C), C), ("op_b", (NL, 2 * C, 1), C),
        ("sp_w0", (C, C), 3 * C), ("sp_w1", (C, C), 3 * C),
        ("sp_w2", (C, C), 3 * C), ("sp_b", (C, 1), 3 * C),
        ("ow0", (1, C), 3 * C), ("ow1", (1, C), 3 * C),
        ("ow2", (1, C), 3 * C), ("ob", (1, 1), 3 * C),
    ]
    keys = jax.random.split(key, len(shapes))
    params = {}
    for k, (name, shape, fan_in) in zip(keys, shapes):
        params[name] = jax.random.normal(k, shape, jnp.float32) / math.sqrt(fan_in)

    # Constant 0/1 selection matrices used by the pure-JAX reference only
    # (the kernel folds them into its fused weight matrices host-side).
    lane = jnp.arange(L)
    src = (lane - pad) % Tdim
    params["pad_mat"] = (jnp.arange(Tdim)[:, None] == src[None, :]).astype(jnp.float32)

    rolls = []
    for i in range(NL):
        d = 2 ** (i % cfg["dilation_cycle_length"])
        r_m = (lane[:, None] == ((lane - d) % L)[None, :]).astype(jnp.float32)
        r_p = (lane[:, None] == ((lane + d) % L)[None, :]).astype(jnp.float32)
        rolls.append(jnp.stack([r_m, r_p], axis=0))
    params["roll_mats"] = jnp.stack(rolls, axis=0)        # (NL, 2, L, L), reference only
    return params


# ---------------------------------------------------------------------------
# Host-side weight folding (float64 numpy): every linear map on the flattened
# (C*L) feature axis becomes a dense matrix, and the per-layer LHS operands are
# K-stacked into a single (ZK, C*L) gate / filter weight with the bias folded
# into the ones-column row.
# ---------------------------------------------------------------------------
def build_fused_params(raw, cfg, dtype=jnp.float32):
    C = cfg["residual_channels"]
    H = cfg["residual_hidden"]
    NL = cfg["residual_layers"]
    Tdim = cfg["target_dim"]
    pad = cfg["padding"]
    L = Tdim + 2 * pad
    CL = C * L                                    # 160
    Lo = L - 2
    ZK = _round_up(CL + H + L + 1, 128)           # stacked K: [x | d | cond | 1 | 0] -> 256

    p = {k: np.asarray(v, np.float64) for k, v in raw.items()}
    eye_L = np.eye(L)
    lane = np.arange(L)
    pad_mat = p["pad_mat"]                        # (Tdim, L)

    def rep(vec, n):
        return np.repeat(np.asarray(vec).reshape(-1), n)[None, :]

    f = {}
    # input_projection (1x1 circular-pad conv) fused with the circular pad.
    f["w_in"] = np.einsum("c,tl->tcl", p["ip_w"][:, 0], pad_mat).reshape(Tdim, CL)
    f["b_in"] = rep(p["ip_b"][:, 0], L)
    # DiffusionEmbedding projections.
    f["w_de1"], f["b_de1"] = p["de_w1"], p["de_b1"]
    f["w_de2"], f["b_de2"] = p["de_w2"], p["de_b2"]
    # CondUpsampler; circular pad folded into the second linear (exact: the pad
    # matrix is a 0/1 column selection, so it commutes with leaky_relu).
    f["w_cu1"], f["b_cu1"] = p["cu_w1"], p["cu_b1"]
    f["w_cu2p"] = p["cu_w2"] @ pad_mat                       # (Tdim//2, L)
    f["b_cu2p"] = p["cu_b2"] @ pad_mat                       # (1, L)

    w_g, w_f, w_op, b_op = [], [], [], []
    for i in range(NL):
        d = 2 ** (i % cfg["dilation_cycle_length"])
        r_m = (lane[:, None] == (lane[None, :] - d) % L).astype(np.float64)
        r_p = (lane[:, None] == (lane[None, :] + d) % L).astype(np.float64)
        # dilated circular conv as a dense (C*L, 2C*L) map (columns o-major: gate|filter).
        wconv = (np.einsum("oc,ml->cmol", p["dcw0"][i], r_m)
                 + np.einsum("oc,ml->cmol", p["dcw1"][i], eye_L)
                 + np.einsum("oc,ml->cmol", p["dcw2"][i], r_p)).reshape(CL, 2 * CL)
        # diffusion_projection broadcast (H -> C*L), folded through the conv.
        wdp = np.repeat(p["dp_w"][i].T, L, axis=1)           # (H, CL)
        # conditioner_projection (1x1 on the already-padded cond): (L, 2C*L).
        wcnd = np.einsum("o,ml->mol", p["cp_w"][i][:, 0], eye_L).reshape(L, 2 * CL)
        # all biases feeding the gate/filter pre-activation.
        bias = (rep(p["dp_b"][i][:, 0], L) @ wconv
                + rep(p["dc_b"][i][:, 0], L)
                + rep(p["cp_b"][i][:, 0], L))                # (1, 2*CL)

        # Stacked-K weight: rows = [x (CL) | d (H) | cond_pad (L) | ones | zero-pad].
        wz = np.zeros((ZK, 2 * CL))
        wz[0:CL] = wconv
        wz[CL:CL + H] = wdp @ wconv
        wz[CL + H:CL + H + L] = wcnd
        wz[CL + H + L] = bias[0]                 # bias folded via the ones column of z
        w_g.append(wz[:, :CL])
        w_f.append(wz[:, CL:])

        # output_projection (1x1): residual cols [0:CL), skip cols [CL:2CL).
        w_op.append(np.einsum("oc,ml->cmol", p["op_w"][i], eye_L).reshape(CL, 2 * CL))
        b_op.append(rep(p["op_b"][i][:, 0], L))
    f["w_g"] = np.stack(w_g)                     # (NL, ZK, CL)
    f["w_f"] = np.stack(w_f)                     # (NL, ZK, CL)
    f["w_op"] = np.stack(w_op)                   # (NL, CL, 2*CL)
    f["b_op"] = np.stack(b_op)                   # (NL, 1, 2*CL)

    # skip_projection: Conv1d(C -> C, k=3, valid) applied to the skip half of the
    # (2*CL)-wide carry; rows for the x half are zero, 1/sqrt(NL) folded in.
    w_sp = np.zeros((CL, C * Lo))
    for t, w in enumerate([p["sp_w0"], p["sp_w1"], p["sp_w2"]]):
        S = (lane[:, None] == (np.arange(Lo)[None, :] + t)).astype(np.float64)
        w_sp += np.einsum("cC,mj->Cmcj", w, S).reshape(CL, C * Lo)
    w_sp_full = np.zeros((2 * CL, C * Lo))
    w_sp_full[CL:] = w_sp / math.sqrt(float(NL))
    f["w_sp"] = w_sp_full                        # (2*CL, C*Lo)
    f["b_sp"] = rep(p["sp_b"][:, 0], Lo)

    # output_projection: Conv1d(C -> 1, k=3, valid) as (C*Lo, Tdim).
    w_out = np.zeros((C * Lo, Tdim))
    for t, w in enumerate([p["ow0"], p["ow1"], p["ow2"]]):
        S = (np.arange(Lo)[:, None] == (np.arange(Tdim)[None, :] + t)).astype(np.float64)
        w_out += np.einsum("c,mj->cmj", w[0], S).reshape(C * Lo, Tdim)
    f["w_out"] = w_out
    f["b_out"] = np.full((1, Tdim), float(p["ob"][0, 0]))

    # Matmul weights go to `dtype` (f32 or bf16); standalone biases stay f32.
    mat_names = ("w_in", "w_de1", "w_de2", "w_cu1", "w_cu2p",
                 "w_g", "w_f", "w_op", "w_sp", "w_out")
    return {k: jnp.asarray(v, dtype if k in mat_names else jnp.float32)
            for k, v in f.items()}


def diffusion_time_embedding(time, dim, max_steps):
    # probts/TimeGrad DiffusionEmbedding table: [sin(t*10^(4k/dim)), cos(...)]
    steps = jnp.arange(max_steps, dtype=jnp.float32)[:, None]
    dims = jnp.arange(dim, dtype=jnp.float32)[None, :]
    table = steps * (10.0 ** (dims * 4.0 / dim))
    table = jnp.concatenate([jnp.sin(table), jnp.cos(table)], axis=1)  # (T, 2*dim)
    return table[time]                                                 # (B, 2*dim)


# ---------------------------------------------------------------------------
# Pallas kernel: one batch tile per grid step.
#   z scratch (Bt, ZK) f32 = [x | d | cond_pad | 1 | 0]; only the x slice (lane 0,
#   width CL) is rewritten each layer, so the two gate/filter dots share one LHS.
#   carry (Bt, 2*CL) = [x | skip], updated with a per-lane scale vector.
# ---------------------------------------------------------------------------
def epsilon_theta_kernel(inp_ref, emb_ref, cond_ref, *rest, num_layers):
    param_refs = rest[:-2]
    out_ref = rest[-2]
    z_ref = rest[-1]
    assert len(param_refs) == len(FUSED_PARAM_ORDER)
    p = dict(zip(FUSED_PARAM_ORDER, param_refs))

    wdt = p["w_g"].dtype          # matmul compute dtype (f32 or bf16)
    ZK = p["w_g"].shape[1]        # stacked K (256)
    CL = p["w_g"].shape[2]        # C*L flattened feature width (160)
    Bt = inp_ref.shape[0]

    def mdot(a, w):
        # Cast LHS to the weight dtype so bf16 weights take the native MXU path;
        # always accumulate in f32.
        return jnp.dot(a.astype(wdt), w, preferred_element_type=jnp.float32)

    # --- stem ---------------------------------------------------------------
    # input_projection + circular pad (fused)            -> (Bt, C*L)
    x = leaky_relu(mdot(inp_ref[...], p["w_in"][...]) + p["b_in"][...])
    # DiffusionEmbedding: Linear + SiLU x2                -> (Bt, H)
    d = silu(mdot(emb_ref[...], p["w_de1"][...]) + p["b_de1"][...])
    d = silu(mdot(d, p["w_de2"][...]) + p["b_de2"][...])
    # CondUpsampler + circular pad (fused)                -> (Bt, L)
    cu = leaky_relu(mdot(cond_ref[...], p["w_cu1"][...]) + p["b_cu1"][...])
    cond_pad = leaky_relu(mdot(cu, p["w_cu2p"][...]) + p["b_cu2p"][...])

    # Stacked-K LHS z = [x | d | cond_pad | 1 | 0...]; only the x slice changes later.
    parts = [x, d, cond_pad, jnp.ones((Bt, 1), jnp.float32)]
    rem = ZK - (CL + d.shape[1] + cond_pad.shape[1] + 1)
    if rem:
        parts.append(jnp.zeros((Bt, rem), jnp.float32))
    z_ref[...] = jnp.concatenate(parts, axis=1)

    inv_sqrt2 = 1.0 / math.sqrt(2.0)
    # Per-lane carry scale: 1/sqrt(2) on the residual half, 1.0 on the skip half.
    scale_vec = jnp.concatenate(
        [jnp.full((1, CL), inv_sqrt2, jnp.float32), jnp.ones((1, CL), jnp.float32)],
        axis=1)

    # carry = [x | skip_sum], f32.
    carry = jnp.concatenate([x, jnp.zeros((Bt, CL), jnp.float32)], axis=1)

    # --- residual layers (fully unrolled; static weight offsets) -------------
    for i in range(num_layers):
        zc = z_ref[...].astype(wdt)
        # gate / filter pre-activations: one K-stacked dot each (bias folded in
        # via the ones column of z).
        conv_g = jnp.dot(zc, p["w_g"][i], preferred_element_type=jnp.float32)
        conv_f = jnp.dot(zc, p["w_f"][i], preferred_element_type=jnp.float32)
        g = jax.nn.sigmoid(conv_g) * jnp.tanh(conv_f)                    # (Bt, C*L)
        # output_projection (1x1): residual|skip concatenated -> (Bt, 2*C*L)
        rs = leaky_relu(mdot(g, p["w_op"][i]) + p["b_op"][i])
        carry = (carry + rs) * scale_vec
        if i + 1 < num_layers:
            z_ref[:, 0:CL] = carry[:, 0:CL]       # next layer's x, lane-0 aligned

    # --- head -----------------------------------------------------------------
    # skip_projection (k=3, valid) on the skip half (zero rows for the x half,
    # 1/sqrt(num_layers) folded into the weights) + leaky_relu   -> (Bt, C*(L-2))
    xs = leaky_relu(mdot(carry, p["w_sp"][...]) + p["b_sp"][...])
    # output_projection (k=3, valid)                              -> (Bt, target_dim)
    out_ref[...] = mdot(xs, p["w_out"][...]) + p["b_out"][...]


# ---------------------------------------------------------------------------
# Wrapper: embedding gather, batch padding/tiling, specs in plain JAX.
# ---------------------------------------------------------------------------
def epsilon_theta_forward(inputs, time, cond, fused, cfg, batch_tile=256):
    B = inputs.shape[0]
    Tdim = cfg["target_dim"]
    TED = cfg["time_emb_dim"]
    CLen = cfg["cond_length"]

    emb = diffusion_time_embedding(time, TED, cfg["max_steps"]).astype(jnp.float32)
    inp2 = inputs.reshape(B, Tdim).astype(jnp.float32)
    cond2 = cond.reshape(B, CLen).astype(jnp.float32)

    # Batch tile: multiple of 8 sublanes.  Cap so that batches >= 16 give at least
    # two grid tiles: dimension_semantics=("parallel",) then shards them across
    # both v7x TensorCores (no-op on single-core v5e/v6e).
    Bt = min(batch_tile, _round_up(B, 8))
    if B >= 16:
        Bt = min(Bt, _round_up((B + 1) // 2, 8))
    B_pad = _round_up(B, Bt)
    if B_pad != B:
        padw = ((0, B_pad - B), (0, 0))
        inp2 = jnp.pad(inp2, padw)
        emb = jnp.pad(emb, padw)
        cond2 = jnp.pad(cond2, padw)
    grid = (B_pad // Bt,)

    def bspec(ncols):
        return pl.BlockSpec((Bt, ncols), lambda b: (b, 0))

    def cspec(shape):
        nd = len(shape)
        return pl.BlockSpec(tuple(shape), lambda b, _nd=nd: (0,) * _nd)

    param_arrs = [fused[name] for name in FUSED_PARAM_ORDER]
    in_specs = ([bspec(Tdim), bspec(2 * TED), bspec(CLen)]
                + [cspec(a.shape) for a in param_arrs])

    ZK = fused["w_g"].shape[1]
    kernel = functools.partial(epsilon_theta_kernel,
                               num_layers=cfg["residual_layers"])

    out = pl.pallas_call(
        kernel,
        out_shape=jax.ShapeDtypeStruct((B_pad, Tdim), jnp.float32),
        grid_spec=pltpu.PrefetchScalarGridSpec(
            num_scalar_prefetch=0,
            grid=grid,
            in_specs=in_specs,
            out_specs=pl.BlockSpec((Bt, Tdim), lambda b: (b, 0)),
            scratch_shapes=[pltpu.VMEM((Bt, ZK), jnp.float32)],
        ),
        compiler_params=pltpu.CompilerParams(
            dimension_semantics=("parallel",),
            vmem_limit_bytes=32 * 1024 * 1024,
        ),
    )(inp2, emb, cond2, *param_arrs)

    return out[:B].reshape(B, 1, Tdim)


# ---------------------------------------------------------------------------
# Pure-JAX reference: original (un-fused) per-element math, HIGHEST precision.
# ---------------------------------------------------------------------------
def _forward_single(inp, emb, cond, p, *, num_layers, residual_channels,
                    target_dim, pad, dot):
    """inp: (1, Tdim), emb: (1, 2*time_emb_dim), cond: (1, cond_length) -> (1, Tdim)."""
    C = residual_channels
    Tdim = target_dim
    L = Tdim + 2 * pad

    inp_pad = dot(inp, p["pad_mat"])                       # (1, L)
    x = leaky_relu(p["ip_w"] * inp_pad + p["ip_b"])        # (C, L)

    d = silu(dot(emb, p["de_w1"]) + p["de_b1"])            # (1, H)
    d = silu(dot(d, p["de_w2"]) + p["de_b2"])              # (1, H)

    cu = leaky_relu(dot(cond, p["cu_w1"]) + p["cu_b1"])
    cu = leaky_relu(dot(cu, p["cu_w2"]) + p["cu_b2"])
    cond_pad = dot(cu, p["pad_mat"])                       # (1, L)

    inv_sqrt2 = 1.0 / math.sqrt(2.0)
    skip_sum = jnp.zeros((C, L), jnp.float32)

    for i in range(num_layers):
        dp = jnp.sum(p["dp_w"][i] * d, axis=1, keepdims=True) + p["dp_b"][i]
        y = x + dp
        t_m = dot(y, p["roll_mats"][i, 0])
        t_p = dot(y, p["roll_mats"][i, 1])
        conv = (dot(p["dcw0"][i], t_m) + dot(p["dcw1"][i], y)
                + dot(p["dcw2"][i], t_p) + p["dc_b"][i])
        conv = conv + p["cp_w"][i] * cond_pad + p["cp_b"][i]
        gate, filt = conv[:C, :], conv[C:, :]
        y = jax.nn.sigmoid(gate) * jnp.tanh(filt)
        y = leaky_relu(dot(p["op_w"][i], y) + p["op_b"][i])
        x = (x + y[:C, :]) * inv_sqrt2
        skip_sum = skip_sum + y[C:, :]

    x = skip_sum / math.sqrt(float(num_layers))
    Lo = L - 2
    x = leaky_relu(dot(p["sp_w0"], x[:, 0:Lo]) + dot(p["sp_w1"], x[:, 1:Lo + 1])
                   + dot(p["sp_w2"], x[:, 2:Lo + 2]) + p["sp_b"])
    out = (dot(p["ow0"], x[:, 0:Tdim]) + dot(p["ow1"], x[:, 1:Tdim + 1])
           + dot(p["ow2"], x[:, 2:Tdim + 2]) + p["ob"])
    return out


def epsilon_theta_reference(inputs, time, cond, params, cfg):
    B = inputs.shape[0]
    emb = diffusion_time_embedding(time, cfg["time_emb_dim"], cfg["max_steps"])
    emb = emb.reshape(B, 1, 2 * cfg["time_emb_dim"]).astype(jnp.float32)
    dot = functools.partial(jnp.dot, preferred_element_type=jnp.float32,
                            precision=jax.lax.Precision.HIGHEST)
    fn = functools.partial(_forward_single, p=params,
                           num_layers=cfg["residual_layers"],
                           residual_channels=cfg["residual_channels"],
                           target_dim=cfg["target_dim"],
                           pad=cfg["padding"], dot=dot)
    return jax.vmap(lambda i, e, c: fn(i, e, c))(inputs, emb, cond)


if __name__ == "__main__":
    cfg = CONFIG
    key = jax.random.PRNGKey(0)
    k_data, k_par = jax.random.split(key, 2)

    raw = init_params(k_par, cfg)
    fused_f32 = build_fused_params(raw, cfg, dtype=jnp.float32)
    fused_bf16 = build_fused_params(raw, cfg, dtype=jnp.bfloat16)

    def run_case(b, batch_tile, fused, atol, rtol):
        ki, kt, kc = jax.random.split(jax.random.fold_in(k_data, b), 3)
        inputs = jax.random.normal(ki, (b, 1, cfg["target_dim"]), jnp.float32)
        time = jax.random.randint(kt, (b,), 0, cfg["max_steps"])
        cond = jax.random.normal(kc, (b, 1, cfg["cond_length"]), jnp.float32)

        out = jax.block_until_ready(
            epsilon_theta_forward(inputs, time, cond, fused, cfg,
                                  batch_tile=batch_tile))
        assert out.shape == (b, 1, cfg["target_dim"]), out.shape

        ref = jax.block_until_ready(
            epsilon_theta_reference(inputs, time, cond, raw, cfg))
        max_err = float(jnp.max(jnp.abs(out - ref)))
        assert jnp.allclose(out, ref, atol=atol, rtol=rtol), (max_err, atol, rtol)

    # f32 weights: semantic check (tolerance absorbs only the kernel's f32 dot rounding)
    run_case(3, 256, fused_f32, 3e-3, 3e-3)     # small batch, single padded tile
    run_case(40, 16, fused_f32, 3e-3, 3e-3)     # multi-tile grid (3 tiles) with padding
    # bf16 weights / native bf16 MXU path: ~1e-2 expected error through 8 K=256
    # contractions, checked at a documented looser tolerance.
    run_case(40, 16, fused_bf16, 1e-1, 1e-1)

    print("KERNEL_OK")
</pallas_src>

<mosaic_0001>
module attributes {stable_mosaic.version = 11 : i64} {
  func.func @epsilon_theta_kernel(%arg0: i32, %arg1: memref<8x16xf32, #tpu.memory_space<vmem>>, %arg2: memref<8x32xf32, #tpu.memory_space<vmem>>, %arg3: memref<8x32xf32, #tpu.memory_space<vmem>>, %arg4: memref<16x160xf32, #tpu.memory_space<vmem>>, %arg5: memref<1x160xf32, #tpu.memory_space<vmem>>, %arg6: memref<32x64xf32, #tpu.memory_space<vmem>>, %arg7: memref<1x64xf32, #tpu.memory_space<vmem>>, %arg8: memref<64x64xf32, #tpu.memory_space<vmem>>, %arg9: memref<1x64xf32, #tpu.memory_space<vmem>>, %arg10: memref<32x8xf32, #tpu.memory_space<vmem>>, %arg11: memref<1x8xf32, #tpu.memory_space<vmem>>, %arg12: memref<8x20xf32, #tpu.memory_space<vmem>>, %arg13: memref<1x20xf32, #tpu.memory_space<vmem>>, %arg14: memref<8x256x160xf32, #tpu.memory_space<vmem>>, %arg15: memref<8x256x160xf32, #tpu.memory_space<vmem>>, %arg16: memref<8x160x320xf32, #tpu.memory_space<vmem>>, %arg17: memref<8x1x320xf32, #tpu.memory_space<vmem>>, %arg18: memref<320x144xf32, #tpu.memory_space<vmem>>, %arg19: memref<1x144xf32, #tpu.memory_space<vmem>>, %arg20: memref<144x16xf32, #tpu.memory_space<vmem>>, %arg21: memref<1x16xf32, #tpu.memory_space<vmem>>, %arg22: memref<8x16xf32, #tpu.memory_space<vmem>>, %arg23: memref<8x256xf32, #tpu.memory_space<vmem>>) attributes {dimension_semantics = [#tpu.dimension_semantics<parallel>], iteration_bounds = array<i64: 1>, scalar_prefetch = 0 : i64, scratch_operands = 1 : i64, tpu.core_type = #tpu.core_type<tc>, window_params = [{transform_indices = @transform_0, window_bounds = array<i64: 8, 16>}, {transform_indices = @transform_1, window_bounds = array<i64: 8, 32>}, {transform_indices = @transform_2, window_bounds = array<i64: 8, 32>}, {pipeline_mode = #tpu.pipeline_mode<synchronous>, transform_indices = @transform_3, window_bounds = array<i64: 16, 160>}, {pipeline_mode = #tpu.pipeline_mode<synchronous>, transform_indices = @transform_4, window_bounds = array<i64: 1, 160>}, {pipeline_mode = #tpu.pipeline_mode<synchronous>, transform_indices = @transform_5, window_bounds = array<i64: 32, 64>}, {pipeline_mode = #tpu.pipeline_mode<synchronous>, transform_indices = @transform_6, window_bounds = array<i64: 1, 64>}, {pipeline_mode = #tpu.pipeline_mode<synchronous>, transform_indices = @transform_7, window_bounds = array<i64: 64, 64>}, {pipeline_mode = #tpu.pipeline_mode<synchronous>, transform_indices = @transform_8, window_bounds = array<i64: 1, 64>}, {pipeline_mode = #tpu.pipeline_mode<synchronous>, transform_indices = @transform_9, window_bounds = array<i64: 32, 8>}, {pipeline_mode = #tpu.pipeline_mode<synchronous>, transform_indices = @transform_10, window_bounds = array<i64: 1, 8>}, {pipeline_mode = #tpu.pipeline_mode<synchronous>, transform_indices = @transform_11, window_bounds = array<i64: 8, 20>}, {pipeline_mode = #tpu.pipeline_mode<synchronous>, transform_indices = @transform_12, window_bounds = array<i64: 1, 20>}, {pipeline_mode = #tpu.pipeline_mode<synchronous>, transform_indices = @transform_13, window_bounds = array<i64: 8, 256, 160>}, {pipeline_mode = #tpu.pipeline_mode<synchronous>, transform_indices = @transform_14, window_bounds = array<i64: 8, 256, 160>}, {pipeline_mode = #tpu.pipeline_mode<synchronous>, transform_indices = @transform_15, window_bounds = array<i64: 8, 160, 320>}, {pipeline_mode = #tpu.pipeline_mode<synchronous>, transform_indices = @transform_16, window_bounds = array<i64: 8, 1, 320>}, {pipeline_mode = #tpu.pipeline_mode<synchronous>, transform_indices = @transform_17, window_bounds = array<i64: 320, 144>}, {pipeline_mode = #tpu.pipeline_mode<synchronous>, transform_indices = @transform_18, window_bounds = array<i64: 1, 144>}, {pipeline_mode = #tpu.pipeline_mode<synchronous>, transform_indices = @transform_19, window_bounds = array<i64: 144, 16>}, {pipeline_mode = #tpu.pipeline_mode<synchronous>, transform_indices = @transform_20, window_bounds = array<i64: 1, 16>}, {transform_indices = @transform_21, window_bounds = array<i64: 8, 16>}]} {
    %c0 = arith.constant 0 : index
    %c0_0 = arith.constant 0 : index
    %0 = vector.load %arg1[%c0, %c0_0] : memref<8x16xf32, #tpu.memory_space<vmem>>, vector<8x16xf32>
    %c0_1 = arith.constant 0 : index
    %c0_2 = arith.constant 0 : index
    %1 = vector.load %arg4[%c0_1, %c0_2] : memref<16x160xf32, #tpu.memory_space<vmem>>, vector<16x160xf32>
    %cst = arith.constant dense<0.000000e+00> : vector<8x160xf32>
    %2 = tpu.matmul %0, %1, %cst {dimension_numbers = #tpu.dot_dimension_numbers<[1], [0], [0], [1], [0, 0, 1, 1], [], []>} : vector<8x16xf32>, vector<16x160xf32>, vector<8x160xf32> -> vector<8x160xf32>
    %c0_3 = arith.constant 0 : index
    %c0_4 = arith.constant 0 : index
    %3 = vector.load %arg5[%c0_3, %c0_4] : memref<1x160xf32, #tpu.memory_space<vmem>>, vector<1x160xf32>
    %4 = vector.broadcast %3 : vector<1x160xf32> to vector<8x160xf32>
    %5 = arith.addf %2, %4 : vector<8x160xf32>
    %cst_5 = arith.constant 4.000000e-01 : f32
    %6 = vector.broadcast %cst_5 : f32 to vector<8x160xf32>
    %7 = arith.mulf %6, %5 : vector<8x160xf32>
    %8 = arith.maximumf %5, %7 : vector<8x160xf32>
    %c0_6 = arith.constant 0 : index
    %c0_7 = arith.constant 0 : index
    %9 = vector.load %arg2[%c0_6, %c0_7] : memref<8x32xf32, #tpu.memory_space<vmem>>, vector<8x32xf32>
    %c0_8 = arith.constant 0 : index
    %c0_9 = arith.constant 0 : index
    %10 = vector.load %arg6[%c0_8, %c0_9] : memref<32x64xf32, #tpu.memory_space<vmem>>, vector<32x64xf32>
    %cst_10 = arith.constant dense<0.000000e+00> : vector<8x64xf32>
    %11 = tpu.matmul %9, %10, %cst_10 {dimension_numbers = #tpu.dot_dimension_numbers<[1], [0], [0], [1], [0, 0, 1, 1], [], []>} : vector<8x32xf32>, vector<32x64xf32>, vector<8x64xf32> -> vector<8x64xf32>
    %c0_11 = arith.constant 0 : index
    %c0_12 = arith.constant 0 : index
    %12 = vector.load %arg7[%c0_11, %c0_12] : memref<1x64xf32, #tpu.memory_space<vmem>>, vector<1x64xf32>
    %13 = vector.broadcast %12 : vector<1x64xf32> to vector<8x64xf32>
    %14 = arith.addf %11, %13 : vector<8x64xf32>
    %15 = arith.negf %14 : vector<8x64xf32>
    %16 = math.exp %15 : vector<8x64xf32>
    %cst_13 = arith.constant 1.000000e+00 : f32
    %17 = vector.broadcast %cst_13 : f32 to vector<8x64xf32>
    %18 = arith.addf %17, %16 : vector<8x64xf32>
    %19 = arith.divf %17, %18 : vector<8x64xf32>
    %20 = arith.mulf %14, %19 : vector<8x64xf32>
    %c0_14 = arith.constant 0 : index
    %c0_15 = arith.constant 0 : index
    %21 = vector.load %arg8[%c0_14, %c0_15] : memref<64x64xf32, #tpu.memory_space<vmem>>, vector<64x64xf32>
    %cst_16 = arith.constant dense<0.000000e+00> : vector<8x64xf32>
    %22 = tpu.matmul %20, %21, %cst_16 {dimension_numbers = #tpu.dot_dimension_numbers<[1], [0], [0], [1], [0, 0, 1, 1], [], []>} : vector<8x64xf32>, vector<64x64xf32>, vector<8x64xf32> -> vector<8x64xf32>
    %c0_17 = arith.constant 0 : index
    %c0_18 = arith.constant 0 : index
    %23 = vector.load %arg9[%c0_17, %c0_18] : memref<1x64xf32, #tpu.memory_space<vmem>>, vector<1x64xf32>
    %24 = vector.broadcast %23 : vector<1x64xf32> to vector<8x64xf32>
    %25 = arith.addf %22, %24 : vector<8x64xf32>
    %26 = arith.negf %25 : vector<8x64xf32>
    %27 = math.exp %26 : vector<8x64xf32>
    %cst_19 = arith.constant 1.000000e+00 : f32
    %28 = vector.broadcast %cst_19 : f32 to vector<8x64xf32>
    %29 = arith.addf %28, %27 : vector<8x64xf32>
    %30 = arith.divf %28, %29 : vector<8x64xf32>
    %31 = arith.mulf %25, %30 : vector<8x64xf32>
    %c0_20 = arith.constant 0 : index
    %c0_21 = arith.constant 0 : index
    %32 = vector.load %arg3[%c0_20, %c0_21] : memref<8x32xf32, #tpu.memory_space<vmem>>, vector<8x32xf32>
    %c0_22 = arith.constant 0 : index
    %c0_23 = arith.constant 0 : index
    %33 = vector.load %arg10[%c0_22, %c0_23] : memref<32x8xf32, #tpu.memory_space<vmem>>, vector<32x8xf32>
    %cst_24 = arith.constant dense<0.000000e+00> : vector<8x8xf32>
    %34 = tpu.matmul %32, %33, %cst_24 {dimension_numbers = #tpu.dot_dimension_numbers<[1], [0], [0], [1], [0, 0, 1, 1], [], []>} : vector<8x32xf32>, vector<32x8xf32>, vector<8x8xf32> -> vector<8x8xf32>
    %c0_25 = arith.constant 0 : index
    %c0_26 = arith.constant 0 : index
    %35 = vector.load %arg11[%c0_25, %c0_26] : memref<1x8xf32, #tpu.memory_space<vmem>>, vector<1x8xf32>
    %36 = vector.broadcast %35 : vector<1x8xf32> to vector<8x8xf32>
    %37 = arith.addf %34, %36 : vector<8x8xf32>
    %cst_27 = arith.constant 4.000000e-01 : f32
    %38 = vector.broadcast %cst_27 : f32 to vector<8x8xf32>
    %39 = arith.mulf %38, %37 : vector<8x8xf32>
    %40 = arith.maximumf %37, %39 : vector<8x8xf32>
    %c0_28 = arith.constant 0 : index
    %c0_29 = arith.constant 0 : index
    %41 = vector.load %arg12[%c0_28, %c0_29] : memref<8x20xf32, #tpu.memory_space<vmem>>, vector<8x20xf32>
    %cst_30 = arith.constant dense<0.000000e+00> : vector<8x20xf32>
    %42 = tpu.matmul %40, %41, %cst_30 {dimension_numbers = #tpu.dot_dimension_numbers<[1], [0], [0], [1], [0, 0, 1, 1], [], []>} : vector<8x8xf32>, vector<8x20xf32>, vector<8x20xf32> -> vector<8x20xf32>
    %c0_31 = arith.constant 0 : index
    %c0_32 = arith.constant 0 : index
    %43 = vector.load %arg13[%c0_31, %c0_32] : memref<1x20xf32, #tpu.memory_space<vmem>>, vector<1x20xf32>
    %44 = vector.broadcast %43 : vector<1x20xf32> to vector<8x20xf32>
    %45 = arith.addf %42, %44 : vector<8x20xf32>
    %cst_33 = arith.constant 4.000000e-01 : f32
    %46 = vector.broadcast %cst_33 : f32 to vector<8x20xf32>
    %47 = arith.mulf %46, %45 : vector<8x20xf32>
    %48 = arith.maximumf %45, %47 : vector<8x20xf32>
    %cst_34 = arith.constant 1.000000e+00 : f32
    %49 = vector.broadcast %cst_34 : f32 to vector<8x1xf32>
    %cst_35 = arith.constant 0.000000e+00 : f32
    %50 = vector.broadcast %cst_35 : f32 to vector<8x11xf32>
    %51 = tpu.concatenate %8, %31, %48, %49, %50 in 1 : vector<8x160xf32>, vector<8x64xf32>, vector<8x20xf32>, vector<8x1xf32>, vector<8x11xf32> -> vector<8x256xf32>
    %c0_36 = arith.constant 0 : index
    %c0_37 = arith.constant 0 : index
    %52 = vector.load %arg23[%c0_36, %c0_37] : memref<8x256xf32, #tpu.memory_space<vmem>>, vector<8x256xf32>
    tpu.vector_store %arg23[%c0_36, %c0_37], %51 {strides = array<i32>} : memref<8x256xf32, #tpu.memory_space<vmem>>, vector<8x256xf32>,
    %cst_38 = arith.constant 0.707106769 : f32
    %53 = vector.broadcast %cst_38 : f32 to vector<1x160xf32>
    %cst_39 = arith.constant 1.000000e+00 : f32
    %54 = vector.broadcast %cst_39 : f32 to vector<1x160xf32>
    %55 = tpu.concatenate %53, %54 in 1 : vector<1x160xf32>, vector<1x160xf32> -> vector<1x320xf32>
    %cst_40 = arith.constant 0.000000e+00 : f32
    %56 = vector.broadcast %cst_40 : f32 to vector<8x160xf32>
    %57 = tpu.concatenate %8, %56 in 1 : vector<8x160xf32>, vector<8x160xf32> -> vector<8x320xf32>
    %c0_41 = arith.constant 0 : index
    %c0_42 = arith.constant 0 : index
    %58 = vector.load %arg23[%c0_41, %c0_42] : memref<8x256xf32, #tpu.memory_space<vmem>>, vector<8x256xf32>
    %c0_43 = arith.constant 0 : index
    %c0_44 = arith.constant 0 : index
    %c0_45 = arith.constant 0 : index
    %59 = vector.load %arg14[%c0_43, %c0_44, %c0_45] : memref<8x256x160xf32, #tpu.memory_space<vmem>>, vector<1x256x160xf32>
    %60 = vector.shape_cast %59 : vector<1x256x160xf32> to vector<256x160xf32>
    %cst_46 = arith.constant dense<0.000000e+00> : vector<8x160xf32>
    %61 = tpu.matmul %58, %60, %cst_46 {dimension_numbers = #tpu.dot_dimension_numbers<[1], [0], [0], [1], [0, 0, 1, 1], [], []>} : vector<8x256xf32>, vector<256x160xf32>, vector<8x160xf32> -> vector<8x160xf32>
    %c0_47 = arith.constant 0 : index
    %c0_48 = arith.constant 0 : index
    %c0_49 = arith.constant 0 : index
    %62 = vector.load %arg15[%c0_47, %c0_48, %c0_49] : memref<8x256x160xf32, #tpu.memory_space<vmem>>, vector<1x256x160xf32>
    %63 = vector.shape_cast %62 : vector<1x256x160xf32> to vector<256x160xf32>
    %cst_50 = arith.constant dense<0.000000e+00> : vector<8x160xf32>
    %64 = tpu.matmul %58, %63, %cst_50 {dimension_numbers = #tpu.dot_dimension_numbers<[1], [0], [0], [1], [0, 0, 1, 1], [], []>} : vector<8x256xf32>, vector<256x160xf32>, vector<8x160xf32> -> vector<8x160xf32>
    %65 = arith.negf %61 : vector<8x160xf32>
    %66 = math.exp %65 : vector<8x160xf32>
    %cst_51 = arith.constant 1.000000e+00 : f32
    %67 = vector.broadcast %cst_51 : f32 to vector<8x160xf32>
    %68 = arith.addf %67, %66 : vector<8x160xf32>
    %69 = arith.divf %67, %68 : vector<8x160xf32>
    %70 = math.tanh %64 : vector<8x160xf32>
    %71 = arith.mulf %69, %70 : vector<8x160xf32>
    %c0_52 = arith.constant 0 : index
    %c0_53 = arith.constant 0 : index
    %c0_54 = arith.constant 0 : index
    %72 = vector.load %arg16[%c0_52, %c0_53, %c0_54] : memref<8x160x320xf32, #tpu.memory_space<vmem>>, vector<1x160x320xf32>
    %73 = vector.shape_cast %72 : vector<1x160x320xf32> to vector<160x320xf32>
    %cst_55 = arith.constant dense<0.000000e+00> : vector<8x320xf32>
    %74 = tpu.matmul %71, %73, %cst_55 {dimension_numbers = #tpu.dot_dimension_numbers<[1], [0], [0], [1], [0, 0, 1, 1], [], []>} : vector<8x160xf32>, vector<160x320xf32>, vector<8x320xf32> -> vector<8x320xf32>
    %c0_56 = arith.constant 0 : index
    %c0_57 = arith.constant 0 : index
    %c0_58 = arith.constant 0 : index
    %75 = vector.load %arg17[%c0_56, %c0_57, %c0_58] : memref<8x1x320xf32, #tpu.memory_space<vmem>>, vector<1x1x320xf32>
    %76 = vector.shape_cast %75 : vector<1x1x320xf32> to vector<1x320xf32>
    %77 = vector.broadcast %76 : vector<1x320xf32> to vector<8x320xf32>
    %78 = arith.addf %74, %77 : vector<8x320xf32>
    %cst_59 = arith.constant 4.000000e-01 : f32
    %79 = vector.broadcast %cst_59 : f32 to vector<8x320xf32>
    %80 = arith.mulf %79, %78 : vector<8x320xf32>
    %81 = arith.maximumf %78, %80 : vector<8x320xf32>
    %82 = arith.addf %57, %81 : vector<8x320xf32>
    %83 = vector.broadcast %55 : vector<1x320xf32> to vector<8x320xf32>
    %84 = arith.mulf %82, %83 : vector<8x320xf32>
    %85 = vector.extract_strided_slice %84 {offsets = [0, 0], sizes = [8, 160], strides = [1, 1]} : vector<8x320xf32> to vector<8x160xf32>
    %c0_60 = arith.constant 0 : index
    %c0_61 = arith.constant 0 : index
    %86 = vector.load %arg23[%c0_60, %c0_61] : memref<8x256xf32, #tpu.memory_space<vmem>>, vector<8x160xf32>
    tpu.vector_store %arg23[%c0_60, %c0_61], %85 {strides = array<i32>} : memref<8x256xf32, #tpu.memory_space<vmem>>, vector<8x160xf32>,
    %c0_62 = arith.constant 0 : index
    %c0_63 = arith.constant 0 : index
    %87 = vector.load %arg23[%c0_62, %c0_63] : memref<8x256xf32, #tpu.memory_space<vmem>>, vector<8x256xf32>
    %c1 = arith.constant 1 : index
    %c0_64 = arith.constant 0 : index
    %c0_65 = arith.constant 0 : index
    %88 = vector.load %arg14[%c1, %c0_64, %c0_65] : memref<8x256x160xf32, #tpu.memory_space<vmem>>, vector<1x256x160xf32>
    %89 = vector.shape_cast %88 : vector<1x256x160xf32> to vector<256x160xf32>
    %cst_66 = arith.constant dense<0.000000e+00> : vector<8x160xf32>
    %90 = tpu.matmul %87, %89, %cst_66 {dimension_numbers = #tpu.dot_dimension_numbers<[1], [0], [0], [1], [0, 0, 1, 1], [], []>} : vector<8x256xf32>, vector<256x160xf32>, vector<8x160xf32> -> vector<8x160xf32>
    %c1_67 = arith.constant 1 : index
    %c0_68 = arith.constant 0 : index
    %c0_69 = arith.constant 0 : index
    %91 = vector.load %arg15[%c1_67, %c0_68, %c0_69] : memref<8x256x160xf32, #tpu.memory_space<vmem>>, vector<1x256x160xf32>
    %92 = vector.shape_cast %91 : vector<1x256x160xf32> to vector<256x160xf32>
    %cst_70 = arith.constant dense<0.000000e+00> : vector<8x160xf32>
    %93 = tpu.matmul %87, %92, %cst_70 {dimension_numbers = #tpu.dot_dimension_numbers<[1], [0], [0], [1], [0, 0, 1, 1], [], []>} : vector<8x256xf32>, vector<256x160xf32>, vector<8x160xf32> -> vector<8x160xf32>
    %94 = arith.negf %90 : vector<8x160xf32>
    %95 = math.exp %94 : vector<8x160xf32>
    %cst_71 = arith.constant 1.000000e+00 : f32
    %96 = vector.broadcast %cst_71 : f32 to vector<8x160xf32>
    %97 = arith.addf %96, %95 : vector<8x160xf32>
    %98 = arith.divf %96, %97 : vector<8x160xf32>
    %99 = math.tanh %93 : vector<8x160xf32>
    %100 = arith.mulf %98, %99 : vector<8x160xf32>
    %c1_72 = arith.constant 1 : index
    %c0_73 = arith.constant 0 : index
    %c0_74 = arith.constant 0 : index
    %101 = vector.load %arg16[%c1_72, %c0_73, %c0_74] : memref<8x160x320xf32, #tpu.memory_space<vmem>>, vector<1x160x320xf32>
    %102 = vector.shape_cast %101 : vector<1x160x320xf32> to vector<160x320xf32>
    %cst_75 = arith.constant dense<0.000000e+00> : vector<8x320xf32>
    %103 = tpu.matmul %100, %102, %cst_75 {dimension_numbers = #tpu.dot_dimension_numbers<[1], [0], [0], [1], [0, 0, 1, 1], [], []>} : vector<8x160xf32>, vector<160x320xf32>, vector<8x320xf32> -> vector<8x320xf32>
    %c1_76 = arith.constant 1 : index
    %c0_77 = arith.constant 0 : index
    %c0_78 = arith.constant 0 : index
    %104 = vector.load %arg17[%c1_76, %c0_77, %c0_78] : memref<8x1x320xf32, #tpu.memory_space<vmem>>, vector<1x1x320xf32>
    %105 = vector.shape_cast %104 : vector<1x1x320xf32> to vector<1x320xf32>
    %106 = vector.broadcast %105 : vector<1x320xf32> to vector<8x320xf32>
    %107 = arith.addf %103, %106 : vector<8x320xf32>
    %cst_79 = arith.constant 4.000000e-01 : f32
    %108 = vector.broadcast %cst_79 : f32 to vector<8x320xf32>
    %109 = arith.mulf %108, %107 : vector<8x320xf32>
    %110 = arith.maximumf %107, %109 : vector<8x320xf32>
    %111 = arith.addf %84, %110 : vector<8x320xf32>
    %112 = vector.broadcast %55 : vector<1x320xf32> to vector<8x320xf32>
    %113 = arith.mulf %111, %112 : vector<8x320xf32>
    %114 = vector.extract_strided_slice %113 {offsets = [0, 0], sizes = [8, 160], strides = [1, 1]} : vector<8x320xf32> to vector<8x160xf32>
    %c0_80 = arith.constant 0 : index
    %c0_81 = arith.constant 0 : index
    %115 = vector.load %arg23[%c0_80, %c0_81] : memref<8x256xf32, #tpu.memory_space<vmem>>, vector<8x160xf32>
    tpu.vector_store %arg23[%c0_80, %c0_81], %114 {strides = array<i32>} : memref<8x256xf32, #tpu.memory_space<vmem>>, vector<8x160xf32>,
    %c0_82 = arith.constant 0 : index
    %c0_83 = arith.constant 0 : index
    %116 = vector.load %arg23[%c0_82, %c0_83] : memref<8x256xf32, #tpu.memory_space<vmem>>, vector<8x256xf32>
    %c2 = arith.constant 2 : index
    %c0_84 = arith.constant 0 : index
    %c0_85 = arith.constant 0 : index
    %117 = vector.load %arg14[%c2, %c0_84, %c0_85] : memref<8x256x160xf32, #tpu.memory_space<vmem>>, vector<1x256x160xf32>
    %118 = vector.shape_cast %117 : vector<1x256x160xf32> to vector<256x160xf32>
    %cst_86 = arith.constant dense<0.000000e+00> : vector<8x160xf32>
    %119 = tpu.matmul %116, %118, %cst_86 {dimension_numbers = #tpu.dot_dimension_numbers<[1], [0], [0], [1], [0, 0, 1, 1], [], []>} : vector<8x256xf32>, vector<256x160xf32>, vector<8x160xf32> -> vector<8x160xf32>
    %c2_87 = arith.constant 2 : index
    %c0_88 = arith.constant 0 : index
    %c0_89 = arith.constant 0 : index
    %120 = vector.load %arg15[%c2_87, %c0_88, %c0_89] : memref<8x256x160xf32, #tpu.memory_space<vmem>>, vector<1x256x160xf32>
    %121 = vector.shape_cast %120 : vector<1x256x160xf32> to vector<256x160xf32>
    %cst_90 = arith.constant dense<0.000000e+00> : vector<8x160xf32>
    %122 = tpu.matmul %116, %121, %cst_90 {dimension_numbers = #tpu.dot_dimension_numbers<[1], [0], [0], [1], [0, 0, 1, 1], [], []>} : vector<8x256xf32>, vector<256x160xf32>, vector<8x160xf32> -> vector<8x160xf32>
    %123 = arith.negf %119 : vector<8x160xf32>
    %124 = math.exp %123 : vector<8x160xf32>
    %cst_91 = arith.constant 1.000000e+00 : f32
    %125 = vector.broadcast %cst_91 : f32 to vector<8x160xf32>
    %126 = arith.addf %125, %124 : vector<8x160xf32>
    %127 = arith.divf %125, %126 : vector<8x160xf32>
    %128 = math.tanh %122 : vector<8x160xf32>
    %129 = arith.mulf %127, %128 : vector<8x160xf32>
    %c2_92 = arith.constant 2 : index
    %c0_93 = arith.constant 0 : index
    %c0_94 = arith.constant 0 : index
    %130 = vector.load %arg16[%c2_92, %c0_93, %c0_94] : memref<8x160x320xf32, #tpu.memory_space<vmem>>, vector<1x160x320xf32>
    %131 = vector.shape_cast %130 : vector<1x160x320xf32> to vector<160x320xf32>
    %cst_95 = arith.constant dense<0.000000e+00> : vector<8x320xf32>
    %132 = tpu.matmul %129, %131, %cst_95 {dimension_numbers = #tpu.dot_dimension_numbers<[1], [0], [0], [1], [0, 0, 1, 1], [], []>} : vector<8x160xf32>, vector<160x320xf32>, vector<8x320xf32> -> vector<8x320xf32>
    %c2_96 = arith.constant 2 : index
    %c0_97 = arith.constant 0 : index
    %c0_98 = arith.constant 0 : index
    %133 = vector.load %arg17[%c2_96, %c0_97, %c0_98] : memref<8x1x320xf32, #tpu.memory_space<vmem>>, vector<1x1x320xf32>
    %134 = vector.shape_cast %133 : vector<1x1x320xf32> to vector<1x320xf32>
    %135 = vector.broadcast %134 : vector<1x320xf32> to vector<8x320xf32>
    %136 = arith.addf %132, %135 : vector<8x320xf32>
    %cst_99 = arith.constant 4.000000e-01 : f32
    %137 = vector.broadcast %cst_99 : f32 to vector<8x320xf32>
    %138 = arith.mulf %137, %136 : vector<8x320xf32>
    %139 = arith.maximumf %136, %138 : vector<8x320xf32>
    %140 = arith.addf %113, %139 : vector<8x320xf32>
    %141 = vector.broadcast %55 : vector<1x320xf32> to vector<8x320xf32>
    %142 = arith.mulf %140, %141 : vector<8x320xf32>
    %143 = vector.extract_strided_slice %142 {offsets = [0, 0], sizes = [8, 160], strides = [1, 1]} : vector<8x320xf32> to vector<8x160xf32>
    %c0_100 = arith.constant 0 : index
    %c0_101 = arith.constant 0 : index
    %144 = vector.load %arg23[%c0_100, %c0_101] : memref<8x256xf32, #tpu.memory_space<vmem>>, vector<8x160xf32>
    tpu.vector_store %arg23[%c0_100, %c0_101], %143 {strides = array<i32>} : memref<8x256xf32, #tpu.memory_space<vmem>>, vector<8x160xf32>,
    %c0_102 = arith.constant 0 : index
    %c0_103 = arith.constant 0 : index
    %145 = vector.load %arg23[%c0_102, %c0_103] : memref<8x256xf32, #tpu.memory_space<vmem>>, vector<8x256xf32>
    %c3 = arith.constant 3 : index
    %c0_104 = arith.constant 0 : index
    %c0_105 = arith.constant 0 : index
    %146 = vector.load %arg14[%c3, %c0_104, %c0_105] : memref<8x256x160xf32, #tpu.memory_space<vmem>>, vector<1x256x160xf32>
    %147 = vector.shape_cast %146 : vector<1x256x160xf32> to vector<256x160xf32>
    %cst_106 = arith.constant dense<0.000000e+00> : vector<8x160xf32>
    %148 = tpu.matmul %145, %147, %cst_106 {dimension_numbers = #tpu.dot_dimension_numbers<[1], [0], [0], [1], [0, 0, 1, 1], [], []>} : vector<8x256xf32>, vector<256x160xf32>, vector<8x160xf32> -> vector<8x160xf32>
    %c3_107 = arith.constant 3 : index
    %c0_108 = arith.constant 0 : index
    %c0_109 = arith.constant 0 : index
    %149 = vector.load %arg15[%c3_107, %c0_108, %c0_109] : memref<8x256x160xf32, #tpu.memory_space<vmem>>, vector<1x256x160xf32>
    %150 = vector.shape_cast %149 : vector<1x256x160xf32> to vector<256x160xf32>
    %cst_110 = arith.constant dense<0.000000e+00> : vector<8x160xf32>
    %151 = tpu.matmul %145, %150, %cst_110 {dimension_numbers = #tpu.dot_dimension_numbers<[1], [0], [0], [1], [0, 0, 1, 1], [], []>} : vector<8x256xf32>, vector<256x160xf32>, vector<8x160xf32> -> vector<8x160xf32>
    %152 = arith.negf %148 : vector<8x160xf32>
    %153 = math.exp %152 : vector<8x160xf32>
    %cst_111 = arith.constant 1.000000e+00 : f32
    %154 = vector.broadcast %cst_111 : f32 to vector<8x160xf32>
    %155 = arith.addf %154, %153 : vector<8x160xf32>
    %156 = arith.divf %154, %155 : vector<8x160xf32>
    %157 = math.tanh %151 : vector<8x160xf32>
    %158 = arith.mulf %156, %157 : vector<8x160xf32>
    %c3_112 = arith.constant 3 : index
    %c0_113 = arith.constant 0 : index
    %c0_114 = arith.constant 0 : index
    %159 = vector.load %arg16[%c3_112, %c0_113, %c0_114] : memref<8x160x320xf32, #tpu.memory_space<vmem>>, vector<1x160x320xf32>
    %160 = vector.shape_cast %159 : vector<1x160x320xf32> to vector<160x320xf32>
    %cst_115 = arith.constant dense<0.000000e+00> : vector<8x320xf32>
    %161 = tpu.matmul %158, %160, %cst_115 {dimension_numbers = #tpu.dot_dimension_numbers<[1], [0], [0], [1], [0, 0, 1, 1], [], []>} : vector<8x160xf32>, vector<160x320xf32>, vector<8x320xf32> -> vector<8x320xf32>
    %c3_116 = arith.constant 3 : index
    %c0_117 = arith.constant 0 : index
    %c0_118 = arith.constant 0 : index
    %162 = vector.load %arg17[%c3_116, %c0_117, %c0_118] : memref<8x1x320xf32, #tpu.memory_space<vmem>>, vector<1x1x320xf32>
    %163 = vector.shape_cast %162 : vector<1x1x320xf32> to vector<1x320xf32>
    %164 = vector.broadcast %163 : vector<1x320xf32> to vector<8x320xf32>
    %165 = arith.addf %161, %164 : vector<8x320xf32>
    %cst_119 = arith.constant 4.000000e-01 : f32
    %166 = vector.broadcast %cst_119 : f32 to vector<8x320xf32>
    %167 = arith.mulf %166, %165 : vector<8x320xf32>
    %168 = arith.maximumf %165, %167 : vector<8x320xf32>
    %169 = arith.addf %142, %168 : vector<8x320xf32>
    %170 = vector.broadcast %55 : vector<1x320xf32> to vector<8x320xf32>
    %171 = arith.mulf %169, %170 : vector<8x320xf32>
    %172 = vector.extract_strided_slice %171 {offsets = [0, 0], sizes = [8, 160], strides = [1, 1]} : vector<8x320xf32> to vector<8x160xf32>
    %c0_120 = arith.constant 0 : index
    %c0_121 = arith.constant 0 : index
    %173 = vector.load %arg23[%c0_120, %c0_121] : memref<8x256xf32, #tpu.memory_space<vmem>>, vector<8x160xf32>
    tpu.vector_store %arg23[%c0_120, %c0_121], %172 {strides = array<i32>} : memref<8x256xf32, #tpu.memory_space<vmem>>, vector<8x160xf32>,
    %c0_122 = arith.constant 0 : index
    %c0_123 = arith.constant 0 : index
    %174 = vector.load %arg23[%c0_122, %c0_123] : memref<8x256xf32, #tpu.memory_space<vmem>>, vector<8x256xf32>
    %c4 = arith.constant 4 : index
    %c0_124 = arith.constant 0 : index
    %c0_125 = arith.constant 0 : index
    %175 = vector.load %arg14[%c4, %c0_124, %c0_125] : memref<8x256x160xf32, #tpu.memory_space<vmem>>, vector<1x256x160xf32>
    %176 = vector.shape_cast %175 : vector<1x256x160xf32> to vector<256x160xf32>
    %cst_126 = arith.constant dense<0.000000e+00> : vector<8x160xf32>
    %177 = tpu.matmul %174, %176, %cst_126 {dimension_numbers = #tpu.dot_dimension_numbers<[1], [0], [0], [1], [0, 0, 1, 1], [], []>} : vector<8x256xf32>, vector<256x160xf32>, vector<8x160xf32> -> vector<8x160xf32>
    %c4_127 = arith.constant 4 : index
    %c0_128 = arith.constant 0 : index
    %c0_129 = arith.constant 0 : index
    %178 = vector.load %arg15[%c4_127, %c0_128, %c0_129] : memref<8x256x160xf32, #tpu.memory_space<vmem>>, vector<1x256x160xf32>
    %179 = vector.shape_cast %178 : vector<1x256x160xf32> to vector<256x160xf32>
    %cst_130 = arith.constant dense<0.000000e+00> : vector<8x160xf32>
    %180 = tpu.matmul %174, %179, %cst_130 {dimension_numbers = #tpu.dot_dimension_numbers<[1], [0], [0], [1], [0, 0, 1, 1], [], []>} : vector<8x256xf32>, vector<256x160xf32>, vector<8x160xf32> -> vector<8x160xf32>
    %181 = arith.negf %177 : vector<8x160xf32>
    %182 = math.exp %181 : vector<8x160xf32>
    %cst_131 = arith.constant 1.000000e+00 : f32
    %183 = vector.broadcast %cst_131 : f32 to vector<8x160xf32>
    %184 = arith.addf %183, %182 : vector<8x160xf32>
    %185 = arith.divf %183, %184 : vector<8x160xf32>
    %186 = math.tanh %180 : vector<8x160xf32>
    %187 = arith.mulf %185, %186 : vector<8x160xf32>
    %c4_132 = arith.constant 4 : index
    %c0_133 = arith.constant 0 : index
    %c0_134 = arith.constant 0 : index
    %188 = vector.load %arg16[%c4_132, %c0_133, %c0_134] : memref<8x160x320xf32, #tpu.memory_space<vmem>>, vector<1x160x320xf32>
    %189 = vector.shape_cast %188 : vector<1x160x320xf32> to vector<160x320xf32>
    %cst_135 = arith.constant dense<0.000000e+00> : vector<8x320xf32>
    %190 = tpu.matmul %187, %189, %cst_135 {dimension_numbers = #tpu.dot_dimension_numbers<[1], [0], [0], [1], [0, 0, 1, 1], [], []>} : vector<8x160xf32>, vector<160x320xf32>, vector<8x320xf32> -> vector<8x320xf32>
    %c4_136 = arith.constant 4 : index
    %c0_137 = arith.constant 0 : index
    %c0_138 = arith.constant 0 : index
    %191 = vector.load %arg17[%c4_136, %c0_137, %c0_138] : memref<8x1x320xf32, #tpu.memory_space<vmem>>, vector<1x1x320xf32>
    %192 = vector.shape_cast %191 : vector<1x1x320xf32> to vector<1x320xf32>
    %193 = vector.broadcast %192 : vector<1x320xf32> to vector<8x320xf32>
    %194 = arith.addf %190, %193 : vector<8x320xf32>
    %cst_139 = arith.constant 4.000000e-01 : f32
    %195 = vector.broadcast %cst_139 : f32 to vector<8x320xf32>
    %196 = arith.mulf %195, %194 : vector<8x320xf32>
    %197 = arith.maximumf %194, %196 : vector<8x320xf32>
    %198 = arith.addf %171, %197 : vector<8x320xf32>
    %199 = vector.broadcast %55 : vector<1x320xf32> to vector<8x320xf32>
    %200 = arith.mulf %198, %199 : vector<8x320xf32>
    %201 = vector.extract_strided_slice %200 {offsets = [0, 0], sizes = [8, 160], strides = [1, 1]} : vector<8x320xf32> to vector<8x160xf32>
    %c0_140 = arith.constant 0 : index
    %c0_141 = arith.constant 0 : index
    %202 = vector.load %arg23[%c0_140, %c0_141] : memref<8x256xf32, #tpu.memory_space<vmem>>, vector<8x160xf32>
    tpu.vector_store %arg23[%c0_140, %c0_141], %201 {strides = array<i32>} : memref<8x256xf32, #tpu.memory_space<vmem>>, vector<8x160xf32>,
    %c0_142 = arith.constant 0 : index
    %c0_143 = arith.constant 0 : index
    %203 = vector.load %arg23[%c0_142, %c0_143] : memref<8x256xf32, #tpu.memory_space<vmem>>, vector<8x256xf32>
    %c5 = arith.constant 5 : index
    %c0_144 = arith.constant 0 : index
    %c0_145 = arith.constant 0 : index
    %204 = vector.load %arg14[%c5, %c0_144, %c0_145] : memref<8x256x160xf32, #tpu.memory_space<vmem>>, vector<1x256x160xf32>
    %205 = vector.shape_cast %204 : vector<1x256x160xf32> to vector<256x160xf32>
    %cst_146 = arith.constant dense<0.000000e+00> : vector<8x160xf32>
    %206 = tpu.matmul %203, %205, %cst_146 {dimension_numbers = #tpu.dot_dimension_numbers<[1], [0], [0], [1], [0, 0, 1, 1], [], []>} : vector<8x256xf32>, vector<256x160xf32>, vector<8x160xf32> -> vector<8x160xf32>
    %c5_147 = arith.constant 5 : index
    %c0_148 = arith.constant 0 : index
    %c0_149 = arith.constant 0 : index
    %207 = vector.load %arg15[%c5_147, %c0_148, %c0_149] : memref<8x256x160xf32, #tpu.memory_space<vmem>>, vector<1x256x160xf32>
    %208 = vector.shape_cast %207 : vector<1x256x160xf32> to vector<256x160xf32>
    %cst_150 = arith.constant dense<0.000000e+00> : vector<8x160xf32>
    %209 = tpu.matmul %203, %208, %cst_150 {dimension_numbers = #tpu.dot_dimension_numbers<[1], [0], [0], [1], [0, 0, 1, 1], [], []>} : vector<8x256xf32>, vector<256x160xf32>, vector<8x160xf32> -> vector<8x160xf32>
    %210 = arith.negf %206 : vector<8x160xf32>
    %211 = math.exp %210 : vector<8x160xf32>
    %cst_151 = arith.constant 1.000000e+00 : f32
    %212 = vector.broadcast %cst_151 : f32 to vector<8x160xf32>
    %213 = arith.addf %212, %211 : vector<8x160xf32>
    %214 = arith.divf %212, %213 : vector<8x160xf32>
    %215 = math.tanh %209 : vector<8x160xf32>
    %216 = arith.mulf %214, %215 : vector<8x160xf32>
    %c5_152 = arith.constant 5 : index
    %c0_153 = arith.constant 0 : index
    %c0_154 = arith.constant 0 : index
    %217 = vector.load %arg16[%c5_152, %c0_153, %c0_154] : memref<8x160x320xf32, #tpu.memory_space<vmem>>, vector<1x160x320xf32>
    %218 = vector.shape_cast %217 : vector<1x160x320xf32> to vector<160x320xf32>
    %cst_155 = arith.constant dense<0.000000e+00> : vector<8x320xf32>
    %219 = tpu.matmul %216, %218, %cst_155 {dimension_numbers = #tpu.dot_dimension_numbers<[1], [0], [0], [1], [0, 0, 1, 1], [], []>} : vector<8x160xf32>, vector<160x320xf32>, vector<8x320xf32> -> vector<8x320xf32>
    %c5_156 = arith.constant 5 : index
    %c0_157 = arith.constant 0 : index
    %c0_158 = arith.constant 0 : index
    %220 = vector.load %arg17[%c5_156, %c0_157, %c0_158] : memref<8x1x320xf32, #tpu.memory_space<vmem>>, vector<1x1x320xf32>
    %221 = vector.shape_cast %220 : vector<1x1x320xf32> to vector<1x320xf32>
    %222 = vector.broadcast %221 : vector<1x320xf32> to vector<8x320xf32>
    %223 = arith.addf %219, %222 : vector<8x320xf32>
    %cst_159 = arith.constant 4.000000e-01 : f32
    %224 = vector.broadcast %cst_159 : f32 to vector<8x320xf32>
    %225 = arith.mulf %224, %223 : vector<8x320xf32>
    %226 = arith.maximumf %223, %225 : vector<8x320xf32>
    %227 = arith.addf %200, %226 : vector<8x320xf32>
    %228 = vector.broadcast %55 : vector<1x320xf32> to vector<8x320xf32>
    %229 = arith.mulf %227, %228 : vector<8x320xf32>
    %230 = vector.extract_strided_slice %229 {offsets = [0, 0], sizes = [8, 160], strides = [1, 1]} : vector<8x320xf32> to vector<8x160xf32>
    %c0_160 = arith.constant 0 : index
    %c0_161 = arith.constant 0 : index
    %231 = vector.load %arg23[%c0_160, %c0_161] : memref<8x256xf32, #tpu.memory_space<vmem>>, vector<8x160xf32>
    tpu.vector_store %arg23[%c0_160, %c0_161], %230 {strides = array<i32>} : memref<8x256xf32, #tpu.memory_space<vmem>>, vector<8x160xf32>,
    %c0_162 = arith.constant 0 : index
    %c0_163 = arith.constant 0 : index
    %232 = vector.load %arg23[%c0_162, %c0_163] : memref<8x256xf32, #tpu.memory_space<vmem>>, vector<8x256xf32>
    %c6 = arith.constant 6 : index
    %c0_164 = arith.constant 0 : index
    %c0_165 = arith.constant 0 : index
    %233 = vector.load %arg14[%c6, %c0_164, %c0_165] : memref<8x256x160xf32, #tpu.memory_space<vmem>>, vector<1x256x160xf32>
    %234 = vector.shape_cast %233 : vector<1x256x160xf32> to vector<256x160xf32>
    %cst_166 = arith.constant dense<0.000000e+00> : vector<8x160xf32>
    %235 = tpu.matmul %232, %234, %cst_166 {dimension_numbers = #tpu.dot_dimension_numbers<[1], [0], [0], [1], [0, 0, 1, 1], [], []>} : vector<8x256xf32>, vector<256x160xf32>, vector<8x160xf32> -> vector<8x160xf32>
    %c6_167 = arith.constant 6 : index
    %c0_168 = arith.constant 0 : index
    %c0_169 = arith.constant 0 : index
    %236 = vector.load %arg15[%c6_167, %c0_168, %c0_169] : memref<8x256x160xf32, #tpu.memory_space<vmem>>, vector<1x256x160xf32>
    %237 = vector.shape_cast %236 : vector<1x256x160xf32> to vector<256x160xf32>
    %cst_170 = arith.constant dense<0.000000e+00> : vector<8x160xf32>
    %238 = tpu.matmul %232, %237, %cst_170 {dimension_numbers = #tpu.dot_dimension_numbers<[1], [0], [0], [1], [0, 0, 1, 1], [], []>} : vector<8x256xf32>, vector<256x160xf32>, vector<8x160xf32> -> vector<8x160xf32>
    %239 = arith.negf %235 : vector<8x160xf32>
    %240 = math.exp %239 : vector<8x160xf32>
    %cst_171 = arith.constant 1.000000e+00 : f32
    %241 = vector.broadcast %cst_171 : f32 to vector<8x160xf32>
    %242 = arith.addf %241, %240 : vector<8x160xf32>
    %243 = arith.divf %241, %242 : vector<8x160xf32>
    %244 = math.tanh %238 : vector<8x160xf32>
    %245 = arith.mulf %243, %244 : vector<8x160xf32>
    %c6_172 = arith.constant 6 : index
    %c0_173 = arith.constant 0 : index
    %c0_174 = arith.constant 0 : index
    %246 = vector.load %arg16[%c6_172, %c0_173, %c0_174] : memref<8x160x320xf32, #tpu.memory_space<vmem>>, vector<1x160x320xf32>
    %247 = vector.shape_cast %246 : vector<1x160x320xf32> to vector<160x320xf32>
    %cst_175 = arith.constant dense<0.000000e+00> : vector<8x320xf32>
    %248 = tpu.matmul %245, %247, %cst_175 {dimension_numbers = #tpu.dot_dimension_numbers<[1], [0], [0], [1], [0, 0, 1, 1], [], []>} : vector<8x160xf32>, vector<160x320xf32>, vector<8x320xf32> -> vector<8x320xf32>
    %c6_176 = arith.constant 6 : index
    %c0_177 = arith.constant 0 : index
    %c0_178 = arith.constant 0 : index
    %249 = vector.load %arg17[%c6_176, %c0_177, %c0_178] : memref<8x1x320xf32, #tpu.memory_space<vmem>>, vector<1x1x320xf32>
    %250 = vector.shape_cast %249 : vector<1x1x320xf32> to vector<1x320xf32>
    %251 = vector.broadcast %250 : vector<1x320xf32> to vector<8x320xf32>
    %252 = arith.addf %248, %251 : vector<8x320xf32>
    %cst_179 = arith.constant 4.000000e-01 : f32
    %253 = vector.broadcast %cst_179 : f32 to vector<8x320xf32>
    %254 = arith.mulf %253, %252 : vector<8x320xf32>
    %255 = arith.maximumf %252, %254 : vector<8x320xf32>
    %256 = arith.addf %229, %255 : vector<8x320xf32>
    %257 = vector.broadcast %55 : vector<1x320xf32> to vector<8x320xf32>
    %258 = arith.mulf %256, %257 : vector<8x320xf32>
    %259 = vector.extract_strided_slice %258 {offsets = [0, 0], sizes = [8, 160], strides = [1, 1]} : vector<8x320xf32> to vector<8x160xf32>
    %c0_180 = arith.constant 0 : index
    %c0_181 = arith.constant 0 : index
    %260 = vector.load %arg23[%c0_180, %c0_181] : memref<8x256xf32, #tpu.memory_space<vmem>>, vector<8x160xf32>
    tpu.vector_store %arg23[%c0_180, %c0_181], %259 {strides = array<i32>} : memref<8x256xf32, #tpu.memory_space<vmem>>, vector<8x160xf32>,
    %c0_182 = arith.constant 0 : index
    %c0_183 = arith.constant 0 : index
    %261 = vector.load %arg23[%c0_182, %c0_183] : memref<8x256xf32, #tpu.memory_space<vmem>>, vector<8x256xf32>
    %c7 = arith.constant 7 : index
    %c0_184 = arith.constant 0 : index
    %c0_185 = arith.constant 0 : index
    %262 = vector.load %arg14[%c7, %c0_184, %c0_185] : memref<8x256x160xf32, #tpu.memory_space<vmem>>, vector<1x256x160xf32>
    %263 = vector.shape_cast %262 : vector<1x256x160xf32> to vector<256x160xf32>
    %cst_186 = arith.constant dense<0.000000e+00> : vector<8x160xf32>
    %264 = tpu.matmul %261, %263, %cst_186 {dimension_numbers = #tpu.dot_dimension_numbers<[1], [0], [0], [1], [0, 0, 1, 1], [], []>} : vector<8x256xf32>, vector<256x160xf32>, vector<8x160xf32> -> vector<8x160xf32>
    %c7_187 = arith.constant 7 : index
    %c0_188 = arith.constant 0 : index
    %c0_189 = arith.constant 0 : index
    %265 = vector.load %arg15[%c7_187, %c0_188, %c0_189] : memref<8x256x160xf32, #tpu.memory_space<vmem>>, vector<1x256x160xf32>
    %266 = vector.shape_cast %265 : vector<1x256x160xf32> to vector<256x160xf32>
    %cst_190 = arith.constant dense<0.000000e+00> : vector<8x160xf32>
    %267 = tpu.matmul %261, %266, %cst_190 {dimension_numbers = #tpu.dot_dimension_numbers<[1], [0], [0], [1], [0, 0, 1, 1], [], []>} : vector<8x256xf32>, vector<256x160xf32>, vector<8x160xf32> -> vector<8x160xf32>
    %268 = arith.negf %264 : vector<8x160xf32>
    %269 = math.exp %268 : vector<8x160xf32>
    %cst_191 = arith.constant 1.000000e+00 : f32
    %270 = vector.broadcast %cst_191 : f32 to vector<8x160xf32>
    %271 = arith.addf %270, %269 : vector<8x160xf32>
    %272 = arith.divf %270, %271 : vector<8x160xf32>
    %273 = math.tanh %267 : vector<8x160xf32>
    %274 = arith.mulf %272, %273 : vector<8x160xf32>
    %c7_192 = arith.constant 7 : index
    %c0_193 = arith.constant 0 : index
    %c0_194 = arith.constant 0 : index
    %275 = vector.load %arg16[%c7_192, %c0_193, %c0_194] : memref<8x160x320xf32, #tpu.memory_space<vmem>>, vector<1x160x320xf32>
    %276 = vector.shape_cast %275 : vector<1x160x320xf32> to vector<160x320xf32>
    %cst_195 = arith.constant dense<0.000000e+00> : vector<8x320xf32>
    %277 = tpu.matmul %274, %276, %cst_195 {dimension_numbers = #tpu.dot_dimension_numbers<[1], [0], [0], [1], [0, 0, 1, 1], [], []>} : vector<8x160xf32>, vector<160x320xf32>, vector<8x320xf32> -> vector<8x320xf32>
    %c7_196 = arith.constant 7 : index
    %c0_197 = arith.constant 0 : index
    %c0_198 = arith.constant 0 : index
    %278 = vector.load %arg17[%c7_196, %c0_197, %c0_198] : memref<8x1x320xf32, #tpu.memory_space<vmem>>, vector<1x1x320xf32>
    %279 = vector.shape_cast %278 : vector<1x1x320xf32> to vector<1x320xf32>
    %280 = vector.broadcast %279 : vector<1x320xf32> to vector<8x320xf32>
    %281 = arith.addf %277, %280 : vector<8x320xf32>
    %cst_199 = arith.constant 4.000000e-01 : f32
    %282 = vector.broadcast %cst_199 : f32 to vector<8x320xf32>
    %283 = arith.mulf %282, %281 : vector<8x320xf32>
    %284 = arith.maximumf %281, %283 : vector<8x320xf32>
    %285 = arith.addf %258, %284 : vector<8x320xf32>
    %286 = vector.broadcast %55 : vector<1x320xf32> to vector<8x320xf32>
    %287 = arith.mulf %285, %286 : vector<8x320xf32>
    %c0_200 = arith.constant 0 : index
    %c0_201 = arith.constant 0 : index
    %288 = vector.load %arg18[%c0_200, %c0_201] : memref<320x144xf32, #tpu.memory_space<vmem>>, vector<320x144xf32>
    %cst_202 = arith.constant dense<0.000000e+00> : vector<8x144xf32>
    %289 = tpu.matmul %287, %288, %cst_202 {dimension_numbers = #tpu.dot_dimension_numbers<[1], [0], [0], [1], [0, 0, 1, 1], [], []>} : vector<8x320xf32>, vector<320x144xf32>, vector<8x144xf32> -> vector<8x144xf32>
    %c0_203 = arith.constant 0 : index
    %c0_204 = arith.constant 0 : index
    %290 = vector.load %arg19[%c0_203, %c0_204] : memref<1x144xf32, #tpu.memory_space<vmem>>, vector<1x144xf32>
    %291 = vector.broadcast %290 : vector<1x144xf32> to vector<8x144xf32>
    %292 = arith.addf %289, %291 : vector<8x144xf32>
    %cst_205 = arith.constant 4.000000e-01 : f32
    %293 = vector.broadcast %cst_205 : f32 to vector<8x144xf32>
    %294 = arith.mulf %293, %292 : vector<8x144xf32>
    %295 = arith.maximumf %292, %294 : vector<8x144xf32>
    %c0_206 = arith.constant 0 : index
    %c0_207 = arith.constant 0 : index
    %296 = vector.load %arg20[%c0_206, %c0_207] : memref<144x16xf32, #tpu.memory_space<vmem>>, vector<144x16xf32>
    %cst_208 = arith.constant dense<0.000000e+00> : vector<8x16xf32>
    %297 = tpu.matmul %295, %296, %cst_208 {dimension_numbers = #tpu.dot_dimension_numbers<[1], [0], [0], [1], [0, 0, 1, 1], [], []>} : vector<8x144xf32>, vector<144x16xf32>, vector<8x16xf32> -> vector<8x16xf32>
    %c0_209 = arith.constant 0 : index
    %c0_210 = arith.constant 0 : index
    %298 = vector.load %arg21[%c0_209, %c0_210] : memref<1x16xf32, #tpu.memory_space<vmem>>, vector<1x16xf32>
    %299 = vector.broadcast %298 : vector<1x16xf32> to vector<8x16xf32>
    %300 = arith.addf %297, %299 : vector<8x16xf32>
    %c0_211 = arith.constant 0 : index
    %c0_212 = arith.constant 0 : index
    %301 = vector.load %arg22[%c0_211, %c0_212] : memref<8x16xf32, #tpu.memory_space<vmem>>, vector<8x16xf32>
    tpu.vector_store %arg22[%c0_211, %c0_212], %300 {strides = array<i32>} : memref<8x16xf32, #tpu.memory_space<vmem>>, vector<8x16xf32>,
    return
  }
  func.func @transform_0(%arg0: i32) -> (i32, i32) {
    %c0_i32 = arith.constant 0 : i32
    %c0_i32_0 = arith.constant 0 : i32
    return %arg0, %c0_i32 : i32, i32
  }
  func.func @transform_1(%arg0: i32) -> (i32, i32) {
    %c0_i32 = arith.constant 0 : i32
    %c0_i32_0 = arith.constant 0 : i32
    return %arg0, %c0_i32 : i32, i32
  }
  func.func @transform_2(%arg0: i32) -> (i32, i32) {
    %c0_i32 = arith.constant 0 : i32
    %c0_i32_0 = arith.constant 0 : i32
    return %arg0, %c0_i32 : i32, i32
  }
  func.func @transform_3(%arg0: i32) -> (i32, i32) {
    %c0_i32 = arith.constant 0 : i32
    %c0_i32_0 = arith.constant 0 : i32
    %c0_i32_1 = arith.constant 0 : i32
    return %c0_i32, %c0_i32_0 : i32, i32
  }
  func.func @transform_4(%arg0: i32) -> (i32, i32) {
    %c0_i32 = arith.constant 0 : i32
    %c0_i32_0 = arith.constant 0 : i32
    %c0_i32_1 = arith.constant 0 : i32
    return %c0_i32, %c0_i32_0 : i32, i32
  }
  func.func @transform_5(%arg0: i32) -> (i32, i32) {
    %c0_i32 = arith.constant 0 : i32
    %c0_i32_0 = arith.constant 0 : i32
    %c0_i32_1 = arith.constant 0 : i32
    return %c0_i32, %c0_i32_0 : i32, i32
  }
  func.func @transform_6(%arg0: i32) -> (i32, i32) {
    %c0_i32 = arith.constant 0 : i32
    %c0_i32_0 = arith.constant 0 : i32
    %c0_i32_1 = arith.constant 0 : i32
    return %c0_i32, %c0_i32_0 : i32, i32
  }
  func.func @transform_7(%arg0: i32) -> (i32, i32) {
    %c0_i32 = arith.constant 0 : i32
    %c0_i32_0 = arith.constant 0 : i32
    %c0_i32_1 = arith.constant 0 : i32
    return %c0_i32, %c0_i32_0 : i32, i32
  }
  func.func @transform_8(%arg0: i32) -> (i32, i32) {
    %c0_i32 = arith.constant 0 : i32
    %c0_i32_0 = arith.constant 0 : i32
    %c0_i32_1 = arith.constant 0 : i32
    return %c0_i32, %c0_i32_0 : i32, i32
  }
  func.func @transform_9(%arg0: i32) -> (i32, i32) {
    %c0_i32 = arith.constant 0 : i32
    %c0_i32_0 = arith.constant 0 : i32
    %c0_i32_1 = arith.constant 0 : i32
    return %c0_i32, %c0_i32_0 : i32, i32
  }
  func.func @transform_10(%arg0: i32) -> (i32, i32) {
    %c0_i32 = arith.constant 0 : i32
    %c0_i32_0 = arith.constant 0 : i32
    %c0_i32_1 = arith.constant 0 : i32
    return %c0_i32, %c0_i32_0 : i32, i32
  }
  func.func @transform_11(%arg0: i32) -> (i32, i32) {
    %c0_i32 = arith.constant 0 : i32
    %c0_i32_0 = arith.constant 0 : i32
    %c0_i32_1 = arith.constant 0 : i32
    return %c0_i32, %c0_i32_0 : i32, i32
  }
  func.func @transform_12(%arg0: i32) -> (i32, i32) {
    %c0_i32 = arith.constant 0 : i32
    %c0_i32_0 = arith.constant 0 : i32
    %c0_i32_1 = arith.constant 0 : i32
    return %c0_i32, %c0_i32_0 : i32, i32
  }
  func.func @transform_13(%arg0: i32) -> (i32, i32, i32) {
    %c0_i32 = arith.constant 0 : i32
    %c0_i32_0 = arith.constant 0 : i32
    %c0_i32_1 = arith.constant 0 : i32
    %c0_i32_2 = arith.constant 0 : i32
    return %c0_i32, %c0_i32_0, %c0_i32_1 : i32, i32, i32
  }
  func.func @transform_14(%arg0: i32) -> (i32, i32, i32) {
    %c0_i32 = arith.constant 0 : i32
    %c0_i32_0 = arith.constant 0 : i32
    %c0_i32_1 = arith.constant 0 : i32
    %c0_i32_2 = arith.constant 0 : i32
    return %c0_i32, %c0_i32_0, %c0_i32_1 : i32, i32, i32
  }
  func.func @transform_15(%arg0: i32) -> (i32, i32, i32) {
    %c0_i32 = arith.constant 0 : i32
    %c0_i32_0 = arith.constant 0 : i32
    %c0_i32_1 = arith.constant 0 : i32
    %c0_i32_2 = arith.constant 0 : i32
    return %c0_i32, %c0_i32_0, %c0_i32_1 : i32, i32, i32
  }
  func.func @transform_16(%arg0: i32) -> (i32, i32, i32) {
    %c0_i32 = arith.constant 0 : i32
    %c0_i32_0 = arith.constant 0 : i32
    %c0_i32_1 = arith.constant 0 : i32
    %c0_i32_2 = arith.constant 0 : i32
    return %c0_i32, %c0_i32_0, %c0_i32_1 : i32, i32, i32
  }
  func.func @transform_17(%arg0: i32) -> (i32, i32) {
    %c0_i32 = arith.constant 0 : i32
    %c0_i32_0 = arith.constant 0 : i32
    %c0_i32_1 = arith.constant 0 : i32
    return %c0_i32, %c0_i32_0 : i32, i32
  }
  func.func @transform_18(%arg0: i32) -> (i32, i32) {
    %c0_i32 = arith.constant 0 : i32
    %c0_i32_0 = arith.constant 0 : i32
    %c0_i32_1 = arith.constant 0 : i32
    return %c0_i32, %c0_i32_0 : i32, i32
  }
  func.func @transform_19(%arg0: i32) -> (i32, i32) {
    %c0_i32 = arith.constant 0 : i32
    %c0_i32_0 = arith.constant 0 : i32
    %c0_i32_1 = arith.constant 0 : i32
    return %c0_i32, %c0_i32_0 : i32, i32
  }
  func.func @transform_20(%arg0: i32) -> (i32, i32) {
    %c0_i32 = arith.constant 0 : i32
    %c0_i32_0 = arith.constant 0 : i32
    %c0_i32_1 = arith.constant 0 : i32
    return %c0_i32, %c0_i32_0 : i32, i32
  }
  func.func @transform_21(%arg0: i32) -> (i32, i32) {
    %c0_i32 = arith.constant 0 : i32
    %c0_i32_0 = arith.constant 0 : i32
    return %arg0, %c0_i32 : i32, i32
  }
}

</mosaic_0001>

<llo_original>
// kernel: tpu_custom_call.1
$region0: #{tpu_custom_call.1}
  #allocation0 [shape = 'u32[]', space=smem, size = 0x4, offset = 0x4, fixed_abs, tag = 'smem constant byte address 0x4 - core index']
  #allocation1 [shape = 'u32[144,128]{1,0:T(1,128)}', space=vmem, size = 0x12000, scoped, tag = 'internal scratch']
  #allocation2 [shape = 'f32[8,256]{1,0:T(8,128)}', space=vmem, size = 0x2000, scoped, tag = 'scratch operand']
  %s0 = inlined_call_operand.vmem [shape: f32[8,16], index: 0, kind: input, shape index: {}]
  %s1 = inlined_call_operand.vmem [shape: f32[8,32], index: 1, kind: input, shape index: {}]
  %s2 = inlined_call_operand.vmem [shape: f32[8,32], index: 2, kind: input, shape index: {}]
  %s3 = inlined_call_operand.vmem [shape: f32[16,160], index: 3, kind: input, shape index: {}]
  %s4 = inlined_call_operand.vmem [shape: f32[1,160], index: 4, kind: input, shape index: {}]
  %s5 = inlined_call_operand.vmem [shape: f32[32,64], index: 5, kind: input, shape index: {}]
  %s6 = inlined_call_operand.vmem [shape: f32[1,64], index: 6, kind: input, shape index: {}]
  %s7 = inlined_call_operand.vmem [shape: f32[64,64], index: 7, kind: input, shape index: {}]
  %s8 = inlined_call_operand.vmem [shape: f32[1,64], index: 8, kind: input, shape index: {}]
  %s9 = inlined_call_operand.vmem [shape: f32[32,8], index: 9, kind: input, shape index: {}]
  %s10 = inlined_call_operand.vmem [shape: f32[1,8], index: 10, kind: input, shape index: {}]
  %s11 = inlined_call_operand.vmem [shape: f32[8,20], index: 11, kind: input, shape index: {}]
  %s12 = inlined_call_operand.vmem [shape: f32[1,20], index: 12, kind: input, shape index: {}]
  %s13 = inlined_call_operand.vmem [shape: f32[8,256,160], index: 13, kind: input, shape index: {}]
  %s14 = inlined_call_operand.vmem [shape: f32[8,256,160], index: 14, kind: input, shape index: {}]
  %s15 = inlined_call_operand.vmem [shape: f32[8,160,320], index: 15, kind: input, shape index: {}]
  %s16 = inlined_call_operand.vmem [shape: f32[8,1,320], index: 16, kind: input, shape index: {}]
  %s17 = inlined_call_operand.vmem [shape: f32[320,144], index: 17, kind: input, shape index: {}]
  %s18 = inlined_call_operand.vmem [shape: f32[1,144], index: 18, kind: input, shape index: {}]
  %s19 = inlined_call_operand.vmem [shape: f32[144,16], index: 19, kind: input, shape index: {}]
  %s20 = inlined_call_operand.vmem [shape: f32[1,16], index: 20, kind: input, shape index: {}]
  %s21 = inlined_call_operand.hbm [shape: f32[8,16], index: 21, kind: output, shape index: {}]
  %s22 = sld [smem:[#allocation0]]
  $region94: #{tpu_custom_call.1} parent=0
    _
  %s24 = ssub.s32 1, %s22
  %s25 = scalar_select 0, %s24, %s22
  $region1: #{tpu_custom_call.1} parent=0
    #allocation3 [shape = 'u8[4096]{0}', space=vmem, size = 0x1000, scoped, tag = 'output window, operand 0, single buffered']
    #allocation4 [shape = 's32[1]{0}', space=sflag, size = 0x4, scoped, tag = 'scoped memory for tpu_custom_call.1']
    %26 = vsyncpa [#allocation4], 0
    // Predicated region
    $region2: #{tpu_custom_call.1} parent=1 // pred_check
      _
    $region3: #{tpu_custom_call.1} parent=1 // pred_check_branch
      %28 = sbr.rel (0) target = $region5
    $region4: #{tpu_custom_call.1} parent=1 // pred_region
      _
    $region5: #{tpu_custom_call.1} parent=1 // pred_fallthru
      _
    // Predicated region
    $region6: #{tpu_custom_call.1} parent=1 // pred_check
      _
    $region7: #{tpu_custom_call.1} parent=1 // pred_check_branch
      %30 = sbr.rel (0) target = $region9
    $region8: #{tpu_custom_call.1} parent=1 // pred_region
      _
    $region9: #{tpu_custom_call.1} parent=1 // pred_fallthru
      _
    // Predicated region
    $region10: #{tpu_custom_call.1} parent=1 // pred_check
      _
    $region11: #{tpu_custom_call.1} parent=1 // pred_check_branch
      %32 = sbr.rel (0) target = $region13
    $region12: #{tpu_custom_call.1} parent=1 // pred_region
      _
    $region13: #{tpu_custom_call.1} parent=1 // pred_fallthru
      _
    // Predicated region
    $region14: #{tpu_custom_call.1} parent=1 // pred_check
      _
    $region15: #{tpu_custom_call.1} parent=1 // pred_check_branch
      %34 = sbr.rel (0) target = $region17
    $region16: #{tpu_custom_call.1} parent=1 // pred_region
      _
    $region17: #{tpu_custom_call.1} parent=1 // pred_fallthru
      _
    // Predicated region
    $region18: #{tpu_custom_call.1} parent=1 // pred_check
      _
    $region19: #{tpu_custom_call.1} parent=1 // pred_check_branch
      %36 = sbr.rel (0) target = $region21
    $region20: #{tpu_custom_call.1} parent=1 // pred_region
      _
    $region21: #{tpu_custom_call.1} parent=1 // pred_fallthru
      _
    // Predicated region
    $region22: #{tpu_custom_call.1} parent=1 // pred_check
      _
    $region23: #{tpu_custom_call.1} parent=1 // pred_check_branch
      %38 = sbr.rel (0) target = $region25
    $region24: #{tpu_custom_call.1} parent=1 // pred_region
      _
    $region25: #{tpu_custom_call.1} parent=1 // pred_fallthru
      _
    // Predicated region
    $region26: #{tpu_custom_call.1} parent=1 // pred_check
      _
    $region27: #{tpu_custom_call.1} parent=1 // pred_check_branch
      %40 = sbr.rel (0) target = $region29
    $region28: #{tpu_custom_call.1} parent=1 // pred_region
      _
    $region29: #{tpu_custom_call.1} parent=1 // pred_fallthru
      _
    // Predicated region
    $region30: #{tpu_custom_call.1} parent=1 // pred_check
      _
    $region31: #{tpu_custom_call.1} parent=1 // pred_check_branch
      %42 = sbr.rel (0) target = $region33
    $region32: #{tpu_custom_call.1} parent=1 // pred_region
      _
    $region33: #{tpu_custom_call.1} parent=1 // pred_fallthru
      _
    // Predicated region
    $region34: #{tpu_custom_call.1} parent=1 // pred_check
      _
    $region35: #{tpu_custom_call.1} parent=1 // pred_check_branch
      %44 = sbr.rel (0) target = $region37
    $region36: #{tpu_custom_call.1} parent=1 // pred_region
      _
    $region37: #{tpu_custom_call.1} parent=1 // pred_fallthru
      _
    // Predicated region
    $region38: #{tpu_custom_call.1} parent=1 // pred_check
      _
    $region39: #{tpu_custom_call.1} parent=1 // pred_check_branch
      %46 = sbr.rel (0) target = $region41
    $region40: #{tpu_custom_call.1} parent=1 // pred_region
      _
    $region41: #{tpu_custom_call.1} parent=1 // pred_fallthru
      _
    // Predicated region
    $region42: #{tpu_custom_call.1} parent=1 // pred_check
      _
    $region43: #{tpu_custom_call.1} parent=1 // pred_check_branch
      %48 = sbr.rel (0) target = $region45
    $region44: #{tpu_custom_call.1} parent=1 // pred_region
      _
    $region45: #{tpu_custom_call.1} parent=1 // pred_fallthru
      _
    // Predicated region
    $region46: #{tpu_custom_call.1} parent=1 // pred_check
      _
    $region47: #{tpu_custom_call.1} parent=1 // pred_check_branch
      %50 = sbr.rel (0) target = $region49
    $region48: #{tpu_custom_call.1} parent=1 // pred_region
      _
    $region49: #{tpu_custom_call.1} parent=1 // pred_fallthru
      _
    // Predicated region
    $region50: #{tpu_custom_call.1} parent=1 // pred_check
      _
    $region51: #{tpu_custom_call.1} parent=1 // pred_check_branch
      %52 = sbr.rel (0) target = $region53
    $region52: #{tpu_custom_call.1} parent=1 // pred_region
      _
    $region53: #{tpu_custom_call.1} parent=1 // pred_fallthru
      _
    // Predicated region
    $region54: #{tpu_custom_call.1} parent=1 // pred_check
      _
    $region55: #{tpu_custom_call.1} parent=1 // pred_check_branch
      %54 = sbr.rel (0) target = $region57
    $region56: #{tpu_custom_call.1} parent=1 // pred_region
      _
    $region57: #{tpu_custom_call.1} parent=1 // pred_fallthru
      _
    // Predicated region
    $region58: #{tpu_custom_call.1} parent=1 // pred_check
      _
    $region59: #{tpu_custom_call.1} parent=1 // pred_check_branch
      %56 = sbr.rel (0) target = $region61
    $region60: #{tpu_custom_call.1} parent=1 // pred_region
      _
    $region61: #{tpu_custom_call.1} parent=1 // pred_fallthru
      _
    // Predicated region
    $region62: #{tpu_custom_call.1} parent=1 // pred_check
      _
    $region63: #{tpu_custom_call.1} parent=1 // pred_check_branch
      %58 = sbr.rel (0) target = $region65
    $region64: #{tpu_custom_call.1} parent=1 // pred_region
      _
    $region65: #{tpu_custom_call.1} parent=1 // pred_fallthru
      _
    // Predicated region
    $region66: #{tpu_custom_call.1} parent=1 // pred_check
      _
    $region67: #{tpu_custom_call.1} parent=1 // pred_check_branch
      %60 = sbr.rel (0) target = $region69
    $region68: #{tpu_custom_call.1} parent=1 // pred_region
      _
    $region69: #{tpu_custom_call.1} parent=1 // pred_fallthru
      _
    // Predicated region
    $region70: #{tpu_custom_call.1} parent=1 // pred_check
      _
    $region71: #{tpu_custom_call.1} parent=1 // pred_check_branch
      %62 = sbr.rel (0) target = $region73
    $region72: #{tpu_custom_call.1} parent=1 // pred_region
      _
    $region73: #{tpu_custom_call.1} parent=1 // pred_fallthru
      _
    // Predicated region
    $region74: #{tpu_custom_call.1} parent=1 // pred_check
      _
    $region75: #{tpu_custom_call.1} parent=1 // pred_check_branch
      %64 = sbr.rel (0) target = $region77
    $region76: #{tpu_custom_call.1} parent=1 // pred_region
      _
    $region77: #{tpu_custom_call.1} parent=1 // pred_fallthru
      _
    // Predicated region
    $region78: #{tpu_custom_call.1} parent=1 // pred_check
      _
    $region79: #{tpu_custom_call.1} parent=1 // pred_check_branch
      %66 = sbr.rel (0) target = $region81
    $region80: #{tpu_custom_call.1} parent=1 // pred_region
      _
    $region81: #{tpu_custom_call.1} parent=1 // pred_fallthru
      _
    // Predicated region
    $region82: #{tpu_custom_call.1} parent=1 // pred_check
      _
    $region83: #{tpu_custom_call.1} parent=1 // pred_check_branch
      %68 = sbr.rel (0) target = $region85
    $region84: #{tpu_custom_call.1} parent=1 // pred_region
      _
    $region85: #{tpu_custom_call.1} parent=1 // pred_fallthru
      _
    %v69 = vld [vmem:[%s0] sm:$0xff]
    %v70 = vld [vmem:[%s3] sm:$0xff]
    %v71 = vld [vmem:[%s3 + $0x8] sm:$0xff]
    %v72 = vld [vmem:[%s3 + $0x10] sm:$0xff]
    %v73 = vld [vmem:[%s3 + $0x18] sm:$0xff]
    %v74 = vld [vmem:[%s4] sm:$0x3]
    %v76 = vlaneseq
    %v77 = vshrl.u32 %v76, 7
    %v78 = vsub.s32 0, %v77
    %v79 = vrot.slane %v74, %v78
    %v80 = vlaneseq
    %v81 = vshrl.u32 %v80, 7
    %v82 = vsub.s32 1, %v81
    %v83 = vrot.slane %v74, %v82
    %vm86 = vcmask 130048
    %v88 = vsel %vm86, %v69, 0
    %90 = vmatprep.subr.mxu0 0.0
    %91 = vmatpush1.msra.mxu0 0.0
    %92 = vmatprep.subr.mxu0 0.0
    %93 = vmatpush1.msra.mxu0 0.0
    %94 = vmatprep.subr.mxu0 0.0
    %95 = vmatpush1.msra.mxu0 0.0
    %96 = vmatprep.subr.mxu0 0.0
    %97 = vmatpush1.msra.mxu0 0.0
    %98 = vmatprep.subr.mxu0 0.0
    %99 = vmatpush1.msra.mxu0 0.0
    %100 = vmatprep.subr.mxu0 0.0
    %101 = vmatpush1.msra.mxu0 0.0
    %102 = vmatprep.subr.mxu0 0.0
    %103 = vmatpush1.msra.mxu0 0.0
    %104 = vmatprep.subr.mxu0 0.0
    %105 = vmatpush1.msra.mxu0 0.0
    %106 = vmatprep.subr.mxu0 0.0
    %107 = vmatpush1.msra.mxu0 0.0
    %108 = vmatprep.subr.mxu0 0.0
    %109 = vmatpush1.msra.mxu0 0.0
    %110 = vmatprep.subr.mxu0 0.0
    %111 = vmatpush1.msra.mxu0 0.0
    %112 = vmatprep.subr.mxu0 0.0
    %113 = vmatpush1.msra.mxu0 0.0
    %114 = vmatprep.subr.mxu0 0.0
    %115 = vmatpush1.msra.mxu0 0.0
    %116 = vmatprep.subr.mxu0 0.0
    %117 = vmatpush1.msra.mxu0 0.0
    %118 = vmatprep.subr.mxu0 %v73
    %119 = vmatpush1.msra.mxu0 %v72
    %120 = vmatprep.subr.mxu0 %v71
    %121 = vmatpush1.msra.mxu0 %v70
    %122 = vmatprep.subr.mxu0 0.0
    %123 = vmatpush2.msra.mxu0 0.0
    %124 = vmatprep.subr.mxu0 0.0
    %125 = vmatpush2.msra.mxu0 0.0
    %126 = vmatprep.subr.mxu0 0.0
    %127 = vmatpush2.msra.mxu0 0.0
    %128 = vmatprep.subr.mxu0 0.0
    %129 = vmatpush2.msra.mxu0 0.0
    %130 = vmatprep.subr.mxu0 0.0
    %131 = vmatpush2.msra.mxu0 0.0
    %132 = vmatprep.subr.mxu0 0.0
    %133 = vmatpush2.msra.mxu0 0.0
    %134 = vmatprep.subr.mxu0 0.0
    %135 = vmatpush2.msra.mxu0 0.0
    %136 = vmatprep.subr.mxu0 0.0
    %137 = vmatpush2.msra.mxu0 0.0
    %138 = vmatprep.subr.mxu0 0.0
    %139 = vmatpush2.msra.mxu0 0.0
    %140 = vmatprep.subr.mxu0 0.0
    %141 = vmatpush2.msra.mxu0 0.0
    %142 = vmatprep.subr.mxu0 0.0
    %143 = vmatpush2.msra.mxu0 0.0
    %144 = vmatprep.subr.mxu0 0.0
    %145 = vmatpush2.msra.mxu0 0.0
    %146 = vmatprep.subr.mxu0 0.0
    %147 = vmatpush2.msra.mxu0 0.0
    %148 = vmatprep.subr.mxu0 0.0
    %149 = vmatpush2.msra.mxu0 0.0
    %150 = vmatprep.subr.mxu0 0.0
    %151 = vmatpush2.msra.mxu0 0.0
    %152 = vmatprep.subr.mxu0 0.0
    %153 = vmatpush2.msra.mxu0 0.0
    %154 = vmatprep.mubr.f32.mxu0 0.0
    %155 = vmatmul.mubr.f32.gmra.mxu0 %v88
    %v156 = vpop.f32.mrf.mxu0
    %v157 = vadd.f32 %v79, %v156
    %v158 = vpop.f32.mrf.mxu0
    %v159 = vadd.f32 %v83, %v158
    %160 = vdwg.mxu0
    %v161 = vmul.f32 %v157, 0.4
    %v162 = vmul.f32 %v159, 0.4
    %v163 = vmax.f32 %v157, %v161
    %v164 = vmax.f32 %v159, %v162
    %v165 = vld [vmem:[%s1] sm:$0xff]
    %v166 = vld [vmem:[%s5] sm:$0xff]
    %v167 = vld [vmem:[%s5 + $0x8] sm:$0xff]
    %v168 = vld [vmem:[%s5 + $0x10] sm:$0xff]
    %v169 = vld [vmem:[%s5 + $0x18] sm:$0xff]
    %v170 = vld [vmem:[%s6] sm:$0x1]
    %v172 = vlaneseq
    %v173 = vshrl.u32 %v172, 7
    %v174 = vsub.s32 0, %v173
    %v175 = vrot.slane %v170, %v174
    %vm177 = vcmask 261120
    %v179 = vsel %vm177, %v165, 0
    %181 = vmatprep.subr.mxu0 0.0
    %182 = vmatpush1.msra.mxu0 0.0
    %183 = vmatprep.subr.mxu0 0.0
    %184 = vmatpush1.msra.mxu0 0.0
    %185 = vmatprep.subr.mxu0 0.0
    %186 = vmatpush1.msra.mxu0 0.0
    %187 = vmatprep.subr.mxu0 0.0
    %188 = vmatpush1.msra.mxu0 0.0
    %189 = vmatprep.subr.mxu0 0.0
    %190 = vmatpush1.msra.mxu0 0.0
    %191 = vmatprep.subr.mxu0 0.0
    %192 = vmatpush1.msra.mxu0 0.0
    %193 = vmatprep.subr.mxu0 0.0
    %194 = vmatpush1.msra.mxu0 0.0
    %195 = vmatprep.subr.mxu0 0.0
    %196 = vmatpush1.msra.mxu0 0.0
    %197 = vmatprep.subr.mxu0 0.0
    %198 = vmatpush1.msra.mxu0 0.0
    %199 = vmatprep.subr.mxu0 0.0
    %200 = vmatpush1.msra.mxu0 0.0
    %201 = vmatprep.subr.mxu0 0.0
    %202 = vmatpush1.msra.mxu0 0.0
    %203 = vmatprep.subr.mxu0 0.0
    %204 = vmatpush1.msra.mxu0 0.0
    %205 = vmatprep.subr.mxu0 0.0
    %206 = vmatpush1.msra.mxu0 %v169
    %207 = vmatprep.subr.mxu0 0.0
    %208 = vmatpush1.msra.mxu0 %v168
    %209 = vmatprep.subr.mxu0 0.0
    %210 = vmatpush1.msra.mxu0 %v167
    %211 = vmatprep.subr.mxu0 0.0
    %212 = vmatpush1.msra.mxu0 %v166
    %213 = vmatprep.subr.mxu0 0.0
    %214 = vmatpush2.msra.mxu0 0.0
    %215 = vmatprep.subr.mxu0 0.0
    %216 = vmatpush2.msra.mxu0 0.0
    %217 = vmatprep.subr.mxu0 0.0
    %218 = vmatpush2.msra.mxu0 0.0
    %219 = vmatprep.subr.mxu0 0.0
    %220 = vmatpush2.msra.mxu0 0.0
    %221 = vmatprep.subr.mxu0 0.0
    %222 = vmatpush2.msra.mxu0 0.0
    %223 = vmatprep.subr.mxu0 0.0
    %224 = vmatpush2.msra.mxu0 0.0
    %225 = vmatprep.subr.mxu0 0.0
    %226 = vmatpush2.msra.mxu0 0.0
    %227 = vmatprep.subr.mxu0 0.0
    %228 = vmatpush2.msra.mxu0 0.0
    %229 = vmatprep.subr.mxu0 0.0
    %230 = vmatpush2.msra.mxu0 0.0
    %231 = vmatprep.subr.mxu0 0.0
    %232 = vmatpush2.msra.mxu0 0.0
    %233 = vmatprep.subr.mxu0 0.0
    %234 = vmatpush2.msra.mxu0 0.0
    %235 = vmatprep.subr.mxu0 0.0
    %236 = vmatpush2.msra.mxu0 0.0
    %237 = vmatprep.subr.mxu0 0.0
    %238 = vmatpush2.msra.mxu0 0.0
    %239 = vmatprep.subr.mxu0 0.0
    %240 = vmatpush2.msra.mxu0 0.0
    %241 = vmatprep.subr.mxu0 0.0
    %242 = vmatpush2.msra.mxu0 0.0
    %243 = vmatprep.subr.mxu0 0.0
    %244 = vmatpush2.msra.mxu0 0.0
    %245 = vmatprep.mubr.f32.mxu0 0.0
    %246 = vmatmul.mubr.f32.gmra.mxu0 %v179
    %v247 = vpop.f32.mrf.mxu0
    %v248 = vadd.f32 %v175, %v247
    %v249 = vpop.f32.mrf.mxu0
    %250 = vdwg.mxu0
    %v251 = vxor.u32 %v248, 2147483648
    %v252 = vmul.f32 %v251, 1.442695
    %v253 = vpow.pop %v252
    %v254 = vadd.f32 %v253, 1.0
    %v255 = vrcp.pop %v254
    %v256 = vmul.f32 1.0, %v255
    %v257 = vmul.f32 %v248, %v256
    %v258 = vld [vmem:[%s7] sm:$0xff]
    %v259 = vld [vmem:[%s7 + $0x8] sm:$0xff]
    %v260 = vld [vmem:[%s7 + $0x10] sm:$0xff]
    %v261 = vld [vmem:[%s7 + $0x18] sm:$0xff]
    %v262 = vld [vmem:[%s7 + $0x20] sm:$0xff]
    %v263 = vld [vmem:[%s7 + $0x28] sm:$0xff]
    %v264 = vld [vmem:[%s7 + $0x30] sm:$0xff]
    %v265 = vld [vmem:[%s7 + $0x38] sm:$0xff]
    %v266 = vld [vmem:[%s8] sm:$0x1]
    %v268 = vlaneseq
    %v269 = vshrl.u32 %v268, 7
    %v270 = vsub.s32 0, %v269
    %v271 = vrot.slane %v266, %v270
    %vm273 = vcmask 523264
    %v275 = vsel %vm273, %v257, 0
    %277 = vmatprep.subr.mxu0 0.0
    %278 = vmatpush1.msra.mxu0 0.0
    %279 = vmatprep.subr.mxu0 0.0
    %280 = vmatpush1.msra.mxu0 0.0
    %281 = vmatprep.subr.mxu0 0.0
    %282 = vmatpush1.msra.mxu0 0.0
    %283 = vmatprep.subr.mxu0 0.0
    %284 = vmatpush1.msra.mxu0 0.0
    %285 = vmatprep.subr.mxu0 0.0
    %286 = vmatpush1.msra.mxu0 0.0
    %287 = vmatprep.subr.mxu0 0.0
    %288 = vmatpush1.msra.mxu0 0.0
    %289 = vmatprep.subr.mxu0 0.0
    %290 = vmatpush1.msra.mxu0 0.0
    %291 = vmatprep.subr.mxu0 0.0
    %292 = vmatpush1.msra.mxu0 0.0
    %293 = vmatprep.subr.mxu0 0.0
    %294 = vmatpush1.msra.mxu0 %v265
    %295 = vmatprep.subr.mxu0 0.0
    %296 = vmatpush1.msra.mxu0 %v264
    %297 = vmatprep.subr.mxu0 0.0
    %298 = vmatpush1.msra.mxu0 %v263
    %299 = vmatprep.subr.mxu0 0.0
    %300 = vmatpush1.msra.mxu0 %v262
    %301 = vmatprep.subr.mxu0 0.0
    %302 = vmatpush1.msra.mxu0 %v261
    %303 = vmatprep.subr.mxu0 0.0
    %304 = vmatpush1.msra.mxu0 %v260
    %305 = vmatprep.subr.mxu0 0.0
    %306 = vmatpush1.msra.mxu0 %v259
    %307 = vmatprep.subr.mxu0 0.0
    %308 = vmatpush1.msra.mxu0 %v258
    %309 = vmatprep.subr.mxu0 0.0
    %310 = vmatpush2.msra.mxu0 0.0
    %311 = vmatprep.subr.mxu0 0.0
    %312 = vmatpush2.msra.mxu0 0.0
    %313 = vmatprep.subr.mxu0 0.0
    %314 = vmatpush2.msra.mxu0 0.0
    %315 = vmatprep.subr.mxu0 0.0
    %316 = vmatpush2.msra.mxu0 0.0
    %317 = vmatprep.subr.mxu0 0.0
    %318 = vmatpush2.msra.mxu0 0.0
    %319 = vmatprep.subr.mxu0 0.0
    %320 = vmatpush2.msra.mxu0 0.0
    %321 = vmatprep.subr.mxu0 0.0
    %322 = vmatpush2.msra.mxu0 0.0
    %323 = vmatprep.subr.mxu0 0.0
    %324 = vmatpush2.msra.mxu0 0.0
    %325 = vmatprep.subr.mxu0 0.0
    %326 = vmatpush2.msra.mxu0 0.0
    %327 = vmatprep.subr.mxu0 0.0
    %328 = vmatpush2.msra.mxu0 0.0
    %329 = vmatprep.subr.mxu0 0.0
    %330 = vmatpush2.msra.mxu0 0.0
    %331 = vmatprep.subr.mxu0 0.0
    %332 = vmatpush2.msra.mxu0 0.0
    %333 = vmatprep.subr.mxu0 0.0
    %334 = vmatpush2.msra.mxu0 0.0
    %335 = vmatprep.subr.mxu0 0.0
    %336 = vmatpush2.msra.mxu0 0.0
    %337 = vmatprep.subr.mxu0 0.0
    %338 = vmatpush2.msra.mxu0 0.0
    %339 = vmatprep.subr.mxu0 0.0
    %340 = vmatpush2.msra.mxu0 0.0
    %341 = vmatprep.mubr.f32.mxu0 0.0
    %342 = vmatmul.mubr.f32.gmra.mxu0 %v275
    %v343 = vpop.f32.mrf.mxu0
    %v344 = vadd.f32 %v271, %v343
    %v345 = vpop.f32.mrf.mxu0
    %346 = vdwg.mxu0
    %v347 = vxor.u32 %v344, 2147483648
    %v348 = vmul.f32 %v347, 1.442695
    %v349 = vpow.pop %v348
    %v350 = vadd.f32 %v349, 1.0
    %v351 = vrcp.pop %v350
    %v352 = vmul.f32 1.0, %v351
    %v353 = vmul.f32 %v344, %v352
    %v354 = vld [vmem:[%s2] sm:$0xff]
    %v355 = vld [vmem:[%s9] sm:$0xff]
    %v356 = vld [vmem:[%s9 + $0x8] sm:$0xff]
    %v357 = vld [vmem:[%s9 + $0x10] sm:$0xff]
    %v358 = vld [vmem:[%s9 + $0x18] sm:$0xff]
    %v359 = vld [vmem:[%s10] sm:$0x1]
    %v361 = vlaneseq
    %v362 = vshrl.u32 %v361, 7
    %v363 = vsub.s32 0, %v362
    %v364 = vrot.slane %v359, %v363
    %v367 = vsel %vm177, %v354, 0
    %369 = vmatprep.subr.mxu0 0.0
    %370 = vmatpush1.msra.mxu0 0.0
    %371 = vmatprep.subr.mxu0 0.0
    %372 = vmatpush1.msra.mxu0 0.0
    %373 = vmatprep.subr.mxu0 0.0
    %374 = vmatpush1.msra.mxu0 0.0
    %375 = vmatprep.subr.mxu0 0.0
    %376 = vmatpush1.msra.mxu0 0.0
    %377 = vmatprep.subr.mxu0 0.0
    %378 = vmatpush1.msra.mxu0 0.0
    %379 = vmatprep.subr.mxu0 0.0
    %380 = vmatpush1.msra.mxu0 0.0
    %381 = vmatprep.subr.mxu0 0.0
    %382 = vmatpush1.msra.mxu0 0.0
    %383 = vmatprep.subr.mxu0 0.0
    %384 = vmatpush1.msra.mxu0 0.0
    %385 = vmatprep.subr.mxu0 0.0
    %386 = vmatpush1.msra.mxu0 0.0
    %387 = vmatprep.subr.mxu0 0.0
    %388 = vmatpush1.msra.mxu0 0.0
    %389 = vmatprep.subr.mxu0 0.0
    %390 = vmatpush1.msra.mxu0 0.0
    %391 = vmatprep.subr.mxu0 0.0
    %392 = vmatpush1.msra.mxu0 0.0
    %393 = vmatprep.subr.mxu0 0.0
    %394 = vmatpush1.msra.mxu0 %v358
    %395 = vmatprep.subr.mxu0 0.0
    %396 = vmatpush1.msra.mxu0 %v357
    %397 = vmatprep.subr.mxu0 0.0
    %398 = vmatpush1.msra.mxu0 %v356
    %399 = vmatprep.subr.mxu0 0.0
    %400 = vmatpush1.msra.mxu0 %v355
    %401 = vmatprep.subr.mxu0 0.0
    %402 = vmatpush2.msra.mxu0 0.0
    %403 = vmatprep.subr.mxu0 0.0
    %404 = vmatpush2.msra.mxu0 0.0
    %405 = vmatprep.subr.mxu0 0.0
    %406 = vmatpush2.msra.mxu0 0.0
    %407 = vmatprep.subr.mxu0 0.0
    %408 = vmatpush2.msra.mxu0 0.0
    %409 = vmatprep.subr.mxu0 0.0
    %410 = vmatpush2.msra.mxu0 0.0
    %411 = vmatprep.subr.mxu0 0.0
    %412 = vmatpush2.msra.mxu0 0.0
    %413 = vmatprep.subr.mxu0 0.0
    %414 = vmatpush2.msra.mxu0 0.0
    %415 = vmatprep.subr.mxu0 0.0
    %416 = vmatpush2.msra.mxu0 0.0
    %417 = vmatprep.subr.mxu0 0.0
    %418 = vmatpush2.msra.mxu0 0.0
    %419 = vmatprep.subr.mxu0 0.0
    %420 = vmatpush2.msra.mxu0 0.0
    %421 = vmatprep.subr.mxu0 0.0
    %422 = vmatpush2.msra.mxu0 0.0
    %423 = vmatprep.subr.mxu0 0.0
    %424 = vmatpush2.msra.mxu0 0.0
    %425 = vmatprep.subr.mxu0 0.0
    %426 = vmatpush2.msra.mxu0 0.0
    %427 = vmatprep.subr.mxu0 0.0
    %428 = vmatpush2.msra.mxu0 0.0
    %429 = vmatprep.subr.mxu0 0.0
    %430 = vmatpush2.msra.mxu0 0.0
    %431 = vmatprep.subr.mxu0 0.0
    %432 = vmatpush2.msra.mxu0 0.0
    %433 = vmatprep.mubr.f32.mxu0 0.0
    %434 = vmatmul.mubr.f32.gmra.mxu0 %v367
    %v435 = vpop.f32.mrf.mxu0
    %v436 = vadd.f32 %v364, %v435
    %v437 = vpop.f32.mrf.mxu0
    %438 = vdwg.mxu0
    %v439 = vmul.f32 %v436, 0.4
    %v440 = vmax.f32 %v436, %v439
    %v441 = vld [vmem:[%s11] sm:$0xff]
    %v442 = vld [vmem:[%s12] sm:$0x1]
    %v444 = vlaneseq
    %v445 = vshrl.u32 %v444, 7
    %v446 = vsub.s32 0, %v445
    %v447 = vrot.slane %v442, %v446
    %vm449 = vcmask 64512
    %v451 = vsel %vm449, %v440, 0
    %453 = vmatprep.subr.mxu0 0.0
    %454 = vmatpush1.msra.mxu0 0.0
    %455 = vmatprep.subr.mxu0 0.0
    %456 = vmatpush1.msra.mxu0 0.0
    %457 = vmatprep.subr.mxu0 0.0
    %458 = vmatpush1.msra.mxu0 0.0
    %459 = vmatprep.subr.mxu0 0.0
    %460 = vmatpush1.msra.mxu0 0.0
    %461 = vmatprep.subr.mxu0 0.0
    %462 = vmatpush1.msra.mxu0 0.0
    %463 = vmatprep.subr.mxu0 0.0
    %464 = vmatpush1.msra.mxu0 0.0
    %465 = vmatprep.subr.mxu0 0.0
    %466 = vmatpush1.msra.mxu0 0.0
    %467 = vmatprep.subr.mxu0 0.0
    %468 = vmatpush1.msra.mxu0 0.0
    %469 = vmatprep.subr.mxu0 0.0
    %470 = vmatpush1.msra.mxu0 0.0
    %471 = vmatprep.subr.mxu0 0.0
    %472 = vmatpush1.msra.mxu0 0.0
    %473 = vmatprep.subr.mxu0 0.0
    %474 = vmatpush1.msra.mxu0 0.0
    %475 = vmatprep.subr.mxu0 0.0
    %476 = vmatpush1.msra.mxu0 0.0
    %477 = vmatprep.subr.mxu0 0.0
    %478 = vmatpush1.msra.mxu0 0.0
    %479 = vmatprep.subr.mxu0 0.0
    %480 = vmatpush1.msra.mxu0 0.0
    %481 = vmatprep.subr.mxu0 0.0
    %482 = vmatpush1.msra.mxu0 0.0
    %483 = vmatprep.subr.mxu0 0.0
    %484 = vmatpush1.msra.mxu0 %v441
    %485 = vmatprep.subr.mxu0 0.0
    %486 = vmatpush2.msra.mxu0 0.0
    %487 = vmatprep.subr.mxu0 0.0
    %488 = vmatpush2.msra.mxu0 0.0
    %489 = vmatprep.subr.mxu0 0.0
    %490 = vmatpush2.msra.mxu0 0.0
    %491 = vmatprep.subr.mxu0 0.0
    %492 = vmatpush2.msra.mxu0 0.0
    %493 = vmatprep.subr.mxu0 0.0
    %494 = vmatpush2.msra.mxu0 0.0
    %495 = vmatprep.subr.mxu0 0.0
    %496 = vmatpush2.msra.mxu0 0.0
    %497 = vmatprep.subr.mxu0 0.0
    %498 = vmatpush2.msra.mxu0 0.0
    %499 = vmatprep.subr.mxu0 0.0
    %500 = vmatpush2.msra.mxu0 0.0
    %501 = vmatprep.subr.mxu0 0.0
    %502 = vmatpush2.msra.mxu0 0.0
    %503 = vmatprep.subr.mxu0 0.0
    %504 = vmatpush2.msra.mxu0 0.0
    %505 = vmatprep.subr.mxu0 0.0
    %506 = vmatpush2.msra.mxu0 0.0
    %507 = vmatprep.subr.mxu0 0.0
    %508 = vmatpush2.msra.mxu0 0.0
    %509 = vmatprep.subr.mxu0 0.0
    %510 = vmatpush2.msra.mxu0 0.0
    %511 = vmatprep.subr.mxu0 0.0
    %512 = vmatpush2.msra.mxu0 0.0
    %513 = vmatprep.subr.mxu0 0.0
    %514 = vmatpush2.msra.mxu0 0.0
    %515 = vmatprep.subr.mxu0 0.0
    %516 = vmatpush2.msra.mxu0 0.0
    %517 = vmatprep.mubr.f32.mxu0 0.0
    %518 = vmatmul.mubr.f32.gmra.mxu0 %v451
    %v519 = vpop.f32.mrf.mxu0
    %v520 = vadd.f32 %v447, %v519
    %v521 = vpop.f32.mrf.mxu0
    %522 = vdwg.mxu0
    %v523 = vmul.f32 %v520, 0.4
    %v524 = vmax.f32 %v520, %v523
    %526 = vrot.lane.b32.xlu0 %v353, 32
    %v527 = vpop.permute.xlu0 %526
    %530 = vrot.lane.b32.xlu0 %v524, 96
    %v531 = vpop.permute.xlu0 %530
    %v533 = vsel %vm177, %v164, %v527
    %vm534 = vcmask 785408
    %v535 = vsel %vm534, %v533, %v531
    %vm536 = vcmask 949248
    %v537 = vsel %vm536, %v535, 1.0
    %vm538 = vcmask 957440
    %v539 = vsel %vm538, %v537, 0.0
    %540 = vst [vmem:[#allocation2] sm:$0xff] %v163
    %541 = vst [vmem:[#allocation2 + $0x8] sm:$0xff] %v539
    %v542 = vsel %vm177, 0.70710677, 1.0
    %v543 = vsel %vm177, %v164, 0.0
    %v544 = vld [vmem:[#allocation2] sm:$0xff]
    %v545 = vld [vmem:[#allocation2 + $0x8] sm:$0xff]
    %v546 = vld [vmem:[%s13] sm:$0xff]
    %v547 = vld [vmem:[%s13 + $0x8] sm:$0xff]
    %v548 = vld [vmem:[%s13 + $0x10] sm:$0xff]
    %v549 = vld [vmem:[%s13 + $0x18] sm:$0xff]
    %v550 = vld [vmem:[%s13 + $0x20] sm:$0xff]
    %v551 = vld [vmem:[%s13 + $0x28] sm:$0xff]
    %v552 = vld [vmem:[%s13 + $0x30] sm:$0xff]
    %v553 = vld [vmem:[%s13 + $0x38] sm:$0xff]
    %v554 = vld [vmem:[%s13 + $0x40] sm:$0xff]
    %v555 = vld [vmem:[%s13 + $0x48] sm:$0xff]
    %v556 = vld [vmem:[%s13 + $0x50] sm:$0xff]
    %v557 = vld [vmem:[%s13 + $0x58] sm:$0xff]
    %v558 = vld [vmem:[%s13 + $0x60] sm:$0xff]
    %v559 = vld [vmem:[%s13 + $0x68] sm:$0xff]
    %v560 = vld [vmem:[%s13 + $0x70] sm:$0xff]
    %v561 = vld [vmem:[%s13 + $0x78] sm:$0xff]
    %v562 = vld [vmem:[%s13 + $0x80] sm:$0xff]
    %v563 = vld [vmem:[%s13 + $0x88] sm:$0xff]
    %v564 = vld [vmem:[%s13 + $0x90] sm:$0xff]
    %v565 = vld [vmem:[%s13 + $0x98] sm:$0xff]
    %v566 = vld [vmem:[%s13 + $0xa0] sm:$0xff]
    %v567 = vld [vmem:[%s13 + $0xa8] sm:$0xff]
    %v568 = vld [vmem:[%s13 + $0xb0] sm:$0xff]
    %v569 = vld [vmem:[%s13 + $0xb8] sm:$0xff]
    %v570 = vld [vmem:[%s13 + $0xc0] sm:$0xff]
    %v571 = vld [vmem:[%s13 + $0xc8] sm:$0xff]
    %v572 = vld [vmem:[%s13 + $0xd0] sm:$0xff]
    %v573 = vld [vmem:[%s13 + $0xd8] sm:$0xff]
    %v574 = vld [vmem:[%s13 + $0xe0] sm:$0xff]
    %v575 = vld [vmem:[%s13 + $0xe8] sm:$0xff]
    %v576 = vld [vmem:[%s13 + $0xf0] sm:$0xff]
    %v577 = vld [vmem:[%s13 + $0xf8] sm:$0xff]
    %v578 = vld [vmem:[%s13 + $0x100] sm:$0xff]
    %v579 = vld [vmem:[%s13 + $0x108] sm:$0xff]
    %v580 = vld [vmem:[%s13 + $0x110] sm:$0xff]
    %v581 = vld [vmem:[%s13 + $0x118] sm:$0xff]
    %v582 = vld [vmem:[%s13 + $0x120] sm:$0xff]
    %v583 = vld [vmem:[%s13 + $0x128] sm:$0xff]
    %v584 = vld [vmem:[%s13 + $0x130] sm:$0xff]
    %v585 = vld [vmem:[%s13 + $0x138] sm:$0xff]
    %v586 = vld [vmem:[%s13 + $0x140] sm:$0xff]
    %v587 = vld [vmem:[%s13 + $0x148] sm:$0xff]
    %v588 = vld [vmem:[%s13 + $0x150] sm:$0xff]
    %v589 = vld [vmem:[%s13 + $0x158] sm:$0xff]
    %v590 = vld [vmem:[%s13 + $0x160] sm:$0xff]
    %v591 = vld [vmem:[%s13 + $0x168] sm:$0xff]
    %v592 = vld [vmem:[%s13 + $0x170] sm:$0xff]
    %v593 = vld [vmem:[%s13 + $0x178] sm:$0xff]
    %v594 = vld [vmem:[%s13 + $0x180] sm:$0xff]
    %v595 = vld [vmem:[%s13 + $0x188] sm:$0xff]
    %v596 = vld [vmem:[%s13 + $0x190] sm:$0xff]
    %v597 = vld [vmem:[%s13 + $0x198] sm:$0xff]
    %v598 = vld [vmem:[%s13 + $0x1a0] sm:$0xff]
    %v599 = vld [vmem:[%s13 + $0x1a8] sm:$0xff]
    %v600 = vld [vmem:[%s13 + $0x1b0] sm:$0xff]
    %v601 = vld [vmem:[%s13 + $0x1b8] sm:$0xff]
    %v602 = vld [vmem:[%s13 + $0x1c0] sm:$0xff]
    %v603 = vld [vmem:[%s13 + $0x1c8] sm:$0xff]
    %v604 = vld [vmem:[%s13 + $0x1d0] sm:$0xff]
    %v605 = vld [vmem:[%s13 + $0x1d8] sm:$0xff]
    %v606 = vld [vmem:[%s13 + $0x1e0] sm:$0xff]
    %v607 = vld [vmem:[%s13 + $0x1e8] sm:$0xff]
    %v608 = vld [vmem:[%s13 + $0x1f0] sm:$0xff]
    %v609 = vld [vmem:[%s13 + $0x1f8] sm:$0xff]
    %610 = vmatprep.subr.mxu0 %v577
    %611 = vmatpush1.msra.mxu0 %v576
    %612 = vmatprep.subr.mxu0 %v575
    %613 = vmatpush1.msra.mxu0 %v574
    %614 = vmatprep.subr.mxu0 %v573
    %615 = vmatpush1.msra.mxu0 %v572
    %616 = vmatprep.subr.mxu0 %v571
    %617 = vmatpush1.msra.mxu0 %v570
    %618 = vmatprep.subr.mxu0 %v569
    %619 = vmatpush1.msra.mxu0 %v568
    %620 = vmatprep.subr.mxu0 %v567
    %621 = vmatpush1.msra.mxu0 %v566
    %622 = vmatprep.subr.mxu0 %v565
    %623 = vmatpush1.msra.mxu0 %v564
    %624 = vmatprep.subr.mxu0 %v563
    %625 = vmatpush1.msra.mxu0 %v562
    %626 = vmatprep.subr.mxu0 %v561
    %627 = vmatpush1.msra.mxu0 %v560
    %628 = vmatprep.subr.mxu0 %v559
    %629 = vmatpush1.msra.mxu0 %v558
    %630 = vmatprep.subr.mxu0 %v557
    %631 = vmatpush1.msra.mxu0 %v556
    %632 = vmatprep.subr.mxu0 %v555
    %633 = vmatpush1.msra.mxu0 %v554
    %634 = vmatprep.subr.mxu0 %v553
    %635 = vmatpush1.msra.mxu0 %v552
    %636 = vmatprep.subr.mxu0 %v551
    %637 = vmatpush1.msra.mxu0 %v550
    %638 = vmatprep.subr.mxu0 %v549
    %639 = vmatpush1.msra.mxu0 %v548
    %640 = vmatprep.subr.mxu0 %v547
    %641 = vmatpush1.msra.mxu0 %v546
    %642 = vmatprep.subr.mxu0 %v609
    %643 = vmatpush2.msra.mxu0 %v608
    %644 = vmatprep.subr.mxu0 %v607
    %645 = vmatpush2.msra.mxu0 %v606
    %646 = vmatprep.subr.mxu0 %v605
    %647 = vmatpush2.msra.mxu0 %v604
    %648 = vmatprep.subr.mxu0 %v603
    %649 = vmatpush2.msra.mxu0 %v602
    %650 = vmatprep.subr.mxu0 %v601
    %651 = vmatpush2.msra.mxu0 %v600
    %652 = vmatprep.subr.mxu0 %v599
    %653 = vmatpush2.msra.mxu0 %v598
    %654 = vmatprep.subr.mxu0 %v597
    %655 = vmatpush2.msra.mxu0 %v596
    %656 = vmatprep.subr.mxu0 %v595
    %657 = vmatpush2.msra.mxu0 %v594
    %658 = vmatprep.subr.mxu0 %v593
    %659 = vmatpush2.msra.mxu0 %v592
    %660 = vmatprep.subr.mxu0 %v591
    %661 = vmatpush2.msra.mxu0 %v590
    %662 = vmatprep.subr.mxu0 %v589
    %663 = vmatpush2.msra.mxu0 %v588
    %664 = vmatprep.subr.mxu0 %v587
    %665 = vmatpush2.msra.mxu0 %v586
    %666 = vmatprep.subr.mxu0 %v585
    %667 = vmatpush2.msra.mxu0 %v584
    %668 = vmatprep.subr.mxu0 %v583
    %669 = vmatpush2.msra.mxu0 %v582
    %670 = vmatprep.subr.mxu0 %v581
    %671 = vmatpush2.msra.mxu0 %v580
    %672 = vmatprep.subr.mxu0 %v579
    %673 = vmatpush2.msra.mxu0 %v578
    %674 = vmatprep.mubr.f32.mxu0 %v545
    %675 = vmatmul.mubr.f32.gmra.mxu0 %v544
    %v676 = vpop.f32.mrf.mxu0
    %v677 = vadd.f32 0.0, %v676
    %v678 = vpop.f32.mrf.mxu0
    %v679 = vadd.f32 0.0, %v678
    %680 = vdwg.mxu0
    %v681 = vld [vmem:[%s14] sm:$0xff]
    %v682 = vld [vmem:[%s14 + $0x8] sm:$0xff]
    %v683 = vld [vmem:[%s14 + $0x10] sm:$0xff]
    %v684 = vld [vmem:[%s14 + $0x18] sm:$0xff]
    %v685 = vld [vmem:[%s14 + $0x20] sm:$0xff]
    %v686 = vld [vmem:[%s14 + $0x28] sm:$0xff]
    %v687 = vld [vmem:[%s14 + $0x30] sm:$0xff]
    %v688 = vld [vmem:[%s14 + $0x38] sm:$0xff]
    %v689 = vld [vmem:[%s14 + $0x40] sm:$0xff]
    %v690 = vld [vmem:[%s14 + $0x48] sm:$0xff]
    %v691 = vld [vmem:[%s14 + $0x50] sm:$0xff]
    %v692 = vld [vmem:[%s14 + $0x58] sm:$0xff]
    %v693 = vld [vmem:[%s14 + $0x60] sm:$0xff]
    %v694 = vld [vmem:[%s14 + $0x68] sm:$0xff]
    %v695 = vld [vmem:[%s14 + $0x70] sm:$0xff]
    %v696 = vld [vmem:[%s14 + $0x78] sm:$0xff]
    %v697 = vld [vmem:[%s14 + $0x80] sm:$0xff]
    %v698 = vld [vmem:[%s14 + $0x88] sm:$0xff]
    %v699 = vld [vmem:[%s14 + $0x90] sm:$0xff]
    %v700 = vld [vmem:[%s14 + $0x98] sm:$0xff]
    %v701 = vld [vmem:[%s14 + $0xa0] sm:$0xff]
    %v702 = vld [vmem:[%s14 + $0xa8] sm:$0xff]
    %v703 = vld [vmem:[%s14 + $0xb0] sm:$0xff]
    %v704 = vld [vmem:[%s14 + $0xb8] sm:$0xff]
    %v705 = vld [vmem:[%s14 + $0xc0] sm:$0xff]
    %v706 = vld [vmem:[%s14 + $0xc8] sm:$0xff]
    %v707 = vld [vmem:[%s14 + $0xd0] sm:$0xff]
    %v708 = vld [vmem:[%s14 + $0xd8] sm:$0xff]
    %v709 = vld [vmem:[%s14 + $0xe0] sm:$0xff]
    %v710 = vld [vmem:[%s14 + $0xe8] sm:$0xff]
    %v711 = vld [vmem:[%s14 + $0xf0] sm:$0xff]
    %v712 = vld [vmem:[%s14 + $0xf8] sm:$0xff]
    %v713 = vld [vmem:[%s14 + $0x100] sm:$0xff]
    %v714 = vld [vmem:[%s14 + $0x108] sm:$0xff]
    %v715 = vld [vmem:[%s14 + $0x110] sm:$0xff]
    %v716 = vld [vmem:[%s14 + $0x118] sm:$0xff]
    %v717 = vld [vmem:[%s14 + $0x120] sm:$0xff]
    %v718 = vld [vmem:[%s14 + $0x128] sm:$0xff]
    %v719 = vld [vmem:[%s14 + $0x130] sm:$0xff]
    %v720 = vld [vmem:[%s14 + $0x138] sm:$0xff]
    %v721 = vld [vmem:[%s14 + $0x140] sm:$0xff]
    %v722 = vld [vmem:[%s14 + $0x148] sm:$0xff]
    %v723 = vld [vmem:[%s14 + $0x150] sm:$0xff]
    %v724 = vld [vmem:[%s14 + $0x158] sm:$0xff]
    %v725 = vld [vmem:[%s14 + $0x160] sm:$0xff]
    %v726 = vld [vmem:[%s14 + $0x168] sm:$0xff]
    %v727 = vld [vmem:[%s14 + $0x170] sm:$0xff]
    %v728 = vld [vmem:[%s14 + $0x178] sm:$0xff]
    %v729 = vld [vmem:[%s14 + $0x180] sm:$0xff]
    %v730 = vld [vmem:[%s14 + $0x188] sm:$0xff]
    %v731 = vld [vmem:[%s14 + $0x190] sm:$0xff]
    %v732 = vld [vmem:[%s14 + $0x198] sm:$0xff]
    %v733 = vld [vmem:[%s14 + $0x1a0] sm:$0xff]
    %v734 = vld [vmem:[%s14 + $0x1a8] sm:$0xff]
    %v735 = vld [vmem:[%s14 + $0x1b0] sm:$0xff]
    %v736 = vld [vmem:[%s14 + $0x1b8] sm:$0xff]
    %v737 = vld [vmem:[%s14 + $0x1c0] sm:$0xff]
    %v738 = vld [vmem:[%s14 + $0x1c8] sm:$0xff]
    %v739 = vld [vmem:[%s14 + $0x1d0] sm:$0xff]
    %v740 = vld [vmem:[%s14 + $0x1d8] sm:$0xff]
    %v741 = vld [vmem:[%s14 + $0x1e0] sm:$0xff]
    %v742 = vld [vmem:[%s14 + $0x1e8] sm:$0xff]
    %v743 = vld [vmem:[%s14 + $0x1f0] sm:$0xff]
    %v744 = vld [vmem:[%s14 + $0x1f8] sm:$0xff]
    %745 = vmatprep.subr.mxu0 %v712
    %746 = vmatpush1.msra.mxu0 %v711
    %747 = vmatprep.subr.mxu0 %v710
    %748 = vmatpush1.msra.mxu0 %v709
    %749 = vmatprep.subr.mxu0 %v708
    %750 = vmatpush1.msra.mxu0 %v707
    %751 = vmatprep.subr.mxu0 %v706
    %752 = vmatpush1.msra.mxu0 %v705
    %753 = vmatprep.subr.mxu0 %v704
    %754 = vmatpush1.msra.mxu0 %v703
    %755 = vmatprep.subr.mxu0 %v702
    %756 = vmatpush1.msra.mxu0 %v701
    %757 = vmatprep.subr.mxu0 %v700
    %758 = vmatpush1.msra.mxu0 %v699
    %759 = vmatprep.subr.mxu0 %v698
    %760 = vmatpush1.msra.mxu0 %v697
    %761 = vmatprep.subr.mxu0 %v696
    %762 = vmatpush1.msra.mxu0 %v695
    %763 = vmatprep.subr.mxu0 %v694
    %764 = vmatpush1.msra.mxu0 %v693
    %765 = vmatprep.subr.mxu0 %v692
    %766 = vmatpush1.msra.mxu0 %v691
    %767 = vmatprep.subr.mxu0 %v690
    %768 = vmatpush1.msra.mxu0 %v689
    %769 = vmatprep.subr.mxu0 %v688
    %770 = vmatpush1.msra.mxu0 %v687
    %771 = vmatprep.subr.mxu0 %v686
    %772 = vmatpush1.msra.mxu0 %v685
    %773 = vmatprep.subr.mxu0 %v684
    %774 = vmatpush1.msra.mxu0 %v683
    %775 = vmatprep.subr.mxu0 %v682
    %776 = vmatpush1.msra.mxu0 %v681
    %777 = vmatprep.subr.mxu0 %v744
    %778 = vmatpush2.msra.mxu0 %v743
    %779 = vmatprep.subr.mxu0 %v742
    %780 = vmatpush2.msra.mxu0 %v741
    %781 = vmatprep.subr.mxu0 %v740
    %782 = vmatpush2.msra.mxu0 %v739
    %783 = vmatprep.subr.mxu0 %v738
    %784 = vmatpush2.msra.mxu0 %v737
    %785 = vmatprep.subr.mxu0 %v736
    %786 = vmatpush2.msra.mxu0 %v735
    %787 = vmatprep.subr.mxu0 %v734
    %788 = vmatpush2.msra.mxu0 %v733
    %789 = vmatprep.subr.mxu0 %v732
    %790 = vmatpush2.msra.mxu0 %v731
    %791 = vmatprep.subr.mxu0 %v730
    %792 = vmatpush2.msra.mxu0 %v729
    %793 = vmatprep.subr.mxu0 %v728
    %794 = vmatpush2.msra.mxu0 %v727
    %795 = vmatprep.subr.mxu0 %v726
    %796 = vmatpush2.msra.mxu0 %v725
    %797 = vmatprep.subr.mxu0 %v724
    %798 = vmatpush2.msra.mxu0 %v723
    %799 = vmatprep.subr.mxu0 %v722
    %800 = vmatpush2.msra.mxu0 %v721
    %801 = vmatprep.subr.mxu0 %v720
    %802 = vmatpush2.msra.mxu0 %v719
    %803 = vmatprep.subr.mxu0 %v718
    %804 = vmatpush2.msra.mxu0 %v717
    %805 = vmatprep.subr.mxu0 %v716
    %806 = vmatpush2.msra.mxu0 %v715
    %807 = vmatprep.subr.mxu0 %v714
    %808 = vmatpush2.msra.mxu0 %v713
    %809 = vmatprep.mubr.f32.mxu0 %v545
    %810 = vmatmul.mubr.f32.gmra.mxu0 %v544
    %v811 = vpop.f32.mrf.mxu0
    %v812 = vadd.f32 0.0, %v811
    %v813 = vpop.f32.mrf.mxu0
    %v814 = vadd.f32 0.0, %v813
    %815 = vdwg.mxu0
    %v816 = vxor.u32 %v677, 2147483648
    %v817 = vxor.u32 %v679, 2147483648
    %v818 = vmul.f32 %v816, 1.442695
    %v819 = vpow.pop %v818
    %v820 = vmul.f32 %v817, 1.442695
    %v821 = vpow.pop %v820
    %v822 = vadd.f32 %v819, 1.0
    %v823 = vadd.f32 %v821, 1.0
    %v824 = vrcp.pop %v822
    %v825 = vmul.f32 1.0, %v824
    %v826 = vrcp.pop %v823
    %v827 = vmul.f32 1.0, %v826
    %v828 = vtanh.pop %v812
    %v829 = vtanh.pop %v814
    %v830 = vmul.f32 %v825, %v828
    %v831 = vmul.f32 %v827, %v829
    %v832 = vld [vmem:[%s15] sm:$0xff]
    %v833 = vld [vmem:[%s15 + $0x8] sm:$0xff]
    %v834 = vld [vmem:[%s15 + $0x10] sm:$0xff]
    %v835 = vld [vmem:[%s15 + $0x18] sm:$0xff]
    %v836 = vld [vmem:[%s15 + $0x20] sm:$0xff]
    %v837 = vld [vmem:[%s15 + $0x28] sm:$0xff]
    %v838 = vld [vmem:[%s15 + $0x30] sm:$0xff]
    %v839 = vld [vmem:[%s15 + $0x38] sm:$0xff]
    %v840 = vld [vmem:[%s15 + $0x40] sm:$0xff]
    %v841 = vld [vmem:[%s15 + $0x48] sm:$0xff]
    %v842 = vld [vmem:[%s15 + $0x50] sm:$0xff]
    %v843 = vld [vmem:[%s15 + $0x58] sm:$0xff]
    %v844 = vld [vmem:[%s15 + $0x60] sm:$0xff]
    %v845 = vld [vmem:[%s15 + $0x68] sm:$0xff]
    %v846 = vld [vmem:[%s15 + $0x70] sm:$0xff]
    %v847 = vld [vmem:[%s15 + $0x78] sm:$0xff]
    %v848 = vld [vmem:[%s15 + $0x80] sm:$0xff]
    %v849 = vld [vmem:[%s15 + $0x88] sm:$0xff]
    %v850 = vld [vmem:[%s15 + $0x90] sm:$0xff]
    %v851 = vld [vmem:[%s15 + $0x98] sm:$0xff]
    %v852 = vld [vmem:[%s15 + $0xa0] sm:$0xff]
    %v853 = vld [vmem:[%s15 + $0xa8] sm:$0xff]
    %v854 = vld [vmem:[%s15 + $0xb0] sm:$0xff]
    %v855 = vld [vmem:[%s15 + $0xb8] sm:$0xff]
    %v856 = vld [vmem:[%s15 + $0xc0] sm:$0xff]
    %v857 = vld [vmem:[%s15 + $0xc8] sm:$0xff]
    %v858 = vld [vmem:[%s15 + $0xd0] sm:$0xff]
    %v859 = vld [vmem:[%s15 + $0xd8] sm:$0xff]
    %v860 = vld [vmem:[%s15 + $0xe0] sm:$0xff]
    %v861 = vld [vmem:[%s15 + $0xe8] sm:$0xff]
    %v862 = vld [vmem:[%s15 + $0xf0] sm:$0xff]
    %v863 = vld [vmem:[%s15 + $0xf8] sm:$0xff]
    %v864 = vld [vmem:[%s15 + $0x100] sm:$0xff]
    %v865 = vld [vmem:[%s15 + $0x108] sm:$0xff]
    %v866 = vld [vmem:[%s15 + $0x110] sm:$0xff]
    %v867 = vld [vmem:[%s15 + $0x118] sm:$0xff]
    %v868 = vld [vmem:[%s15 + $0x120] sm:$0xff]
    %v869 = vld [vmem:[%s15 + $0x128] sm:$0xff]
    %v870 = vld [vmem:[%s15 + $0x130] sm:$0xff]
    %v871 = vld [vmem:[%s15 + $0x138] sm:$0xff]
    %v872 = vld [vmem:[%s15 + $0x140] sm:$0xff]
    %v873 = vld [vmem:[%s15 + $0x148] sm:$0xff]
    %v874 = vld [vmem:[%s15 + $0x150] sm:$0xff]
    %v875 = vld [vmem:[%s15 + $0x158] sm:$0xff]
    %v876 = vld [vmem:[%s15 + $0x160] sm:$0xff]
    %v877 = vld [vmem:[%s15 + $0x168] sm:$0xff]
    %v878 = vld [vmem:[%s15 + $0x170] sm:$0xff]
    %v879 = vld [vmem:[%s15 + $0x178] sm:$0xff]
    %v880 = vld [vmem:[%s15 + $0x180] sm:$0xff]
    %v881 = vld [vmem:[%s15 + $0x188] sm:$0xff]
    %v882 = vld [vmem:[%s15 + $0x190] sm:$0xff]
    %v883 = vld [vmem:[%s15 + $0x198] sm:$0xff]
    %v884 = vld [vmem:[%s15 + $0x1a0] sm:$0xff]
    %v885 = vld [vmem:[%s15 + $0x1a8] sm:$0xff]
    %v886 = vld [vmem:[%s15 + $0x1b0] sm:$0xff]
    %v887 = vld [vmem:[%s15 + $0x1b8] sm:$0xff]
    %v888 = vld [vmem:[%s15 + $0x1c0] sm:$0xff]
    %v889 = vld [vmem:[%s15 + $0x1c8] sm:$0xff]
    %v890 = vld [vmem:[%s15 + $0x1d0] sm:$0xff]
    %v891 = vld [vmem:[%s15 + $0x1d8] sm:$0xff]
    %v892 = vld [vmem:[%s16] sm:$0x7]
    %v894 = vlaneseq
    %v895 = vshrl.u32 %v894, 7
    %v896 = vsub.s32 0, %v895
    %v897 = vrot.slane %v892, %v896
    %v898 = vlaneseq
    %v899 = vshrl.u32 %v898, 7
    %v900 = vsub.s32 1, %v899
    %v901 = vrot.slane %v892, %v900
    %v902 = vlaneseq
    %v903 = vshrl.u32 %v902, 7
    %v904 = vsub.s32 2, %v903
    %v905 = vrot.slane %v892, %v904
    %v910 = vsel %vm177, %v831, 0
    %912 = vmatprep.subr.mxu0 %v878
    %913 = vmatpush1.msra.mxu0 %v877
    %914 = vmatprep.subr.mxu0 %v875
    %915 = vmatpush1.msra.mxu0 %v874
    %916 = vmatprep.subr.mxu0 %v872
    %917 = vmatpush1.msra.mxu0 %v871
    %918 = vmatprep.subr.mxu0 %v869
    %919 = vmatpush1.msra.mxu0 %v868
    %920 = vmatprep.subr.mxu0 %v866
    %921 = vmatpush1.msra.mxu0 %v865
    %922 = vmatprep.subr.mxu0 %v863
    %923 = vmatpush1.msra.mxu0 %v862
    %924 = vmatprep.subr.mxu0 %v860
    %925 = vmatpush1.msra.mxu0 %v859
    %926 = vmatprep.subr.mxu0 %v857
    %927 = vmatpush1.msra.mxu0 %v856
    %928 = vmatprep.subr.mxu0 %v854
    %929 = vmatpush1.msra.mxu0 %v853
    %930 = vmatprep.subr.mxu0 %v851
    %931 = vmatpush1.msra.mxu0 %v850
    %932 = vmatprep.subr.mxu0 %v848
    %933 = vmatpush1.msra.mxu0 %v847
    %934 = vmatprep.subr.mxu0 %v845
    %935 = vmatpush1.msra.mxu0 %v844
    %936 = vmatprep.subr.mxu0 %v842
    %937 = vmatpush1.msra.mxu0 %v841
    %938 = vmatprep.subr.mxu0 %v839
    %939 = vmatpush1.msra.mxu0 %v838
    %940 = vmatprep.subr.mxu0 %v836
    %941 = vmatpush1.msra.mxu0 %v835
    %942 = vmatprep.subr.mxu0 %v833
    %943 = vmatpush1.msra.mxu0 %v832
    %944 = vmatprep.subr.mxu0 0.0
    %945 = vmatpush2.msra.mxu0 0.0
    %946 = vmatprep.subr.mxu0 0.0
    %947 = vmatpush2.msra.mxu0 0.0
    %948 = vmatprep.subr.mxu0 0.0
    %949 = vmatpush2.msra.mxu0 0.0
    %950 = vmatprep.subr.mxu0 0.0
    %951 = vmatpush2.msra.mxu0 0.0
    %952 = vmatprep.subr.mxu0 0.0
    %953 = vmatpush2.msra.mxu0 0.0
    %954 = vmatprep.subr.mxu0 0.0
    %955 = vmatpush2.msra.mxu0 0.0
    %956 = vmatprep.subr.mxu0 0.0
    %957 = vmatpush2.msra.mxu0 0.0
    %958 = vmatprep.subr.mxu0 0.0
    %959 = vmatpush2.msra.mxu0 0.0
    %960 = vmatprep.subr.mxu0 0.0
    %961 = vmatpush2.msra.mxu0 0.0
    %962 = vmatprep.subr.mxu0 0.0
    %963 = vmatpush2.msra.mxu0 0.0
    %964 = vmatprep.subr.mxu0 0.0
    %965 = vmatpush2.msra.mxu0 0.0
    %966 = vmatprep.subr.mxu0 0.0
    %967 = vmatpush2.msra.mxu0 0.0
    %968 = vmatprep.subr.mxu0 %v890
    %969 = vmatpush2.msra.mxu0 %v889
    %970 = vmatprep.subr.mxu0 %v887
    %971 = vmatpush2.msra.mxu0 %v886
    %972 = vmatprep.subr.mxu0 %v884
    %973 = vmatpush2.msra.mxu0 %v883
    %974 = vmatprep.subr.mxu0 %v881
    %975 = vmatpush2.msra.mxu0 %v880
    %976 = vmatprep.mubr.f32.mxu0 %v910
    %977 = vmatmul.mubr.f32.gmra.mxu0 %v830
    %v978 = vpop.f32.mrf.mxu0
    %v979 = vadd.f32 %v897, %v978
    %v980 = vpop.f32.mrf.mxu0
    %v981 = vadd.f32 %v901, %v980
    %982 = vdwg.mxu0
    %983 = vmatprep.subr.mxu0 0.0
    %984 = vmatpush1.msra.mxu0 %v879
    %985 = vmatprep.subr.mxu0 0.0
    %986 = vmatpush1.msra.mxu0 %v876
    %987 = vmatprep.subr.mxu0 0.0
    %988 = vmatpush1.msra.mxu0 %v873
    %989 = vmatprep.subr.mxu0 0.0
    %990 = vmatpush1.msra.mxu0 %v870
    %991 = vmatprep.subr.mxu0 0.0
    %992 = vmatpush1.msra.mxu0 %v867
    %993 = vmatprep.subr.mxu0 0.0
    %994 = vmatpush1.msra.mxu0 %v864
    %995 = vmatprep.subr.mxu0 0.0
    %996 = vmatpush1.msra.mxu0 %v861
    %997 = vmatprep.subr.mxu0 0.0
    %998 = vmatpush1.msra.mxu0 %v858
    %999 = vmatprep.subr.mxu0 0.0
    %1000 = vmatpush1.msra.mxu0 %v855
    %1001 = vmatprep.subr.mxu0 0.0
    %1002 = vmatpush1.msra.mxu0 %v852
    %1003 = vmatprep.subr.mxu0 0.0
    %1004 = vmatpush1.msra.mxu0 %v849
    %1005 = vmatprep.subr.mxu0 0.0
    %1006 = vmatpush1.msra.mxu0 %v846
    %1007 = vmatprep.subr.mxu0 0.0
    %1008 = vmatpush1.msra.mxu0 %v843
    %1009 = vmatprep.subr.mxu0 0.0
    %1010 = vmatpush1.msra.mxu0 %v840
    %1011 = vmatprep.subr.mxu0 0.0
    %1012 = vmatpush1.msra.mxu0 %v837
    %1013 = vmatprep.subr.mxu0 0.0
    %1014 = vmatpush1.msra.mxu0 %v834
    %1015 = vmatprep.subr.mxu0 0.0
    %1016 = vmatpush2.msra.mxu0 0.0
    %1017 = vmatprep.subr.mxu0 0.0
    %1018 = vmatpush2.msra.mxu0 0.0
    %1019 = vmatprep.subr.mxu0 0.0
    %1020 = vmatpush2.msra.mxu0 0.0
    %1021 = vmatprep.subr.mxu0 0.0
    %1022 = vmatpush2.msra.mxu0 0.0
    %1023 = vmatprep.subr.mxu0 0.0
    %1024 = vmatpush2.msra.mxu0 0.0
    %1025 = vmatprep.subr.mxu0 0.0
    %1026 = vmatpush2.msra.mxu0 0.0
    %1027 = vmatprep.subr.mxu0 0.0
    %1028 = vmatpush2.msra.mxu0 0.0
    %1029 = vmatprep.subr.mxu0 0.0
    %1030 = vmatpush2.msra.mxu0 0.0
    %1031 = vmatprep.subr.mxu0 0.0
    %1032 = vmatpush2.msra.mxu0 0.0
    %1033 = vmatprep.subr.mxu0 0.0
    %1034 = vmatpush2.msra.mxu0 0.0
    %1035 = vmatprep.subr.mxu0 0.0
    %1036 = vmatpush2.msra.mxu0 0.0
    %1037 = vmatprep.subr.mxu0 0.0
    %1038 = vmatpush2.msra.mxu0 0.0
    %1039 = vmatprep.subr.mxu0 0.0
    %1040 = vmatpush2.msra.mxu0 %v891
    %1041 = vmatprep.subr.mxu0 0.0
    %1042 = vmatpush2.msra.mxu0 %v888
    %1043 = vmatprep.subr.mxu0 0.0
    %1044 = vmatpush2.msra.mxu0 %v885
    %1045 = vmatprep.subr.mxu0 0.0
    %1046 = vmatpush2.msra.mxu0 %v882
    %1047 = vmatprep.mubr.f32.mxu0 %v910
    %1048 = vmatmul.mubr.f32.gmra.mxu0 %v830
    %v1049 = vpop.f32.mrf.mxu0
    %v1050 = vadd.f32 %v905, %v1049
    %v1051 = vpop.f32.mrf.mxu0
    %1052 = vdwg.mxu0
    %v1053 = vmul.f32 %v979, 0.4
    %v1054 = vmul.f32 %v981, 0.4
    %v1055 = vmul.f32 %v1050, 0.4
    %v1056 = vmax.f32 %v979, %v1053
    %v1057 = vmax.f32 %v981, %v1054
    %v1058 = vmax.f32 %v1050, %v1055
    %v1059 = vadd.f32 %v163, %v1056
    %v1060 = vadd.f32 %v543, %v1057
    %v1061 = vadd.f32 %v1058, 0.0
    %v1062 = vlaneseq
    %v1063 = vshrl.u32 %v1062, 7
    %v1064 = vsub.s32 0, %v1063
    %v1065 = vlaneseq
    %v1066 = vshrl.u32 %v1065, 7
    %v1067 = vsub.s32 0, %v1066
    %v1068 = vrot.slane %v542, %v1067
    %v1069 = vlaneseq
    %v1070 = vshrl.u32 %v1069, 7
    %v1071 = vsub.s32 0, %v1070
    %v1072 = vmul.f32 %v1059, 0.70710677
    %v1073 = vmul.f32 %v1060, %v1068
    %v1074 = vmul.f32 %v1061, 1.0
    %1075 = vst [vmem:[#allocation2] sm:$0xff] %v1072
    %1076 = vst.msk [vmem:[#allocation2 + $0x8] sm:$0xff] %vm177, %v1073
    %v1077 = vld [vmem:[#allocation2] sm:$0xff]
    %v1078 = vld [vmem:[#allocation2 + $0x8] sm:$0xff]
    %s1079 = scalar_lea.vmem %s13, 512
    %v1080 = vld [vmem:[%s1079] sm:$0xff]
    %v1081 = vld [vmem:[%s1079 + $0x8] sm:$0xff]
    %v1082 = vld [vmem:[%s1079 + $0x10] sm:$0xff]
    %v1083 = vld [vmem:[%s1079 + $0x18] sm:$0xff]
    %v1084 = vld [vmem:[%s1079 + $0x20] sm:$0xff]
    %v1085 = vld [vmem:[%s1079 + $0x28] sm:$0xff]
    %v1086 = vld [vmem:[%s1079 + $0x30] sm:$0xff]
    %v1087 = vld [vmem:[%s1079 + $0x38] sm:$0xff]
    %v1088 = vld [vmem:[%s1079 + $0x40] sm:$0xff]
    %v1089 = vld [vmem:[%s1079 + $0x48] sm:$0xff]
    %v1090 = vld [vmem:[%s1079 + $0x50] sm:$0xff]
    %v1091 = vld [vmem:[%s1079 + $0x58] sm:$0xff]
    %v1092 = vld [vmem:[%s1079 + $0x60] sm:$0xff]
    %v1093 = vld [vmem:[%s1079 + $0x68] sm:$0xff]
    %v1094 = vld [vmem:[%s1079 + $0x70] sm:$0xff]
    %v1095 = vld [vmem:[%s1079 + $0x78] sm:$0xff]
    %v1096 = vld [vmem:[%s1079 + $0x80] sm:$0xff]
    %v1097 = vld [vmem:[%s1079 + $0x88] sm:$0xff]
    %v1098 = vld [vmem:[%s1079 + $0x90] sm:$0xff]
    %v1099 = vld [vmem:[%s1079 + $0x98] sm:$0xff]
    %v1100 = vld [vmem:[%s1079 + $0xa0] sm:$0xff]
    %v1101 = vld [vmem:[%s1079 + $0xa8] sm:$0xff]
    %v1102 = vld [vmem:[%s1079 + $0xb0] sm:$0xff]
    %v1103 = vld [vmem:[%s1079 + $0xb8] sm:$0xff]
    %v1104 = vld [vmem:[%s1079 + $0xc0] sm:$0xff]
    %v1105 = vld [vmem:[%s1079 + $0xc8] sm:$0xff]
    %v1106 = vld [vmem:[%s1079 + $0xd0] sm:$0xff]
    %v1107 = vld [vmem:[%s1079 + $0xd8] sm:$0xff]
    %v1108 = vld [vmem:[%s1079 + $0xe0] sm:$0xff]
    %v1109 = vld [vmem:[%s1079 + $0xe8] sm:$0xff]
    %v1110 = vld [vmem:[%s1079 + $0xf0] sm:$0xff]
    %v1111 = vld [vmem:[%s1079 + $0xf8] sm:$0xff]
    %v1112 = vld [vmem:[%s1079 + $0x100] sm:$0xff]
    %v1113 = vld [vmem:[%s1079 + $0x108] sm:$0xff]
    %v1114 = vld [vmem:[%s1079 + $0x110] sm:$0xff]
    %v1115 = vld [vmem:[%s1079 + $0x118] sm:$0xff]
    %v1116 = vld [vmem:[%s1079 + $0x120] sm:$0xff]
    %v1117 = vld [vmem:[%s1079 + $0x128] sm:$0xff]
    %v1118 = vld [vmem:[%s1079 + $0x130] sm:$0xff]
    %v1119 = vld [vmem:[%s1079 + $0x138] sm:$0xff]
    %v1120 = vld [vmem:[%s1079 + $0x140] sm:$0xff]
    %v1121 = vld [vmem:[%s1079 + $0x148] sm:$0xff]
    %v1122 = vld [vmem:[%s1079 + $0x150] sm:$0xff]
    %v1123 = vld [vmem:[%s1079 + $0x158] sm:$0xff]
    %v1124 = vld [vmem:[%s1079 + $0x160] sm:$0xff]
    %v1125 = vld [vmem:[%s1079 + $0x168] sm:$0xff]
    %v1126 = vld [vmem:[%s1079 + $0x170] sm:$0xff]
    %v1127 = vld [vmem:[%s1079 + $0x178] sm:$0xff]
    %v1128 = vld [vmem:[%s1079 + $0x180] sm:$0xff]
    %v1129 = vld [vmem:[%s1079 + $0x188] sm:$0xff]
    %v1130 = vld [vmem:[%s1079 + $0x190] sm:$0xff]
    %v1131 = vld [vmem:[%s1079 + $0x198] sm:$0xff]
    %v1132 = vld [vmem:[%s1079 + $0x1a0] sm:$0xff]
    %v1133 = vld [vmem:[%s1079 + $0x1a8] sm:$0xff]
    %v1134 = vld [vmem:[%s1079 + $0x1b0] sm:$0xff]
    %v1135 = vld [vmem:[%s1079 + $0x1b8] sm:$0xff]
    %v1136 = vld [vmem:[%s1079 + $0x1c0] sm:$0xff]
    %v1137 = vld [vmem:[%s1079 + $0x1c8] sm:$0xff]
    %v1138 = vld [vmem:[%s1079 + $0x1d0] sm:$0xff]
    %v1139 = vld [vmem:[%s1079 + $0x1d8] sm:$0xff]
    %v1140 = vld [vmem:[%s1079 + $0x1e0] sm:$0xff]
    %v1141 = vld [vmem:[%s1079 + $0x1e8] sm:$0xff]
    %v1142 = vld [vmem:[%s1079 + $0x1f0] sm:$0xff]
    %v1143 = vld [vmem:[%s1079 + $0x1f8] sm:$0xff]
    %1144 = vmatprep.subr.mxu0 %v1111
    %1145 = vmatpush1.msra.mxu0 %v1110
    %1146 = vmatprep.subr.mxu0 %v1109
    %1147 = vmatpush1.msra.mxu0 %v1108
    %1148 = vmatprep.subr.mxu0 %v1107
    %1149 = vmatpush1.msra.mxu0 %v1106
    %1150 = vmatprep.subr.mxu0 %v1105
    %1151 = vmatpush1.msra.mxu0 %v1104
    %1152 = vmatprep.subr.mxu0 %v1103
    %1153 = vmatpush1.msra.mxu0 %v1102
    %1154 = vmatprep.subr.mxu0 %v1101
    %1155 = vmatpush1.msra.mxu0 %v1100
    %1156 = vmatprep.subr.mxu0 %v1099
    %1157 = vmatpush1.msra.mxu0 %v1098
    %1158 = vmatprep.subr.mxu0 %v1097
    %1159 = vmatpush1.msra.mxu0 %v1096
    %1160 = vmatprep.subr.mxu0 %v1095
    %1161 = vmatpush1.msra.mxu0 %v1094
    %1162 = vmatprep.subr.mxu0 %v1093
    %1163 = vmatpush1.msra.mxu0 %v1092
    %1164 = vmatprep.subr.mxu0 %v1091
    %1165 = vmatpush1.msra.mxu0 %v1090
    %1166 = vmatprep.subr.mxu0 %v1089
    %1167 = vmatpush1.msra.mxu0 %v1088
    %1168 = vmatprep.subr.mxu0 %v1087
    %1169 = vmatpush1.msra.mxu0 %v1086
    %1170 = vmatprep.subr.mxu0 %v1085
    %1171 = vmatpush1.msra.mxu0 %v1084
    %1172 = vmatprep.subr.mxu0 %v1083
    %1173 = vmatpush1.msra.mxu0 %v1082
    %1174 = vmatprep.subr.mxu0 %v1081
    %1175 = vmatpush1.msra.mxu0 %v1080
    %1176 = vmatprep.subr.mxu0 %v1143
    %1177 = vmatpush2.msra.mxu0 %v1142
    %1178 = vmatprep.subr.mxu0 %v1141
    %1179 = vmatpush2.msra.mxu0 %v1140
    %1180 = vmatprep.subr.mxu0 %v1139
    %1181 = vmatpush2.msra.mxu0 %v1138
    %1182 = vmatprep.subr.mxu0 %v1137
    %1183 = vmatpush2.msra.mxu0 %v1136
    %1184 = vmatprep.subr.mxu0 %v1135
    %1185 = vmatpush2.msra.mxu0 %v1134
    %1186 = vmatprep.subr.mxu0 %v1133
    %1187 = vmatpush2.msra.mxu0 %v1132
    %1188 = vmatprep.subr.mxu0 %v1131
    %1189 = vmatpush2.msra.mxu0 %v1130
    %1190 = vmatprep.subr.mxu0 %v1129
    %1191 = vmatpush2.msra.mxu0 %v1128
    %1192 = vmatprep.subr.mxu0 %v1127
    %1193 = vmatpush2.msra.mxu0 %v1126
    %1194 = vmatprep.subr.mxu0 %v1125
    %1195 = vmatpush2.msra.mxu0 %v1124
    %1196 = vmatprep.subr.mxu0 %v1123
    %1197 = vmatpush2.msra.mxu0 %v1122
    %1198 = vmatprep.subr.mxu0 %v1121
    %1199 = vmatpush2.msra.mxu0 %v1120
    %1200 = vmatprep.subr.mxu0 %v1119
    %1201 = vmatpush2.msra.mxu0 %v1118
    %1202 = vmatprep.subr.mxu0 %v1117
    %1203 = vmatpush2.msra.mxu0 %v1116
    %1204 = vmatprep.subr.mxu0 %v1115
    %1205 = vmatpush2.msra.mxu0 %v1114
    %1206 = vmatprep.subr.mxu0 %v1113
    %1207 = vmatpush2.msra.mxu0 %v1112
    %1208 = vmatprep.mubr.f32.mxu0 %v1078
    %1209 = vmatmul.mubr.f32.gmra.mxu0 %v1077
    %v1210 = vpop.f32.mrf.mxu0
    %v1211 = vadd.f32 0.0, %v1210
    %v1212 = vpop.f32.mrf.mxu0
    %v1213 = vadd.f32 0.0, %v1212
    %1214 = vdwg.mxu0
    %s1215 = scalar_lea.vmem %s14, 512
    %v1216 = vld [vmem:[%s1215] sm:$0xff]
    %v1217 = vld [vmem:[%s1215 + $0x8] sm:$0xff]
    %v1218 = vld [vmem:[%s1215 + $0x10] sm:$0xff]
    %v1219 = vld [vmem:[%s1215 + $0x18] sm:$0xff]
    %v1220 = vld [vmem:[%s1215 + $0x20] sm:$0xff]
    %v1221 = vld [vmem:[%s1215 + $0x28] sm:$0xff]
    %v1222 = vld [vmem:[%s1215 + $0x30] sm:$0xff]
    %v1223 = vld [vmem:[%s1215 + $0x38] sm:$0xff]
    %v1224 = vld [vmem:[%s1215 + $0x40] sm:$0xff]
    %v1225 = vld [vmem:[%s1215 + $0x48] sm:$0xff]
    %v1226 = vld [vmem:[%s1215 + $0x50] sm:$0xff]
    %v1227 = vld [vmem:[%s1215 + $0x58] sm:$0xff]
    %v1228 = vld [vmem:[%s1215 + $0x60] sm:$0xff]
    %v1229 = vld [vmem:[%s1215 + $0x68] sm:$0xff]
    %v1230 = vld [vmem:[%s1215 + $0x70] sm:$0xff]
    %v1231 = vld [vmem:[%s1215 + $0x78] sm:$0xff]
    %v1232 = vld [vmem:[%s1215 + $0x80] sm:$0xff]
    %v1233 = vld [vmem:[%s1215 + $0x88] sm:$0xff]
    %v1234 = vld [vmem:[%s1215 + $0x90] sm:$0xff]
    %v1235 = vld [vmem:[%s1215 + $0x98] sm:$0xff]
    %v1236 = vld [vmem:[%s1215 + $0xa0] sm:$0xff]
    %v1237 = vld [vmem:[%s1215 + $0xa8] sm:$0xff]
    %v1238 = vld [vmem:[%s1215 + $0xb0] sm:$0xff]
    %v1239 = vld [vmem:[%s1215 + $0xb8] sm:$0xff]
    %v1240 = vld [vmem:[%s1215 + $0xc0] sm:$0xff]
    %v1241 = vld [vmem:[%s1215 + $0xc8] sm:$0xff]
    %v1242 = vld [vmem:[%s1215 + $0xd0] sm:$0xff]
    %v1243 = vld [vmem:[%s1215 + $0xd8] sm:$0xff]
    %v1244 = vld [vmem:[%s1215 + $0xe0] sm:$0xff]
    %v1245 = vld [vmem:[%s1215 + $0xe8] sm:$0xff]
    %v1246 = vld [vmem:[%s1215 + $0xf0] sm:$0xff]
    %v1247 = vld [vmem:[%s1215 + $0xf8] sm:$0xff]
    %v1248 = vld [vmem:[%s1215 + $0x100] sm:$0xff]
    %v1249 = vld [vmem:[%s1215 + $0x108] sm:$0xff]
    %v1250 = vld [vmem:[%s1215 + $0x110] sm:$0xff]
    %v1251 = vld [vmem:[%s1215 + $0x118] sm:$0xff]
    %v1252 = vld [vmem:[%s1215 + $0x120] sm:$0xff]
    %v1253 = vld [vmem:[%s1215 + $0x128] sm:$0xff]
    %v1254 = vld [vmem:[%s1215 + $0x130] sm:$0xff]
    %v1255 = vld [vmem:[%s1215 + $0x138] sm:$0xff]
    %v1256 = vld [vmem:[%s1215 + $0x140] sm:$0xff]
    %v1257 = vld [vmem:[%s1215 + $0x148] sm:$0xff]
    %v1258 = vld [vmem:[%s1215 + $0x150] sm:$0xff]
    %v1259 = vld [vmem:[%s1215 + $0x158] sm:$0xff]
    %v1260 = vld [vmem:[%s1215 + $0x160] sm:$0xff]
    %v1261 = vld [vmem:[%s1215 + $0x168] sm:$0xff]
    %v1262 = vld [vmem:[%s1215 + $0x170] sm:$0xff]
    %v1263 = vld [vmem:[%s1215 + $0x178] sm:$0xff]
    %v1264 = vld [vmem:[%s1215 + $0x180] sm:$0xff]
    %v1265 = vld [vmem:[%s1215 + $0x188] sm:$0xff]
    %v1266 = vld [vmem:[%s1215 + $0x190] sm:$0xff]
    %v1267 = vld [vmem:[%s1215 + $0x198] sm:$0xff]
    %v1268 = vld [vmem:[%s1215 + $0x1a0] sm:$0xff]
    %v1269 = vld [vmem:[%s1215 + $0x1a8] sm:$0xff]
    %v1270 = vld [vmem:[%s1215 + $0x1b0] sm:$0xff]
    %v1271 = vld [vmem:[%s1215 + $0x1b8] sm:$0xff]
    %v1272 = vld [vmem:[%s1215 + $0x1c0] sm:$0xff]
    %v1273 = vld [vmem:[%s1215 + $0x1c8] sm:$0xff]
    %v1274 = vld [vmem:[%s1215 + $0x1d0] sm:$0xff]
    %v1275 = vld [vmem:[%s1215 + $0x1d8] sm:$0xff]
    %v1276 = vld [vmem:[%s1215 + $0x1e0] sm:$0xff]
    %v1277 = vld [vmem:[%s1215 + $0x1e8] sm:$0xff]
    %v1278 = vld [vmem:[%s1215 + $0x1f0] sm:$0xff]
    %v1279 = vld [vmem:[%s1215 + $0x1f8] sm:$0xff]
    %1280 = vmatprep.subr.mxu0 %v1247
    %1281 = vmatpush1.msra.mxu0 %v1246
    %1282 = vmatprep.subr.mxu0 %v1245
    %1283 = vmatpush1.msra.mxu0 %v1244
    %1284 = vmatprep.subr.mxu0 %v1243
    %1285 = vmatpush1.msra.mxu0 %v1242
    %1286 = vmatprep.subr.mxu0 %v1241
    %1287 = vmatpush1.msra.mxu0 %v1240
    %1288 = vmatprep.subr.mxu0 %v1239
    %1289 = vmatpush1.msra.mxu0 %v1238
    %1290 = vmatprep.subr.mxu0 %v1237
    %1291 = vmatpush1.msra.mxu0 %v1236
    %1292 = vmatprep.subr.mxu0 %v1235
    %1293 = vmatpush1.msra.mxu0 %v1234
    %1294 = vmatprep.subr.mxu0 %v1233
    %1295 = vmatpush1.msra.mxu0 %v1232
    %1296 = vmatprep.subr.mxu0 %v1231
    %1297 = vmatpush1.msra.mxu0 %v1230
    %1298 = vmatprep.subr.mxu0 %v1229
    %1299 = vmatpush1.msra.mxu0 %v1228
    %1300 = vmatprep.subr.mxu0 %v1227
    %1301 = vmatpush1.msra.mxu0 %v1226
    %1302 = vmatprep.subr.mxu0 %v1225
    %1303 = vmatpush1.msra.mxu0 %v1224
    %1304 = vmatprep.subr.mxu0 %v1223
    %1305 = vmatpush1.msra.mxu0 %v1222
    %1306 = vmatprep.subr.mxu0 %v1221
    %1307 = vmatpush1.msra.mxu0 %v1220
    %1308 = vmatprep.subr.mxu0 %v1219
    %1309 = vmatpush1.msra.mxu0 %v1218
    %1310 = vmatprep.subr.mxu0 %v1217
    %1311 = vmatpush1.msra.mxu0 %v1216
    %1312 = vmatprep.subr.mxu0 %v1279
    %1313 = vmatpush2.msra.mxu0 %v1278
    %1314 = vmatprep.subr.mxu0 %v1277
    %1315 = vmatpush2.msra.mxu0 %v1276
    %1316 = vmatprep.subr.mxu0 %v1275
    %1317 = vmatpush2.msra.mxu0 %v1274
    %1318 = vmatprep.subr.mxu0 %v1273
    %1319 = vmatpush2.msra.mxu0 %v1272
    %1320 = vmatprep.subr.mxu0 %v1271
    %1321 = vmatpush2.msra.mxu0 %v1270
    %1322 = vmatprep.subr.mxu0 %v1269
    %1323 = vmatpush2.msra.mxu0 %v1268
    %1324 = vmatprep.subr.mxu0 %v1267
    %1325 = vmatpush2.msra.mxu0 %v1266
    %1326 = vmatprep.subr.mxu0 %v1265
    %1327 = vmatpush2.msra.mxu0 %v1264
    %1328 = vmatprep.subr.mxu0 %v1263
    %1329 = vmatpush2.msra.mxu0 %v1262
    %1330 = vmatprep.subr.mxu0 %v1261
    %1331 = vmatpush2.msra.mxu0 %v1260
    %1332 = vmatprep.subr.mxu0 %v1259
    %1333 = vmatpush2.msra.mxu0 %v1258
    %1334 = vmatprep.subr.mxu0 %v1257
    %1335 = vmatpush2.msra.mxu0 %v1256
    %1336 = vmatprep.subr.mxu0 %v1255
    %1337 = vmatpush2.msra.mxu0 %v1254
    %1338 = vmatprep.subr.mxu0 %v1253
    %1339 = vmatpush2.msra.mxu0 %v1252
    %1340 = vmatprep.subr.mxu0 %v1251
    %1341 = vmatpush2.msra.mxu0 %v1250
    %1342 = vmatprep.subr.mxu0 %v1249
    %1343 = vmatpush2.msra.mxu0 %v1248
    %1344 = vmatprep.mubr.f32.mxu0 %v1078
    %1345 = vmatmul.mubr.f32.gmra.mxu0 %v1077
    %v1346 = vpop.f32.mrf.mxu0
    %v1347 = vadd.f32 0.0, %v1346
    %v1348 = vpop.f32.mrf.mxu0
    %v1349 = vadd.f32 0.0, %v1348
    %1350 = vdwg.mxu0
    %v1351 = vxor.u32 %v1211, 2147483648
    %v1352 = vxor.u32 %v1213, 2147483648
    %v1353 = vmul.f32 %v1351, 1.442695
    %v1354 = vpow.pop %v1353
    %v1355 = vmul.f32 %v1352, 1.442695
    %v1356 = vpow.pop %v1355
    %v1357 = vadd.f32 %v1354, 1.0
    %v1358 = vadd.f32 %v1356, 1.0
    %v1359 = vrcp.pop %v1357
    %v1360 = vmul.f32 1.0, %v1359
    %v1361 = vrcp.pop %v1358
    %v1362 = vmul.f32 1.0, %v1361
    %v1363 = vtanh.pop %v1347
    %v1364 = vtanh.pop %v1349
    %v1365 = vmul.f32 %v1360, %v1363
    %v1366 = vmul.f32 %v1362, %v1364
    %s1367 = scalar_lea.vmem %s15, 480
    %v1368 = vld [vmem:[%s1367] sm:$0xff]
    %v1369 = vld [vmem:[%s1367 + $0x8] sm:$0xff]
    %v1370 = vld [vmem:[%s1367 + $0x10] sm:$0xff]
    %v1371 = vld [vmem:[%s1367 + $0x18] sm:$0xff]
    %v1372 = vld [vmem:[%s1367 + $0x20] sm:$0xff]
    %v1373 = vld [vmem:[%s1367 + $0x28] sm:$0xff]
    %v1374 = vld [vmem:[%s1367 + $0x30] sm:$0xff]
    %v1375 = vld [vmem:[%s1367 + $0x38] sm:$0xff]
    %v1376 = vld [vmem:[%s1367 + $0x40] sm:$0xff]
    %v1377 = vld [vmem:[%s1367 + $0x48] sm:$0xff]
    %v1378 = vld [vmem:[%s1367 + $0x50] sm:$0xff]
    %v1379 = vld [vmem:[%s1367 + $0x58] sm:$0xff]
    %v1380 = vld [vmem:[%s1367 + $0x60] sm:$0xff]
    %v1381 = vld [vmem:[%s1367 + $0x68] sm:$0xff]
    %v1382 = vld [vmem:[%s1367 + $0x70] sm:$0xff]
    %v1383 = vld [vmem:[%s1367 + $0x78] sm:$0xff]
    %v1384 = vld [vmem:[%s1367 + $0x80] sm:$0xff]
    %v1385 = vld [vmem:[%s1367 + $0x88] sm:$0xff]
    %v1386 = vld [vmem:[%s1367 + $0x90] sm:$0xff]
    %v1387 = vld [vmem:[%s1367 + $0x98] sm:$0xff]
    %v1388 = vld [vmem:[%s1367 + $0xa0] sm:$0xff]
    %v1389 = vld [vmem:[%s1367 + $0xa8] sm:$0xff]
    %v1390 = vld [vmem:[%s1367 + $0xb0] sm:$0xff]
    %v1391 = vld [vmem:[%s1367 + $0xb8] sm:$0xff]
    %v1392 = vld [vmem:[%s1367 + $0xc0] sm:$0xff]
    %v1393 = vld [vmem:[%s1367 + $0xc8] sm:$0xff]
    %v1394 = vld [vmem:[%s1367 + $0xd0] sm:$0xff]
    %v1395 = vld [vmem:[%s1367 + $0xd8] sm:$0xff]
    %v1396 = vld [vmem:[%s1367 + $0xe0] sm:$0xff]
    %v1397 = vld [vmem:[%s1367 + $0xe8] sm:$0xff]
    %v1398 = vld [vmem:[%s1367 + $0xf0] sm:$0xff]
    %v1399 = vld [vmem:[%s1367 + $0xf8] sm:$0xff]
    %v1400 = vld [vmem:[%s1367 + $0x100] sm:$0xff]
    %v1401 = vld [vmem:[%s1367 + $0x108] sm:$0xff]
    %v1402 = vld [vmem:[%s1367 + $0x110] sm:$0xff]
    %v1403 = vld [vmem:[%s1367 + $0x118] sm:$0xff]
    %v1404 = vld [vmem:[%s1367 + $0x120] sm:$0xff]
    %v1405 = vld [vmem:[%s1367 + $0x128] sm:$0xff]
    %v1406 = vld [vmem:[%s1367 + $0x130] sm:$0xff]
    %v1407 = vld [vmem:[%s1367 + $0x138] sm:$0xff]
    %v1408 = vld [vmem:[%s1367 + $0x140] sm:$0xff]
    %v1409 = vld [vmem:[%s1367 + $0x148] sm:$0xff]
    %v1410 = vld [vmem:[%s1367 + $0x150] sm:$0xff]
    %v1411 = vld [vmem:[%s1367 + $0x158] sm:$0xff]
    %v1412 = vld [vmem:[%s1367 + $0x160] sm:$0xff]
    %v1413 = vld [vmem:[%s1367 + $0x168] sm:$0xff]
    %v1414 = vld [vmem:[%s1367 + $0x170] sm:$0xff]
    %v1415 = vld [vmem:[%s1367 + $0x178] sm:$0xff]
    %v1416 = vld [vmem:[%s1367 + $0x180] sm:$0xff]
    %v1417 = vld [vmem:[%s1367 + $0x188] sm:$0xff]
    %v1418 = vld [vmem:[%s1367 + $0x190] sm:$0xff]
    %v1419 = vld [vmem:[%s1367 + $0x198] sm:$0xff]
    %v1420 = vld [vmem:[%s1367 + $0x1a0] sm:$0xff]
    %v1421 = vld [vmem:[%s1367 + $0x1a8] sm:$0xff]
    %v1422 = vld [vmem:[%s1367 + $0x1b0] sm:$0xff]
    %v1423 = vld [vmem:[%s1367 + $0x1b8] sm:$0xff]
    %v1424 = vld [vmem:[%s1367 + $0x1c0] sm:$0xff]
    %v1425 = vld [vmem:[%s1367 + $0x1c8] sm:$0xff]
    %v1426 = vld [vmem:[%s1367 + $0x1d0] sm:$0xff]
    %v1427 = vld [vmem:[%s1367 + $0x1d8] sm:$0xff]
    %s1428 = scalar_lea.vmem %s16, 3
    %v1429 = vld [vmem:[%s1428] sm:$0x7]
    %v1431 = vlaneseq
    %v1432 = vshrl.u32 %v1431, 7
    %v1433 = vsub.s32 0, %v1432
    %v1434 = vrot.slane %v1429, %v1433
    %v1435 = vlaneseq
    %v1436 = vshrl.u32 %v1435, 7
    %v1437 = vsub.s32 1, %v1436
    %v1438 = vrot.slane %v1429, %v1437
    %v1439 = vlaneseq
    %v1440 = vshrl.u32 %v1439, 7
    %v1441 = vsub.s32 2, %v1440
    %v1442 = vrot.slane %v1429, %v1441
    %v1447 = vsel %vm177, %v1366, 0
    %1449 = vmatprep.subr.mxu0 %v1414
    %1450 = vmatpush1.msra.mxu0 %v1413
    %1451 = vmatprep.subr.mxu0 %v1411
    %1452 = vmatpush1.msra.mxu0 %v1410
    %1453 = vmatprep.subr.mxu0 %v1408
    %1454 = vmatpush1.msra.mxu0 %v1407
    %1455 = vmatprep.subr.mxu0 %v1405
    %1456 = vmatpush1.msra.mxu0 %v1404
    %1457 = vmatprep.subr.mxu0 %v1402
    %1458 = vmatpush1.msra.mxu0 %v1401
    %1459 = vmatprep.subr.mxu0 %v1399
    %1460 = vmatpush1.msra.mxu0 %v1398
    %1461 = vmatprep.subr.mxu0 %v1396
    %1462 = vmatpush1.msra.mxu0 %v1395
    %1463 = vmatprep.subr.mxu0 %v1393
    %1464 = vmatpush1.msra.mxu0 %v1392
    %1465 = vmatprep.subr.mxu0 %v1390
    %1466 = vmatpush1.msra.mxu0 %v1389
    %1467 = vmatprep.subr.mxu0 %v1387
    %1468 = vmatpush1.msra.mxu0 %v1386
    %1469 = vmatprep.subr.mxu0 %v1384
    %1470 = vmatpush1.msra.mxu0 %v1383
    %1471 = vmatprep.subr.mxu0 %v1381
    %1472 = vmatpush1.msra.mxu0 %v1380
    %1473 = vmatprep.subr.mxu0 %v1378
    %1474 = vmatpush1.msra.mxu0 %v1377
    %1475 = vmatprep.subr.mxu0 %v1375
    %1476 = vmatpush1.msra.mxu0 %v1374
    %1477 = vmatprep.subr.mxu0 %v1372
    %1478 = vmatpush1.msra.mxu0 %v1371
    %1479 = vmatprep.subr.mxu0 %v1369
    %1480 = vmatpush1.msra.mxu0 %v1368
    %1481 = vmatprep.subr.mxu0 0.0
    %1482 = vmatpush2.msra.mxu0 0.0
    %1483 = vmatprep.subr.mxu0 0.0
    %1484 = vmatpush2.msra.mxu0 0.0
    %1485 = vmatprep.subr.mxu0 0.0
    %1486 = vmatpush2.msra.mxu0 0.0
    %1487 = vmatprep.subr.mxu0 0.0
    %1488 = vmatpush2.msra.mxu0 0.0
    %1489 = vmatprep.subr.mxu0 0.0
    %1490 = vmatpush2.msra.mxu0 0.0
    %1491 = vmatprep.subr.mxu0 0.0
    %1492 = vmatpush2.msra.mxu0 0.0
    %1493 = vmatprep.subr.mxu0 0.0
    %1494 = vmatpush2.msra.mxu0 0.0
    %1495 = vmatprep.subr.mxu0 0.0
    %1496 = vmatpush2.msra.mxu0 0.0
    %1497 = vmatprep.subr.mxu0 0.0
    %1498 = vmatpush2.msra.mxu0 0.0
    %1499 = vmatprep.subr.mxu0 0.0
    %1500 = vmatpush2.msra.mxu0 0.0
    %1501 = vmatprep.subr.mxu0 0.0
    %1502 = vmatpush2.msra.mxu0 0.0
    %1503 = vmatprep.subr.mxu0 0.0
    %1504 = vmatpush2.msra.mxu0 0.0
    %1505 = vmatprep.subr.mxu0 %v1426
    %1506 = vmatpush2.msra.mxu0 %v1425
    %1507 = vmatprep.subr.mxu0 %v1423
    %1508 = vmatpush2.msra.mxu0 %v1422
    %1509 = vmatprep.subr.mxu0 %v1420
    %1510 = vmatpush2.msra.mxu0 %v1419
    %1511 = vmatprep.subr.mxu0 %v1417
    %1512 = vmatpush2.msra.mxu0 %v1416
    %1513 = vmatprep.mubr.f32.mxu0 %v1447
    %1514 = vmatmul.mubr.f32.gmra.mxu0 %v1365
    %v1515 = vpop.f32.mrf.mxu0
    %v1516 = vadd.f32 %v1434, %v1515
    %v1517 = vpop.f32.mrf.mxu0
    %v1518 = vadd.f32 %v1438, %v1517
    %1519 = vdwg.mxu0
    %1520 = vmatprep.subr.mxu0 0.0
    %1521 = vmatpush1.msra.mxu0 %v1415
    %1522 = vmatprep.subr.mxu0 0.0
    %1523 = vmatpush1.msra.mxu0 %v1412
    %1524 = vmatprep.subr.mxu0 0.0
    %1525 = vmatpush1.msra.mxu0 %v1409
    %1526 = vmatprep.subr.mxu0 0.0
    %1527 = vmatpush1.msra.mxu0 %v1406
    %1528 = vmatprep.subr.mxu0 0.0
    %1529 = vmatpush1.msra.mxu0 %v1403
    %1530 = vmatprep.subr.mxu0 0.0
    %1531 = vmatpush1.msra.mxu0 %v1400
    %1532 = vmatprep.subr.mxu0 0.0
    %1533 = vmatpush1.msra.mxu0 %v1397
    %1534 = vmatprep.subr.mxu0 0.0
    %1535 = vmatpush1.msra.mxu0 %v1394
    %1536 = vmatprep.subr.mxu0 0.0
    %1537 = vmatpush1.msra.mxu0 %v1391
    %1538 = vmatprep.subr.mxu0 0.0
    %1539 = vmatpush1.msra.mxu0 %v1388
    %1540 = vmatprep.subr.mxu0 0.0
    %1541 = vmatpush1.msra.mxu0 %v1385
    %1542 = vmatprep.subr.mxu0 0.0
    %1543 = vmatpush1.msra.mxu0 %v1382
    %1544 = vmatprep.subr.mxu0 0.0
    %1545 = vmatpush1.msra.mxu0 %v1379
    %1546 = vmatprep.subr.mxu0 0.0
    %1547 = vmatpush1.msra.mxu0 %v1376
    %1548 = vmatprep.subr.mxu0 0.0
    %1549 = vmatpush1.msra.mxu0 %v1373
    %1550 = vmatprep.subr.mxu0 0.0
    %1551 = vmatpush1.msra.mxu0 %v1370
    %1552 = vmatprep.subr.mxu0 0.0
    %1553 = vmatpush2.msra.mxu0 0.0
    %1554 = vmatprep.subr.mxu0 0.0
    %1555 = vmatpush2.msra.mxu0 0.0
    %1556 = vmatprep.subr.mxu0 0.0
    %1557 = vmatpush2.msra.mxu0 0.0
    %1558 = vmatprep.subr.mxu0 0.0
    %1559 = vmatpush2.msra.mxu0 0.0
    %1560 = vmatprep.subr.mxu0 0.0
    %1561 = vmatpush2.msra.mxu0 0.0
    %1562 = vmatprep.subr.mxu0 0.0
    %1563 = vmatpush2.msra.mxu0 0.0
    %1564 = vmatprep.subr.mxu0 0.0
    %1565 = vmatpush2.msra.mxu0 0.0
    %1566 = vmatprep.subr.mxu0 0.0
    %1567 = vmatpush2.msra.mxu0 0.0
    %1568 = vmatprep.subr.mxu0 0.0
    %1569 = vmatpush2.msra.mxu0 0.0
    %1570 = vmatprep.subr.mxu0 0.0
    %1571 = vmatpush2.msra.mxu0 0.0
    %1572 = vmatprep.subr.mxu0 0.0
    %1573 = vmatpush2.msra.mxu0 0.0
    %1574 = vmatprep.subr.mxu0 0.0
    %1575 = vmatpush2.msra.mxu0 0.0
    %1576 = vmatprep.subr.mxu0 0.0
    %1577 = vmatpush2.msra.mxu0 %v1427
    %1578 = vmatprep.subr.mxu0 0.0
    %1579 = vmatpush2.msra.mxu0 %v1424
    %1580 = vmatprep.subr.mxu0 0.0
    %1581 = vmatpush2.msra.mxu0 %v1421
    %1582 = vmatprep.subr.mxu0 0.0
    %1583 = vmatpush2.msra.mxu0 %v1418
    %1584 = vmatprep.mubr.f32.mxu0 %v1447
    %1585 = vmatmul.mubr.f32.gmra.mxu0 %v1365
    %v1586 = vpop.f32.mrf.mxu0
    %v1587 = vadd.f32 %v1442, %v1586
    %v1588 = vpop.f32.mrf.mxu0
    %1589 = vdwg.mxu0
    %v1590 = vmul.f32 %v1516, 0.4
    %v1591 = vmul.f32 %v1518, 0.4
    %v1592 = vmul.f32 %v1587, 0.4
    %v1593 = vmax.f32 %v1516, %v1590
    %v1594 = vmax.f32 %v1518, %v1591
    %v1595 = vmax.f32 %v1587, %v1592
    %v1596 = vadd.f32 %v1072, %v1593
    %v1597 = vadd.f32 %v1073, %v1594
    %v1598 = vadd.f32 %v1074, %v1595
    %v1599 = vmul.f32 %v1596, 0.70710677
    %v1600 = vmul.f32 %v1597, %v1068
    %v1601 = vmul.f32 %v1598, 1.0
    %1602 = vst [vmem:[#allocation2] sm:$0xff] %v1599
    %1603 = vst.msk [vmem:[#allocation2 + $0x8] sm:$0xff] %vm177, %v1600
    %v1604 = vld [vmem:[#allocation2] sm:$0xff]
    %v1605 = vld [vmem:[#allocation2 + $0x8] sm:$0xff]
    %s1606 = scalar_lea.vmem %s13, 1024
    %v1607 = vld [vmem:[%s1606] sm:$0xff]
    %v1608 = vld [vmem:[%s1606 + $0x8] sm:$0xff]
    %v1609 = vld [vmem:[%s1606 + $0x10] sm:$0xff]
    %v1610 = vld [vmem:[%s1606 + $0x18] sm:$0xff]
    %v1611 = vld [vmem:[%s1606 + $0x20] sm:$0xff]
    %v1612 = vld [vmem:[%s1606 + $0x28] sm:$0xff]
    %v1613 = vld [vmem:[%s1606 + $0x30] sm:$0xff]
    %v1614 = vld [vmem:[%s1606 + $0x38] sm:$0xff]
    %v1615 = vld [vmem:[%s1606 + $0x40] sm:$0xff]
    %v1616 = vld [vmem:[%s1606 + $0x48] sm:$0xff]
    %v1617 = vld [vmem:[%s1606 + $0x50] sm:$0xff]
    %v1618 = vld [vmem:[%s1606 + $0x58] sm:$0xff]
    %v1619 = vld [vmem:[%s1606 + $0x60] sm:$0xff]
    %v1620 = vld [vmem:[%s1606 + $0x68] sm:$0xff]
    %v1621 = vld [vmem:[%s1606 + $0x70] sm:$0xff]
    %v1622 = vld [vmem:[%s1606 + $0x78] sm:$0xff]
    %v1623 = vld [vmem:[%s1606 + $0x80] sm:$0xff]
    %v1624 = vld [vmem:[%s1606 + $0x88] sm:$0xff]
    %v1625 = vld [vmem:[%s1606 + $0x90] sm:$0xff]
    %v1626 = vld [vmem:[%s1606 + $0x98] sm:$0xff]
    %v1627 = vld [vmem:[%s1606 + $0xa0] sm:$0xff]
    %v1628 = vld [vmem:[%s1606 + $0xa8] sm:$0xff]
    %v1629 = vld [vmem:[%s1606 + $0xb0] sm:$0xff]
    %v1630 = vld [vmem:[%s1606 + $0xb8] sm:$0xff]
    %v1631 = vld [vmem:[%s1606 + $0xc0] sm:$0xff]
    %v1632 = vld [vmem:[%s1606 + $0xc8] sm:$0xff]
    %v1633 = vld [vmem:[%s1606 + $0xd0] sm:$0xff]
    %v1634 = vld [vmem:[%s1606 + $0xd8] sm:$0xff]
    %v1635 = vld [vmem:[%s1606 + $0xe0] sm:$0xff]
    %v1636 = vld [vmem:[%s1606 + $0xe8] sm:$0xff]
    %v1637 = vld [vmem:[%s1606 + $0xf0] sm:$0xff]
    %v1638 = vld [vmem:[%s1606 + $0xf8] sm:$0xff]
    %v1639 = vld [vmem:[%s1606 + $0x100] sm:$0xff]
    %v1640 = vld [vmem:[%s1606 + $0x108] sm:$0xff]
    %v1641 = vld [vmem:[%s1606 + $0x110] sm:$0xff]
    %v1642 = vld [vmem:[%s1606 + $0x118] sm:$0xff]
    %v1643 = vld [vmem:[%s1606 + $0x120] sm:$0xff]
    %v1644 = vld [vmem:[%s1606 + $0x128] sm:$0xff]
    %v1645 = vld [vmem:[%s1606 + $0x130] sm:$0xff]
    %v1646 = vld [vmem:[%s1606 + $0x138] sm:$0xff]
    %v1647 = vld [vmem:[%s1606 + $0x140] sm:$0xff]
    %v1648 = vld [vmem:[%s1606 + $0x148] sm:$0xff]
    %v1649 = vld [vmem:[%s1606 + $0x150] sm:$0xff]
    %v1650 = vld [vmem:[%s1606 + $0x158] sm:$0xff]
    %v1651 = vld [vmem:[%s1606 + $0x160] sm:$0xff]
    %v1652 = vld [vmem:[%s1606 + $0x168] sm:$0xff]
    %v1653 = vld [vmem:[%s1606 + $0x170] sm:$0xff]
    %v1654 = vld [vmem:[%s1606 + $0x178] sm:$0xff]
    %v1655 = vld [vmem:[%s1606 + $0x180] sm:$0xff]
    %v1656 = vld [vmem:[%s1606 + $0x188] sm:$0xff]
    %v1657 = vld [vmem:[%s1606 + $0x190] sm:$0xff]
    %v1658 = vld [vmem:[%s1606 + $0x198] sm:$0xff]
    %v1659 = vld [vmem:[%s1606 + $0x1a0] sm:$0xff]
    %v1660 = vld [vmem:[%s1606 + $0x1a8] sm:$0xff]
    %v1661 = vld [vmem:[%s1606 + $0x1b0] sm:$0xff]
    %v1662 = vld [vmem:[%s1606 + $0x1b8] sm:$0xff]
    %v1663 = vld [vmem:[%s1606 + $0x1c0] sm:$0xff]
    %v1664 = vld [vmem:[%s1606 + $0x1c8] sm:$0xff]
    %v1665 = vld [vmem:[%s1606 + $0x1d0] sm:$0xff]
    %v1666 = vld [vmem:[%s1606 + $0x1d8] sm:$0xff]
    %v1667 = vld [vmem:[%s1606 + $0x1e0] sm:$0xff]
    %v1668 = vld [vmem:[%s1606 + $0x1e8] sm:$0xff]
    %v1669 = vld [vmem:[%s1606 + $0x1f0] sm:$0xff]
    %v1670 = vld [vmem:[%s1606 + $0x1f8] sm:$0xff]
    %1671 = vmatprep.subr.mxu0 %v1638
    %1672 = vmatpush1.msra.mxu0 %v1637
    %1673 = vmatprep.subr.mxu0 %v1636
    %1674 = vmatpush1.msra.mxu0 %v1635
    %1675 = vmatprep.subr.mxu0 %v1634
    %1676 = vmatpush1.msra.mxu0 %v1633
    %1677 = vmatprep.subr.mxu0 %v1632
    %1678 = vmatpush1.msra.mxu0 %v1631
    %1679 = vmatprep.subr.mxu0 %v1630
    %1680 = vmatpush1.msra.mxu0 %v1629
    %1681 = vmatprep.subr.mxu0 %v1628
    %1682 = vmatpush1.msra.mxu0 %v1627
    %1683 = vmatprep.subr.mxu0 %v1626
    %1684 = vmatpush1.msra.mxu0 %v1625
    %1685 = vmatprep.subr.mxu0 %v1624
    %1686 = vmatpush1.msra.mxu0 %v1623
    %1687 = vmatprep.subr.mxu0 %v1622
    %1688 = vmatpush1.msra.mxu0 %v1621
    %1689 = vmatprep.subr.mxu0 %v1620
    %1690 = vmatpush1.msra.mxu0 %v1619
    %1691 = vmatprep.subr.mxu0 %v1618
    %1692 = vmatpush1.msra.mxu0 %v1617
    %1693 = vmatprep.subr.mxu0 %v1616
    %1694 = vmatpush1.msra.mxu0 %v1615
    %1695 = vmatprep.subr.mxu0 %v1614
    %1696 = vmatpush1.msra.mxu0 %v1613
    %1697 = vmatprep.subr.mxu0 %v1612
    %1698 = vmatpush1.msra.mxu0 %v1611
    %1699 = vmatprep.subr.mxu0 %v1610
    %1700 = vmatpush1.msra.mxu0 %v1609
    %1701 = vmatprep.subr.mxu0 %v1608
    %1702 = vmatpush1.msra.mxu0 %v1607
    %1703 = vmatprep.subr.mxu0 %v1670
    %1704 = vmatpush2.msra.mxu0 %v1669
    %1705 = vmatprep.subr.mxu0 %v1668
    %1706 = vmatpush2.msra.mxu0 %v1667
    %1707 = vmatprep.subr.mxu0 %v1666
    %1708 = vmatpush2.msra.mxu0 %v1665
    %1709 = vmatprep.subr.mxu0 %v1664
    %1710 = vmatpush2.msra.mxu0 %v1663
    %1711 = vmatprep.subr.mxu0 %v1662
    %1712 = vmatpush2.msra.mxu0 %v1661
    %1713 = vmatprep.subr.mxu0 %v1660
    %1714 = vmatpush2.msra.mxu0 %v1659
    %1715 = vmatprep.subr.mxu0 %v1658
    %1716 = vmatpush2.msra.mxu0 %v1657
    %1717 = vmatprep.subr.mxu0 %v1656
    %1718 = vmatpush2.msra.mxu0 %v1655
    %1719 = vmatprep.subr.mxu0 %v1654
    %1720 = vmatpush2.msra.mxu0 %v1653
    %1721 = vmatprep.subr.mxu0 %v1652
    %1722 = vmatpush2.msra.mxu0 %v1651
    %1723 = vmatprep.subr.mxu0 %v1650
    %1724 = vmatpush2.msra.mxu0 %v1649
    %1725 = vmatprep.subr.mxu0 %v1648
    %1726 = vmatpush2.msra.mxu0 %v1647
    %1727 = vmatprep.subr.mxu0 %v1646
    %1728 = vmatpush2.msra.mxu0 %v1645
    %1729 = vmatprep.subr.mxu0 %v1644
    %1730 = vmatpush2.msra.mxu0 %v1643
    %1731 = vmatprep.subr.mxu0 %v1642
    %1732 = vmatpush2.msra.mxu0 %v1641
    %1733 = vmatprep.subr.mxu0 %v1640
    %1734 = vmatpush2.msra.mxu0 %v1639
    %1735 = vmatprep.mubr.f32.mxu0 %v1605
    %1736 = vmatmul.mubr.f32.gmra.mxu0 %v1604
    %v1737 = vpop.f32.mrf.mxu0
    %v1738 = vadd.f32 0.0, %v1737
    %v1739 = vpop.f32.mrf.mxu0
    %v1740 = vadd.f32 0.0, %v1739
    %1741 = vdwg.mxu0
    %s1742 = scalar_lea.vmem %s14, 1024
    %v1743 = vld [vmem:[%s1742] sm:$0xff]
    %v1744 = vld [vmem:[%s1742 + $0x8] sm:$0xff]
    %v1745 = vld [vmem:[%s1742 + $0x10] sm:$0xff]
    %v1746 = vld [vmem:[%s1742 + $0x18] sm:$0xff]
    %v1747 = vld [vmem:[%s1742 + $0x20] sm:$0xff]
    %v1748 = vld [vmem:[%s1742 + $0x28] sm:$0xff]
    %v1749 = vld [vmem:[%s1742 + $0x30] sm:$0xff]
    %v1750 = vld [vmem:[%s1742 + $0x38] sm:$0xff]
    %v1751 = vld [vmem:[%s1742 + $0x40] sm:$0xff]
    %v1752 = vld [vmem:[%s1742 + $0x48] sm:$0xff]
    %v1753 = vld [vmem:[%s1742 + $0x50] sm:$0xff]
    %v1754 = vld [vmem:[%s1742 + $0x58] sm:$0xff]
    %v1755 = vld [vmem:[%s1742 + $0x60] sm:$0xff]
    %v1756 = vld [vmem:[%s1742 + $0x68] sm:$0xff]
    %v1757 = vld [vmem:[%s1742 + $0x70] sm:$0xff]
    %v1758 = vld [vmem:[%s1742 + $0x78] sm:$0xff]
    %v1759 = vld [vmem:[%s1742 + $0x80] sm:$0xff]
    %v1760 = vld [vmem:[%s1742 + $0x88] sm:$0xff]
    %v1761 = vld [vmem:[%s1742 + $0x90] sm:$0xff]
    %v1762 = vld [vmem:[%s1742 + $0x98] sm:$0xff]
    %v1763 = vld [vmem:[%s1742 + $0xa0] sm:$0xff]
    %v1764 = vld [vmem:[%s1742 + $0xa8] sm:$0xff]
    %v1765 = vld [vmem:[%s1742 + $0xb0] sm:$0xff]
    %v1766 = vld [vmem:[%s1742 + $0xb8] sm:$0xff]
    %v1767 = vld [vmem:[%s1742 + $0xc0] sm:$0xff]
    %v1768 = vld [vmem:[%s1742 + $0xc8] sm:$0xff]
    %v1769 = vld [vmem:[%s1742 + $0xd0] sm:$0xff]
    %v1770 = vld [vmem:[%s1742 + $0xd8] sm:$0xff]
    %v1771 = vld [vmem:[%s1742 + $0xe0] sm:$0xff]
    %v1772 = vld [vmem:[%s1742 + $0xe8] sm:$0xff]
    %v1773 = vld [vmem:[%s1742 + $0xf0] sm:$0xff]
    %v1774 = vld [vmem:[%s1742 + $0xf8] sm:$0xff]
    %v1775 = vld [vmem:[%s1742 + $0x100] sm:$0xff]
    %v1776 = vld [vmem:[%s1742 + $0x108] sm:$0xff]
    %v1777 = vld [vmem:[%s1742 + $0x110] sm:$0xff]
    %v1778 = vld [vmem:[%s1742 + $0x118] sm:$0xff]
    %v1779 = vld [vmem:[%s1742 + $0x120] sm:$0xff]
    %v1780 = vld [vmem:[%s1742 + $0x128] sm:$0xff]
    %v1781 = vld [vmem:[%s1742 + $0x130] sm:$0xff]
    %v1782 = vld [vmem:[%s1742 + $0x138] sm:$0xff]
    %v1783 = vld [vmem:[%s1742 + $0x140] sm:$0xff]
    %v1784 = vld [vmem:[%s1742 + $0x148] sm:$0xff]
    %v1785 = vld [vmem:[%s1742 + $0x150] sm:$0xff]
    %v1786 = vld [vmem:[%s1742 + $0x158] sm:$0xff]
    %v1787 = vld [vmem:[%s1742 + $0x160] sm:$0xff]
    %v1788 = vld [vmem:[%s1742 + $0x168] sm:$0xff]
    %v1789 = vld [vmem:[%s1742 + $0x170] sm:$0xff]
    %v1790 = vld [vmem:[%s1742 + $0x178] sm:$0xff]
    %v1791 = vld [vmem:[%s1742 + $0x180] sm:$0xff]
    %v1792 = vld [vmem:[%s1742 + $0x188] sm:$0xff]
    %v1793 = vld [vmem:[%s1742 + $0x190] sm:$0xff]
    %v1794 = vld [vmem:[%s1742 + $0x198] sm:$0xff]
    %v1795 = vld [vmem:[%s1742 + $0x1a0] sm:$0xff]
    %v1796 = vld [vmem:[%s1742 + $0x1a8] sm:$0xff]
    %v1797 = vld [vmem:[%s1742 + $0x1b0] sm:$0xff]
    %v1798 = vld [vmem:[%s1742 + $0x1b8] sm:$0xff]
    %v1799 = vld [vmem:[%s1742 + $0x1c0] sm:$0xff]
    %v1800 = vld [vmem:[%s1742 + $0x1c8] sm:$0xff]
    %v1801 = vld [vmem:[%s1742 + $0x1d0] sm:$0xff]
    %v1802 = vld [vmem:[%s1742 + $0x1d8] sm:$0xff]
    %v1803 = vld [vmem:[%s1742 + $0x1e0] sm:$0xff]
    %v1804 = vld [vmem:[%s1742 + $0x1e8] sm:$0xff]
    %v1805 = vld [vmem:[%s1742 + $0x1f0] sm:$0xff]
    %v1806 = vld [vmem:[%s1742 + $0x1f8] sm:$0xff]
    %1807 = vmatprep.subr.mxu0 %v1774
    %1808 = vmatpush1.msra.mxu0 %v1773
    %1809 = vmatprep.subr.mxu0 %v1772
    %1810 = vmatpush1.msra.mxu0 %v1771
    %1811 = vmatprep.subr.mxu0 %v1770
    %1812 = vmatpush1.msra.mxu0 %v1769
    %1813 = vmatprep.subr.mxu0 %v1768
    %1814 = vmatpush1.msra.mxu0 %v1767
    %1815 = vmatprep.subr.mxu0 %v1766
    %1816 = vmatpush1.msra.mxu0 %v1765
    %1817 = vmatprep.subr.mxu0 %v1764
    %1818 = vmatpush1.msra.mxu0 %v1763
    %1819 = vmatprep.subr.mxu0 %v1762
    %1820 = vmatpush1.msra.mxu0 %v1761
    %1821 = vmatprep.subr.mxu0 %v1760
    %1822 = vmatpush1.msra.mxu0 %v1759
    %1823 = vmatprep.subr.mxu0 %v1758
    %1824 = vmatpush1.msra.mxu0 %v1757
    %1825 = vmatprep.subr.mxu0 %v1756
    %1826 = vmatpush1.msra.mxu0 %v1755
    %1827 = vmatprep.subr.mxu0 %v1754
    %1828 = vmatpush1.msra.mxu0 %v1753
    %1829 = vmatprep.subr.mxu0 %v1752
    %1830 = vmatpush1.msra.mxu0 %v1751
    %1831 = vmatprep.subr.mxu0 %v1750
    %1832 = vmatpush1.msra.mxu0 %v1749
    %1833 = vmatprep.subr.mxu0 %v1748
    %1834 = vmatpush1.msra.mxu0 %v1747
    %1835 = vmatprep.subr.mxu0 %v1746
    %1836 = vmatpush1.msra.mxu0 %v1745
    %1837 = vmatprep.subr.mxu0 %v1744
    %1838 = vmatpush1.msra.mxu0 %v1743
    %1839 = vmatprep.subr.mxu0 %v1806
    %1840 = vmatpush2.msra.mxu0 %v1805
    %1841 = vmatprep.subr.mxu0 %v1804
    %1842 = vmatpush2.msra.mxu0 %v1803
    %1843 = vmatprep.subr.mxu0 %v1802
    %1844 = vmatpush2.msra.mxu0 %v1801
    %1845 = vmatprep.subr.mxu0 %v1800
    %1846 = vmatpush2.msra.mxu0 %v1799
    %1847 = vmatprep.subr.mxu0 %v1798
    %1848 = vmatpush2.msra.mxu0 %v1797
    %1849 = vmatprep.subr.mxu0 %v1796
    %1850 = vmatpush2.msra.mxu0 %v1795
    %1851 = vmatprep.subr.mxu0 %v1794
    %1852 = vmatpush2.msra.mxu0 %v1793
    %1853 = vmatprep.subr.mxu0 %v1792
    %1854 = vmatpush2.msra.mxu0 %v1791
    %1855 = vmatprep.subr.mxu0 %v1790
    %1856 = vmatpush2.msra.mxu0 %v1789
    %1857 = vmatprep.subr.mxu0 %v1788
    %1858 = vmatpush2.msra.mxu0 %v1787
    %1859 = vmatprep.subr.mxu0 %v1786
    %1860 = vmatpush2.msra.mxu0 %v1785
    %1861 = vmatprep.subr.mxu0 %v1784
    %1862 = vmatpush2.msra.mxu0 %v1783
    %1863 = vmatprep.subr.mxu0 %v1782
    %1864 = vmatpush2.msra.mxu0 %v1781
    %1865 = vmatprep.subr.mxu0 %v1780
    %1866 = vmatpush2.msra.mxu0 %v1779
    %1867 = vmatprep.subr.mxu0 %v1778
    %1868 = vmatpush2.msra.mxu0 %v1777
    %1869 = vmatprep.subr.mxu0 %v1776
    %1870 = vmatpush2.msra.mxu0 %v1775
    %1871 = vmatprep.mubr.f32.mxu0 %v1605
    %1872 = vmatmul.mubr.f32.gmra.mxu0 %v1604
    %v1873 = vpop.f32.mrf.mxu0
    %v1874 = vadd.f32 0.0, %v1873
    %v1875 = vpop.f32.mrf.mxu0
    %v1876 = vadd.f32 0.0, %v1875
    %1877 = vdwg.mxu0
    %v1878 = vxor.u32 %v1738, 2147483648
    %v1879 = vxor.u32 %v1740, 2147483648
    %v1880 = vmul.f32 %v1878, 1.442695
    %v1881 = vpow.pop %v1880
    %v1882 = vmul.f32 %v1879, 1.442695
    %v1883 = vpow.pop %v1882
    %v1884 = vadd.f32 %v1881, 1.0
    %v1885 = vadd.f32 %v1883, 1.0
    %v1886 = vrcp.pop %v1884
    %v1887 = vmul.f32 1.0, %v1886
    %v1888 = vrcp.pop %v1885
    %v1889 = vmul.f32 1.0, %v1888
    %v1890 = vtanh.pop %v1874
    %v1891 = vtanh.pop %v1876
    %v1892 = vmul.f32 %v1887, %v1890
    %v1893 = vmul.f32 %v1889, %v1891
    %s1894 = scalar_lea.vmem %s15, 960
    %v1895 = vld [vmem:[%s1894] sm:$0xff]
    %v1896 = vld [vmem:[%s1894 + $0x8] sm:$0xff]
    %v1897 = vld [vmem:[%s1894 + $0x10] sm:$0xff]
    %v1898 = vld [vmem:[%s1894 + $0x18] sm:$0xff]
    %v1899 = vld [vmem:[%s1894 + $0x20] sm:$0xff]
    %v1900 = vld [vmem:[%s1894 + $0x28] sm:$0xff]
    %v1901 = vld [vmem:[%s1894 + $0x30] sm:$0xff]
    %v1902 = vld [vmem:[%s1894 + $0x38] sm:$0xff]
    %v1903 = vld [vmem:[%s1894 + $0x40] sm:$0xff]
    %v1904 = vld [vmem:[%s1894 + $0x48] sm:$0xff]
    %v1905 = vld [vmem:[%s1894 + $0x50] sm:$0xff]
    %v1906 = vld [vmem:[%s1894 + $0x58] sm:$0xff]
    %v1907 = vld [vmem:[%s1894 + $0x60] sm:$0xff]
    %v1908 = vld [vmem:[%s1894 + $0x68] sm:$0xff]
    %v1909 = vld [vmem:[%s1894 + $0x70] sm:$0xff]
    %v1910 = vld [vmem:[%s1894 + $0x78] sm:$0xff]
    %v1911 = vld [vmem:[%s1894 + $0x80] sm:$0xff]
    %v1912 = vld [vmem:[%s1894 + $0x88] sm:$0xff]
    %v1913 = vld [vmem:[%s1894 + $0x90] sm:$0xff]
    %v1914 = vld [vmem:[%s1894 + $0x98] sm:$0xff]
    %v1915 = vld [vmem:[%s1894 + $0xa0] sm:$0xff]
    %v1916 = vld [vmem:[%s1894 + $0xa8] sm:$0xff]
    %v1917 = vld [vmem:[%s1894 + $0xb0] sm:$0xff]
    %v1918 = vld [vmem:[%s1894 + $0xb8] sm:$0xff]
    %v1919 = vld [vmem:[%s1894 + $0xc0] sm:$0xff]
    %v1920 = vld [vmem:[%s1894 + $0xc8] sm:$0xff]
    %v1921 = vld [vmem:[%s1894 + $0xd0] sm:$0xff]
    %v1922 = vld [vmem:[%s1894 + $0xd8] sm:$0xff]
    %v1923 = vld [vmem:[%s1894 + $0xe0] sm:$0xff]
    %v1924 = vld [vmem:[%s1894 + $0xe8] sm:$0xff]
    %v1925 = vld [vmem:[%s1894 + $0xf0] sm:$0xff]
    %v1926 = vld [vmem:[%s1894 + $0xf8] sm:$0xff]
    %v1927 = vld [vmem:[%s1894 + $0x100] sm:$0xff]
    %v1928 = vld [vmem:[%s1894 + $0x108] sm:$0xff]
    %v1929 = vld [vmem:[%s1894 + $0x110] sm:$0xff]
    %v1930 = vld [vmem:[%s1894 + $0x118] sm:$0xff]
    %v1931 = vld [vmem:[%s1894 + $0x120] sm:$0xff]
    %v1932 = vld [vmem:[%s1894 + $0x128] sm:$0xff]
    %v1933 = vld [vmem:[%s1894 + $0x130] sm:$0xff]
    %v1934 = vld [vmem:[%s1894 + $0x138] sm:$0xff]
    %v1935 = vld [vmem:[%s1894 + $0x140] sm:$0xff]
    %v1936 = vld [vmem:[%s1894 + $0x148] sm:$0xff]
    %v1937 = vld [vmem:[%s1894 + $0x150] sm:$0xff]
    %v1938 = vld [vmem:[%s1894 + $0x158] sm:$0xff]
    %v1939 = vld [vmem:[%s1894 + $0x160] sm:$0xff]
    %v1940 = vld [vmem:[%s1894 + $0x168] sm:$0xff]
    %v1941 = vld [vmem:[%s1894 + $0x170] sm:$0xff]
    %v1942 = vld [vmem:[%s1894 + $0x178] sm:$0xff]
    %v1943 = vld [vmem:[%s1894 + $0x180] sm:$0xff]
    %v1944 = vld [vmem:[%s1894 + $0x188] sm:$0xff]
    %v1945 = vld [vmem:[%s1894 + $0x190] sm:$0xff]
    %v1946 = vld [vmem:[%s1894 + $0x198] sm:$0xff]
    %v1947 = vld [vmem:[%s1894 + $0x1a0] sm:$0xff]
    %v1948 = vld [vmem:[%s1894 + $0x1a8] sm:$0xff]
    %v1949 = vld [vmem:[%s1894 + $0x1b0] sm:$0xff]
    %v1950 = vld [vmem:[%s1894 + $0x1b8] sm:$0xff]
    %v1951 = vld [vmem:[%s1894 + $0x1c0] sm:$0xff]
    %v1952 = vld [vmem:[%s1894 + $0x1c8] sm:$0xff]
    %v1953 = vld [vmem:[%s1894 + $0x1d0] sm:$0xff]
    %v1954 = vld [vmem:[%s1894 + $0x1d8] sm:$0xff]
    %s1955 = scalar_lea.vmem %s16, 6
    %v1956 = vld [vmem:[%s1955] sm:$0x7]
    %v1958 = vlaneseq
    %v1959 = vshrl.u32 %v1958, 7
    %v1960 = vsub.s32 0, %v1959
    %v1961 = vrot.slane %v1956, %v1960
    %v1962 = vlaneseq
    %v1963 = vshrl.u32 %v1962, 7
    %v1964 = vsub.s32 1, %v1963
    %v1965 = vrot.slane %v1956, %v1964
    %v1966 = vlaneseq
    %v1967 = vshrl.u32 %v1966, 7
    %v1968 = vsub.s32 2, %v1967
    %v1969 = vrot.slane %v1956, %v1968
    %v1974 = vsel %vm177, %v1893, 0
    %1976 = vmatprep.subr.mxu0 %v1941
    %1977 = vmatpush1.msra.mxu0 %v1940
    %1978 = vmatprep.subr.mxu0 %v1938
    %1979 = vmatpush1.msra.mxu0 %v1937
    %1980 = vmatprep.subr.mxu0 %v1935
    %1981 = vmatpush1.msra.mxu0 %v1934
    %1982 = vmatprep.subr.mxu0 %v1932
    %1983 = vmatpush1.msra.mxu0 %v1931
    %1984 = vmatprep.subr.mxu0 %v1929
    %1985 = vmatpush1.msra.mxu0 %v1928
    %1986 = vmatprep.subr.mxu0 %v1926
    %1987 = vmatpush1.msra.mxu0 %v1925
    %1988 = vmatprep.subr.mxu0 %v1923
    %1989 = vmatpush1.msra.mxu0 %v1922
    %1990 = vmatprep.subr.mxu0 %v1920
    %1991 = vmatpush1.msra.mxu0 %v1919
    %1992 = vmatprep.subr.mxu0 %v1917
    %1993 = vmatpush1.msra.mxu0 %v1916
    %1994 = vmatprep.subr.mxu0 %v1914
    %1995 = vmatpush1.msra.mxu0 %v1913
    %1996 = vmatprep.subr.mxu0 %v1911
    %1997 = vmatpush1.msra.mxu0 %v1910
    %1998 = vmatprep.subr.mxu0 %v1908
    %1999 = vmatpush1.msra.mxu0 %v1907
    %2000 = vmatprep.subr.mxu0 %v1905
    %2001 = vmatpush1.msra.mxu0 %v1904
    %2002 = vmatprep.subr.mxu0 %v1902
    %2003 = vmatpush1.msra.mxu0 %v1901
    %2004 = vmatprep.subr.mxu0 %v1899
    %2005 = vmatpush1.msra.mxu0 %v1898
    %2006 = vmatprep.subr.mxu0 %v1896
    %2007 = vmatpush1.msra.mxu0 %v1895
    %2008 = vmatprep.subr.mxu0 0.0
    %2009 = vmatpush2.msra.mxu0 0.0
    %2010 = vmatprep.subr.mxu0 0.0
    %2011 = vmatpush2.msra.mxu0 0.0
    %2012 = vmatprep.subr.mxu0 0.0
    %2013 = vmatpush2.msra.mxu0 0.0
    %2014 = vmatprep.subr.mxu0 0.0
    %2015 = vmatpush2.msra.mxu0 0.0
    %2016 = vmatprep.subr.mxu0 0.0
    %2017 = vmatpush2.msra.mxu0 0.0
    %2018 = vmatprep.subr.mxu0 0.0
    %2019 = vmatpush2.msra.mxu0 0.0
    %2020 = vmatprep.subr.mxu0 0.0
    %2021 = vmatpush2.msra.mxu0 0.0
    %2022 = vmatprep.subr.mxu0 0.0
    %2023 = vmatpush2.msra.mxu0 0.0
    %2024 = vmatprep.subr.mxu0 0.0
    %2025 = vmatpush2.msra.mxu0 0.0
    %2026 = vmatprep.subr.mxu0 0.0
    %2027 = vmatpush2.msra.mxu0 0.0
    %2028 = vmatprep.subr.mxu0 0.0
    %2029 = vmatpush2.msra.mxu0 0.0
    %2030 = vmatprep.subr.mxu0 0.0
    %2031 = vmatpush2.msra.mxu0 0.0
    %2032 = vmatprep.subr.mxu0 %v1953
    %2033 = vmatpush2.msra.mxu0 %v1952
    %2034 = vmatprep.subr.mxu0 %v1950
    %2035 = vmatpush2.msra.mxu0 %v1949
    %2036 = vmatprep.subr.mxu0 %v1947
    %2037 = vmatpush2.msra.mxu0 %v1946
    %2038 = vmatprep.subr.mxu0 %v1944
    %2039 = vmatpush2.msra.mxu0 %v1943
    %2040 = vmatprep.mubr.f32.mxu0 %v1974
    %2041 = vmatmul.mubr.f32.gmra.mxu0 %v1892
    %v2042 = vpop.f32.mrf.mxu0
    %v2043 = vadd.f32 %v1961, %v2042
    %v2044 = vpop.f32.mrf.mxu0
    %v2045 = vadd.f32 %v1965, %v2044
    %2046 = vdwg.mxu0
    %2047 = vmatprep.subr.mxu0 0.0
    %2048 = vmatpush1.msra.mxu0 %v1942
    %2049 = vmatprep.subr.mxu0 0.0
    %2050 = vmatpush1.msra.mxu0 %v1939
    %2051 = vmatprep.subr.mxu0 0.0
    %2052 = vmatpush1.msra.mxu0 %v1936
    %2053 = vmatprep.subr.mxu0 0.0
    %2054 = vmatpush1.msra.mxu0 %v1933
    %2055 = vmatprep.subr.mxu0 0.0
    %2056 = vmatpush1.msra.mxu0 %v1930
    %2057 = vmatprep.subr.mxu0 0.0
    %2058 = vmatpush1.msra.mxu0 %v1927
    %2059 = vmatprep.subr.mxu0 0.0
    %2060 = vmatpush1.msra.mxu0 %v1924
    %2061 = vmatprep.subr.mxu0 0.0
    %2062 = vmatpush1.msra.mxu0 %v1921
    %2063 = vmatprep.subr.mxu0 0.0
    %2064 = vmatpush1.msra.mxu0 %v1918
    %2065 = vmatprep.subr.mxu0 0.0
    %2066 = vmatpush1.msra.mxu0 %v1915
    %2067 = vmatprep.subr.mxu0 0.0
    %2068 = vmatpush1.msra.mxu0 %v1912
    %2069 = vmatprep.subr.mxu0 0.0
    %2070 = vmatpush1.msra.mxu0 %v1909
    %2071 = vmatprep.subr.mxu0 0.0
    %2072 = vmatpush1.msra.mxu0 %v1906
    %2073 = vmatprep.subr.mxu0 0.0
    %2074 = vmatpush1.msra.mxu0 %v1903
    %2075 = vmatprep.subr.mxu0 0.0
    %2076 = vmatpush1.msra.mxu0 %v1900
    %2077 = vmatprep.subr.mxu0 0.0
    %2078 = vmatpush1.msra.mxu0 %v1897
    %2079 = vmatprep.subr.mxu0 0.0
    %2080 = vmatpush2.msra.mxu0 0.0
    %2081 = vmatprep.subr.mxu0 0.0
    %2082 = vmatpush2.msra.mxu0 0.0
    %2083 = vmatprep.subr.mxu0 0.0
    %2084 = vmatpush2.msra.mxu0 0.0
    %2085 = vmatprep.subr.mxu0 0.0
    %2086 = vmatpush2.msra.mxu0 0.0
    %2087 = vmatprep.subr.mxu0 0.0
    %2088 = vmatpush2.msra.mxu0 0.0
    %2089 = vmatprep.subr.mxu0 0.0
    %2090 = vmatpush2.msra.mxu0 0.0
    %2091 = vmatprep.subr.mxu0 0.0
    %2092 = vmatpush2.msra.mxu0 0.0
    %2093 = vmatprep.subr.mxu0 0.0
    %2094 = vmatpush2.msra.mxu0 0.0
    %2095 = vmatprep.subr.mxu0 0.0
    %2096 = vmatpush2.msra.mxu0 0.0
    %2097 = vmatprep.subr.mxu0 0.0
    %2098 = vmatpush2.msra.mxu0 0.0
    %2099 = vmatprep.subr.mxu0 0.0
    %2100 = vmatpush2.msra.mxu0 0.0
    %2101 = vmatprep.subr.mxu0 0.0
    %2102 = vmatpush2.msra.mxu0 0.0
    %2103 = vmatprep.subr.mxu0 0.0
    %2104 = vmatpush2.msra.mxu0 %v1954
    %2105 = vmatprep.subr.mxu0 0.0
    %2106 = vmatpush2.msra.mxu0 %v1951
    %2107 = vmatprep.subr.mxu0 0.0
    %2108 = vmatpush2.msra.mxu0 %v1948
    %2109 = vmatprep.subr.mxu0 0.0
    %2110 = vmatpush2.msra.mxu0 %v1945
    %2111 = vmatprep.mubr.f32.mxu0 %v1974
    %2112 = vmatmul.mubr.f32.gmra.mxu0 %v1892
    %v2113 = vpop.f32.mrf.mxu0
    %v2114 = vadd.f32 %v1969, %v2113
    %v2115 = vpop.f32.mrf.mxu0
    %2116 = vdwg.mxu0
    %v2117 = vmul.f32 %v2043, 0.4
    %v2118 = vmul.f32 %v2045, 0.4
    %v2119 = vmul.f32 %v2114, 0.4
    %v2120 = vmax.f32 %v2043, %v2117
    %v2121 = vmax.f32 %v2045, %v2118
    %v2122 = vmax.f32 %v2114, %v2119
    %v2123 = vadd.f32 %v1599, %v2120
    %v2124 = vadd.f32 %v1600, %v2121
    %v2125 = vadd.f32 %v1601, %v2122
    %v2126 = vmul.f32 %v2123, 0.70710677
    %v2127 = vmul.f32 %v2124, %v1068
    %v2128 = vmul.f32 %v2125, 1.0
    %2129 = vst [vmem:[#allocation2] sm:$0xff] %v2126
    %2130 = vst.msk [vmem:[#allocation2 + $0x8] sm:$0xff] %vm177, %v2127
    %v2131 = vld [vmem:[#allocation2] sm:$0xff]
    %v2132 = vld [vmem:[#allocation2 + $0x8] sm:$0xff]
    %s2133 = scalar_lea.vmem %s13, 1536
    %v2134 = vld [vmem:[%s2133] sm:$0xff]
    %v2135 = vld [vmem:[%s2133 + $0x8] sm:$0xff]
    %v2136 = vld [vmem:[%s2133 + $0x10] sm:$0xff]
    %v2137 = vld [vmem:[%s2133 + $0x18] sm:$0xff]
    %v2138 = vld [vmem:[%s2133 + $0x20] sm:$0xff]
    %v2139 = vld [vmem:[%s2133 + $0x28] sm:$0xff]
    %v2140 = vld [vmem:[%s2133 + $0x30] sm:$0xff]
    %v2141 = vld [vmem:[%s2133 + $0x38] sm:$0xff]
    %v2142 = vld [vmem:[%s2133 + $0x40] sm:$0xff]
    %v2143 = vld [vmem:[%s2133 + $0x48] sm:$0xff]
    %v2144 = vld [vmem:[%s2133 + $0x50] sm:$0xff]
    %v2145 = vld [vmem:[%s2133 + $0x58] sm:$0xff]
    %v2146 = vld [vmem:[%s2133 + $0x60] sm:$0xff]
    %v2147 = vld [vmem:[%s2133 + $0x68] sm:$0xff]
    %v2148 = vld [vmem:[%s2133 + $0x70] sm:$0xff]
    %v2149 = vld [vmem:[%s2133 + $0x78] sm:$0xff]
    %v2150 = vld [vmem:[%s2133 + $0x80] sm:$0xff]
    %v2151 = vld [vmem:[%s2133 + $0x88] sm:$0xff]
    %v2152 = vld [vmem:[%s2133 + $0x90] sm:$0xff]
    %v2153 = vld [vmem:[%s2133 + $0x98] sm:$0xff]
    %v2154 = vld [vmem:[%s2133 + $0xa0] sm:$0xff]
    %v2155 = vld [vmem:[%s2133 + $0xa8] sm:$0xff]
    %v2156 = vld [vmem:[%s2133 + $0xb0] sm:$0xff]
    %v2157 = vld [vmem:[%s2133 + $0xb8] sm:$0xff]
    %v2158 = vld [vmem:[%s2133 + $0xc0] sm:$0xff]
    %v2159 = vld [vmem:[%s2133 + $0xc8] sm:$0xff]
    %v2160 = vld [vmem:[%s2133 + $0xd0] sm:$0xff]
    %v2161 = vld [vmem:[%s2133 + $0xd8] sm:$0xff]
    %v2162 = vld [vmem:[%s2133 + $0xe0] sm:$0xff]
    %v2163 = vld [vmem:[%s2133 + $0xe8] sm:$0xff]
    %v2164 = vld [vmem:[%s2133 + $0xf0] sm:$0xff]
    %v2165 = vld [vmem:[%s2133 + $0xf8] sm:$0xff]
    %v2166 = vld [vmem:[%s2133 + $0x100] sm:$0xff]
    %v2167 = vld [vmem:[%s2133 + $0x108] sm:$0xff]
    %v2168 = vld [vmem:[%s2133 + $0x110] sm:$0xff]
    %v2169 = vld [vmem:[%s2133 + $0x118] sm:$0xff]
    %v2170 = vld [vmem:[%s2133 + $0x120] sm:$0xff]
    %v2171 = vld [vmem:[%s2133 + $0x128] sm:$0xff]
    %v2172 = vld [vmem:[%s2133 + $0x130] sm:$0xff]
    %v2173 = vld [vmem:[%s2133 + $0x138] sm:$0xff]
    %v2174 = vld [vmem:[%s2133 + $0x140] sm:$0xff]
    %v2175 = vld [vmem:[%s2133 + $0x148] sm:$0xff]
    %v2176 = vld [vmem:[%s2133 + $0x150] sm:$0xff]
    %v2177 = vld [vmem:[%s2133 + $0x158] sm:$0xff]
    %v2178 = vld [vmem:[%s2133 + $0x160] sm:$0xff]
    %v2179 = vld [vmem:[%s2133 + $0x168] sm:$0xff]
    %v2180 = vld [vmem:[%s2133 + $0x170] sm:$0xff]
    %v2181 = vld [vmem:[%s2133 + $0x178] sm:$0xff]
    %v2182 = vld [vmem:[%s2133 + $0x180] sm:$0xff]
    %v2183 = vld [vmem:[%s2133 + $0x188] sm:$0xff]
    %v2184 = vld [vmem:[%s2133 + $0x190] sm:$0xff]
    %v2185 = vld [vmem:[%s2133 + $0x198] sm:$0xff]
    %v2186 = vld [vmem:[%s2133 + $0x1a0] sm:$0xff]
    %v2187 = vld [vmem:[%s2133 + $0x1a8] sm:$0xff]
    %v2188 = vld [vmem:[%s2133 + $0x1b0] sm:$0xff]
    %v2189 = vld [vmem:[%s2133 + $0x1b8] sm:$0xff]
    %v2190 = vld [vmem:[%s2133 + $0x1c0] sm:$0xff]
    %v2191 = vld [vmem:[%s2133 + $0x1c8] sm:$0xff]
    %v2192 = vld [vmem:[%s2133 + $0x1d0] sm:$0xff]
    %v2193 = vld [vmem:[%s2133 + $0x1d8] sm:$0xff]
    %v2194 = vld [vmem:[%s2133 + $0x1e0] sm:$0xff]
    %v2195 = vld [vmem:[%s2133 + $0x1e8] sm:$0xff]
    %v2196 = vld [vmem:[%s2133 + $0x1f0] sm:$0xff]
    %v2197 = vld [vmem:[%s2133 + $0x1f8] sm:$0xff]
    %2198 = vmatprep.subr.mxu0 %v2165
    %2199 = vmatpush1.msra.mxu0 %v2164
    %2200 = vmatprep.subr.mxu0 %v2163
    %2201 = vmatpush1.msra.mxu0 %v2162
    %2202 = vmatprep.subr.mxu0 %v2161
    %2203 = vmatpush1.msra.mxu0 %v2160
    %2204 = vmatprep.subr.mxu0 %v2159
    %2205 = vmatpush1.msra.mxu0 %v2158
    %2206 = vmatprep.subr.mxu0 %v2157
    %2207 = vmatpush1.msra.mxu0 %v2156
    %2208 = vmatprep.subr.mxu0 %v2155
    %2209 = vmatpush1.msra.mxu0 %v2154
    %2210 = vmatprep.subr.mxu0 %v2153
    %2211 = vmatpush1.msra.mxu0 %v2152
    %2212 = vmatprep.subr.mxu0 %v2151
    %2213 = vmatpush1.msra.mxu0 %v2150
    %2214 = vmatprep.subr.mxu0 %v2149
    %2215 = vmatpush1.msra.mxu0 %v2148
    %2216 = vmatprep.subr.mxu0 %v2147
    %2217 = vmatpush1.msra.mxu0 %v2146
    %2218 = vmatprep.subr.mxu0 %v2145
    %2219 = vmatpush1.msra.mxu0 %v2144
    %2220 = vmatprep.subr.mxu0 %v2143
    %2221 = vmatpush1.msra.mxu0 %v2142
    %2222 = vmatprep.subr.mxu0 %v2141
    %2223 = vmatpush1.msra.mxu0 %v2140
    %2224 = vmatprep.subr.mxu0 %v2139
    %2225 = vmatpush1.msra.mxu0 %v2138
    %2226 = vmatprep.subr.mxu0 %v2137
    %2227 = vmatpush1.msra.mxu0 %v2136
    %2228 = vmatprep.subr.mxu0 %v2135
    %2229 = vmatpush1.msra.mxu0 %v2134
    %2230 = vmatprep.subr.mxu0 %v2197
    %2231 = vmatpush2.msra.mxu0 %v2196
    %2232 = vmatprep.subr.mxu0 %v2195
    %2233 = vmatpush2.msra.mxu0 %v2194
    %2234 = vmatprep.subr.mxu0 %v2193
    %2235 = vmatpush2.msra.mxu0 %v2192
    %2236 = vmatprep.subr.mxu0 %v2191
    %2237 = vmatpush2.msra.mxu0 %v2190
    %2238 = vmatprep.subr.mxu0 %v2189
    %2239 = vmatpush2.msra.mxu0 %v2188
    %2240 = vmatprep.subr.mxu0 %v2187
    %2241 = vmatpush2.msra.mxu0 %v2186
    %2242 = vmatprep.subr.mxu0 %v2185
    %2243 = vmatpush2.msra.mxu0 %v2184
    %2244 = vmatprep.subr.mxu0 %v2183
    %2245 = vmatpush2.msra.mxu0 %v2182
    %2246 = vmatprep.subr.mxu0 %v2181
    %2247 = vmatpush2.msra.mxu0 %v2180
    %2248 = vmatprep.subr.mxu0 %v2179
    %2249 = vmatpush2.msra.mxu0 %v2178
    %2250 = vmatprep.subr.mxu0 %v2177
    %2251 = vmatpush2.msra.mxu0 %v2176
    %2252 = vmatprep.subr.mxu0 %v2175
    %2253 = vmatpush2.msra.mxu0 %v2174
    %2254 = vmatprep.subr.mxu0 %v2173
    %2255 = vmatpush2.msra.mxu0 %v2172
    %2256 = vmatprep.subr.mxu0 %v2171
    %2257 = vmatpush2.msra.mxu0 %v2170
    %2258 = vmatprep.subr.mxu0 %v2169
    %2259 = vmatpush2.msra.mxu0 %v2168
    %2260 = vmatprep.subr.mxu0 %v2167
    %2261 = vmatpush2.msra.mxu0 %v2166
    %2262 = vmatprep.mubr.f32.mxu0 %v2132
    %2263 = vmatmul.mubr.f32.gmra.mxu0 %v2131
    %v2264 = vpop.f32.mrf.mxu0
    %v2265 = vadd.f32 0.0, %v2264
    %v2266 = vpop.f32.mrf.mxu0
    %v2267 = vadd.f32 0.0, %v2266
    %2268 = vdwg.mxu0
    %s2269 = scalar_lea.vmem %s14, 1536
    %v2270 = vld [vmem:[%s2269] sm:$0xff]
    %v2271 = vld [vmem:[%s2269 + $0x8] sm:$0xff]
    %v2272 = vld [vmem:[%s2269 + $0x10] sm:$0xff]
    %v2273 = vld [vmem:[%s2269 + $0x18] sm:$0xff]
    %v2274 = vld [vmem:[%s2269 + $0x20] sm:$0xff]
    %v2275 = vld [vmem:[%s2269 + $0x28] sm:$0xff]
    %v2276 = vld [vmem:[%s2269 + $0x30] sm:$0xff]
    %v2277 = vld [vmem:[%s2269 + $0x38] sm:$0xff]
    %v2278 = vld [vmem:[%s2269 + $0x40] sm:$0xff]
    %v2279 = vld [vmem:[%s2269 + $0x48] sm:$0xff]
    %v2280 = vld [vmem:[%s2269 + $0x50] sm:$0xff]
    %v2281 = vld [vmem:[%s2269 + $0x58] sm:$0xff]
    %v2282 = vld [vmem:[%s2269 + $0x60] sm:$0xff]
    %v2283 = vld [vmem:[%s2269 + $0x68] sm:$0xff]
    %v2284 = vld [vmem:[%s2269 + $0x70] sm:$0xff]
    %v2285 = vld [vmem:[%s2269 + $0x78] sm:$0xff]
    %v2286 = vld [vmem:[%s2269 + $0x80] sm:$0xff]
    %v2287 = vld [vmem:[%s2269 + $0x88] sm:$0xff]
    %v2288 = vld [vmem:[%s2269 + $0x90] sm:$0xff]
    %v2289 = vld [vmem:[%s2269 + $0x98] sm:$0xff]
    %v2290 = vld [vmem:[%s2269 + $0xa0] sm:$0xff]
    %v2291 = vld [vmem:[%s2269 + $0xa8] sm:$0xff]
    %v2292 = vld [vmem:[%s2269 + $0xb0] sm:$0xff]
    %v2293 = vld [vmem:[%s2269 + $0xb8] sm:$0xff]
    %v2294 = vld [vmem:[%s2269 + $0xc0] sm:$0xff]
    %v2295 = vld [vmem:[%s2269 + $0xc8] sm:$0xff]
    %v2296 = vld [vmem:[%s2269 + $0xd0] sm:$0xff]
    %v2297 = vld [vmem:[%s2269 + $0xd8] sm:$0xff]
    %v2298 = vld [vmem:[%s2269 + $0xe0] sm:$0xff]
    %v2299 = vld [vmem:[%s2269 + $0xe8] sm:$0xff]
    %v2300 = vld [vmem:[%s2269 + $0xf0] sm:$0xff]
    %v2301 = vld [vmem:[%s2269 + $0xf8] sm:$0xff]
    %v2302 = vld [vmem:[%s2269 + $0x100] sm:$0xff]
    %v2303 = vld [vmem:[%s2269 + $0x108] sm:$0xff]
    %v2304 = vld [vmem:[%s2269 + $0x110] sm:$0xff]
    %v2305 = vld [vmem:[%s2269 + $0x118] sm:$0xff]
    %v2306 = vld [vmem:[%s2269 + $0x120] sm:$0xff]
    %v2307 = vld [vmem:[%s2269 + $0x128] sm:$0xff]
    %v2308 = vld [vmem:[%s2269 + $0x130] sm:$0xff]
    %v2309 = vld [vmem:[%s2269 + $0x138] sm:$0xff]
    %v2310 = vld [vmem:[%s2269 + $0x140] sm:$0xff]
    %v2311 = vld [vmem:[%s2269 + $0x148] sm:$0xff]
    %v2312 = vld [vmem:[%s2269 + $0x150] sm:$0xff]
    %v2313 = vld [vmem:[%s2269 + $0x158] sm:$0xff]
    %v2314 = vld [vmem:[%s2269 + $0x160] sm:$0xff]
    %v2315 = vld [vmem:[%s2269 + $0x168] sm:$0xff]
    %v2316 = vld [vmem:[%s2269 + $0x170] sm:$0xff]
    %v2317 = vld [vmem:[%s2269 + $0x178] sm:$0xff]
    %v2318 = vld [vmem:[%s2269 + $0x180] sm:$0xff]
    %v2319 = vld [vmem:[%s2269 + $0x188] sm:$0xff]
    %v2320 = vld [vmem:[%s2269 + $0x190] sm:$0xff]
    %v2321 = vld [vmem:[%s2269 + $0x198] sm:$0xff]
    %v2322 = vld [vmem:[%s2269 + $0x1a0] sm:$0xff]
    %v2323 = vld [vmem:[%s2269 + $0x1a8] sm:$0xff]
    %v2324 = vld [vmem:[%s2269 + $0x1b0] sm:$0xff]
    %v2325 = vld [vmem:[%s2269 + $0x1b8] sm:$0xff]
    %v2326 = vld [vmem:[%s2269 + $0x1c0] sm:$0xff]
    %v2327 = vld [vmem:[%s2269 + $0x1c8] sm:$0xff]
    %v2328 = vld [vmem:[%s2269 + $0x1d0] sm:$0xff]
    %v2329 = vld [vmem:[%s2269 + $0x1d8] sm:$0xff]
    %v2330 = vld [vmem:[%s2269 + $0x1e0] sm:$0xff]
    %v2331 = vld [vmem:[%s2269 + $0x1e8] sm:$0xff]
    %v2332 = vld [vmem:[%s2269 + $0x1f0] sm:$0xff]
    %v2333 = vld [vmem:[%s2269 + $0x1f8] sm:$0xff]
    %2334 = vmatprep.subr.mxu0 %v2301
    %2335 = vmatpush1.msra.mxu0 %v2300
    %2336 = vmatprep.subr.mxu0 %v2299
    %2337 = vmatpush1.msra.mxu0 %v2298
    %2338 = vmatprep.subr.mxu0 %v2297
    %2339 = vmatpush1.msra.mxu0 %v2296
    %2340 = vmatprep.subr.mxu0 %v2295
    %2341 = vmatpush1.msra.mxu0 %v2294
    %2342 = vmatprep.subr.mxu0 %v2293
    %2343 = vmatpush1.msra.mxu0 %v2292
    %2344 = vmatprep.subr.mxu0 %v2291
    %2345 = vmatpush1.msra.mxu0 %v2290
    %2346 = vmatprep.subr.mxu0 %v2289
    %2347 = vmatpush1.msra.mxu0 %v2288
    %2348 = vmatprep.subr.mxu0 %v2287
    %2349 = vmatpush1.msra.mxu0 %v2286
    %2350 = vmatprep.subr.mxu0 %v2285
    %2351 = vmatpush1.msra.mxu0 %v2284
    %2352 = vmatprep.subr.mxu0 %v2283
    %2353 = vmatpush1.msra.mxu0 %v2282
    %2354 = vmatprep.subr.mxu0 %v2281
    %2355 = vmatpush1.msra.mxu0 %v2280
    %2356 = vmatprep.subr.mxu0 %v2279
    %2357 = vmatpush1.msra.mxu0 %v2278
    %2358 = vmatprep.subr.mxu0 %v2277
    %2359 = vmatpush1.msra.mxu0 %v2276
    %2360 = vmatprep.subr.mxu0 %v2275
    %2361 = vmatpush1.msra.mxu0 %v2274
    %2362 = vmatprep.subr.mxu0 %v2273
    %2363 = vmatpush1.msra.mxu0 %v2272
    %2364 = vmatprep.subr.mxu0 %v2271
    %2365 = vmatpush1.msra.mxu0 %v2270
    %2366 = vmatprep.subr.mxu0 %v2333
    %2367 = vmatpush2.msra.mxu0 %v2332
    %2368 = vmatprep.subr.mxu0 %v2331
    %2369 = vmatpush2.msra.mxu0 %v2330
    %2370 = vmatprep.subr.mxu0 %v2329
    %2371 = vmatpush2.msra.mxu0 %v2328
    %2372 = vmatprep.subr.mxu0 %v2327
    %2373 = vmatpush2.msra.mxu0 %v2326
    %2374 = vmatprep.subr.mxu0 %v2325
    %2375 = vmatpush2.msra.mxu0 %v2324
    %2376 = vmatprep.subr.mxu0 %v2323
    %2377 = vmatpush2.msra.mxu0 %v2322
    %2378 = vmatprep.subr.mxu0 %v2321
    %2379 = vmatpush2.msra.mxu0 %v2320
    %2380 = vmatprep.subr.mxu0 %v2319
    %2381 = vmatpush2.msra.mxu0 %v2318
    %2382 = vmatprep.subr.mxu0 %v2317
    %2383 = vmatpush2.msra.mxu0 %v2316
    %2384 = vmatprep.subr.mxu0 %v2315
    %2385 = vmatpush2.msra.mxu0 %v2314
    %2386 = vmatprep.subr.mxu0 %v2313
    %2387 = vmatpush2.msra.mxu0 %v2312
    %2388 = vmatprep.subr.mxu0 %v2311
    %2389 = vmatpush2.msra.mxu0 %v2310
    %2390 = vmatprep.subr.mxu0 %v2309
    %2391 = vmatpush2.msra.mxu0 %v2308
    %2392 = vmatprep.subr.mxu0 %v2307
    %2393 = vmatpush2.msra.mxu0 %v2306
    %2394 = vmatprep.subr.mxu0 %v2305
    %2395 = vmatpush2.msra.mxu0 %v2304
    %2396 = vmatprep.subr.mxu0 %v2303
    %2397 = vmatpush2.msra.mxu0 %v2302
    %2398 = vmatprep.mubr.f32.mxu0 %v2132
    %2399 = vmatmul.mubr.f32.gmra.mxu0 %v2131
    %v2400 = vpop.f32.mrf.mxu0
    %v2401 = vadd.f32 0.0, %v2400
    %v2402 = vpop.f32.mrf.mxu0
    %v2403 = vadd.f32 0.0, %v2402
    %2404 = vdwg.mxu0
    %v2405 = vxor.u32 %v2265, 2147483648
    %v2406 = vxor.u32 %v2267, 2147483648
    %v2407 = vmul.f32 %v2405, 1.442695
    %v2408 = vpow.pop %v2407
    %v2409 = vmul.f32 %v2406, 1.442695
    %v2410 = vpow.pop %v2409
    %v2411 = vadd.f32 %v2408, 1.0
    %v2412 = vadd.f32 %v2410, 1.0
    %v2413 = vrcp.pop %v2411
    %v2414 = vmul.f32 1.0, %v2413
    %v2415 = vrcp.pop %v2412
    %v2416 = vmul.f32 1.0, %v2415
    %v2417 = vtanh.pop %v2401
    %v2418 = vtanh.pop %v2403
    %v2419 = vmul.f32 %v2414, %v2417
    %v2420 = vmul.f32 %v2416, %v2418
    %s2421 = scalar_lea.vmem %s15, 1440
    %v2422 = vld [vmem:[%s2421] sm:$0xff]
    %v2423 = vld [vmem:[%s2421 + $0x8] sm:$0xff]
    %v2424 = vld [vmem:[%s2421 + $0x10] sm:$0xff]
    %v2425 = vld [vmem:[%s2421 + $0x18] sm:$0xff]
    %v2426 = vld [vmem:[%s2421 + $0x20] sm:$0xff]
    %v2427 = vld [vmem:[%s2421 + $0x28] sm:$0xff]
    %v2428 = vld [vmem:[%s2421 + $0x30] sm:$0xff]
    %v2429 = vld [vmem:[%s2421 + $0x38] sm:$0xff]
    %v2430 = vld [vmem:[%s2421 + $0x40] sm:$0xff]
    %v2431 = vld [vmem:[%s2421 + $0x48] sm:$0xff]
    %v2432 = vld [vmem:[%s2421 + $0x50] sm:$0xff]
    %v2433 = vld [vmem:[%s2421 + $0x58] sm:$0xff]
    %v2434 = vld [vmem:[%s2421 + $0x60] sm:$0xff]
    %v2435 = vld [vmem:[%s2421 + $0x68] sm:$0xff]
    %v2436 = vld [vmem:[%s2421 + $0x70] sm:$0xff]
    %v2437 = vld [vmem:[%s2421 + $0x78] sm:$0xff]
    %v2438 = vld [vmem:[%s2421 + $0x80] sm:$0xff]
    %v2439 = vld [vmem:[%s2421 + $0x88] sm:$0xff]
    %v2440 = vld [vmem:[%s2421 + $0x90] sm:$0xff]
    %v2441 = vld [vmem:[%s2421 + $0x98] sm:$0xff]
    %v2442 = vld [vmem:[%s2421 + $0xa0] sm:$0xff]
    %v2443 = vld [vmem:[%s2421 + $0xa8] sm:$0xff]
    %v2444 = vld [vmem:[%s2421 + $0xb0] sm:$0xff]
    %v2445 = vld [vmem:[%s2421 + $0xb8] sm:$0xff]
    %v2446 = vld [vmem:[%s2421 + $0xc0] sm:$0xff]
    %v2447 = vld [vmem:[%s2421 + $0xc8] sm:$0xff]
    %v2448 = vld [vmem:[%s2421 + $0xd0] sm:$0xff]
    %v2449 = vld [vmem:[%s2421 + $0xd8] sm:$0xff]
    %v2450 = vld [vmem:[%s2421 + $0xe0] sm:$0xff]
    %v2451 = vld [vmem:[%s2421 + $0xe8] sm:$0xff]
    %v2452 = vld [vmem:[%s2421 + $0xf0] sm:$0xff]
    %v2453 = vld [vmem:[%s2421 + $0xf8] sm:$0xff]
    %v2454 = vld [vmem:[%s2421 + $0x100] sm:$0xff]
    %v2455 = vld [vmem:[%s2421 + $0x108] sm:$0xff]
    %v2456 = vld [vmem:[%s2421 + $0x110] sm:$0xff]
    %v2457 = vld [vmem:[%s2421 + $0x118] sm:$0xff]
    %v2458 = vld [vmem:[%s2421 + $0x120] sm:$0xff]
    %v2459 = vld [vmem:[%s2421 + $0x128] sm:$0xff]
    %v2460 = vld [vmem:[%s2421 + $0x130] sm:$0xff]
    %v2461 = vld [vmem:[%s2421 + $0x138] sm:$0xff]
    %v2462 = vld [vmem:[%s2421 + $0x140] sm:$0xff]
    %v2463 = vld [vmem:[%s2421 + $0x148] sm:$0xff]
    %v2464 = vld [vmem:[%s2421 + $0x150] sm:$0xff]
    %v2465 = vld [vmem:[%s2421 + $0x158] sm:$0xff]
    %v2466 = vld [vmem:[%s2421 + $0x160] sm:$0xff]
    %v2467 = vld [vmem:[%s2421 + $0x168] sm:$0xff]
    %v2468 = vld [vmem:[%s2421 + $0x170] sm:$0xff]
    %v2469 = vld [vmem:[%s2421 + $0x178] sm:$0xff]
    %v2470 = vld [vmem:[%s2421 + $0x180] sm:$0xff]
    %v2471 = vld [vmem:[%s2421 + $0x188] sm:$0xff]
    %v2472 = vld [vmem:[%s2421 + $0x190] sm:$0xff]
    %v2473 = vld [vmem:[%s2421 + $0x198] sm:$0xff]
    %v2474 = vld [vmem:[%s2421 + $0x1a0] sm:$0xff]
    %v2475 = vld [vmem:[%s2421 + $0x1a8] sm:$0xff]
    %v2476 = vld [vmem:[%s2421 + $0x1b0] sm:$0xff]
    %v2477 = vld [vmem:[%s2421 + $0x1b8] sm:$0xff]
    %v2478 = vld [vmem:[%s2421 + $0x1c0] sm:$0xff]
    %v2479 = vld [vmem:[%s2421 + $0x1c8] sm:$0xff]
    %v2480 = vld [vmem:[%s2421 + $0x1d0] sm:$0xff]
    %v2481 = vld [vmem:[%s2421 + $0x1d8] sm:$0xff]
    %s2482 = scalar_lea.vmem %s16, 9
    %v2483 = vld [vmem:[%s2482] sm:$0x7]
    %v2485 = vlaneseq
    %v2486 = vshrl.u32 %v2485, 7
    %v2487 = vsub.s32 0, %v2486
    %v2488 = vrot.slane %v2483, %v2487
    %v2489 = vlaneseq
    %v2490 = vshrl.u32 %v2489, 7
    %v2491 = vsub.s32 1, %v2490
    %v2492 = vrot.slane %v2483, %v2491
    %v2493 = vlaneseq
    %v2494 = vshrl.u32 %v2493, 7
    %v2495 = vsub.s32 2, %v2494
    %v2496 = vrot.slane %v2483, %v2495
    %v2501 = vsel %vm177, %v2420, 0
    %2503 = vmatprep.subr.mxu0 %v2468
    %2504 = vmatpush1.msra.mxu0 %v2467
    %2505 = vmatprep.subr.mxu0 %v2465
    %2506 = vmatpush1.msra.mxu0 %v2464
    %2507 = vmatprep.subr.mxu0 %v2462
    %2508 = vmatpush1.msra.mxu0 %v2461
    %2509 = vmatprep.subr.mxu0 %v2459
    %2510 = vmatpush1.msra.mxu0 %v2458
    %2511 = vmatprep.subr.mxu0 %v2456
    %2512 = vmatpush1.msra.mxu0 %v2455
    %2513 = vmatprep.subr.mxu0 %v2453
    %2514 = vmatpush1.msra.mxu0 %v2452
    %2515 = vmatprep.subr.mxu0 %v2450
    %2516 = vmatpush1.msra.mxu0 %v2449
    %2517 = vmatprep.subr.mxu0 %v2447
    %2518 = vmatpush1.msra.mxu0 %v2446
    %2519 = vmatprep.subr.mxu0 %v2444
    %2520 = vmatpush1.msra.mxu0 %v2443
    %2521 = vmatprep.subr.mxu0 %v2441
    %2522 = vmatpush1.msra.mxu0 %v2440
    %2523 = vmatprep.subr.mxu0 %v2438
    %2524 = vmatpush1.msra.mxu0 %v2437
    %2525 = vmatprep.subr.mxu0 %v2435
    %2526 = vmatpush1.msra.mxu0 %v2434
    %2527 = vmatprep.subr.mxu0 %v2432
    %2528 = vmatpush1.msra.mxu0 %v2431
    %2529 = vmatprep.subr.mxu0 %v2429
    %2530 = vmatpush1.msra.mxu0 %v2428
    %2531 = vmatprep.subr.mxu0 %v2426
    %2532 = vmatpush1.msra.mxu0 %v2425
    %2533 = vmatprep.subr.mxu0 %v2423
    %2534 = vmatpush1.msra.mxu0 %v2422
    %2535 = vmatprep.subr.mxu0 0.0
    %2536 = vmatpush2.msra.mxu0 0.0
    %2537 = vmatprep.subr.mxu0 0.0
    %2538 = vmatpush2.msra.mxu0 0.0
    %2539 = vmatprep.subr.mxu0 0.0
    %2540 = vmatpush2.msra.mxu0 0.0
    %2541 = vmatprep.subr.mxu0 0.0
    %2542 = vmatpush2.msra.mxu0 0.0
    %2543 = vmatprep.subr.mxu0 0.0
    %2544 = vmatpush2.msra.mxu0 0.0
    %2545 = vmatprep.subr.mxu0 0.0
    %2546 = vmatpush2.msra.mxu0 0.0
    %2547 = vmatprep.subr.mxu0 0.0
    %2548 = vmatpush2.msra.mxu0 0.0
    %2549 = vmatprep.subr.mxu0 0.0
    %2550 = vmatpush2.msra.mxu0 0.0
    %2551 = vmatprep.subr.mxu0 0.0
    %2552 = vmatpush2.msra.mxu0 0.0
    %2553 = vmatprep.subr.mxu0 0.0
    %2554 = vmatpush2.msra.mxu0 0.0
    %2555 = vmatprep.subr.mxu0 0.0
    %2556 = vmatpush2.msra.mxu0 0.0
    %2557 = vmatprep.subr.mxu0 0.0
    %2558 = vmatpush2.msra.mxu0 0.0
    %2559 = vmatprep.subr.mxu0 %v2480
    %2560 = vmatpush2.msra.mxu0 %v2479
    %2561 = vmatprep.subr.mxu0 %v2477
    %2562 = vmatpush2.msra.mxu0 %v2476
    %2563 = vmatprep.subr.mxu0 %v2474
    %2564 = vmatpush2.msra.mxu0 %v2473
    %2565 = vmatprep.subr.mxu0 %v2471
    %2566 = vmatpush2.msra.mxu0 %v2470
    %2567 = vmatprep.mubr.f32.mxu0 %v2501
    %2568 = vmatmul.mubr.f32.gmra.mxu0 %v2419
    %v2569 = vpop.f32.mrf.mxu0
    %v2570 = vadd.f32 %v2488, %v2569
    %v2571 = vpop.f32.mrf.mxu0
    %v2572 = vadd.f32 %v2492, %v2571
    %2573 = vdwg.mxu0
    %2574 = vmatprep.subr.mxu0 0.0
    %2575 = vmatpush1.msra.mxu0 %v2469
    %2576 = vmatprep.subr.mxu0 0.0
    %2577 = vmatpush1.msra.mxu0 %v2466
    %2578 = vmatprep.subr.mxu0 0.0
    %2579 = vmatpush1.msra.mxu0 %v2463
    %2580 = vmatprep.subr.mxu0 0.0
    %2581 = vmatpush1.msra.mxu0 %v2460
    %2582 = vmatprep.subr.mxu0 0.0
    %2583 = vmatpush1.msra.mxu0 %v2457
    %2584 = vmatprep.subr.mxu0 0.0
    %2585 = vmatpush1.msra.mxu0 %v2454
    %2586 = vmatprep.subr.mxu0 0.0
    %2587 = vmatpush1.msra.mxu0 %v2451
    %2588 = vmatprep.subr.mxu0 0.0
    %2589 = vmatpush1.msra.mxu0 %v2448
    %2590 = vmatprep.subr.mxu0 0.0
    %2591 = vmatpush1.msra.mxu0 %v2445
    %2592 = vmatprep.subr.mxu0 0.0
    %2593 = vmatpush1.msra.mxu0 %v2442
    %2594 = vmatprep.subr.mxu0 0.0
    %2595 = vmatpush1.msra.mxu0 %v2439
    %2596 = vmatprep.subr.mxu0 0.0
    %2597 = vmatpush1.msra.mxu0 %v2436
    %2598 = vmatprep.subr.mxu0 0.0
    %2599 = vmatpush1.msra.mxu0 %v2433
    %2600 = vmatprep.subr.mxu0 0.0
    %2601 = vmatpush1.msra.mxu0 %v2430
    %2602 = vmatprep.subr.mxu0 0.0
    %2603 = vmatpush1.msra.mxu0 %v2427
    %2604 = vmatprep.subr.mxu0 0.0
    %2605 = vmatpush1.msra.mxu0 %v2424
    %2606 = vmatprep.subr.mxu0 0.0
    %2607 = vmatpush2.msra.mxu0 0.0
    %2608 = vmatprep.subr.mxu0 0.0
    %2609 = vmatpush2.msra.mxu0 0.0
    %2610 = vmatprep.subr.mxu0 0.0
    %2611 = vmatpush2.msra.mxu0 0.0
    %2612 = vmatprep.subr.mxu0 0.0
    %2613 = vmatpush2.msra.mxu0 0.0
    %2614 = vmatprep.subr.mxu0 0.0
    %2615 = vmatpush2.msra.mxu0 0.0
    %2616 = vmatprep.subr.mxu0 0.0
    %2617 = vmatpush2.msra.mxu0 0.0
    %2618 = vmatprep.subr.mxu0 0.0
    %2619 = vmatpush2.msra.mxu0 0.0
    %2620 = vmatprep.subr.mxu0 0.0
    %2621 = vmatpush2.msra.mxu0 0.0
    %2622 = vmatprep.subr.mxu0 0.0
    %2623 = vmatpush2.msra.mxu0 0.0
    %2624 = vmatprep.subr.mxu0 0.0
    %2625 = vmatpush2.msra.mxu0 0.0
    %2626 = vmatprep.subr.mxu0 0.0
    %2627 = vmatpush2.msra.mxu0 0.0
    %2628 = vmatprep.subr.mxu0 0.0
    %2629 = vmatpush2.msra.mxu0 0.0
    %2630 = vmatprep.subr.mxu0 0.0
    %2631 = vmatpush2.msra.mxu0 %v2481
    %2632 = vmatprep.subr.mxu0 0.0
    %2633 = vmatpush2.msra.mxu0 %v2478
    %2634 = vmatprep.subr.mxu0 0.0
    %2635 = vmatpush2.msra.mxu0 %v2475
    %2636 = vmatprep.subr.mxu0 0.0
    %2637 = vmatpush2.msra.mxu0 %v2472
    %2638 = vmatprep.mubr.f32.mxu0 %v2501
    %2639 = vmatmul.mubr.f32.gmra.mxu0 %v2419
    %v2640 = vpop.f32.mrf.mxu0
    %v2641 = vadd.f32 %v2496, %v2640
    %v2642 = vpop.f32.mrf.mxu0
    %2643 = vdwg.mxu0
    %v2644 = vmul.f32 %v2570, 0.4
    %v2645 = vmul.f32 %v2572, 0.4
    %v2646 = vmul.f32 %v2641, 0.4
    %v2647 = vmax.f32 %v2570, %v2644
    %v2648 = vmax.f32 %v2572, %v2645
    %v2649 = vmax.f32 %v2641, %v2646
    %v2650 = vadd.f32 %v2126, %v2647
    %v2651 = vadd.f32 %v2127, %v2648
    %v2652 = vadd.f32 %v2128, %v2649
    %v2653 = vmul.f32 %v2650, 0.70710677
    %v2654 = vmul.f32 %v2651, %v1068
    %v2655 = vmul.f32 %v2652, 1.0
    %2656 = vst [vmem:[#allocation2] sm:$0xff] %v2653
    %2657 = vst.msk [vmem:[#allocation2 + $0x8] sm:$0xff] %vm177, %v2654
    %v2658 = vld [vmem:[#allocation2] sm:$0xff]
    %v2659 = vld [vmem:[#allocation2 + $0x8] sm:$0xff]
    %s2660 = scalar_lea.vmem %s13, 2048
    %v2661 = vld [vmem:[%s2660] sm:$0xff]
    %v2662 = vld [vmem:[%s2660 + $0x8] sm:$0xff]
    %v2663 = vld [vmem:[%s2660 + $0x10] sm:$0xff]
    %v2664 = vld [vmem:[%s2660 + $0x18] sm:$0xff]
    %v2665 = vld [vmem:[%s2660 + $0x20] sm:$0xff]
    %v2666 = vld [vmem:[%s2660 + $0x28] sm:$0xff]
    %v2667 = vld [vmem:[%s2660 + $0x30] sm:$0xff]
    %v2668 = vld [vmem:[%s2660 + $0x38] sm:$0xff]
    %v2669 = vld [vmem:[%s2660 + $0x40] sm:$0xff]
    %v2670 = vld [vmem:[%s2660 + $0x48] sm:$0xff]
    %v2671 = vld [vmem:[%s2660 + $0x50] sm:$0xff]
    %v2672 = vld [vmem:[%s2660 + $0x58] sm:$0xff]
    %v2673 = vld [vmem:[%s2660 + $0x60] sm:$0xff]
    %v2674 = vld [vmem:[%s2660 + $0x68] sm:$0xff]
    %v2675 = vld [vmem:[%s2660 + $0x70] sm:$0xff]
    %v2676 = vld [vmem:[%s2660 + $0x78] sm:$0xff]
    %v2677 = vld [vmem:[%s2660 + $0x80] sm:$0xff]
    %v2678 = vld [vmem:[%s2660 + $0x88] sm:$0xff]
    %v2679 = vld [vmem:[%s2660 + $0x90] sm:$0xff]
    %v2680 = vld [vmem:[%s2660 + $0x98] sm:$0xff]
    %v2681 = vld [vmem:[%s2660 + $0xa0] sm:$0xff]
    %v2682 = vld [vmem:[%s2660 + $0xa8] sm:$0xff]
    %v2683 = vld [vmem:[%s2660 + $0xb0] sm:$0xff]
    %v2684 = vld [vmem:[%s2660 + $0xb8] sm:$0xff]
    %v2685 = vld [vmem:[%s2660 + $0xc0] sm:$0xff]
    %v2686 = vld [vmem:[%s2660 + $0xc8] sm:$0xff]
    %v2687 = vld [vmem:[%s2660 + $0xd0] sm:$0xff]
    %v2688 = vld [vmem:[%s2660 + $0xd8] sm:$0xff]
    %v2689 = vld [vmem:[%s2660 + $0xe0] sm:$0xff]
    %v2690 = vld [vmem:[%s2660 + $0xe8] sm:$0xff]
    %v2691 = vld [vmem:[%s2660 + $0xf0] sm:$0xff]
    %v2692 = vld [vmem:[%s2660 + $0xf8] sm:$0xff]
    %v2693 = vld [vmem:[%s2660 + $0x100] sm:$0xff]
    %v2694 = vld [vmem:[%s2660 + $0x108] sm:$0xff]
    %v2695 = vld [vmem:[%s2660 + $0x110] sm:$0xff]
    %v2696 = vld [vmem:[%s2660 + $0x118] sm:$0xff]
    %v2697 = vld [vmem:[%s2660 + $0x120] sm:$0xff]
    %v2698 = vld [vmem:[%s2660 + $0x128] sm:$0xff]
    %v2699 = vld [vmem:[%s2660 + $0x130] sm:$0xff]
    %v2700 = vld [vmem:[%s2660 + $0x138] sm:$0xff]
    %v2701 = vld [vmem:[%s2660 + $0x140] sm:$0xff]
    %v2702 = vld [vmem:[%s2660 + $0x148] sm:$0xff]
    %v2703 = vld [vmem:[%s2660 + $0x150] sm:$0xff]
    %v2704 = vld [vmem:[%s2660 + $0x158] sm:$0xff]
    %v2705 = vld [vmem:[%s2660 + $0x160] sm:$0xff]
    %v2706 = vld [vmem:[%s2660 + $0x168] sm:$0xff]
    %v2707 = vld [vmem:[%s2660 + $0x170] sm:$0xff]
    %v2708 = vld [vmem:[%s2660 + $0x178] sm:$0xff]
    %v2709 = vld [vmem:[%s2660 + $0x180] sm:$0xff]
    %v2710 = vld [vmem:[%s2660 + $0x188] sm:$0xff]
    %v2711 = vld [vmem:[%s2660 + $0x190] sm:$0xff]
    %v2712 = vld [vmem:[%s2660 + $0x198] sm:$0xff]
    %v2713 = vld [vmem:[%s2660 + $0x1a0] sm:$0xff]
    %v2714 = vld [vmem:[%s2660 + $0x1a8] sm:$0xff]
    %v2715 = vld [vmem:[%s2660 + $0x1b0] sm:$0xff]
    %v2716 = vld [vmem:[%s2660 + $0x1b8] sm:$0xff]
    %v2717 = vld [vmem:[%s2660 + $0x1c0] sm:$0xff]
    %v2718 = vld [vmem:[%s2660 + $0x1c8] sm:$0xff]
    %v2719 = vld [vmem:[%s2660 + $0x1d0] sm:$0xff]
    %v2720 = vld [vmem:[%s2660 + $0x1d8] sm:$0xff]
    %v2721 = vld [vmem:[%s2660 + $0x1e0] sm:$0xff]
    %v2722 = vld [vmem:[%s2660 + $0x1e8] sm:$0xff]
    %v2723 = vld [vmem:[%s2660 + $0x1f0] sm:$0xff]
    %v2724 = vld [vmem:[%s2660 + $0x1f8] sm:$0xff]
    %2725 = vmatprep.subr.mxu0 %v2692
    %2726 = vmatpush1.msra.mxu0 %v2691
    %2727 = vmatprep.subr.mxu0 %v2690
    %2728 = vmatpush1.msra.mxu0 %v2689
    %2729 = vmatprep.subr.mxu0 %v2688
    %2730 = vmatpush1.msra.mxu0 %v2687
    %2731 = vmatprep.subr.mxu0 %v2686
    %2732 = vmatpush1.msra.mxu0 %v2685
    %2733 = vmatprep.subr.mxu0 %v2684
    %2734 = vmatpush1.msra.mxu0 %v2683
    %2735 = vmatprep.subr.mxu0 %v2682
    %2736 = vmatpush1.msra.mxu0 %v2681
    %2737 = vmatprep.subr.mxu0 %v2680
    %2738 = vmatpush1.msra.mxu0 %v2679
    %2739 = vmatprep.subr.mxu0 %v2678
    %2740 = vmatpush1.msra.mxu0 %v2677
    %2741 = vmatprep.subr.mxu0 %v2676
    %2742 = vmatpush1.msra.mxu0 %v2675
    %2743 = vmatprep.subr.mxu0 %v2674
    %2744 = vmatpush1.msra.mxu0 %v2673
    %2745 = vmatprep.subr.mxu0 %v2672
    %2746 = vmatpush1.msra.mxu0 %v2671
    %2747 = vmatprep.subr.mxu0 %v2670
    %2748 = vmatpush1.msra.mxu0 %v2669
    %2749 = vmatprep.subr.mxu0 %v2668
    %2750 = vmatpush1.msra.mxu0 %v2667
    %2751 = vmatprep.subr.mxu0 %v2666
    %2752 = vmatpush1.msra.mxu0 %v2665
    %2753 = vmatprep.subr.mxu0 %v2664
    %2754 = vmatpush1.msra.mxu0 %v2663
    %2755 = vmatprep.subr.mxu0 %v2662
    %2756 = vmatpush1.msra.mxu0 %v2661
    %2757 = vmatprep.subr.mxu0 %v2724
    %2758 = vmatpush2.msra.mxu0 %v2723
    %2759 = vmatprep.subr.mxu0 %v2722
    %2760 = vmatpush2.msra.mxu0 %v2721
    %2761 = vmatprep.subr.mxu0 %v2720
    %2762 = vmatpush2.msra.mxu0 %v2719
    %2763 = vmatprep.subr.mxu0 %v2718
    %2764 = vmatpush2.msra.mxu0 %v2717
    %2765 = vmatprep.subr.mxu0 %v2716
    %2766 = vmatpush2.msra.mxu0 %v2715
    %2767 = vmatprep.subr.mxu0 %v2714
    %2768 = vmatpush2.msra.mxu0 %v2713
    %2769 = vmatprep.subr.mxu0 %v2712
    %2770 = vmatpush2.msra.mxu0 %v2711
    %2771 = vmatprep.subr.mxu0 %v2710
    %2772 = vmatpush2.msra.mxu0 %v2709
    %2773 = vmatprep.subr.mxu0 %v2708
    %2774 = vmatpush2.msra.mxu0 %v2707
    %2775 = vmatprep.subr.mxu0 %v2706
    %2776 = vmatpush2.msra.mxu0 %v2705
    %2777 = vmatprep.subr.mxu0 %v2704
    %2778 = vmatpush2.msra.mxu0 %v2703
    %2779 = vmatprep.subr.mxu0 %v2702
    %2780 = vmatpush2.msra.mxu0 %v2701
    %2781 = vmatprep.subr.mxu0 %v2700
    %2782 = vmatpush2.msra.mxu0 %v2699
    %2783 = vmatprep.subr.mxu0 %v2698
    %2784 = vmatpush2.msra.mxu0 %v2697
    %2785 = vmatprep.subr.mxu0 %v2696
    %2786 = vmatpush2.msra.mxu0 %v2695
    %2787 = vmatprep.subr.mxu0 %v2694
    %2788 = vmatpush2.msra.mxu0 %v2693
    %2789 = vmatprep.mubr.f32.mxu0 %v2659
    %2790 = vmatmul.mubr.f32.gmra.mxu0 %v2658
    %v2791 = vpop.f32.mrf.mxu0
    %v2792 = vadd.f32 0.0, %v2791
    %v2793 = vpop.f32.mrf.mxu0
    %v2794 = vadd.f32 0.0, %v2793
    %2795 = vdwg.mxu0
    %s2796 = scalar_lea.vmem %s14, 2048
    %v2797 = vld [vmem:[%s2796] sm:$0xff]
    %v2798 = vld [vmem:[%s2796 + $0x8] sm:$0xff]
    %v2799 = vld [vmem:[%s2796 + $0x10] sm:$0xff]
    %v2800 = vld [vmem:[%s2796 + $0x18] sm:$0xff]
    %v2801 = vld [vmem:[%s2796 + $0x20] sm:$0xff]
    %v2802 = vld [vmem:[%s2796 + $0x28] sm:$0xff]
    %v2803 = vld [vmem:[%s2796 + $0x30] sm:$0xff]
    %v2804 = vld [vmem:[%s2796 + $0x38] sm:$0xff]
    %v2805 = vld [vmem:[%s2796 + $0x40] sm:$0xff]
    %v2806 = vld [vmem:[%s2796 + $0x48] sm:$0xff]
    %v2807 = vld [vmem:[%s2796 + $0x50] sm:$0xff]
    %v2808 = vld [vmem:[%s2796 + $0x58] sm:$0xff]
    %v2809 = vld [vmem:[%s2796 + $0x60] sm:$0xff]
    %v2810 = vld [vmem:[%s2796 + $0x68] sm:$0xff]
    %v2811 = vld [vmem:[%s2796 + $0x70] sm:$0xff]
    %v2812 = vld [vmem:[%s2796 + $0x78] sm:$0xff]
    %v2813 = vld [vmem:[%s2796 + $0x80] sm:$0xff]
    %v2814 = vld [vmem:[%s2796 + $0x88] sm:$0xff]
    %v2815 = vld [vmem:[%s2796 + $0x90] sm:$0xff]
    %v2816 = vld [vmem:[%s2796 + $0x98] sm:$0xff]
    %v2817 = vld [vmem:[%s2796 + $0xa0] sm:$0xff]
    %v2818 = vld [vmem:[%s2796 + $0xa8] sm:$0xff]
    %v2819 = vld [vmem:[%s2796 + $0xb0] sm:$0xff]
    %v2820 = vld [vmem:[%s2796 + $0xb8] sm:$0xff]
    %v2821 = vld [vmem:[%s2796 + $0xc0] sm:$0xff]
    %v2822 = vld [vmem:[%s2796 + $0xc8] sm:$0xff]
    %v2823 = vld [vmem:[%s2796 + $0xd0] sm:$0xff]
    %v2824 = vld [vmem:[%s2796 + $0xd8] sm:$0xff]
    %v2825 = vld [vmem:[%s2796 + $0xe0] sm:$0xff]
    %v2826 = vld [vmem:[%s2796 + $0xe8] sm:$0xff]
    %v2827 = vld [vmem:[%s2796 + $0xf0] sm:$0xff]
    %v2828 = vld [vmem:[%s2796 + $0xf8] sm:$0xff]
    %v2829 = vld [vmem:[%s2796 + $0x100] sm:$0xff]
    %v2830 = vld [vmem:[%s2796 + $0x108] sm:$0xff]
    %v2831 = vld [vmem:[%s2796 + $0x110] sm:$0xff]
    %v2832 = vld [vmem:[%s2796 + $0x118] sm:$0xff]
    %v2833 = vld [vmem:[%s2796 + $0x120] sm:$0xff]
    %v2834 = vld [vmem:[%s2796 + $0x128] sm:$0xff]
    %v2835 = vld [vmem:[%s2796 + $0x130] sm:$0xff]
    %v2836 = vld [vmem:[%s2796 + $0x138] sm:$0xff]
    %v2837 = vld [vmem:[%s2796 + $0x140] sm:$0xff]
    %v2838 = vld [vmem:[%s2796 + $0x148] sm:$0xff]
    %v2839 = vld [vmem:[%s2796 + $0x150] sm:$0xff]
    %v2840 = vld [vmem:[%s2796 + $0x158] sm:$0xff]
    %v2841 = vld [vmem:[%s2796 + $0x160] sm:$0xff]
    %v2842 = vld [vmem:[%s2796 + $0x168] sm:$0xff]
    %v2843 = vld [vmem:[%s2796 + $0x170] sm:$0xff]
    %v2844 = vld [vmem:[%s2796 + $0x178] sm:$0xff]
    %v2845 = vld [vmem:[%s2796 + $0x180] sm:$0xff]
    %v2846 = vld [vmem:[%s2796 + $0x188] sm:$0xff]
    %v2847 = vld [vmem:[%s2796 + $0x190] sm:$0xff]
    %v2848 = vld [vmem:[%s2796 + $0x198] sm:$0xff]
    %v2849 = vld [vmem:[%s2796 + $0x1a0] sm:$0xff]
    %v2850 = vld [vmem:[%s2796 + $0x1a8] sm:$0xff]
    %v2851 = vld [vmem:[%s2796 + $0x1b0] sm:$0xff]
    %v2852 = vld [vmem:[%s2796 + $0x1b8] sm:$0xff]
    %v2853 = vld [vmem:[%s2796 + $0x1c0] sm:$0xff]
    %v2854 = vld [vmem:[%s2796 + $0x1c8] sm:$0xff]
    %v2855 = vld [vmem:[%s2796 + $0x1d0] sm:$0xff]
    %v2856 = vld [vmem:[%s2796 + $0x1d8] sm:$0xff]
    %v2857 = vld [vmem:[%s2796 + $0x1e0] sm:$0xff]
    %v2858 = vld [vmem:[%s2796 + $0x1e8] sm:$0xff]
    %v2859 = vld [vmem:[%s2796 + $0x1f0] sm:$0xff]
    %v2860 = vld [vmem:[%s2796 + $0x1f8] sm:$0xff]
    %2861 = vmatprep.subr.mxu0 %v2828
    %2862 = vmatpush1.msra.mxu0 %v2827
    %2863 = vmatprep.subr.mxu0 %v2826
    %2864 = vmatpush1.msra.mxu0 %v2825
    %2865 = vmatprep.subr.mxu0 %v2824
    %2866 = vmatpush1.msra.mxu0 %v2823
    %2867 = vmatprep.subr.mxu0 %v2822
    %2868 = vmatpush1.msra.mxu0 %v2821
    %2869 = vmatprep.subr.mxu0 %v2820
    %2870 = vmatpush1.msra.mxu0 %v2819
    %2871 = vmatprep.subr.mxu0 %v2818
    %2872 = vmatpush1.msra.mxu0 %v2817
    %2873 = vmatprep.subr.mxu0 %v2816
    %2874 = vmatpush1.msra.mxu0 %v2815
    %2875 = vmatprep.subr.mxu0 %v2814
    %2876 = vmatpush1.msra.mxu0 %v2813
    %2877 = vmatprep.subr.mxu0 %v2812
    %2878 = vmatpush1.msra.mxu0 %v2811
    %2879 = vmatprep.subr.mxu0 %v2810
    %2880 = vmatpush1.msra.mxu0 %v2809
    %2881 = vmatprep.subr.mxu0 %v2808
    %2882 = vmatpush1.msra.mxu0 %v2807
    %2883 = vmatprep.subr.mxu0 %v2806
    %2884 = vmatpush1.msra.mxu0 %v2805
    %2885 = vmatprep.subr.mxu0 %v2804
    %2886 = vmatpush1.msra.mxu0 %v2803
    %2887 = vmatprep.subr.mxu0 %v2802
    %2888 = vmatpush1.msra.mxu0 %v2801
    %2889 = vmatprep.subr.mxu0 %v2800
    %2890 = vmatpush1.msra.mxu0 %v2799
    %2891 = vmatprep.subr.mxu0 %v2798
    %2892 = vmatpush1.msra.mxu0 %v2797
    %2893 = vmatprep.subr.mxu0 %v2860
    %2894 = vmatpush2.msra.mxu0 %v2859
    %2895 = vmatprep.subr.mxu0 %v2858
    %2896 = vmatpush2.msra.mxu0 %v2857
    %2897 = vmatprep.subr.mxu0 %v2856
    %2898 = vmatpush2.msra.mxu0 %v2855
    %2899 = vmatprep.subr.mxu0 %v2854
    %2900 = vmatpush2.msra.mxu0 %v2853
    %2901 = vmatprep.subr.mxu0 %v2852
    %2902 = vmatpush2.msra.mxu0 %v2851
    %2903 = vmatprep.subr.mxu0 %v2850
    %2904 = vmatpush2.msra.mxu0 %v2849
    %2905 = vmatprep.subr.mxu0 %v2848
    %2906 = vmatpush2.msra.mxu0 %v2847
    %2907 = vmatprep.subr.mxu0 %v2846
    %2908 = vmatpush2.msra.mxu0 %v2845
    %2909 = vmatprep.subr.mxu0 %v2844
    %2910 = vmatpush2.msra.mxu0 %v2843
    %2911 = vmatprep.subr.mxu0 %v2842
    %2912 = vmatpush2.msra.mxu0 %v2841
    %2913 = vmatprep.subr.mxu0 %v2840
    %2914 = vmatpush2.msra.mxu0 %v2839
    %2915 = vmatprep.subr.mxu0 %v2838
    %2916 = vmatpush2.msra.mxu0 %v2837
    %2917 = vmatprep.subr.mxu0 %v2836
    %2918 = vmatpush2.msra.mxu0 %v2835
    %2919 = vmatprep.subr.mxu0 %v2834
    %2920 = vmatpush2.msra.mxu0 %v2833
    %2921 = vmatprep.subr.mxu0 %v2832
    %2922 = vmatpush2.msra.mxu0 %v2831
    %2923 = vmatprep.subr.mxu0 %v2830
    %2924 = vmatpush2.msra.mxu0 %v2829
    %2925 = vmatprep.mubr.f32.mxu0 %v2659
    %2926 = vmatmul.mubr.f32.gmra.mxu0 %v2658
    %v2927 = vpop.f32.mrf.mxu0
    %v2928 = vadd.f32 0.0, %v2927
    %v2929 = vpop.f32.mrf.mxu0
    %v2930 = vadd.f32 0.0, %v2929
    %2931 = vdwg.mxu0
    %v2932 = vxor.u32 %v2792, 2147483648
    %v2933 = vxor.u32 %v2794, 2147483648
    %v2934 = vmul.f32 %v2932, 1.442695
    %v2935 = vpow.pop %v2934
    %v2936 = vmul.f32 %v2933, 1.442695
    %v2937 = vpow.pop %v2936
    %v2938 = vadd.f32 %v2935, 1.0
    %v2939 = vadd.f32 %v2937, 1.0
    %v2940 = vrcp.pop %v2938
    %v2941 = vmul.f32 1.0, %v2940
    %v2942 = vrcp.pop %v2939
    %v2943 = vmul.f32 1.0, %v2942
    %v2944 = vtanh.pop %v2928
    %v2945 = vtanh.pop %v2930
    %v2946 = vmul.f32 %v2941, %v2944
    %v2947 = vmul.f32 %v2943, %v2945
    %s2948 = scalar_lea.vmem %s15, 1920
    %v2949 = vld [vmem:[%s2948] sm:$0xff]
    %v2950 = vld [vmem:[%s2948 + $0x8] sm:$0xff]
    %v2951 = vld [vmem:[%s2948 + $0x10] sm:$0xff]
    %v2952 = vld [vmem:[%s2948 + $0x18] sm:$0xff]
    %v2953 = vld [vmem:[%s2948 + $0x20] sm:$0xff]
    %v2954 = vld [vmem:[%s2948 + $0x28] sm:$0xff]
    %v2955 = vld [vmem:[%s2948 + $0x30] sm:$0xff]
    %v2956 = vld [vmem:[%s2948 + $0x38] sm:$0xff]
    %v2957 = vld [vmem:[%s2948 + $0x40] sm:$0xff]
    %v2958 = vld [vmem:[%s2948 + $0x48] sm:$0xff]
    %v2959 = vld [vmem:[%s2948 + $0x50] sm:$0xff]
    %v2960 = vld [vmem:[%s2948 + $0x58] sm:$0xff]
    %v2961 = vld [vmem:[%s2948 + $0x60] sm:$0xff]
    %v2962 = vld [vmem:[%s2948 + $0x68] sm:$0xff]
    %v2963 = vld [vmem:[%s2948 + $0x70] sm:$0xff]
    %v2964 = vld [vmem:[%s2948 + $0x78] sm:$0xff]
    %v2965 = vld [vmem:[%s2948 + $0x80] sm:$0xff]
    %v2966 = vld [vmem:[%s2948 + $0x88] sm:$0xff]
    %v2967 = vld [vmem:[%s2948 + $0x90] sm:$0xff]
    %v2968 = vld [vmem:[%s2948 + $0x98] sm:$0xff]
    %v2969 = vld [vmem:[%s2948 + $0xa0] sm:$0xff]
    %v2970 = vld [vmem:[%s2948 + $0xa8] sm:$0xff]
    %v2971 = vld [vmem:[%s2948 + $0xb0] sm:$0xff]
    %v2972 = vld [vmem:[%s2948 + $0xb8] sm:$0xff]
    %v2973 = vld [vmem:[%s2948 + $0xc0] sm:$0xff]
    %v2974 = vld [vmem:[%s2948 + $0xc8] sm:$0xff]
    %v2975 = vld [vmem:[%s2948 + $0xd0] sm:$0xff]
    %v2976 = vld [vmem:[%s2948 + $0xd8] sm:$0xff]
    %v2977 = vld [vmem:[%s2948 + $0xe0] sm:$0xff]
    %v2978 = vld [vmem:[%s2948 + $0xe8] sm:$0xff]
    %v2979 = vld [vmem:[%s2948 + $0xf0] sm:$0xff]
    %v2980 = vld [vmem:[%s2948 + $0xf8] sm:$0xff]
    %v2981 = vld [vmem:[%s2948 + $0x100] sm:$0xff]
    %v2982 = vld [vmem:[%s2948 + $0x108] sm:$0xff]
    %v2983 = vld [vmem:[%s2948 + $0x110] sm:$0xff]
    %v2984 = vld [vmem:[%s2948 + $0x118] sm:$0xff]
    %v2985 = vld [vmem:[%s2948 + $0x120] sm:$0xff]
    %v2986 = vld [vmem:[%s2948 + $0x128] sm:$0xff]
    %v2987 = vld [vmem:[%s2948 + $0x130] sm:$0xff]
    %v2988 = vld [vmem:[%s2948 + $0x138] sm:$0xff]
    %v2989 = vld [vmem:[%s2948 + $0x140] sm:$0xff]
    %v2990 = vld [vmem:[%s2948 + $0x148] sm:$0xff]
    %v2991 = vld [vmem:[%s2948 + $0x150] sm:$0xff]
    %v2992 = vld [vmem:[%s2948 + $0x158] sm:$0xff]
    %v2993 = vld [vmem:[%s2948 + $0x160] sm:$0xff]
    %v2994 = vld [vmem:[%s2948 + $0x168] sm:$0xff]
    %v2995 = vld [vmem:[%s2948 + $0x170] sm:$0xff]
    %v2996 = vld [vmem:[%s2948 + $0x178] sm:$0xff]
    %v2997 = vld [vmem:[%s2948 + $0x180] sm:$0xff]
    %v2998 = vld [vmem:[%s2948 + $0x188] sm:$0xff]
    %v2999 = vld [vmem:[%s2948 + $0x190] sm:$0xff]
    %v3000 = vld [vmem:[%s2948 + $0x198] sm:$0xff]
    %v3001 = vld [vmem:[%s2948 + $0x1a0] sm:$0xff]
    %v3002 = vld [vmem:[%s2948 + $0x1a8] sm:$0xff]
    %v3003 = vld [vmem:[%s2948 + $0x1b0] sm:$0xff]
    %v3004 = vld [vmem:[%s2948 + $0x1b8] sm:$0xff]
    %v3005 = vld [vmem:[%s2948 + $0x1c0] sm:$0xff]
    %v3006 = vld [vmem:[%s2948 + $0x1c8] sm:$0xff]
    %v3007 = vld [vmem:[%s2948 + $0x1d0] sm:$0xff]
    %v3008 = vld [vmem:[%s2948 + $0x1d8] sm:$0xff]
    %s3009 = scalar_lea.vmem %s16, 12
    %v3010 = vld [vmem:[%s3009] sm:$0x7]
    %v3012 = vlaneseq
    %v3013 = vshrl.u32 %v3012, 7
    %v3014 = vsub.s32 0, %v3013
    %v3015 = vrot.slane %v3010, %v3014
    %v3016 = vlaneseq
    %v3017 = vshrl.u32 %v3016, 7
    %v3018 = vsub.s32 1, %v3017
    %v3019 = vrot.slane %v3010, %v3018
    %v3020 = vlaneseq
    %v3021 = vshrl.u32 %v3020, 7
    %v3022 = vsub.s32 2, %v3021
    %v3023 = vrot.slane %v3010, %v3022
    %v3028 = vsel %vm177, %v2947, 0
    %3030 = vmatprep.subr.mxu0 %v2995
    %3031 = vmatpush1.msra.mxu0 %v2994
    %3032 = vmatprep.subr.mxu0 %v2992
    %3033 = vmatpush1.msra.mxu0 %v2991
    %3034 = vmatprep.subr.mxu0 %v2989
    %3035 = vmatpush1.msra.mxu0 %v2988
    %3036 = vmatprep.subr.mxu0 %v2986
    %3037 = vmatpush1.msra.mxu0 %v2985
    %3038 = vmatprep.subr.mxu0 %v2983
    %3039 = vmatpush1.msra.mxu0 %v2982
    %3040 = vmatprep.subr.mxu0 %v2980
    %3041 = vmatpush1.msra.mxu0 %v2979
    %3042 = vmatprep.subr.mxu0 %v2977
    %3043 = vmatpush1.msra.mxu0 %v2976
    %3044 = vmatprep.subr.mxu0 %v2974
    %3045 = vmatpush1.msra.mxu0 %v2973
    %3046 = vmatprep.subr.mxu0 %v2971
    %3047 = vmatpush1.msra.mxu0 %v2970
    %3048 = vmatprep.subr.mxu0 %v2968
    %3049 = vmatpush1.msra.mxu0 %v2967
    %3050 = vmatprep.subr.mxu0 %v2965
    %3051 = vmatpush1.msra.mxu0 %v2964
    %3052 = vmatprep.subr.mxu0 %v2962
    %3053 = vmatpush1.msra.mxu0 %v2961
    %3054 = vmatprep.subr.mxu0 %v2959
    %3055 = vmatpush1.msra.mxu0 %v2958
    %3056 = vmatprep.subr.mxu0 %v2956
    %3057 = vmatpush1.msra.mxu0 %v2955
    %3058 = vmatprep.subr.mxu0 %v2953
    %3059 = vmatpush1.msra.mxu0 %v2952
    %3060 = vmatprep.subr.mxu0 %v2950
    %3061 = vmatpush1.msra.mxu0 %v2949
    %3062 = vmatprep.subr.mxu0 0.0
    %3063 = vmatpush2.msra.mxu0 0.0
    %3064 = vmatprep.subr.mxu0 0.0
    %3065 = vmatpush2.msra.mxu0 0.0
    %3066 = vmatprep.subr.mxu0 0.0
    %3067 = vmatpush2.msra.mxu0 0.0
    %3068 = vmatprep.subr.mxu0 0.0
    %3069 = vmatpush2.msra.mxu0 0.0
    %3070 = vmatprep.subr.mxu0 0.0
    %3071 = vmatpush2.msra.mxu0 0.0
    %3072 = vmatprep.subr.mxu0 0.0
    %3073 = vmatpush2.msra.mxu0 0.0
    %3074 = vmatprep.subr.mxu0 0.0
    %3075 = vmatpush2.msra.mxu0 0.0
    %3076 = vmatprep.subr.mxu0 0.0
    %3077 = vmatpush2.msra.mxu0 0.0
    %3078 = vmatprep.subr.mxu0 0.0
    %3079 = vmatpush2.msra.mxu0 0.0
    %3080 = vmatprep.subr.mxu0 0.0
    %3081 = vmatpush2.msra.mxu0 0.0
    %3082 = vmatprep.subr.mxu0 0.0
    %3083 = vmatpush2.msra.mxu0 0.0
    %3084 = vmatprep.subr.mxu0 0.0
    %3085 = vmatpush2.msra.mxu0 0.0
    %3086 = vmatprep.subr.mxu0 %v3007
    %3087 = vmatpush2.msra.mxu0 %v3006
    %3088 = vmatprep.subr.mxu0 %v3004
    %3089 = vmatpush2.msra.mxu0 %v3003
    %3090 = vmatprep.subr.mxu0 %v3001
    %3091 = vmatpush2.msra.mxu0 %v3000
    %3092 = vmatprep.subr.mxu0 %v2998
    %3093 = vmatpush2.msra.mxu0 %v2997
    %3094 = vmatprep.mubr.f32.mxu0 %v3028
    %3095 = vmatmul.mubr.f32.gmra.mxu0 %v2946
    %v3096 = vpop.f32.mrf.mxu0
    %v3097 = vadd.f32 %v3015, %v3096
    %v3098 = vpop.f32.mrf.mxu0
    %v3099 = vadd.f32 %v3019, %v3098
    %3100 = vdwg.mxu0
    %3101 = vmatprep.subr.mxu0 0.0
    %3102 = vmatpush1.msra.mxu0 %v2996
    %3103 = vmatprep.subr.mxu0 0.0
    %3104 = vmatpush1.msra.mxu0 %v2993
    %3105 = vmatprep.subr.mxu0 0.0
    %3106 = vmatpush1.msra.mxu0 %v2990
    %3107 = vmatprep.subr.mxu0 0.0
    %3108 = vmatpush1.msra.mxu0 %v2987
    %3109 = vmatprep.subr.mxu0 0.0
    %3110 = vmatpush1.msra.mxu0 %v2984
    %3111 = vmatprep.subr.mxu0 0.0
    %3112 = vmatpush1.msra.mxu0 %v2981
    %3113 = vmatprep.subr.mxu0 0.0
    %3114 = vmatpush1.msra.mxu0 %v2978
    %3115 = vmatprep.subr.mxu0 0.0
    %3116 = vmatpush1.msra.mxu0 %v2975
    %3117 = vmatprep.subr.mxu0 0.0
    %3118 = vmatpush1.msra.mxu0 %v2972
    %3119 = vmatprep.subr.mxu0 0.0
    %3120 = vmatpush1.msra.mxu0 %v2969
    %3121 = vmatprep.subr.mxu0 0.0
    %3122 = vmatpush1.msra.mxu0 %v2966
    %3123 = vmatprep.subr.mxu0 0.0
    %3124 = vmatpush1.msra.mxu0 %v2963
    %3125 = vmatprep.subr.mxu0 0.0
    %3126 = vmatpush1.msra.mxu0 %v2960
    %3127 = vmatprep.subr.mxu0 0.0
    %3128 = vmatpush1.msra.mxu0 %v2957
    %3129 = vmatprep.subr.mxu0 0.0
    %3130 = vmatpush1.msra.mxu0 %v2954
    %3131 = vmatprep.subr.mxu0 0.0
    %3132 = vmatpush1.msra.mxu0 %v2951
    %3133 = vmatprep.subr.mxu0 0.0
    %3134 = vmatpush2.msra.mxu0 0.0
    %3135 = vmatprep.subr.mxu0 0.0
    %3136 = vmatpush2.msra.mxu0 0.0
    %3137 = vmatprep.subr.mxu0 0.0
    %3138 = vmatpush2.msra.mxu0 0.0
    %3139 = vmatprep.subr.mxu0 0.0
    %3140 = vmatpush2.msra.mxu0 0.0
    %3141 = vmatprep.subr.mxu0 0.0
    %3142 = vmatpush2.msra.mxu0 0.0
    %3143 = vmatprep.subr.mxu0 0.0
    %3144 = vmatpush2.msra.mxu0 0.0
    %3145 = vmatprep.subr.mxu0 0.0
    %3146 = vmatpush2.msra.mxu0 0.0
    %3147 = vmatprep.subr.mxu0 0.0
    %3148 = vmatpush2.msra.mxu0 0.0
    %3149 = vmatprep.subr.mxu0 0.0
    %3150 = vmatpush2.msra.mxu0 0.0
    %3151 = vmatprep.subr.mxu0 0.0
    %3152 = vmatpush2.msra.mxu0 0.0
    %3153 = vmatprep.subr.mxu0 0.0
    %3154 = vmatpush2.msra.mxu0 0.0
    %3155 = vmatprep.subr.mxu0 0.0
    %3156 = vmatpush2.msra.mxu0 0.0
    %3157 = vmatprep.subr.mxu0 0.0
    %3158 = vmatpush2.msra.mxu0 %v3008
    %3159 = vmatprep.subr.mxu0 0.0
    %3160 = vmatpush2.msra.mxu0 %v3005
    %3161 = vmatprep.subr.mxu0 0.0
    %3162 = vmatpush2.msra.mxu0 %v3002
    %3163 = vmatprep.subr.mxu0 0.0
    %3164 = vmatpush2.msra.mxu0 %v2999
    %3165 = vmatprep.mubr.f32.mxu0 %v3028
    %3166 = vmatmul.mubr.f32.gmra.mxu0 %v2946
    %v3167 = vpop.f32.mrf.mxu0
    %v3168 = vadd.f32 %v3023, %v3167
    %v3169 = vpop.f32.mrf.mxu0
    %3170 = vdwg.mxu0
    %v3171 = vmul.f32 %v3097, 0.4
    %v3172 = vmul.f32 %v3099, 0.4
    %v3173 = vmul.f32 %v3168, 0.4
    %v3174 = vmax.f32 %v3097, %v3171
    %v3175 = vmax.f32 %v3099, %v3172
    %v3176 = vmax.f32 %v3168, %v3173
    %v3177 = vadd.f32 %v2653, %v3174
    %v3178 = vadd.f32 %v2654, %v3175
    %v3179 = vadd.f32 %v2655, %v3176
    %v3180 = vmul.f32 %v3177, 0.70710677
    %v3181 = vmul.f32 %v3178, %v1068
    %v3182 = vmul.f32 %v3179, 1.0
    %3183 = vst [vmem:[#allocation2] sm:$0xff] %v3180
    %3184 = vst.msk [vmem:[#allocation2 + $0x8] sm:$0xff] %vm177, %v3181
    %v3185 = vld [vmem:[#allocation2] sm:$0xff]
    %v3186 = vld [vmem:[#allocation2 + $0x8] sm:$0xff]
    %s3187 = scalar_lea.vmem %s13, 2560
    %v3188 = vld [vmem:[%s3187] sm:$0xff]
    %v3189 = vld [vmem:[%s3187 + $0x8] sm:$0xff]
    %v3190 = vld [vmem:[%s3187 + $0x10] sm:$0xff]
    %v3191 = vld [vmem:[%s3187 + $0x18] sm:$0xff]
    %v3192 = vld [vmem:[%s3187 + $0x20] sm:$0xff]
    %v3193 = vld [vmem:[%s3187 + $0x28] sm:$0xff]
    %v3194 = vld [vmem:[%s3187 + $0x30] sm:$0xff]
    %v3195 = vld [vmem:[%s3187 + $0x38] sm:$0xff]
    %v3196 = vld [vmem:[%s3187 + $0x40] sm:$0xff]
    %v3197 = vld [vmem:[%s3187 + $0x48] sm:$0xff]
    %v3198 = vld [vmem:[%s3187 + $0x50] sm:$0xff]
    %v3199 = vld [vmem:[%s3187 + $0x58] sm:$0xff]
    %v3200 = vld [vmem:[%s3187 + $0x60] sm:$0xff]
    %v3201 = vld [vmem:[%s3187 + $0x68] sm:$0xff]
    %v3202 = vld [vmem:[%s3187 + $0x70] sm:$0xff]
    %v3203 = vld [vmem:[%s3187 + $0x78] sm:$0xff]
    %v3204 = vld [vmem:[%s3187 + $0x80] sm:$0xff]
    %v3205 = vld [vmem:[%s3187 + $0x88] sm:$0xff]
    %v3206 = vld [vmem:[%s3187 + $0x90] sm:$0xff]
    %v3207 = vld [vmem:[%s3187 + $0x98] sm:$0xff]
    %v3208 = vld [vmem:[%s3187 + $0xa0] sm:$0xff]
    %v3209 = vld [vmem:[%s3187 + $0xa8] sm:$0xff]
    %v3210 = vld [vmem:[%s3187 + $0xb0] sm:$0xff]
    %v3211 = vld [vmem:[%s3187 + $0xb8] sm:$0xff]
    %v3212 = vld [vmem:[%s3187 + $0xc0] sm:$0xff]
    %v3213 = vld [vmem:[%s3187 + $0xc8] sm:$0xff]
    %v3214 = vld [vmem:[%s3187 + $0xd0] sm:$0xff]
    %v3215 = vld [vmem:[%s3187 + $0xd8] sm:$0xff]
    %v3216 = vld [vmem:[%s3187 + $0xe0] sm:$0xff]
    %v3217 = vld [vmem:[%s3187 + $0xe8] sm:$0xff]
    %v3218 = vld [vmem:[%s3187 + $0xf0] sm:$0xff]
    %v3219 = vld [vmem:[%s3187 + $0xf8] sm:$0xff]
    %v3220 = vld [vmem:[%s3187 + $0x100] sm:$0xff]
    %v3221 = vld [vmem:[%s3187 + $0x108] sm:$0xff]
    %v3222 = vld [vmem:[%s3187 + $0x110] sm:$0xff]
    %v3223 = vld [vmem:[%s3187 + $0x118] sm:$0xff]
    %v3224 = vld [vmem:[%s3187 + $0x120] sm:$0xff]
    %v3225 = vld [vmem:[%s3187 + $0x128] sm:$0xff]
    %v3226 = vld [vmem:[%s3187 + $0x130] sm:$0xff]
    %v3227 = vld [vmem:[%s3187 + $0x138] sm:$0xff]
    %v3228 = vld [vmem:[%s3187 + $0x140] sm:$0xff]
    %v3229 = vld [vmem:[%s3187 + $0x148] sm:$0xff]
    %v3230 = vld [vmem:[%s3187 + $0x150] sm:$0xff]
    %v3231 = vld [vmem:[%s3187 + $0x158] sm:$0xff]
    %v3232 = vld [vmem:[%s3187 + $0x160] sm:$0xff]
    %v3233 = vld [vmem:[%s3187 + $0x168] sm:$0xff]
    %v3234 = vld [vmem:[%s3187 + $0x170] sm:$0xff]
    %v3235 = vld [vmem:[%s3187 + $0x178] sm:$0xff]
    %v3236 = vld [vmem:[%s3187 + $0x180] sm:$0xff]
    %v3237 = vld [vmem:[%s3187 + $0x188] sm:$0xff]
    %v3238 = vld [vmem:[%s3187 + $0x190] sm:$0xff]
    %v3239 = vld [vmem:[%s3187 + $0x198] sm:$0xff]
    %v3240 = vld [vmem:[%s3187 + $0x1a0] sm:$0xff]
    %v3241 = vld [vmem:[%s3187 + $0x1a8] sm:$0xff]
    %v3242 = vld [vmem:[%s3187 + $0x1b0] sm:$0xff]
    %v3243 = vld [vmem:[%s3187 + $0x1b8] sm:$0xff]
    %v3244 = vld [vmem:[%s3187 + $0x1c0] sm:$0xff]
    %v3245 = vld [vmem:[%s3187 + $0x1c8] sm:$0xff]
    %v3246 = vld [vmem:[%s3187 + $0x1d0] sm:$0xff]
    %v3247 = vld [vmem:[%s3187 + $0x1d8] sm:$0xff]
    %v3248 = vld [vmem:[%s3187 + $0x1e0] sm:$0xff]
    %v3249 = vld [vmem:[%s3187 + $0x1e8] sm:$0xff]
    %v3250 = vld [vmem:[%s3187 + $0x1f0] sm:$0xff]
    %v3251 = vld [vmem:[%s3187 + $0x1f8] sm:$0xff]
    %3252 = vmatprep.subr.mxu0 %v3219
    %3253 = vmatpush1.msra.mxu0 %v3218
    %3254 = vmatprep.subr.mxu0 %v3217
    %3255 = vmatpush1.msra.mxu0 %v3216
    %3256 = vmatprep.subr.mxu0 %v3215
    %3257 = vmatpush1.msra.mxu0 %v3214
    %3258 = vmatprep.subr.mxu0 %v3213
    %3259 = vmatpush1.msra.mxu0 %v3212
    %3260 = vmatprep.subr.mxu0 %v3211
    %3261 = vmatpush1.msra.mxu0 %v3210
    %3262 = vmatprep.subr.mxu0 %v3209
    %3263 = vmatpush1.msra.mxu0 %v3208
    %3264 = vmatprep.subr.mxu0 %v3207
    %3265 = vmatpush1.msra.mxu0 %v3206
    %3266 = vmatprep.subr.mxu0 %v3205
    %3267 = vmatpush1.msra.mxu0 %v3204
    %3268 = vmatprep.subr.mxu0 %v3203
    %3269 = vmatpush1.msra.mxu0 %v3202
    %3270 = vmatprep.subr.mxu0 %v3201
    %3271 = vmatpush1.msra.mxu0 %v3200
    %3272 = vmatprep.subr.mxu0 %v3199
    %3273 = vmatpush1.msra.mxu0 %v3198
    %3274 = vmatprep.subr.mxu0 %v3197
    %3275 = vmatpush1.msra.mxu0 %v3196
    %3276 = vmatprep.subr.mxu0 %v3195
    %3277 = vmatpush1.msra.mxu0 %v3194
    %3278 = vmatprep.subr.mxu0 %v3193
    %3279 = vmatpush1.msra.mxu0 %v3192
    %3280 = vmatprep.subr.mxu0 %v3191
    %3281 = vmatpush1.msra.mxu0 %v3190
    %3282 = vmatprep.subr.mxu0 %v3189
    %3283 = vmatpush1.msra.mxu0 %v3188
    %3284 = vmatprep.subr.mxu0 %v3251
    %3285 = vmatpush2.msra.mxu0 %v3250
    %3286 = vmatprep.subr.mxu0 %v3249
    %3287 = vmatpush2.msra.mxu0 %v3248
    %3288 = vmatprep.subr.mxu0 %v3247
    %3289 = vmatpush2.msra.mxu0 %v3246
    %3290 = vmatprep.subr.mxu0 %v3245
    %3291 = vmatpush2.msra.mxu0 %v3244
    %3292 = vmatprep.subr.mxu0 %v3243
    %3293 = vmatpush2.msra.mxu0 %v3242
    %3294 = vmatprep.subr.mxu0 %v3241
    %3295 = vmatpush2.msra.mxu0 %v3240
    %3296 = vmatprep.subr.mxu0 %v3239
    %3297 = vmatpush2.msra.mxu0 %v3238
    %3298 = vmatprep.subr.mxu0 %v3237
    %3299 = vmatpush2.msra.mxu0 %v3236
    %3300 = vmatprep.subr.mxu0 %v3235
    %3301 = vmatpush2.msra.mxu0 %v3234
    %3302 = vmatprep.subr.mxu0 %v3233
    %3303 = vmatpush2.msra.mxu0 %v3232
    %3304 = vmatprep.subr.mxu0 %v3231
    %3305 = vmatpush2.msra.mxu0 %v3230
    %3306 = vmatprep.subr.mxu0 %v3229
    %3307 = vmatpush2.msra.mxu0 %v3228
    %3308 = vmatprep.subr.mxu0 %v3227
    %3309 = vmatpush2.msra.mxu0 %v3226
    %3310 = vmatprep.subr.mxu0 %v3225
    %3311 = vmatpush2.msra.mxu0 %v3224
    %3312 = vmatprep.subr.mxu0 %v3223
    %3313 = vmatpush2.msra.mxu0 %v3222
    %3314 = vmatprep.subr.mxu0 %v3221
    %3315 = vmatpush2.msra.mxu0 %v3220
    %3316 = vmatprep.mubr.f32.mxu0 %v3186
    %3317 = vmatmul.mubr.f32.gmra.mxu0 %v3185
    %v3318 = vpop.f32.mrf.mxu0
    %v3319 = vadd.f32 0.0, %v3318
    %v3320 = vpop.f32.mrf.mxu0
    %v3321 = vadd.f32 0.0, %v3320
    %3322 = vdwg.mxu0
    %s3323 = scalar_lea.vmem %s14, 2560
    %v3324 = vld [vmem:[%s3323] sm:$0xff]
    %v3325 = vld [vmem:[%s3323 + $0x8] sm:$0xff]
    %v3326 = vld [vmem:[%s3323 + $0x10] sm:$0xff]
    %v3327 = vld [vmem:[%s3323 + $0x18] sm:$0xff]
    %v3328 = vld [vmem:[%s3323 + $0x20] sm:$0xff]
    %v3329 = vld [vmem:[%s3323 + $0x28] sm:$0xff]
    %v3330 = vld [vmem:[%s3323 + $0x30] sm:$0xff]
    %v3331 = vld [vmem:[%s3323 + $0x38] sm:$0xff]
    %v3332 = vld [vmem:[%s3323 + $0x40] sm:$0xff]
    %v3333 = vld [vmem:[%s3323 + $0x48] sm:$0xff]
    %v3334 = vld [vmem:[%s3323 + $0x50] sm:$0xff]
    %v3335 = vld [vmem:[%s3323 + $0x58] sm:$0xff]
    %v3336 = vld [vmem:[%s3323 + $0x60] sm:$0xff]
    %v3337 = vld [vmem:[%s3323 + $0x68] sm:$0xff]
    %v3338 = vld [vmem:[%s3323 + $0x70] sm:$0xff]
    %v3339 = vld [vmem:[%s3323 + $0x78] sm:$0xff]
    %v3340 = vld [vmem:[%s3323 + $0x80] sm:$0xff]
    %v3341 = vld [vmem:[%s3323 + $0x88] sm:$0xff]
    %v3342 = vld [vmem:[%s3323 + $0x90] sm:$0xff]
    %v3343 = vld [vmem:[%s3323 + $0x98] sm:$0xff]
    %v3344 = vld [vmem:[%s3323 + $0xa0] sm:$0xff]
    %v3345 = vld [vmem:[%s3323 + $0xa8] sm:$0xff]
    %v3346 = vld [vmem:[%s3323 + $0xb0] sm:$0xff]
    %v3347 = vld [vmem:[%s3323 + $0xb8] sm:$0xff]
    %v3348 = vld [vmem:[%s3323 + $0xc0] sm:$0xff]
    %v3349 = vld [vmem:[%s3323 + $0xc8] sm:$0xff]
    %v3350 = vld [vmem:[%s3323 + $0xd0] sm:$0xff]
    %v3351 = vld [vmem:[%s3323 + $0xd8] sm:$0xff]
    %v3352 = vld [vmem:[%s3323 + $0xe0] sm:$0xff]
    %v3353 = vld [vmem:[%s3323 + $0xe8] sm:$0xff]
    %v3354 = vld [vmem:[%s3323 + $0xf0] sm:$0xff]
    %v3355 = vld [vmem:[%s3323 + $0xf8] sm:$0xff]
    %v3356 = vld [vmem:[%s3323 + $0x100] sm:$0xff]
    %v3357 = vld [vmem:[%s3323 + $0x108] sm:$0xff]
    %v3358 = vld [vmem:[%s3323 + $0x110] sm:$0xff]
    %v3359 = vld [vmem:[%s3323 + $0x118] sm:$0xff]
    %v3360 = vld [vmem:[%s3323 + $0x120] sm:$0xff]
    %v3361 = vld [vmem:[%s3323 + $0x128] sm:$0xff]
    %v3362 = vld [vmem:[%s3323 + $0x130] sm:$0xff]
    %v3363 = vld [vmem:[%s3323 + $0x138] sm:$0xff]
    %v3364 = vld [vmem:[%s3323 + $0x140] sm:$0xff]
    %v3365 = vld [vmem:[%s3323 + $0x148] sm:$0xff]
    %v3366 = vld [vmem:[%s3323 + $0x150] sm:$0xff]
    %v3367 = vld [vmem:[%s3323 + $0x158] sm:$0xff]
    %v3368 = vld [vmem:[%s3323 + $0x160] sm:$0xff]
    %v3369 = vld [vmem:[%s3323 + $0x168] sm:$0xff]
    %v3370 = vld [vmem:[%s3323 + $0x170] sm:$0xff]
    %v3371 = vld [vmem:[%s3323 + $0x178] sm:$0xff]
    %v3372 = vld [vmem:[%s3323 + $0x180] sm:$0xff]
    %v3373 = vld [vmem:[%s3323 + $0x188] sm:$0xff]
    %v3374 = vld [vmem:[%s3323 + $0x190] sm:$0xff]
    %v3375 = vld [vmem:[%s3323 + $0x198] sm:$0xff]
    %v3376 = vld [vmem:[%s3323 + $0x1a0] sm:$0xff]
    %v3377 = vld [vmem:[%s3323 + $0x1a8] sm:$0xff]
    %v3378 = vld [vmem:[%s3323 + $0x1b0] sm:$0xff]
    %v3379 = vld [vmem:[%s3323 + $0x1b8] sm:$0xff]
    %v3380 = vld [vmem:[%s3323 + $0x1c0] sm:$0xff]
    %v3381 = vld [vmem:[%s3323 + $0x1c8] sm:$0xff]
    %v3382 = vld [vmem:[%s3323 + $0x1d0] sm:$0xff]
    %v3383 = vld [vmem:[%s3323 + $0x1d8] sm:$0xff]
    %v3384 = vld [vmem:[%s3323 + $0x1e0] sm:$0xff]
    %v3385 = vld [vmem:[%s3323 + $0x1e8] sm:$0xff]
    %v3386 = vld [vmem:[%s3323 + $0x1f0] sm:$0xff]
    %v3387 = vld [vmem:[%s3323 + $0x1f8] sm:$0xff]
    %3388 = vmatprep.subr.mxu0 %v3355
    %3389 = vmatpush1.msra.mxu0 %v3354
    %3390 = vmatprep.subr.mxu0 %v3353
    %3391 = vmatpush1.msra.mxu0 %v3352
    %3392 = vmatprep.subr.mxu0 %v3351
    %3393 = vmatpush1.msra.mxu0 %v3350
    %3394 = vmatprep.subr.mxu0 %v3349
    %3395 = vmatpush1.msra.mxu0 %v3348
    %3396 = vmatprep.subr.mxu0 %v3347
    %3397 = vmatpush1.msra.mxu0 %v3346
    %3398 = vmatprep.subr.mxu0 %v3345
    %3399 = vmatpush1.msra.mxu0 %v3344
    %3400 = vmatprep.subr.mxu0 %v3343
    %3401 = vmatpush1.msra.mxu0 %v3342
    %3402 = vmatprep.subr.mxu0 %v3341
    %3403 = vmatpush1.msra.mxu0 %v3340
    %3404 = vmatprep.subr.mxu0 %v3339
    %3405 = vmatpush1.msra.mxu0 %v3338
    %3406 = vmatprep.subr.mxu0 %v3337
    %3407 = vmatpush1.msra.mxu0 %v3336
    %3408 = vmatprep.subr.mxu0 %v3335
    %3409 = vmatpush1.msra.mxu0 %v3334
    %3410 = vmatprep.subr.mxu0 %v3333
    %3411 = vmatpush1.msra.mxu0 %v3332
    %3412 = vmatprep.subr.mxu0 %v3331
    %3413 = vmatpush1.msra.mxu0 %v3330
    %3414 = vmatprep.subr.mxu0 %v3329
    %3415 = vmatpush1.msra.mxu0 %v3328
    %3416 = vmatprep.subr.mxu0 %v3327
    %3417 = vmatpush1.msra.mxu0 %v3326
    %3418 = vmatprep.subr.mxu0 %v3325
    %3419 = vmatpush1.msra.mxu0 %v3324
    %3420 = vmatprep.subr.mxu0 %v3387
    %3421 = vmatpush2.msra.mxu0 %v3386
    %3422 = vmatprep.subr.mxu0 %v3385
    %3423 = vmatpush2.msra.mxu0 %v3384
    %3424 = vmatprep.subr.mxu0 %v3383
    %3425 = vmatpush2.msra.mxu0 %v3382
    %3426 = vmatprep.subr.mxu0 %v3381
    %3427 = vmatpush2.msra.mxu0 %v3380
    %3428 = vmatprep.subr.mxu0 %v3379
    %3429 = vmatpush2.msra.mxu0 %v3378
    %3430 = vmatprep.subr.mxu0 %v3377
    %3431 = vmatpush2.msra.mxu0 %v3376
    %3432 = vmatprep.subr.mxu0 %v3375
    %3433 = vmatpush2.msra.mxu0 %v3374
    %3434 = vmatprep.subr.mxu0 %v3373
    %3435 = vmatpush2.msra.mxu0 %v3372
    %3436 = vmatprep.subr.mxu0 %v3371
    %3437 = vmatpush2.msra.mxu0 %v3370
    %3438 = vmatprep.subr.mxu0 %v3369
    %3439 = vmatpush2.msra.mxu0 %v3368
    %3440 = vmatprep.subr.mxu0 %v3367
    %3441 = vmatpush2.msra.mxu0 %v3366
    %3442 = vmatprep.subr.mxu0 %v3365
    %3443 = vmatpush2.msra.mxu0 %v3364
    %3444 = vmatprep.subr.mxu0 %v3363
    %3445 = vmatpush2.msra.mxu0 %v3362
    %3446 = vmatprep.subr.mxu0 %v3361
    %3447 = vmatpush2.msra.mxu0 %v3360
    %3448 = vmatprep.subr.mxu0 %v3359
    %3449 = vmatpush2.msra.mxu0 %v3358
    %3450 = vmatprep.subr.mxu0 %v3357
    %3451 = vmatpush2.msra.mxu0 %v3356
    %3452 = vmatprep.mubr.f32.mxu0 %v3186
    %3453 = vmatmul.mubr.f32.gmra.mxu0 %v3185
    %v3454 = vpop.f32.mrf.mxu0
    %v3455 = vadd.f32 0.0, %v3454
    %v3456 = vpop.f32.mrf.mxu0
    %v3457 = vadd.f32 0.0, %v3456
    %3458 = vdwg.mxu0
    %v3459 = vxor.u32 %v3319, 2147483648
    %v3460 = vxor.u32 %v3321, 2147483648
    %v3461 = vmul.f32 %v3459, 1.442695
    %v3462 = vpow.pop %v3461
    %v3463 = vmul.f32 %v3460, 1.442695
    %v3464 = vpow.pop %v3463
    %v3465 = vadd.f32 %v3462, 1.0
    %v3466 = vadd.f32 %v3464, 1.0
    %v3467 = vrcp.pop %v3465
    %v3468 = vmul.f32 1.0, %v3467
    %v3469 = vrcp.pop %v3466
    %v3470 = vmul.f32 1.0, %v3469
    %v3471 = vtanh.pop %v3455
    %v3472 = vtanh.pop %v3457
    %v3473 = vmul.f32 %v3468, %v3471
    %v3474 = vmul.f32 %v3470, %v3472
    %s3475 = scalar_lea.vmem %s15, 2400
    %v3476 = vld [vmem:[%s3475] sm:$0xff]
    %v3477 = vld [vmem:[%s3475 + $0x8] sm:$0xff]
    %v3478 = vld [vmem:[%s3475 + $0x10] sm:$0xff]
    %v3479 = vld [vmem:[%s3475 + $0x18] sm:$0xff]
    %v3480 = vld [vmem:[%s3475 + $0x20] sm:$0xff]
    %v3481 = vld [vmem:[%s3475 + $0x28] sm:$0xff]
    %v3482 = vld [vmem:[%s3475 + $0x30] sm:$0xff]
    %v3483 = vld [vmem:[%s3475 + $0x38] sm:$0xff]
    %v3484 = vld [vmem:[%s3475 + $0x40] sm:$0xff]
    %v3485 = vld [vmem:[%s3475 + $0x48] sm:$0xff]
    %v3486 = vld [vmem:[%s3475 + $0x50] sm:$0xff]
    %v3487 = vld [vmem:[%s3475 + $0x58] sm:$0xff]
    %v3488 = vld [vmem:[%s3475 + $0x60] sm:$0xff]
    %v3489 = vld [vmem:[%s3475 + $0x68] sm:$0xff]
    %v3490 = vld [vmem:[%s3475 + $0x70] sm:$0xff]
    %v3491 = vld [vmem:[%s3475 + $0x78] sm:$0xff]
    %v3492 = vld [vmem:[%s3475 + $0x80] sm:$0xff]
    %v3493 = vld [vmem:[%s3475 + $0x88] sm:$0xff]
    %v3494 = vld [vmem:[%s3475 + $0x90] sm:$0xff]
    %v3495 = vld [vmem:[%s3475 + $0x98] sm:$0xff]
    %v3496 = vld [vmem:[%s3475 + $0xa0] sm:$0xff]
    %v3497 = vld [vmem:[%s3475 + $0xa8] sm:$0xff]
    %v3498 = vld [vmem:[%s3475 + $0xb0] sm:$0xff]
    %v3499 = vld [vmem:[%s3475 + $0xb8] sm:$0xff]
    %v3500 = vld [vmem:[%s3475 + $0xc0] sm:$0xff]
    %v3501 = vld [vmem:[%s3475 + $0xc8] sm:$0xff]
    %v3502 = vld [vmem:[%s3475 + $0xd0] sm:$0xff]
    %v3503 = vld [vmem:[%s3475 + $0xd8] sm:$0xff]
    %v3504 = vld [vmem:[%s3475 + $0xe0] sm:$0xff]
    %v3505 = vld [vmem:[%s3475 + $0xe8] sm:$0xff]
    %v3506 = vld [vmem:[%s3475 + $0xf0] sm:$0xff]
    %v3507 = vld [vmem:[%s3475 + $0xf8] sm:$0xff]
    %v3508 = vld [vmem:[%s3475 + $0x100] sm:$0xff]
    %v3509 = vld [vmem:[%s3475 + $0x108] sm:$0xff]
    %v3510 = vld [vmem:[%s3475 + $0x110] sm:$0xff]
    %v3511 = vld [vmem:[%s3475 + $0x118] sm:$0xff]
    %v3512 = vld [vmem:[%s3475 + $0x120] sm:$0xff]
    %v3513 = vld [vmem:[%s3475 + $0x128] sm:$0xff]
    %v3514 = vld [vmem:[%s3475 + $0x130] sm:$0xff]
    %v3515 = vld [vmem:[%s3475 + $0x138] sm:$0xff]
    %v3516 = vld [vmem:[%s3475 + $0x140] sm:$0xff]
    %v3517 = vld [vmem:[%s3475 + $0x148] sm:$0xff]
    %v3518 = vld [vmem:[%s3475 + $0x150] sm:$0xff]
    %v3519 = vld [vmem:[%s3475 + $0x158] sm:$0xff]
    %v3520 = vld [vmem:[%s3475 + $0x160] sm:$0xff]
    %v3521 = vld [vmem:[%s3475 + $0x168] sm:$0xff]
    %v3522 = vld [vmem:[%s3475 + $0x170] sm:$0xff]
    %v3523 = vld [vmem:[%s3475 + $0x178] sm:$0xff]
    %v3524 = vld [vmem:[%s3475 + $0x180] sm:$0xff]
    %v3525 = vld [vmem:[%s3475 + $0x188] sm:$0xff]
    %v3526 = vld [vmem:[%s3475 + $0x190] sm:$0xff]
    %v3527 = vld [vmem:[%s3475 + $0x198] sm:$0xff]
    %v3528 = vld [vmem:[%s3475 + $0x1a0] sm:$0xff]
    %v3529 = vld [vmem:[%s3475 + $0x1a8] sm:$0xff]
    %v3530 = vld [vmem:[%s3475 + $0x1b0] sm:$0xff]
    %v3531 = vld [vmem:[%s3475 + $0x1b8] sm:$0xff]
    %v3532 = vld [vmem:[%s3475 + $0x1c0] sm:$0xff]
    %v3533 = vld [vmem:[%s3475 + $0x1c8] sm:$0xff]
    %v3534 = vld [vmem:[%s3475 + $0x1d0] sm:$0xff]
    %v3535 = vld [vmem:[%s3475 + $0x1d8] sm:$0xff]
    %s3536 = scalar_lea.vmem %s16, 15
    %v3537 = vld [vmem:[%s3536] sm:$0x7]
    %v3539 = vlaneseq
    %v3540 = vshrl.u32 %v3539, 7
    %v3541 = vsub.s32 0, %v3540
    %v3542 = vrot.slane %v3537, %v3541
    %v3543 = vlaneseq
    %v3544 = vshrl.u32 %v3543, 7
    %v3545 = vsub.s32 1, %v3544
    %v3546 = vrot.slane %v3537, %v3545
    %v3547 = vlaneseq
    %v3548 = vshrl.u32 %v3547, 7
    %v3549 = vsub.s32 2, %v3548
    %v3550 = vrot.slane %v3537, %v3549
    %v3555 = vsel %vm177, %v3474, 0
    %3557 = vmatprep.subr.mxu0 %v3522
    %3558 = vmatpush1.msra.mxu0 %v3521
    %3559 = vmatprep.subr.mxu0 %v3519
    %3560 = vmatpush1.msra.mxu0 %v3518
    %3561 = vmatprep.subr.mxu0 %v3516
    %3562 = vmatpush1.msra.mxu0 %v3515
    %3563 = vmatprep.subr.mxu0 %v3513
    %3564 = vmatpush1.msra.mxu0 %v3512
    %3565 = vmatprep.subr.mxu0 %v3510
    %3566 = vmatpush1.msra.mxu0 %v3509
    %3567 = vmatprep.subr.mxu0 %v3507
    %3568 = vmatpush1.msra.mxu0 %v3506
    %3569 = vmatprep.subr.mxu0 %v3504
    %3570 = vmatpush1.msra.mxu0 %v3503
    %3571 = vmatprep.subr.mxu0 %v3501
    %3572 = vmatpush1.msra.mxu0 %v3500
    %3573 = vmatprep.subr.mxu0 %v3498
    %3574 = vmatpush1.msra.mxu0 %v3497
    %3575 = vmatprep.subr.mxu0 %v3495
    %3576 = vmatpush1.msra.mxu0 %v3494
    %3577 = vmatprep.subr.mxu0 %v3492
    %3578 = vmatpush1.msra.mxu0 %v3491
    %3579 = vmatprep.subr.mxu0 %v3489
    %3580 = vmatpush1.msra.mxu0 %v3488
    %3581 = vmatprep.subr.mxu0 %v3486
    %3582 = vmatpush1.msra.mxu0 %v3485
    %3583 = vmatprep.subr.mxu0 %v3483
    %3584 = vmatpush1.msra.mxu0 %v3482
    %3585 = vmatprep.subr.mxu0 %v3480
    %3586 = vmatpush1.msra.mxu0 %v3479
    %3587 = vmatprep.subr.mxu0 %v3477
    %3588 = vmatpush1.msra.mxu0 %v3476
    %3589 = vmatprep.subr.mxu0 0.0
    %3590 = vmatpush2.msra.mxu0 0.0
    %3591 = vmatprep.subr.mxu0 0.0
    %3592 = vmatpush2.msra.mxu0 0.0
    %3593 = vmatprep.subr.mxu0 0.0
    %3594 = vmatpush2.msra.mxu0 0.0
    %3595 = vmatprep.subr.mxu0 0.0
    %3596 = vmatpush2.msra.mxu0 0.0
    %3597 = vmatprep.subr.mxu0 0.0
    %3598 = vmatpush2.msra.mxu0 0.0
    %3599 = vmatprep.subr.mxu0 0.0
    %3600 = vmatpush2.msra.mxu0 0.0
    %3601 = vmatprep.subr.mxu0 0.0
    %3602 = vmatpush2.msra.mxu0 0.0
    %3603 = vmatprep.subr.mxu0 0.0
    %3604 = vmatpush2.msra.mxu0 0.0
    %3605 = vmatprep.subr.mxu0 0.0
    %3606 = vmatpush2.msra.mxu0 0.0
    %3607 = vmatprep.subr.mxu0 0.0
    %3608 = vmatpush2.msra.mxu0 0.0
    %3609 = vmatprep.subr.mxu0 0.0
    %3610 = vmatpush2.msra.mxu0 0.0
    %3611 = vmatprep.subr.mxu0 0.0
    %3612 = vmatpush2.msra.mxu0 0.0
    %3613 = vmatprep.subr.mxu0 %v3534
    %3614 = vmatpush2.msra.mxu0 %v3533
    %3615 = vmatprep.subr.mxu0 %v3531
    %3616 = vmatpush2.msra.mxu0 %v3530
    %3617 = vmatprep.subr.mxu0 %v3528
    %3618 = vmatpush2.msra.mxu0 %v3527
    %3619 = vmatprep.subr.mxu0 %v3525
    %3620 = vmatpush2.msra.mxu0 %v3524
    %3621 = vmatprep.mubr.f32.mxu0 %v3555
    %3622 = vmatmul.mubr.f32.gmra.mxu0 %v3473
    %v3623 = vpop.f32.mrf.mxu0
    %v3624 = vadd.f32 %v3542, %v3623
    %v3625 = vpop.f32.mrf.mxu0
    %v3626 = vadd.f32 %v3546, %v3625
    %3627 = vdwg.mxu0
    %3628 = vmatprep.subr.mxu0 0.0
    %3629 = vmatpush1.msra.mxu0 %v3523
    %3630 = vmatprep.subr.mxu0 0.0
    %3631 = vmatpush1.msra.mxu0 %v3520
    %3632 = vmatprep.subr.mxu0 0.0
    %3633 = vmatpush1.msra.mxu0 %v3517
    %3634 = vmatprep.subr.mxu0 0.0
    %3635 = vmatpush1.msra.mxu0 %v3514
    %3636 = vmatprep.subr.mxu0 0.0
    %3637 = vmatpush1.msra.mxu0 %v3511
    %3638 = vmatprep.subr.mxu0 0.0
    %3639 = vmatpush1.msra.mxu0 %v3508
    %3640 = vmatprep.subr.mxu0 0.0
    %3641 = vmatpush1.msra.mxu0 %v3505
    %3642 = vmatprep.subr.mxu0 0.0
    %3643 = vmatpush1.msra.mxu0 %v3502
    %3644 = vmatprep.subr.mxu0 0.0
    %3645 = vmatpush1.msra.mxu0 %v3499
    %3646 = vmatprep.subr.mxu0 0.0
    %3647 = vmatpush1.msra.mxu0 %v3496
    %3648 = vmatprep.subr.mxu0 0.0
    %3649 = vmatpush1.msra.mxu0 %v3493
    %3650 = vmatprep.subr.mxu0 0.0
    %3651 = vmatpush1.msra.mxu0 %v3490
    %3652 = vmatprep.subr.mxu0 0.0
    %3653 = vmatpush1.msra.mxu0 %v3487
    %3654 = vmatprep.subr.mxu0 0.0
    %3655 = vmatpush1.msra.mxu0 %v3484
    %3656 = vmatprep.subr.mxu0 0.0
    %3657 = vmatpush1.msra.mxu0 %v3481
    %3658 = vmatprep.subr.mxu0 0.0
    %3659 = vmatpush1.msra.mxu0 %v3478
    %3660 = vmatprep.subr.mxu0 0.0
    %3661 = vmatpush2.msra.mxu0 0.0
    %3662 = vmatprep.subr.mxu0 0.0
    %3663 = vmatpush2.msra.mxu0 0.0
    %3664 = vmatprep.subr.mxu0 0.0
    %3665 = vmatpush2.msra.mxu0 0.0
    %3666 = vmatprep.subr.mxu0 0.0
    %3667 = vmatpush2.msra.mxu0 0.0
    %3668 = vmatprep.subr.mxu0 0.0
    %3669 = vmatpush2.msra.mxu0 0.0
    %3670 = vmatprep.subr.mxu0 0.0
    %3671 = vmatpush2.msra.mxu0 0.0
    %3672 = vmatprep.subr.mxu0 0.0
    %3673 = vmatpush2.msra.mxu0 0.0
    %3674 = vmatprep.subr.mxu0 0.0
    %3675 = vmatpush2.msra.mxu0 0.0
    %3676 = vmatprep.subr.mxu0 0.0
    %3677 = vmatpush2.msra.mxu0 0.0
    %3678 = vmatprep.subr.mxu0 0.0
    %3679 = vmatpush2.msra.mxu0 0.0
    %3680 = vmatprep.subr.mxu0 0.0
    %3681 = vmatpush2.msra.mxu0 0.0
    %3682 = vmatprep.subr.mxu0 0.0
    %3683 = vmatpush2.msra.mxu0 0.0
    %3684 = vmatprep.subr.mxu0 0.0
    %3685 = vmatpush2.msra.mxu0 %v3535
    %3686 = vmatprep.subr.mxu0 0.0
    %3687 = vmatpush2.msra.mxu0 %v3532
    %3688 = vmatprep.subr.mxu0 0.0
    %3689 = vmatpush2.msra.mxu0 %v3529
    %3690 = vmatprep.subr.mxu0 0.0
    %3691 = vmatpush2.msra.mxu0 %v3526
    %3692 = vmatprep.mubr.f32.mxu0 %v3555
    %3693 = vmatmul.mubr.f32.gmra.mxu0 %v3473
    %v3694 = vpop.f32.mrf.mxu0
    %v3695 = vadd.f32 %v3550, %v3694
    %v3696 = vpop.f32.mrf.mxu0
    %3697 = vdwg.mxu0
    %v3698 = vmul.f32 %v3624, 0.4
    %v3699 = vmul.f32 %v3626, 0.4
    %v3700 = vmul.f32 %v3695, 0.4
    %v3701 = vmax.f32 %v3624, %v3698
    %v3702 = vmax.f32 %v3626, %v3699
    %v3703 = vmax.f32 %v3695, %v3700
    %v3704 = vadd.f32 %v3180, %v3701
    %v3705 = vadd.f32 %v3181, %v3702
    %v3706 = vadd.f32 %v3182, %v3703
    %v3707 = vmul.f32 %v3704, 0.70710677
    %v3708 = vmul.f32 %v3705, %v1068
    %v3709 = vmul.f32 %v3706, 1.0
    %3710 = vst [vmem:[#allocation2] sm:$0xff] %v3707
    %3711 = vst.msk [vmem:[#allocation2 + $0x8] sm:$0xff] %vm177, %v3708
    %v3712 = vld [vmem:[#allocation2] sm:$0xff]
    %v3713 = vld [vmem:[#allocation2 + $0x8] sm:$0xff]
    %s3714 = scalar_lea.vmem %s13, 3072
    %v3715 = vld [vmem:[%s3714] sm:$0xff]
    %v3716 = vld [vmem:[%s3714 + $0x8] sm:$0xff]
    %v3717 = vld [vmem:[%s3714 + $0x10] sm:$0xff]
    %v3718 = vld [vmem:[%s3714 + $0x18] sm:$0xff]
    %v3719 = vld [vmem:[%s3714 + $0x20] sm:$0xff]
    %v3720 = vld [vmem:[%s3714 + $0x28] sm:$0xff]
    %v3721 = vld [vmem:[%s3714 + $0x30] sm:$0xff]
    %v3722 = vld [vmem:[%s3714 + $0x38] sm:$0xff]
    %v3723 = vld [vmem:[%s3714 + $0x40] sm:$0xff]
    %v3724 = vld [vmem:[%s3714 + $0x48] sm:$0xff]
    %v3725 = vld [vmem:[%s3714 + $0x50] sm:$0xff]
    %v3726 = vld [vmem:[%s3714 + $0x58] sm:$0xff]
    %v3727 = vld [vmem:[%s3714 + $0x60] sm:$0xff]
    %v3728 = vld [vmem:[%s3714 + $0x68] sm:$0xff]
    %v3729 = vld [vmem:[%s3714 + $0x70] sm:$0xff]
    %v3730 = vld [vmem:[%s3714 + $0x78] sm:$0xff]
    %v3731 = vld [vmem:[%s3714 + $0x80] sm:$0xff]
    %v3732 = vld [vmem:[%s3714 + $0x88] sm:$0xff]
    %v3733 = vld [vmem:[%s3714 + $0x90] sm:$0xff]
    %v3734 = vld [vmem:[%s3714 + $0x98] sm:$0xff]
    %v3735 = vld [vmem:[%s3714 + $0xa0] sm:$0xff]
    %v3736 = vld [vmem:[%s3714 + $0xa8] sm:$0xff]
    %v3737 = vld [vmem:[%s3714 + $0xb0] sm:$0xff]
    %v3738 = vld [vmem:[%s3714 + $0xb8] sm:$0xff]
    %v3739 = vld [vmem:[%s3714 + $0xc0] sm:$0xff]
    %v3740 = vld [vmem:[%s3714 + $0xc8] sm:$0xff]
    %v3741 = vld [vmem:[%s3714 + $0xd0] sm:$0xff]
    %v3742 = vld [vmem:[%s3714 + $0xd8] sm:$0xff]
    %v3743 = vld [vmem:[%s3714 + $0xe0] sm:$0xff]
    %v3744 = vld [vmem:[%s3714 + $0xe8] sm:$0xff]
    %v3745 = vld [vmem:[%s3714 + $0xf0] sm:$0xff]
    %v3746 = vld [vmem:[%s3714 + $0xf8] sm:$0xff]
    %v3747 = vld [vmem:[%s3714 + $0x100] sm:$0xff]
    %v3748 = vld [vmem:[%s3714 + $0x108] sm:$0xff]
    %v3749 = vld [vmem:[%s3714 + $0x110] sm:$0xff]
    %v3750 = vld [vmem:[%s3714 + $0x118] sm:$0xff]
    %v3751 = vld [vmem:[%s3714 + $0x120] sm:$0xff]
    %v3752 = vld [vmem:[%s3714 + $0x128] sm:$0xff]
    %v3753 = vld [vmem:[%s3714 + $0x130] sm:$0xff]
    %v3754 = vld [vmem:[%s3714 + $0x138] sm:$0xff]
    %v3755 = vld [vmem:[%s3714 + $0x140] sm:$0xff]
    %v3756 = vld [vmem:[%s3714 + $0x148] sm:$0xff]
    %v3757 = vld [vmem:[%s3714 + $0x150] sm:$0xff]
    %v3758 = vld [vmem:[%s3714 + $0x158] sm:$0xff]
    %v3759 = vld [vmem:[%s3714 + $0x160] sm:$0xff]
    %v3760 = vld [vmem:[%s3714 + $0x168] sm:$0xff]
    %v3761 = vld [vmem:[%s3714 + $0x170] sm:$0xff]
    %v3762 = vld [vmem:[%s3714 + $0x178] sm:$0xff]
    %v3763 = vld [vmem:[%s3714 + $0x180] sm:$0xff]
    %v3764 = vld [vmem:[%s3714 + $0x188] sm:$0xff]
    %v3765 = vld [vmem:[%s3714 + $0x190] sm:$0xff]
    %v3766 = vld [vmem:[%s3714 + $0x198] sm:$0xff]
    %v3767 = vld [vmem:[%s3714 + $0x1a0] sm:$0xff]
    %v3768 = vld [vmem:[%s3714 + $0x1a8] sm:$0xff]
    %v3769 = vld [vmem:[%s3714 + $0x1b0] sm:$0xff]
    %v3770 = vld [vmem:[%s3714 + $0x1b8] sm:$0xff]
    %v3771 = vld [vmem:[%s3714 + $0x1c0] sm:$0xff]
    %v3772 = vld [vmem:[%s3714 + $0x1c8] sm:$0xff]
    %v3773 = vld [vmem:[%s3714 + $0x1d0] sm:$0xff]
    %v3774 = vld [vmem:[%s3714 + $0x1d8] sm:$0xff]
    %v3775 = vld [vmem:[%s3714 + $0x1e0] sm:$0xff]
    %v3776 = vld [vmem:[%s3714 + $0x1e8] sm:$0xff]
    %v3777 = vld [vmem:[%s3714 + $0x1f0] sm:$0xff]
    %v3778 = vld [vmem:[%s3714 + $0x1f8] sm:$0xff]
    %3779 = vmatprep.subr.mxu0 %v3746
    %3780 = vmatpush1.msra.mxu0 %v3745
    %3781 = vmatprep.subr.mxu0 %v3744
    %3782 = vmatpush1.msra.mxu0 %v3743
    %3783 = vmatprep.subr.mxu0 %v3742
    %3784 = vmatpush1.msra.mxu0 %v3741
    %3785 = vmatprep.subr.mxu0 %v3740
    %3786 = vmatpush1.msra.mxu0 %v3739
    %3787 = vmatprep.subr.mxu0 %v3738
    %3788 = vmatpush1.msra.mxu0 %v3737
    %3789 = vmatprep.subr.mxu0 %v3736
    %3790 = vmatpush1.msra.mxu0 %v3735
    %3791 = vmatprep.subr.mxu0 %v3734
    %3792 = vmatpush1.msra.mxu0 %v3733
    %3793 = vmatprep.subr.mxu0 %v3732
    %3794 = vmatpush1.msra.mxu0 %v3731
    %3795 = vmatprep.subr.mxu0 %v3730
    %3796 = vmatpush1.msra.mxu0 %v3729
    %3797 = vmatprep.subr.mxu0 %v3728
    %3798 = vmatpush1.msra.mxu0 %v3727
    %3799 = vmatprep.subr.mxu0 %v3726
    %3800 = vmatpush1.msra.mxu0 %v3725
    %3801 = vmatprep.subr.mxu0 %v3724
    %3802 = vmatpush1.msra.mxu0 %v3723
    %3803 = vmatprep.subr.mxu0 %v3722
    %3804 = vmatpush1.msra.mxu0 %v3721
    %3805 = vmatprep.subr.mxu0 %v3720
    %3806 = vmatpush1.msra.mxu0 %v3719
    %3807 = vmatprep.subr.mxu0 %v3718
    %3808 = vmatpush1.msra.mxu0 %v3717
    %3809 = vmatprep.subr.mxu0 %v3716
    %3810 = vmatpush1.msra.mxu0 %v3715
    %3811 = vmatprep.subr.mxu0 %v3778
    %3812 = vmatpush2.msra.mxu0 %v3777
    %3813 = vmatprep.subr.mxu0 %v3776
    %3814 = vmatpush2.msra.mxu0 %v3775
    %3815 = vmatprep.subr.mxu0 %v3774
    %3816 = vmatpush2.msra.mxu0 %v3773
    %3817 = vmatprep.subr.mxu0 %v3772
    %3818 = vmatpush2.msra.mxu0 %v3771
    %3819 = vmatprep.subr.mxu0 %v3770
    %3820 = vmatpush2.msra.mxu0 %v3769
    %3821 = vmatprep.subr.mxu0 %v3768
    %3822 = vmatpush2.msra.mxu0 %v3767
    %3823 = vmatprep.subr.mxu0 %v3766
    %3824 = vmatpush2.msra.mxu0 %v3765
    %3825 = vmatprep.subr.mxu0 %v3764
    %3826 = vmatpush2.msra.mxu0 %v3763
    %3827 = vmatprep.subr.mxu0 %v3762
    %3828 = vmatpush2.msra.mxu0 %v3761
    %3829 = vmatprep.subr.mxu0 %v3760
    %3830 = vmatpush2.msra.mxu0 %v3759
    %3831 = vmatprep.subr.mxu0 %v3758
    %3832 = vmatpush2.msra.mxu0 %v3757
    %3833 = vmatprep.subr.mxu0 %v3756
    %3834 = vmatpush2.msra.mxu0 %v3755
    %3835 = vmatprep.subr.mxu0 %v3754
    %3836 = vmatpush2.msra.mxu0 %v3753
    %3837 = vmatprep.subr.mxu0 %v3752
    %3838 = vmatpush2.msra.mxu0 %v3751
    %3839 = vmatprep.subr.mxu0 %v3750
    %3840 = vmatpush2.msra.mxu0 %v3749
    %3841 = vmatprep.subr.mxu0 %v3748
    %3842 = vmatpush2.msra.mxu0 %v3747
    %3843 = vmatprep.mubr.f32.mxu0 %v3713
    %3844 = vmatmul.mubr.f32.gmra.mxu0 %v3712
    %v3845 = vpop.f32.mrf.mxu0
    %v3846 = vadd.f32 0.0, %v3845
    %v3847 = vpop.f32.mrf.mxu0
    %v3848 = vadd.f32 0.0, %v3847
    %3849 = vdwg.mxu0
    %s3850 = scalar_lea.vmem %s14, 3072
    %v3851 = vld [vmem:[%s3850] sm:$0xff]
    %v3852 = vld [vmem:[%s3850 + $0x8] sm:$0xff]
    %v3853 = vld [vmem:[%s3850 + $0x10] sm:$0xff]
    %v3854 = vld [vmem:[%s3850 + $0x18] sm:$0xff]
    %v3855 = vld [vmem:[%s3850 + $0x20] sm:$0xff]
    %v3856 = vld [vmem:[%s3850 + $0x28] sm:$0xff]
    %v3857 = vld [vmem:[%s3850 + $0x30] sm:$0xff]
    %v3858 = vld [vmem:[%s3850 + $0x38] sm:$0xff]
    %v3859 = vld [vmem:[%s3850 + $0x40] sm:$0xff]
    %v3860 = vld [vmem:[%s3850 + $0x48] sm:$0xff]
    %v3861 = vld [vmem:[%s3850 + $0x50] sm:$0xff]
    %v3862 = vld [vmem:[%s3850 + $0x58] sm:$0xff]
    %v3863 = vld [vmem:[%s3850 + $0x60] sm:$0xff]
    %v3864 = vld [vmem:[%s3850 + $0x68] sm:$0xff]
    %v3865 = vld [vmem:[%s3850 + $0x70] sm:$0xff]
    %v3866 = vld [vmem:[%s3850 + $0x78] sm:$0xff]
    %v3867 = vld [vmem:[%s3850 + $0x80] sm:$0xff]
    %v3868 = vld [vmem:[%s3850 + $0x88] sm:$0xff]
    %v3869 = vld [vmem:[%s3850 + $0x90] sm:$0xff]
    %v3870 = vld [vmem:[%s3850 + $0x98] sm:$0xff]
    %v3871 = vld [vmem:[%s3850 + $0xa0] sm:$0xff]
    %v3872 = vld [vmem:[%s3850 + $0xa8] sm:$0xff]
    %v3873 = vld [vmem:[%s3850 + $0xb0] sm:$0xff]
    %v3874 = vld [vmem:[%s3850 + $0xb8] sm:$0xff]
    %v3875 = vld [vmem:[%s3850 + $0xc0] sm:$0xff]
    %v3876 = vld [vmem:[%s3850 + $0xc8] sm:$0xff]
    %v3877 = vld [vmem:[%s3850 + $0xd0] sm:$0xff]
    %v3878 = vld [vmem:[%s3850 + $0xd8] sm:$0xff]
    %v3879 = vld [vmem:[%s3850 + $0xe0] sm:$0xff]
    %v3880 = vld [vmem:[%s3850 + $0xe8] sm:$0xff]
    %v3881 = vld [vmem:[%s3850 + $0xf0] sm:$0xff]
    %v3882 = vld [vmem:[%s3850 + $0xf8] sm:$0xff]
    %v3883 = vld [vmem:[%s3850 + $0x100] sm:$0xff]
    %v3884 = vld [vmem:[%s3850 + $0x108] sm:$0xff]
    %v3885 = vld [vmem:[%s3850 + $0x110] sm:$0xff]
    %v3886 = vld [vmem:[%s3850 + $0x118] sm:$0xff]
    %v3887 = vld [vmem:[%s3850 + $0x120] sm:$0xff]
    %v3888 = vld [vmem:[%s3850 + $0x128] sm:$0xff]
    %v3889 = vld [vmem:[%s3850 + $0x130] sm:$0xff]
    %v3890 = vld [vmem:[%s3850 + $0x138] sm:$0xff]
    %v3891 = vld [vmem:[%s3850 + $0x140] sm:$0xff]
    %v3892 = vld [vmem:[%s3850 + $0x148] sm:$0xff]
    %v3893 = vld [vmem:[%s3850 + $0x150] sm:$0xff]
    %v3894 = vld [vmem:[%s3850 + $0x158] sm:$0xff]
    %v3895 = vld [vmem:[%s3850 + $0x160] sm:$0xff]
    %v3896 = vld [vmem:[%s3850 + $0x168] sm:$0xff]
    %v3897 = vld [vmem:[%s3850 + $0x170] sm:$0xff]
    %v3898 = vld [vmem:[%s3850 + $0x178] sm:$0xff]
    %v3899 = vld [vmem:[%s3850 + $0x180] sm:$0xff]
    %v3900 = vld [vmem:[%s3850 + $0x188] sm:$0xff]
    %v3901 = vld [vmem:[%s3850 + $0x190] sm:$0xff]
    %v3902 = vld [vmem:[%s3850 + $0x198] sm:$0xff]
    %v3903 = vld [vmem:[%s3850 + $0x1a0] sm:$0xff]
    %v3904 = vld [vmem:[%s3850 + $0x1a8] sm:$0xff]
    %v3905 = vld [vmem:[%s3850 + $0x1b0] sm:$0xff]
    %v3906 = vld [vmem:[%s3850 + $0x1b8] sm:$0xff]
    %v3907 = vld [vmem:[%s3850 + $0x1c0] sm:$0xff]
    %v3908 = vld [vmem:[%s3850 + $0x1c8] sm:$0xff]
    %v3909 = vld [vmem:[%s3850 + $0x1d0] sm:$0xff]
    %v3910 = vld [vmem:[%s3850 + $0x1d8] sm:$0xff]
    %v3911 = vld [vmem:[%s3850 + $0x1e0] sm:$0xff]
    %v3912 = vld [vmem:[%s3850 + $0x1e8] sm:$0xff]
    %v3913 = vld [vmem:[%s3850 + $0x1f0] sm:$0xff]
    %v3914 = vld [vmem:[%s3850 + $0x1f8] sm:$0xff]
    %3915 = vmatprep.subr.mxu0 %v3882
    %3916 = vmatpush1.msra.mxu0 %v3881
    %3917 = vmatprep.subr.mxu0 %v3880
    %3918 = vmatpush1.msra.mxu0 %v3879
    %3919 = vmatprep.subr.mxu0 %v3878
    %3920 = vmatpush1.msra.mxu0 %v3877
    %3921 = vmatprep.subr.mxu0 %v3876
    %3922 = vmatpush1.msra.mxu0 %v3875
    %3923 = vmatprep.subr.mxu0 %v3874
    %3924 = vmatpush1.msra.mxu0 %v3873
    %3925 = vmatprep.subr.mxu0 %v3872
    %3926 = vmatpush1.msra.mxu0 %v3871
    %3927 = vmatprep.subr.mxu0 %v3870
    %3928 = vmatpush1.msra.mxu0 %v3869
    %3929 = vmatprep.subr.mxu0 %v3868
    %3930 = vmatpush1.msra.mxu0 %v3867
    %3931 = vmatprep.subr.mxu0 %v3866
    %3932 = vmatpush1.msra.mxu0 %v3865
    %3933 = vmatprep.subr.mxu0 %v3864
    %3934 = vmatpush1.msra.mxu0 %v3863
    %3935 = vmatprep.subr.mxu0 %v3862
    %3936 = vmatpush1.msra.mxu0 %v3861
    %3937 = vmatprep.subr.mxu0 %v3860
    %3938 = vmatpush1.msra.mxu0 %v3859
    %3939 = vmatprep.subr.mxu0 %v3858
    %3940 = vmatpush1.msra.mxu0 %v3857
    %3941 = vmatprep.subr.mxu0 %v3856
    %3942 = vmatpush1.msra.mxu0 %v3855
    %3943 = vmatprep.subr.mxu0 %v3854
    %3944 = vmatpush1.msra.mxu0 %v3853
    %3945 = vmatprep.subr.mxu0 %v3852
    %3946 = vmatpush1.msra.mxu0 %v3851
    %3947 = vmatprep.subr.mxu0 %v3914
    %3948 = vmatpush2.msra.mxu0 %v3913
    %3949 = vmatprep.subr.mxu0 %v3912
    %3950 = vmatpush2.msra.mxu0 %v3911
    %3951 = vmatprep.subr.mxu0 %v3910
    %3952 = vmatpush2.msra.mxu0 %v3909
    %3953 = vmatprep.subr.mxu0 %v3908
    %3954 = vmatpush2.msra.mxu0 %v3907
    %3955 = vmatprep.subr.mxu0 %v3906
    %3956 = vmatpush2.msra.mxu0 %v3905
    %3957 = vmatprep.subr.mxu0 %v3904
    %3958 = vmatpush2.msra.mxu0 %v3903
    %3959 = vmatprep.subr.mxu0 %v3902
    %3960 = vmatpush2.msra.mxu0 %v3901
    %3961 = vmatprep.subr.mxu0 %v3900
    %3962 = vmatpush2.msra.mxu0 %v3899
    %3963 = vmatprep.subr.mxu0 %v3898
    %3964 = vmatpush2.msra.mxu0 %v3897
    %3965 = vmatprep.subr.mxu0 %v3896
    %3966 = vmatpush2.msra.mxu0 %v3895
    %3967 = vmatprep.subr.mxu0 %v3894
    %3968 = vmatpush2.msra.mxu0 %v3893
    %3969 = vmatprep.subr.mxu0 %v3892
    %3970 = vmatpush2.msra.mxu0 %v3891
    %3971 = vmatprep.subr.mxu0 %v3890
    %3972 = vmatpush2.msra.mxu0 %v3889
    %3973 = vmatprep.subr.mxu0 %v3888
    %3974 = vmatpush2.msra.mxu0 %v3887
    %3975 = vmatprep.subr.mxu0 %v3886
    %3976 = vmatpush2.msra.mxu0 %v3885
    %3977 = vmatprep.subr.mxu0 %v3884
    %3978 = vmatpush2.msra.mxu0 %v3883
    %3979 = vmatprep.mubr.f32.mxu0 %v3713
    %3980 = vmatmul.mubr.f32.gmra.mxu0 %v3712
    %v3981 = vpop.f32.mrf.mxu0
    %v3982 = vadd.f32 0.0, %v3981
    %v3983 = vpop.f32.mrf.mxu0
    %v3984 = vadd.f32 0.0, %v3983
    %3985 = vdwg.mxu0
    %v3986 = vxor.u32 %v3846, 2147483648
    %v3987 = vxor.u32 %v3848, 2147483648
    %v3988 = vmul.f32 %v3986, 1.442695
    %v3989 = vpow.pop %v3988
    %v3990 = vmul.f32 %v3987, 1.442695
    %v3991 = vpow.pop %v3990
    %v3992 = vadd.f32 %v3989, 1.0
    %v3993 = vadd.f32 %v3991, 1.0
    %v3994 = vrcp.pop %v3992
    %v3995 = vmul.f32 1.0, %v3994
    %v3996 = vrcp.pop %v3993
    %v3997 = vmul.f32 1.0, %v3996
    %v3998 = vtanh.pop %v3982
    %v3999 = vtanh.pop %v3984
    %v4000 = vmul.f32 %v3995, %v3998
    %v4001 = vmul.f32 %v3997, %v3999
    %s4002 = scalar_lea.vmem %s15, 2880
    %v4003 = vld [vmem:[%s4002] sm:$0xff]
    %v4004 = vld [vmem:[%s4002 + $0x8] sm:$0xff]
    %v4005 = vld [vmem:[%s4002 + $0x10] sm:$0xff]
    %v4006 = vld [vmem:[%s4002 + $0x18] sm:$0xff]
    %v4007 = vld [vmem:[%s4002 + $0x20] sm:$0xff]
    %v4008 = vld [vmem:[%s4002 + $0x28] sm:$0xff]
    %v4009 = vld [vmem:[%s4002 + $0x30] sm:$0xff]
    %v4010 = vld [vmem:[%s4002 + $0x38] sm:$0xff]
    %v4011 = vld [vmem:[%s4002 + $0x40] sm:$0xff]
    %v4012 = vld [vmem:[%s4002 + $0x48] sm:$0xff]
    %v4013 = vld [vmem:[%s4002 + $0x50] sm:$0xff]
    %v4014 = vld [vmem:[%s4002 + $0x58] sm:$0xff]
    %v4015 = vld [vmem:[%s4002 + $0x60] sm:$0xff]
    %v4016 = vld [vmem:[%s4002 + $0x68] sm:$0xff]
    %v4017 = vld [vmem:[%s4002 + $0x70] sm:$0xff]
    %v4018 = vld [vmem:[%s4002 + $0x78] sm:$0xff]
    %v4019 = vld [vmem:[%s4002 + $0x80] sm:$0xff]
    %v4020 = vld [vmem:[%s4002 + $0x88] sm:$0xff]
    %v4021 = vld [vmem:[%s4002 + $0x90] sm:$0xff]
    %v4022 = vld [vmem:[%s4002 + $0x98] sm:$0xff]
    %v4023 = vld [vmem:[%s4002 + $0xa0] sm:$0xff]
    %v4024 = vld [vmem:[%s4002 + $0xa8] sm:$0xff]
    %v4025 = vld [vmem:[%s4002 + $0xb0] sm:$0xff]
    %v4026 = vld [vmem:[%s4002 + $0xb8] sm:$0xff]
    %v4027 = vld [vmem:[%s4002 + $0xc0] sm:$0xff]
    %v4028 = vld [vmem:[%s4002 + $0xc8] sm:$0xff]
    %v4029 = vld [vmem:[%s4002 + $0xd0] sm:$0xff]
    %v4030 = vld [vmem:[%s4002 + $0xd8] sm:$0xff]
    %v4031 = vld [vmem:[%s4002 + $0xe0] sm:$0xff]
    %v4032 = vld [vmem:[%s4002 + $0xe8] sm:$0xff]
    %v4033 = vld [vmem:[%s4002 + $0xf0] sm:$0xff]
    %v4034 = vld [vmem:[%s4002 + $0xf8] sm:$0xff]
    %v4035 = vld [vmem:[%s4002 + $0x100] sm:$0xff]
    %v4036 = vld [vmem:[%s4002 + $0x108] sm:$0xff]
    %v4037 = vld [vmem:[%s4002 + $0x110] sm:$0xff]
    %v4038 = vld [vmem:[%s4002 + $0x118] sm:$0xff]
    %v4039 = vld [vmem:[%s4002 + $0x120] sm:$0xff]
    %v4040 = vld [vmem:[%s4002 + $0x128] sm:$0xff]
    %v4041 = vld [vmem:[%s4002 + $0x130] sm:$0xff]
    %v4042 = vld [vmem:[%s4002 + $0x138] sm:$0xff]
    %v4043 = vld [vmem:[%s4002 + $0x140] sm:$0xff]
    %v4044 = vld [vmem:[%s4002 + $0x148] sm:$0xff]
    %v4045 = vld [vmem:[%s4002 + $0x150] sm:$0xff]
    %v4046 = vld [vmem:[%s4002 + $0x158] sm:$0xff]
    %v4047 = vld [vmem:[%s4002 + $0x160] sm:$0xff]
    %v4048 = vld [vmem:[%s4002 + $0x168] sm:$0xff]
    %v4049 = vld [vmem:[%s4002 + $0x170] sm:$0xff]
    %v4050 = vld [vmem:[%s4002 + $0x178] sm:$0xff]
    %v4051 = vld [vmem:[%s4002 + $0x180] sm:$0xff]
    %v4052 = vld [vmem:[%s4002 + $0x188] sm:$0xff]
    %v4053 = vld [vmem:[%s4002 + $0x190] sm:$0xff]
    %v4054 = vld [vmem:[%s4002 + $0x198] sm:$0xff]
    %v4055 = vld [vmem:[%s4002 + $0x1a0] sm:$0xff]
    %v4056 = vld [vmem:[%s4002 + $0x1a8] sm:$0xff]
    %v4057 = vld [vmem:[%s4002 + $0x1b0] sm:$0xff]
    %v4058 = vld [vmem:[%s4002 + $0x1b8] sm:$0xff]
    %v4059 = vld [vmem:[%s4002 + $0x1c0] sm:$0xff]
    %v4060 = vld [vmem:[%s4002 + $0x1c8] sm:$0xff]
    %v4061 = vld [vmem:[%s4002 + $0x1d0] sm:$0xff]
    %v4062 = vld [vmem:[%s4002 + $0x1d8] sm:$0xff]
    %s4063 = scalar_lea.vmem %s16, 18
    %v4064 = vld [vmem:[%s4063] sm:$0x7]
    %v4066 = vlaneseq
    %v4067 = vshrl.u32 %v4066, 7
    %v4068 = vsub.s32 0, %v4067
    %v4069 = vrot.slane %v4064, %v4068
    %v4070 = vlaneseq
    %v4071 = vshrl.u32 %v4070, 7
    %v4072 = vsub.s32 1, %v4071
    %v4073 = vrot.slane %v4064, %v4072
    %v4074 = vlaneseq
    %v4075 = vshrl.u32 %v4074, 7
    %v4076 = vsub.s32 2, %v4075
    %v4077 = vrot.slane %v4064, %v4076
    %v4082 = vsel %vm177, %v4001, 0
    %4084 = vmatprep.subr.mxu0 %v4049
    %4085 = vmatpush1.msra.mxu0 %v4048
    %4086 = vmatprep.subr.mxu0 %v4046
    %4087 = vmatpush1.msra.mxu0 %v4045
    %4088 = vmatprep.subr.mxu0 %v4043
    %4089 = vmatpush1.msra.mxu0 %v4042
    %4090 = vmatprep.subr.mxu0 %v4040
    %4091 = vmatpush1.msra.mxu0 %v4039
    %4092 = vmatprep.subr.mxu0 %v4037
    %4093 = vmatpush1.msra.mxu0 %v4036
    %4094 = vmatprep.subr.mxu0 %v4034
    %4095 = vmatpush1.msra.mxu0 %v4033
    %4096 = vmatprep.subr.mxu0 %v4031
    %4097 = vmatpush1.msra.mxu0 %v4030
    %4098 = vmatprep.subr.mxu0 %v4028
    %4099 = vmatpush1.msra.mxu0 %v4027
    %4100 = vmatprep.subr.mxu0 %v4025
    %4101 = vmatpush1.msra.mxu0 %v4024
    %4102 = vmatprep.subr.mxu0 %v4022
    %4103 = vmatpush1.msra.mxu0 %v4021
    %4104 = vmatprep.subr.mxu0 %v4019
    %4105 = vmatpush1.msra.mxu0 %v4018
    %4106 = vmatprep.subr.mxu0 %v4016
    %4107 = vmatpush1.msra.mxu0 %v4015
    %4108 = vmatprep.subr.mxu0 %v4013
    %4109 = vmatpush1.msra.mxu0 %v4012
    %4110 = vmatprep.subr.mxu0 %v4010
    %4111 = vmatpush1.msra.mxu0 %v4009
    %4112 = vmatprep.subr.mxu0 %v4007
    %4113 = vmatpush1.msra.mxu0 %v4006
    %4114 = vmatprep.subr.mxu0 %v4004
    %4115 = vmatpush1.msra.mxu0 %v4003
    %4116 = vmatprep.subr.mxu0 0.0
    %4117 = vmatpush2.msra.mxu0 0.0
    %4118 = vmatprep.subr.mxu0 0.0
    %4119 = vmatpush2.msra.mxu0 0.0
    %4120 = vmatprep.subr.mxu0 0.0
    %4121 = vmatpush2.msra.mxu0 0.0
    %4122 = vmatprep.subr.mxu0 0.0
    %4123 = vmatpush2.msra.mxu0 0.0
    %4124 = vmatprep.subr.mxu0 0.0
    %4125 = vmatpush2.msra.mxu0 0.0
    %4126 = vmatprep.subr.mxu0 0.0
    %4127 = vmatpush2.msra.mxu0 0.0
    %4128 = vmatprep.subr.mxu0 0.0
    %4129 = vmatpush2.msra.mxu0 0.0
    %4130 = vmatprep.subr.mxu0 0.0
    %4131 = vmatpush2.msra.mxu0 0.0
    %4132 = vmatprep.subr.mxu0 0.0
    %4133 = vmatpush2.msra.mxu0 0.0
    %4134 = vmatprep.subr.mxu0 0.0
    %4135 = vmatpush2.msra.mxu0 0.0
    %4136 = vmatprep.subr.mxu0 0.0
    %4137 = vmatpush2.msra.mxu0 0.0
    %4138 = vmatprep.subr.mxu0 0.0
    %4139 = vmatpush2.msra.mxu0 0.0
    %4140 = vmatprep.subr.mxu0 %v4061
    %4141 = vmatpush2.msra.mxu0 %v4060
    %4142 = vmatprep.subr.mxu0 %v4058
    %4143 = vmatpush2.msra.mxu0 %v4057
    %4144 = vmatprep.subr.mxu0 %v4055
    %4145 = vmatpush2.msra.mxu0 %v4054
    %4146 = vmatprep.subr.mxu0 %v4052
    %4147 = vmatpush2.msra.mxu0 %v4051
    %4148 = vmatprep.mubr.f32.mxu0 %v4082
    %4149 = vmatmul.mubr.f32.gmra.mxu0 %v4000
    %v4150 = vpop.f32.mrf.mxu0
    %v4151 = vadd.f32 %v4069, %v4150
    %v4152 = vpop.f32.mrf.mxu0
    %v4153 = vadd.f32 %v4073, %v4152
    %4154 = vdwg.mxu0
    %4155 = vmatprep.subr.mxu0 0.0
    %4156 = vmatpush1.msra.mxu0 %v4050
    %4157 = vmatprep.subr.mxu0 0.0
    %4158 = vmatpush1.msra.mxu0 %v4047
    %4159 = vmatprep.subr.mxu0 0.0
    %4160 = vmatpush1.msra.mxu0 %v4044
    %4161 = vmatprep.subr.mxu0 0.0
    %4162 = vmatpush1.msra.mxu0 %v4041
    %4163 = vmatprep.subr.mxu0 0.0
    %4164 = vmatpush1.msra.mxu0 %v4038
    %4165 = vmatprep.subr.mxu0 0.0
    %4166 = vmatpush1.msra.mxu0 %v4035
    %4167 = vmatprep.subr.mxu0 0.0
    %4168 = vmatpush1.msra.mxu0 %v4032
    %4169 = vmatprep.subr.mxu0 0.0
    %4170 = vmatpush1.msra.mxu0 %v4029
    %4171 = vmatprep.subr.mxu0 0.0
    %4172 = vmatpush1.msra.mxu0 %v4026
    %4173 = vmatprep.subr.mxu0 0.0
    %4174 = vmatpush1.msra.mxu0 %v4023
    %4175 = vmatprep.subr.mxu0 0.0
    %4176 = vmatpush1.msra.mxu0 %v4020
    %4177 = vmatprep.subr.mxu0 0.0
    %4178 = vmatpush1.msra.mxu0 %v4017
    %4179 = vmatprep.subr.mxu0 0.0
    %4180 = vmatpush1.msra.mxu0 %v4014
    %4181 = vmatprep.subr.mxu0 0.0
    %4182 = vmatpush1.msra.mxu0 %v4011
    %4183 = vmatprep.subr.mxu0 0.0
    %4184 = vmatpush1.msra.mxu0 %v4008
    %4185 = vmatprep.subr.mxu0 0.0
    %4186 = vmatpush1.msra.mxu0 %v4005
    %4187 = vmatprep.subr.mxu0 0.0
    %4188 = vmatpush2.msra.mxu0 0.0
    %4189 = vmatprep.subr.mxu0 0.0
    %4190 = vmatpush2.msra.mxu0 0.0
    %4191 = vmatprep.subr.mxu0 0.0
    %4192 = vmatpush2.msra.mxu0 0.0
    %4193 = vmatprep.subr.mxu0 0.0
    %4194 = vmatpush2.msra.mxu0 0.0
    %4195 = vmatprep.subr.mxu0 0.0
    %4196 = vmatpush2.msra.mxu0 0.0
    %4197 = vmatprep.subr.mxu0 0.0
    %4198 = vmatpush2.msra.mxu0 0.0
    %4199 = vmatprep.subr.mxu0 0.0
    %4200 = vmatpush2.msra.mxu0 0.0
    %4201 = vmatprep.subr.mxu0 0.0
    %4202 = vmatpush2.msra.mxu0 0.0
    %4203 = vmatprep.subr.mxu0 0.0
    %4204 = vmatpush2.msra.mxu0 0.0
    %4205 = vmatprep.subr.mxu0 0.0
    %4206 = vmatpush2.msra.mxu0 0.0
    %4207 = vmatprep.subr.mxu0 0.0
    %4208 = vmatpush2.msra.mxu0 0.0
    %4209 = vmatprep.subr.mxu0 0.0
    %4210 = vmatpush2.msra.mxu0 0.0
    %4211 = vmatprep.subr.mxu0 0.0
    %4212 = vmatpush2.msra.mxu0 %v4062
    %4213 = vmatprep.subr.mxu0 0.0
    %4214 = vmatpush2.msra.mxu0 %v4059
    %4215 = vmatprep.subr.mxu0 0.0
    %4216 = vmatpush2.msra.mxu0 %v4056
    %4217 = vmatprep.subr.mxu0 0.0
    %4218 = vmatpush2.msra.mxu0 %v4053
    %4219 = vmatprep.mubr.f32.mxu0 %v4082
    %4220 = vmatmul.mubr.f32.gmra.mxu0 %v4000
    %v4221 = vpop.f32.mrf.mxu0
    %v4222 = vadd.f32 %v4077, %v4221
    %v4223 = vpop.f32.mrf.mxu0
    %4224 = vdwg.mxu0
    %v4225 = vmul.f32 %v4151, 0.4
    %v4226 = vmul.f32 %v4153, 0.4
    %v4227 = vmul.f32 %v4222, 0.4
    %v4228 = vmax.f32 %v4151, %v4225
    %v4229 = vmax.f32 %v4153, %v4226
    %v4230 = vmax.f32 %v4222, %v4227
    %v4231 = vadd.f32 %v3707, %v4228
    %v4232 = vadd.f32 %v3708, %v4229
    %v4233 = vadd.f32 %v3709, %v4230
    %v4234 = vmul.f32 %v4231, 0.70710677
    %v4235 = vmul.f32 %v4232, %v1068
    %v4236 = vmul.f32 %v4233, 1.0
    %4237 = vst [vmem:[#allocation2] sm:$0xff] %v4234
    %4238 = vst.msk [vmem:[#allocation2 + $0x8] sm:$0xff] %vm177, %v4235
    %v4239 = vld [vmem:[#allocation2] sm:$0xff]
    %v4240 = vld [vmem:[#allocation2 + $0x8] sm:$0xff]
    %s4241 = scalar_lea.vmem %s13, 3584
    %v4242 = vld [vmem:[%s4241] sm:$0xff]
    %v4243 = vld [vmem:[%s4241 + $0x8] sm:$0xff]
    %v4244 = vld [vmem:[%s4241 + $0x10] sm:$0xff]
    %v4245 = vld [vmem:[%s4241 + $0x18] sm:$0xff]
    %v4246 = vld [vmem:[%s4241 + $0x20] sm:$0xff]
    %v4247 = vld [vmem:[%s4241 + $0x28] sm:$0xff]
    %v4248 = vld [vmem:[%s4241 + $0x30] sm:$0xff]
    %v4249 = vld [vmem:[%s4241 + $0x38] sm:$0xff]
    %v4250 = vld [vmem:[%s4241 + $0x40] sm:$0xff]
    %v4251 = vld [vmem:[%s4241 + $0x48] sm:$0xff]
    %v4252 = vld [vmem:[%s4241 + $0x50] sm:$0xff]
    %v4253 = vld [vmem:[%s4241 + $0x58] sm:$0xff]
    %v4254 = vld [vmem:[%s4241 + $0x60] sm:$0xff]
    %v4255 = vld [vmem:[%s4241 + $0x68] sm:$0xff]
    %v4256 = vld [vmem:[%s4241 + $0x70] sm:$0xff]
    %v4257 = vld [vmem:[%s4241 + $0x78] sm:$0xff]
    %v4258 = vld [vmem:[%s4241 + $0x80] sm:$0xff]
    %v4259 = vld [vmem:[%s4241 + $0x88] sm:$0xff]
    %v4260 = vld [vmem:[%s4241 + $0x90] sm:$0xff]
    %v4261 = vld [vmem:[%s4241 + $0x98] sm:$0xff]
    %v4262 = vld [vmem:[%s4241 + $0xa0] sm:$0xff]
    %v4263 = vld [vmem:[%s4241 + $0xa8] sm:$0xff]
    %v4264 = vld [vmem:[%s4241 + $0xb0] sm:$0xff]
    %v4265 = vld [vmem:[%s4241 + $0xb8] sm:$0xff]
    %v4266 = vld [vmem:[%s4241 + $0xc0] sm:$0xff]
    %v4267 = vld [vmem:[%s4241 + $0xc8] sm:$0xff]
    %v4268 = vld [vmem:[%s4241 + $0xd0] sm:$0xff]
    %v4269 = vld [vmem:[%s4241 + $0xd8] sm:$0xff]
    %v4270 = vld [vmem:[%s4241 + $0xe0] sm:$0xff]
    %v4271 = vld [vmem:[%s4241 + $0xe8] sm:$0xff]
    %v4272 = vld [vmem:[%s4241 + $0xf0] sm:$0xff]
    %v4273 = vld [vmem:[%s4241 + $0xf8] sm:$0xff]
    %v4274 = vld [vmem:[%s4241 + $0x100] sm:$0xff]
    %v4275 = vld [vmem:[%s4241 + $0x108] sm:$0xff]
    %v4276 = vld [vmem:[%s4241 + $0x110] sm:$0xff]
    %v4277 = vld [vmem:[%s4241 + $0x118] sm:$0xff]
    %v4278 = vld [vmem:[%s4241 + $0x120] sm:$0xff]
    %v4279 = vld [vmem:[%s4241 + $0x128] sm:$0xff]
    %v4280 = vld [vmem:[%s4241 + $0x130] sm:$0xff]
    %v4281 = vld [vmem:[%s4241 + $0x138] sm:$0xff]
    %v4282 = vld [vmem:[%s4241 + $0x140] sm:$0xff]
    %v4283 = vld [vmem:[%s4241 + $0x148] sm:$0xff]
    %v4284 = vld [vmem:[%s4241 + $0x150] sm:$0xff]
    %v4285 = vld [vmem:[%s4241 + $0x158] sm:$0xff]
    %v4286 = vld [vmem:[%s4241 + $0x160] sm:$0xff]
    %v4287 = vld [vmem:[%s4241 + $0x168] sm:$0xff]
    %v4288 = vld [vmem:[%s4241 + $0x170] sm:$0xff]
    %v4289 = vld [vmem:[%s4241 + $0x178] sm:$0xff]
    %v4290 = vld [vmem:[%s4241 + $0x180] sm:$0xff]
    %v4291 = vld [vmem:[%s4241 + $0x188] sm:$0xff]
    %v4292 = vld [vmem:[%s4241 + $0x190] sm:$0xff]
    %v4293 = vld [vmem:[%s4241 + $0x198] sm:$0xff]
    %v4294 = vld [vmem:[%s4241 + $0x1a0] sm:$0xff]
    %v4295 = vld [vmem:[%s4241 + $0x1a8] sm:$0xff]
    %v4296 = vld [vmem:[%s4241 + $0x1b0] sm:$0xff]
    %v4297 = vld [vmem:[%s4241 + $0x1b8] sm:$0xff]
    %v4298 = vld [vmem:[%s4241 + $0x1c0] sm:$0xff]
    %v4299 = vld [vmem:[%s4241 + $0x1c8] sm:$0xff]
    %v4300 = vld [vmem:[%s4241 + $0x1d0] sm:$0xff]
    %v4301 = vld [vmem:[%s4241 + $0x1d8] sm:$0xff]
    %v4302 = vld [vmem:[%s4241 + $0x1e0] sm:$0xff]
    %v4303 = vld [vmem:[%s4241 + $0x1e8] sm:$0xff]
    %v4304 = vld [vmem:[%s4241 + $0x1f0] sm:$0xff]
    %v4305 = vld [vmem:[%s4241 + $0x1f8] sm:$0xff]
    %4306 = vmatprep.subr.mxu0 %v4273
    %4307 = vmatpush1.msra.mxu0 %v4272
    %4308 = vmatprep.subr.mxu0 %v4271
    %4309 = vmatpush1.msra.mxu0 %v4270
    %4310 = vmatprep.subr.mxu0 %v4269
    %4311 = vmatpush1.msra.mxu0 %v4268
    %4312 = vmatprep.subr.mxu0 %v4267
    %4313 = vmatpush1.msra.mxu0 %v4266
    %4314 = vmatprep.subr.mxu0 %v4265
    %4315 = vmatpush1.msra.mxu0 %v4264
    %4316 = vmatprep.subr.mxu0 %v4263
    %4317 = vmatpush1.msra.mxu0 %v4262
    %4318 = vmatprep.subr.mxu0 %v4261
    %4319 = vmatpush1.msra.mxu0 %v4260
    %4320 = vmatprep.subr.mxu0 %v4259
    %4321 = vmatpush1.msra.mxu0 %v4258
    %4322 = vmatprep.subr.mxu0 %v4257
    %4323 = vmatpush1.msra.mxu0 %v4256
    %4324 = vmatprep.subr.mxu0 %v4255
    %4325 = vmatpush1.msra.mxu0 %v4254
    %4326 = vmatprep.subr.mxu0 %v4253
    %4327 = vmatpush1.msra.mxu0 %v4252
    %4328 = vmatprep.subr.mxu0 %v4251
    %4329 = vmatpush1.msra.mxu0 %v4250
    %4330 = vmatprep.subr.mxu0 %v4249
    %4331 = vmatpush1.msra.mxu0 %v4248
    %4332 = vmatprep.subr.mxu0 %v4247
    %4333 = vmatpush1.msra.mxu0 %v4246
    %4334 = vmatprep.subr.mxu0 %v4245
    %4335 = vmatpush1.msra.mxu0 %v4244
    %4336 = vmatprep.subr.mxu0 %v4243
    %4337 = vmatpush1.msra.mxu0 %v4242
    %4338 = vmatprep.subr.mxu0 %v4305
    %4339 = vmatpush2.msra.mxu0 %v4304
    %4340 = vmatprep.subr.mxu0 %v4303
    %4341 = vmatpush2.msra.mxu0 %v4302
    %4342 = vmatprep.subr.mxu0 %v4301
    %4343 = vmatpush2.msra.mxu0 %v4300
    %4344 = vmatprep.subr.mxu0 %v4299
    %4345 = vmatpush2.msra.mxu0 %v4298
    %4346 = vmatprep.subr.mxu0 %v4297
    %4347 = vmatpush2.msra.mxu0 %v4296
    %4348 = vmatprep.subr.mxu0 %v4295
    %4349 = vmatpush2.msra.mxu0 %v4294
    %4350 = vmatprep.subr.mxu0 %v4293
    %4351 = vmatpush2.msra.mxu0 %v4292
    %4352 = vmatprep.subr.mxu0 %v4291
    %4353 = vmatpush2.msra.mxu0 %v4290
    %4354 = vmatprep.subr.mxu0 %v4289
    %4355 = vmatpush2.msra.mxu0 %v4288
    %4356 = vmatprep.subr.mxu0 %v4287
    %4357 = vmatpush2.msra.mxu0 %v4286
    %4358 = vmatprep.subr.mxu0 %v4285
    %4359 = vmatpush2.msra.mxu0 %v4284
    %4360 = vmatprep.subr.mxu0 %v4283
    %4361 = vmatpush2.msra.mxu0 %v4282
    %4362 = vmatprep.subr.mxu0 %v4281
    %4363 = vmatpush2.msra.mxu0 %v4280
    %4364 = vmatprep.subr.mxu0 %v4279
    %4365 = vmatpush2.msra.mxu0 %v4278
    %4366 = vmatprep.subr.mxu0 %v4277
    %4367 = vmatpush2.msra.mxu0 %v4276
    %4368 = vmatprep.subr.mxu0 %v4275
    %4369 = vmatpush2.msra.mxu0 %v4274
    %4370 = vmatprep.mubr.f32.mxu0 %v4240
    %4371 = vmatmul.mubr.f32.gmra.mxu0 %v4239
    %v4372 = vpop.f32.mrf.mxu0
    %v4373 = vadd.f32 0.0, %v4372
    %v4374 = vpop.f32.mrf.mxu0
    %v4375 = vadd.f32 0.0, %v4374
    %4376 = vdwg.mxu0
    %s4377 = scalar_lea.vmem %s14, 3584
    %v4378 = vld [vmem:[%s4377] sm:$0xff]
    %v4379 = vld [vmem:[%s4377 + $0x8] sm:$0xff]
    %v4380 = vld [vmem:[%s4377 + $0x10] sm:$0xff]
    %v4381 = vld [vmem:[%s4377 + $0x18] sm:$0xff]
    %v4382 = vld [vmem:[%s4377 + $0x20] sm:$0xff]
    %v4383 = vld [vmem:[%s4377 + $0x28] sm:$0xff]
    %v4384 = vld [vmem:[%s4377 + $0x30] sm:$0xff]
    %v4385 = vld [vmem:[%s4377 + $0x38] sm:$0xff]
    %v4386 = vld [vmem:[%s4377 + $0x40] sm:$0xff]
    %v4387 = vld [vmem:[%s4377 + $0x48] sm:$0xff]
    %v4388 = vld [vmem:[%s4377 + $0x50] sm:$0xff]
    %v4389 = vld [vmem:[%s4377 + $0x58] sm:$0xff]
    %v4390 = vld [vmem:[%s4377 + $0x60] sm:$0xff]
    %v4391 = vld [vmem:[%s4377 + $0x68] sm:$0xff]
    %v4392 = vld [vmem:[%s4377 + $0x70] sm:$0xff]
    %v4393 = vld [vmem:[%s4377 + $0x78] sm:$0xff]
    %v4394 = vld [vmem:[%s4377 + $0x80] sm:$0xff]
    %v4395 = vld [vmem:[%s4377 + $0x88] sm:$0xff]
    %v4396 = vld [vmem:[%s4377 + $0x90] sm:$0xff]
    %v4397 = vld [vmem:[%s4377 + $0x98] sm:$0xff]
    %v4398 = vld [vmem:[%s4377 + $0xa0] sm:$0xff]
    %v4399 = vld [vmem:[%s4377 + $0xa8] sm:$0xff]
    %v4400 = vld [vmem:[%s4377 + $0xb0] sm:$0xff]
    %v4401 = vld [vmem:[%s4377 + $0xb8] sm:$0xff]
    %v4402 = vld [vmem:[%s4377 + $0xc0] sm:$0xff]
    %v4403 = vld [vmem:[%s4377 + $0xc8] sm:$0xff]
    %v4404 = vld [vmem:[%s4377 + $0xd0] sm:$0xff]
    %v4405 = vld [vmem:[%s4377 + $0xd8] sm:$0xff]
    %v4406 = vld [vmem:[%s4377 + $0xe0] sm:$0xff]
    %v4407 = vld [vmem:[%s4377 + $0xe8] sm:$0xff]
    %v4408 = vld [vmem:[%s4377 + $0xf0] sm:$0xff]
    %v4409 = vld [vmem:[%s4377 + $0xf8] sm:$0xff]
    %v4410 = vld [vmem:[%s4377 + $0x100] sm:$0xff]
    %v4411 = vld [vmem:[%s4377 + $0x108] sm:$0xff]
    %v4412 = vld [vmem:[%s4377 + $0x110] sm:$0xff]
    %v4413 = vld [vmem:[%s4377 + $0x118] sm:$0xff]
    %v4414 = vld [vmem:[%s4377 + $0x120] sm:$0xff]
    %v4415 = vld [vmem:[%s4377 + $0x128] sm:$0xff]
    %v4416 = vld [vmem:[%s4377 + $0x130] sm:$0xff]
    %v4417 = vld [vmem:[%s4377 + $0x138] sm:$0xff]
    %v4418 = vld [vmem:[%s4377 + $0x140] sm:$0xff]
    %v4419 = vld [vmem:[%s4377 + $0x148] sm:$0xff]
    %v4420 = vld [vmem:[%s4377 + $0x150] sm:$0xff]
    %v4421 = vld [vmem:[%s4377 + $0x158] sm:$0xff]
    %v4422 = vld [vmem:[%s4377 + $0x160] sm:$0xff]
    %v4423 = vld [vmem:[%s4377 + $0x168] sm:$0xff]
    %v4424 = vld [vmem:[%s4377 + $0x170] sm:$0xff]
    %v4425 = vld [vmem:[%s4377 + $0x178] sm:$0xff]
    %v4426 = vld [vmem:[%s4377 + $0x180] sm:$0xff]
    %v4427 = vld [vmem:[%s4377 + $0x188] sm:$0xff]
    %v4428 = vld [vmem:[%s4377 + $0x190] sm:$0xff]
    %v4429 = vld [vmem:[%s4377 + $0x198] sm:$0xff]
    %v4430 = vld [vmem:[%s4377 + $0x1a0] sm:$0xff]
    %v4431 = vld [vmem:[%s4377 + $0x1a8] sm:$0xff]
    %v4432 = vld [vmem:[%s4377 + $0x1b0] sm:$0xff]
    %v4433 = vld [vmem:[%s4377 + $0x1b8] sm:$0xff]
    %v4434 = vld [vmem:[%s4377 + $0x1c0] sm:$0xff]
    %v4435 = vld [vmem:[%s4377 + $0x1c8] sm:$0xff]
    %v4436 = vld [vmem:[%s4377 + $0x1d0] sm:$0xff]
    %v4437 = vld [vmem:[%s4377 + $0x1d8] sm:$0xff]
    %v4438 = vld [vmem:[%s4377 + $0x1e0] sm:$0xff]
    %v4439 = vld [vmem:[%s4377 + $0x1e8] sm:$0xff]
    %v4440 = vld [vmem:[%s4377 + $0x1f0] sm:$0xff]
    %v4441 = vld [vmem:[%s4377 + $0x1f8] sm:$0xff]
    %4442 = vmatprep.subr.mxu0 %v4409
    %4443 = vmatpush1.msra.mxu0 %v4408
    %4444 = vmatprep.subr.mxu0 %v4407
    %4445 = vmatpush1.msra.mxu0 %v4406
    %4446 = vmatprep.subr.mxu0 %v4405
    %4447 = vmatpush1.msra.mxu0 %v4404
    %4448 = vmatprep.subr.mxu0 %v4403
    %4449 = vmatpush1.msra.mxu0 %v4402
    %4450 = vmatprep.subr.mxu0 %v4401
    %4451 = vmatpush1.msra.mxu0 %v4400
    %4452 = vmatprep.subr.mxu0 %v4399
    %4453 = vmatpush1.msra.mxu0 %v4398
    %4454 = vmatprep.subr.mxu0 %v4397
    %4455 = vmatpush1.msra.mxu0 %v4396
    %4456 = vmatprep.subr.mxu0 %v4395
    %4457 = vmatpush1.msra.mxu0 %v4394
    %4458 = vmatprep.subr.mxu0 %v4393
    %4459 = vmatpush1.msra.mxu0 %v4392
    %4460 = vmatprep.subr.mxu0 %v4391
    %4461 = vmatpush1.msra.mxu0 %v4390
    %4462 = vmatprep.subr.mxu0 %v4389
    %4463 = vmatpush1.msra.mxu0 %v4388
    %4464 = vmatprep.subr.mxu0 %v4387
    %4465 = vmatpush1.msra.mxu0 %v4386
    %4466 = vmatprep.subr.mxu0 %v4385
    %4467 = vmatpush1.msra.mxu0 %v4384
    %4468 = vmatprep.subr.mxu0 %v4383
    %4469 = vmatpush1.msra.mxu0 %v4382
    %4470 = vmatprep.subr.mxu0 %v4381
    %4471 = vmatpush1.msra.mxu0 %v4380
    %4472 = vmatprep.subr.mxu0 %v4379
    %4473 = vmatpush1.msra.mxu0 %v4378
    %4474 = vmatprep.subr.mxu0 %v4441
    %4475 = vmatpush2.msra.mxu0 %v4440
    %4476 = vmatprep.subr.mxu0 %v4439
    %4477 = vmatpush2.msra.mxu0 %v4438
    %4478 = vmatprep.subr.mxu0 %v4437
    %4479 = vmatpush2.msra.mxu0 %v4436
    %4480 = vmatprep.subr.mxu0 %v4435
    %4481 = vmatpush2.msra.mxu0 %v4434
    %4482 = vmatprep.subr.mxu0 %v4433
    %4483 = vmatpush2.msra.mxu0 %v4432
    %4484 = vmatprep.subr.mxu0 %v4431
    %4485 = vmatpush2.msra.mxu0 %v4430
    %4486 = vmatprep.subr.mxu0 %v4429
    %4487 = vmatpush2.msra.mxu0 %v4428
    %4488 = vmatprep.subr.mxu0 %v4427
    %4489 = vmatpush2.msra.mxu0 %v4426
    %4490 = vmatprep.subr.mxu0 %v4425
    %4491 = vmatpush2.msra.mxu0 %v4424
    %4492 = vmatprep.subr.mxu0 %v4423
    %4493 = vmatpush2.msra.mxu0 %v4422
    %4494 = vmatprep.subr.mxu0 %v4421
    %4495 = vmatpush2.msra.mxu0 %v4420
    %4496 = vmatprep.subr.mxu0 %v4419
    %4497 = vmatpush2.msra.mxu0 %v4418
    %4498 = vmatprep.subr.mxu0 %v4417
    %4499 = vmatpush2.msra.mxu0 %v4416
    %4500 = vmatprep.subr.mxu0 %v4415
    %4501 = vmatpush2.msra.mxu0 %v4414
    %4502 = vmatprep.subr.mxu0 %v4413
    %4503 = vmatpush2.msra.mxu0 %v4412
    %4504 = vmatprep.subr.mxu0 %v4411
    %4505 = vmatpush2.msra.mxu0 %v4410
    %4506 = vmatprep.mubr.f32.mxu0 %v4240
    %4507 = vmatmul.mubr.f32.gmra.mxu0 %v4239
    %v4508 = vpop.f32.mrf.mxu0
    %v4509 = vadd.f32 0.0, %v4508
    %v4510 = vpop.f32.mrf.mxu0
    %v4511 = vadd.f32 0.0, %v4510
    %4512 = vdwg.mxu0
    %v4513 = vxor.u32 %v4373, 2147483648
    %v4514 = vxor.u32 %v4375, 2147483648
    %v4515 = vmul.f32 %v4513, 1.442695
    %v4516 = vpow.pop %v4515
    %v4517 = vmul.f32 %v4514, 1.442695
    %v4518 = vpow.pop %v4517
    %v4519 = vadd.f32 %v4516, 1.0
    %v4520 = vadd.f32 %v4518, 1.0
    %v4521 = vrcp.pop %v4519
    %v4522 = vmul.f32 1.0, %v4521
    %v4523 = vrcp.pop %v4520
    %v4524 = vmul.f32 1.0, %v4523
    %v4525 = vtanh.pop %v4509
    %v4526 = vtanh.pop %v4511
    %v4527 = vmul.f32 %v4522, %v4525
    %v4528 = vmul.f32 %v4524, %v4526
    %s4529 = scalar_lea.vmem %s15, 3360
    %v4530 = vld [vmem:[%s4529] sm:$0xff]
    %v4531 = vld [vmem:[%s4529 + $0x8] sm:$0xff]
    %v4532 = vld [vmem:[%s4529 + $0x10] sm:$0xff]
    %v4533 = vld [vmem:[%s4529 + $0x18] sm:$0xff]
    %v4534 = vld [vmem:[%s4529 + $0x20] sm:$0xff]
    %v4535 = vld [vmem:[%s4529 + $0x28] sm:$0xff]
    %v4536 = vld [vmem:[%s4529 + $0x30] sm:$0xff]
    %v4537 = vld [vmem:[%s4529 + $0x38] sm:$0xff]
    %v4538 = vld [vmem:[%s4529 + $0x40] sm:$0xff]
    %v4539 = vld [vmem:[%s4529 + $0x48] sm:$0xff]
    %v4540 = vld [vmem:[%s4529 + $0x50] sm:$0xff]
    %v4541 = vld [vmem:[%s4529 + $0x58] sm:$0xff]
    %v4542 = vld [vmem:[%s4529 + $0x60] sm:$0xff]
    %v4543 = vld [vmem:[%s4529 + $0x68] sm:$0xff]
    %v4544 = vld [vmem:[%s4529 + $0x70] sm:$0xff]
    %v4545 = vld [vmem:[%s4529 + $0x78] sm:$0xff]
    %v4546 = vld [vmem:[%s4529 + $0x80] sm:$0xff]
    %v4547 = vld [vmem:[%s4529 + $0x88] sm:$0xff]
    %v4548 = vld [vmem:[%s4529 + $0x90] sm:$0xff]
    %v4549 = vld [vmem:[%s4529 + $0x98] sm:$0xff]
    %v4550 = vld [vmem:[%s4529 + $0xa0] sm:$0xff]
    %v4551 = vld [vmem:[%s4529 + $0xa8] sm:$0xff]
    %v4552 = vld [vmem:[%s4529 + $0xb0] sm:$0xff]
    %v4553 = vld [vmem:[%s4529 + $0xb8] sm:$0xff]
    %v4554 = vld [vmem:[%s4529 + $0xc0] sm:$0xff]
    %v4555 = vld [vmem:[%s4529 + $0xc8] sm:$0xff]
    %v4556 = vld [vmem:[%s4529 + $0xd0] sm:$0xff]
    %v4557 = vld [vmem:[%s4529 + $0xd8] sm:$0xff]
    %v4558 = vld [vmem:[%s4529 + $0xe0] sm:$0xff]
    %v4559 = vld [vmem:[%s4529 + $0xe8] sm:$0xff]
    %v4560 = vld [vmem:[%s4529 + $0xf0] sm:$0xff]
    %v4561 = vld [vmem:[%s4529 + $0xf8] sm:$0xff]
    %v4562 = vld [vmem:[%s4529 + $0x100] sm:$0xff]
    %v4563 = vld [vmem:[%s4529 + $0x108] sm:$0xff]
    %v4564 = vld [vmem:[%s4529 + $0x110] sm:$0xff]
    %v4565 = vld [vmem:[%s4529 + $0x118] sm:$0xff]
    %v4566 = vld [vmem:[%s4529 + $0x120] sm:$0xff]
    %v4567 = vld [vmem:[%s4529 + $0x128] sm:$0xff]
    %v4568 = vld [vmem:[%s4529 + $0x130] sm:$0xff]
    %v4569 = vld [vmem:[%s4529 + $0x138] sm:$0xff]
    %v4570 = vld [vmem:[%s4529 + $0x140] sm:$0xff]
    %v4571 = vld [vmem:[%s4529 + $0x148] sm:$0xff]
    %v4572 = vld [vmem:[%s4529 + $0x150] sm:$0xff]
    %v4573 = vld [vmem:[%s4529 + $0x158] sm:$0xff]
    %v4574 = vld [vmem:[%s4529 + $0x160] sm:$0xff]
    %v4575 = vld [vmem:[%s4529 + $0x168] sm:$0xff]
    %v4576 = vld [vmem:[%s4529 + $0x170] sm:$0xff]
    %v4577 = vld [vmem:[%s4529 + $0x178] sm:$0xff]
    %v4578 = vld [vmem:[%s4529 + $0x180] sm:$0xff]
    %v4579 = vld [vmem:[%s4529 + $0x188] sm:$0xff]
    %v4580 = vld [vmem:[%s4529 + $0x190] sm:$0xff]
    %v4581 = vld [vmem:[%s4529 + $0x198] sm:$0xff]
    %v4582 = vld [vmem:[%s4529 + $0x1a0] sm:$0xff]
    %v4583 = vld [vmem:[%s4529 + $0x1a8] sm:$0xff]
    %v4584 = vld [vmem:[%s4529 + $0x1b0] sm:$0xff]
    %v4585 = vld [vmem:[%s4529 + $0x1b8] sm:$0xff]
    %v4586 = vld [vmem:[%s4529 + $0x1c0] sm:$0xff]
    %v4587 = vld [vmem:[%s4529 + $0x1c8] sm:$0xff]
    %v4588 = vld [vmem:[%s4529 + $0x1d0] sm:$0xff]
    %v4589 = vld [vmem:[%s4529 + $0x1d8] sm:$0xff]
    %s4590 = scalar_lea.vmem %s16, 21
    %v4591 = vld [vmem:[%s4590] sm:$0x7]
    %v4593 = vlaneseq
    %v4594 = vshrl.u32 %v4593, 7
    %v4595 = vsub.s32 0, %v4594
    %v4596 = vrot.slane %v4591, %v4595
    %v4597 = vlaneseq
    %v4598 = vshrl.u32 %v4597, 7
    %v4599 = vsub.s32 1, %v4598
    %v4600 = vrot.slane %v4591, %v4599
    %v4601 = vlaneseq
    %v4602 = vshrl.u32 %v4601, 7
    %v4603 = vsub.s32 2, %v4602
    %v4604 = vrot.slane %v4591, %v4603
    %v4609 = vsel %vm177, %v4528, 0
    %4611 = vmatprep.subr.mxu0 %v4576
    %4612 = vmatpush1.msra.mxu0 %v4575
    %4613 = vmatprep.subr.mxu0 %v4573
    %4614 = vmatpush1.msra.mxu0 %v4572
    %4615 = vmatprep.subr.mxu0 %v4570
    %4616 = vmatpush1.msra.mxu0 %v4569
    %4617 = vmatprep.subr.mxu0 %v4567
    %4618 = vmatpush1.msra.mxu0 %v4566
    %4619 = vmatprep.subr.mxu0 %v4564
    %4620 = vmatpush1.msra.mxu0 %v4563
    %4621 = vmatprep.subr.mxu0 %v4561
    %4622 = vmatpush1.msra.mxu0 %v4560
    %4623 = vmatprep.subr.mxu0 %v4558
    %4624 = vmatpush1.msra.mxu0 %v4557
    %4625 = vmatprep.subr.mxu0 %v4555
    %4626 = vmatpush1.msra.mxu0 %v4554
    %4627 = vmatprep.subr.mxu0 %v4552
    %4628 = vmatpush1.msra.mxu0 %v4551
    %4629 = vmatprep.subr.mxu0 %v4549
    %4630 = vmatpush1.msra.mxu0 %v4548
    %4631 = vmatprep.subr.mxu0 %v4546
    %4632 = vmatpush1.msra.mxu0 %v4545
    %4633 = vmatprep.subr.mxu0 %v4543
    %4634 = vmatpush1.msra.mxu0 %v4542
    %4635 = vmatprep.subr.mxu0 %v4540
    %4636 = vmatpush1.msra.mxu0 %v4539
    %4637 = vmatprep.subr.mxu0 %v4537
    %4638 = vmatpush1.msra.mxu0 %v4536
    %4639 = vmatprep.subr.mxu0 %v4534
    %4640 = vmatpush1.msra.mxu0 %v4533
    %4641 = vmatprep.subr.mxu0 %v4531
    %4642 = vmatpush1.msra.mxu0 %v4530
    %4643 = vmatprep.subr.mxu0 0.0
    %4644 = vmatpush2.msra.mxu0 0.0
    %4645 = vmatprep.subr.mxu0 0.0
    %4646 = vmatpush2.msra.mxu0 0.0
    %4647 = vmatprep.subr.mxu0 0.0
    %4648 = vmatpush2.msra.mxu0 0.0
    %4649 = vmatprep.subr.mxu0 0.0
    %4650 = vmatpush2.msra.mxu0 0.0
    %4651 = vmatprep.subr.mxu0 0.0
    %4652 = vmatpush2.msra.mxu0 0.0
    %4653 = vmatprep.subr.mxu0 0.0
    %4654 = vmatpush2.msra.mxu0 0.0
    %4655 = vmatprep.subr.mxu0 0.0
    %4656 = vmatpush2.msra.mxu0 0.0
    %4657 = vmatprep.subr.mxu0 0.0
    %4658 = vmatpush2.msra.mxu0 0.0
    %4659 = vmatprep.subr.mxu0 0.0
    %4660 = vmatpush2.msra.mxu0 0.0
    %4661 = vmatprep.subr.mxu0 0.0
    %4662 = vmatpush2.msra.mxu0 0.0
    %4663 = vmatprep.subr.mxu0 0.0
    %4664 = vmatpush2.msra.mxu0 0.0
    %4665 = vmatprep.subr.mxu0 0.0
    %4666 = vmatpush2.msra.mxu0 0.0
    %4667 = vmatprep.subr.mxu0 %v4588
    %4668 = vmatpush2.msra.mxu0 %v4587
    %4669 = vmatprep.subr.mxu0 %v4585
    %4670 = vmatpush2.msra.mxu0 %v4584
    %4671 = vmatprep.subr.mxu0 %v4582
    %4672 = vmatpush2.msra.mxu0 %v4581
    %4673 = vmatprep.subr.mxu0 %v4579
    %4674 = vmatpush2.msra.mxu0 %v4578
    %4675 = vmatprep.mubr.f32.mxu0 %v4609
    %4676 = vmatmul.mubr.f32.gmra.mxu0 %v4527
    %v4677 = vpop.f32.mrf.mxu0
    %v4678 = vadd.f32 %v4596, %v4677
    %v4679 = vpop.f32.mrf.mxu0
    %v4680 = vadd.f32 %v4600, %v4679
    %4681 = vdwg.mxu0
    %4682 = vmatprep.subr.mxu0 0.0
    %4683 = vmatpush1.msra.mxu0 %v4577
    %4684 = vmatprep.subr.mxu0 0.0
    %4685 = vmatpush1.msra.mxu0 %v4574
    %4686 = vmatprep.subr.mxu0 0.0
    %4687 = vmatpush1.msra.mxu0 %v4571
    %4688 = vmatprep.subr.mxu0 0.0
    %4689 = vmatpush1.msra.mxu0 %v4568
    %4690 = vmatprep.subr.mxu0 0.0
    %4691 = vmatpush1.msra.mxu0 %v4565
    %4692 = vmatprep.subr.mxu0 0.0
    %4693 = vmatpush1.msra.mxu0 %v4562
    %4694 = vmatprep.subr.mxu0 0.0
    %4695 = vmatpush1.msra.mxu0 %v4559
    %4696 = vmatprep.subr.mxu0 0.0
    %4697 = vmatpush1.msra.mxu0 %v4556
    %4698 = vmatprep.subr.mxu0 0.0
    %4699 = vmatpush1.msra.mxu0 %v4553
    %4700 = vmatprep.subr.mxu0 0.0
    %4701 = vmatpush1.msra.mxu0 %v4550
    %4702 = vmatprep.subr.mxu0 0.0
    %4703 = vmatpush1.msra.mxu0 %v4547
    %4704 = vmatprep.subr.mxu0 0.0
    %4705 = vmatpush1.msra.mxu0 %v4544
    %4706 = vmatprep.subr.mxu0 0.0
    %4707 = vmatpush1.msra.mxu0 %v4541
    %4708 = vmatprep.subr.mxu0 0.0
    %4709 = vmatpush1.msra.mxu0 %v4538
    %4710 = vmatprep.subr.mxu0 0.0
    %4711 = vmatpush1.msra.mxu0 %v4535
    %4712 = vmatprep.subr.mxu0 0.0
    %4713 = vmatpush1.msra.mxu0 %v4532
    %4714 = vmatprep.subr.mxu0 0.0
    %4715 = vmatpush2.msra.mxu0 0.0
    %4716 = vmatprep.subr.mxu0 0.0
    %4717 = vmatpush2.msra.mxu0 0.0
    %4718 = vmatprep.subr.mxu0 0.0
    %4719 = vmatpush2.msra.mxu0 0.0
    %4720 = vmatprep.subr.mxu0 0.0
    %4721 = vmatpush2.msra.mxu0 0.0
    %4722 = vmatprep.subr.mxu0 0.0
    %4723 = vmatpush2.msra.mxu0 0.0
    %4724 = vmatprep.subr.mxu0 0.0
    %4725 = vmatpush2.msra.mxu0 0.0
    %4726 = vmatprep.subr.mxu0 0.0
    %4727 = vmatpush2.msra.mxu0 0.0
    %4728 = vmatprep.subr.mxu0 0.0
    %4729 = vmatpush2.msra.mxu0 0.0
    %4730 = vmatprep.subr.mxu0 0.0
    %4731 = vmatpush2.msra.mxu0 0.0
    %4732 = vmatprep.subr.mxu0 0.0
    %4733 = vmatpush2.msra.mxu0 0.0
    %4734 = vmatprep.subr.mxu0 0.0
    %4735 = vmatpush2.msra.mxu0 0.0
    %4736 = vmatprep.subr.mxu0 0.0
    %4737 = vmatpush2.msra.mxu0 0.0
    %4738 = vmatprep.subr.mxu0 0.0
    %4739 = vmatpush2.msra.mxu0 %v4589
    %4740 = vmatprep.subr.mxu0 0.0
    %4741 = vmatpush2.msra.mxu0 %v4586
    %4742 = vmatprep.subr.mxu0 0.0
    %4743 = vmatpush2.msra.mxu0 %v4583
    %4744 = vmatprep.subr.mxu0 0.0
    %4745 = vmatpush2.msra.mxu0 %v4580
    %4746 = vmatprep.mubr.f32.mxu0 %v4609
    %4747 = vmatmul.mubr.f32.gmra.mxu0 %v4527
    %v4748 = vpop.f32.mrf.mxu0
    %v4749 = vadd.f32 %v4604, %v4748
    %v4750 = vpop.f32.mrf.mxu0
    %4751 = vdwg.mxu0
    %v4752 = vmul.f32 %v4678, 0.4
    %v4753 = vmul.f32 %v4680, 0.4
    %v4754 = vmul.f32 %v4749, 0.4
    %v4755 = vmax.f32 %v4678, %v4752
    %v4756 = vmax.f32 %v4680, %v4753
    %v4757 = vmax.f32 %v4749, %v4754
    %v4758 = vadd.f32 %v4234, %v4755
    %v4759 = vadd.f32 %v4235, %v4756
    %v4760 = vadd.f32 %v4236, %v4757
    %v4761 = vmul.f32 %v4758, 0.70710677
    %v4762 = vmul.f32 %v4759, %v1068
    %v4763 = vmul.f32 %v4760, 1.0
    %v4764 = vld [vmem:[%s17] sm:$0xff]
    %v4765 = vld [vmem:[%s17 + $0x8] sm:$0xff]
    %v4766 = vld [vmem:[%s17 + $0x10] sm:$0xff]
    %v4767 = vld [vmem:[%s17 + $0x18] sm:$0xff]
    %v4768 = vld [vmem:[%s17 + $0x20] sm:$0xff]
    %v4769 = vld [vmem:[%s17 + $0x28] sm:$0xff]
    %v4770 = vld [vmem:[%s17 + $0x30] sm:$0xff]
    %v4771 = vld [vmem:[%s17 + $0x38] sm:$0xff]
    %v4772 = vld [vmem:[%s17 + $0x40] sm:$0xff]
    %v4773 = vld [vmem:[%s17 + $0x48] sm:$0xff]
    %v4774 = vld [vmem:[%s17 + $0x50] sm:$0xff]
    %v4775 = vld [vmem:[%s17 + $0x58] sm:$0xff]
    %v4776 = vld [vmem:[%s17 + $0x60] sm:$0xff]
    %v4777 = vld [vmem:[%s17 + $0x68] sm:$0xff]
    %v4778 = vld [vmem:[%s17 + $0x70] sm:$0xff]
    %v4779 = vld [vmem:[%s17 + $0x78] sm:$0xff]
    %v4780 = vld [vmem:[%s17 + $0x80] sm:$0xff]
    %v4781 = vld [vmem:[%s17 + $0x88] sm:$0xff]
    %v4782 = vld [vmem:[%s17 + $0x90] sm:$0xff]
    %v4783 = vld [vmem:[%s17 + $0x98] sm:$0xff]
    %v4784 = vld [vmem:[%s17 + $0xa0] sm:$0xff]
    %v4785 = vld [vmem:[%s17 + $0xa8] sm:$0xff]
    %v4786 = vld [vmem:[%s17 + $0xb0] sm:$0xff]
    %v4787 = vld [vmem:[%s17 + $0xb8] sm:$0xff]
    %v4788 = vld [vmem:[%s17 + $0xc0] sm:$0xff]
    %v4789 = vld [vmem:[%s17 + $0xc8] sm:$0xff]
    %v4790 = vld [vmem:[%s17 + $0xd0] sm:$0xff]
    %v4791 = vld [vmem:[%s17 + $0xd8] sm:$0xff]
    %v4792 = vld [vmem:[%s17 + $0xe0] sm:$0xff]
    %v4793 = vld [vmem:[%s17 + $0xe8] sm:$0xff]
    %v4794 = vld [vmem:[%s17 + $0xf0] sm:$0xff]
    %v4795 = vld [vmem:[%s17 + $0xf8] sm:$0xff]
    %v4796 = vld [vmem:[%s17 + $0x100] sm:$0xff]
    %v4797 = vld [vmem:[%s17 + $0x108] sm:$0xff]
    %v4798 = vld [vmem:[%s17 + $0x110] sm:$0xff]
    %v4799 = vld [vmem:[%s17 + $0x118] sm:$0xff]
    %v4800 = vld [vmem:[%s17 + $0x120] sm:$0xff]
    %v4801 = vld [vmem:[%s17 + $0x128] sm:$0xff]
    %v4802 = vld [vmem:[%s17 + $0x130] sm:$0xff]
    %v4803 = vld [vmem:[%s17 + $0x138] sm:$0xff]
    %v4804 = vld [vmem:[%s17 + $0x140] sm:$0xff]
    %v4805 = vld [vmem:[%s17 + $0x148] sm:$0xff]
    %v4806 = vld [vmem:[%s17 + $0x150] sm:$0xff]
    %v4807 = vld [vmem:[%s17 + $0x158] sm:$0xff]
    %v4808 = vld [vmem:[%s17 + $0x160] sm:$0xff]
    %v4809 = vld [vmem:[%s17 + $0x168] sm:$0xff]
    %v4810 = vld [vmem:[%s17 + $0x170] sm:$0xff]
    %v4811 = vld [vmem:[%s17 + $0x178] sm:$0xff]
    %v4812 = vld [vmem:[%s17 + $0x180] sm:$0xff]
    %v4813 = vld [vmem:[%s17 + $0x188] sm:$0xff]
    %v4814 = vld [vmem:[%s17 + $0x190] sm:$0xff]
    %v4815 = vld [vmem:[%s17 + $0x198] sm:$0xff]
    %v4816 = vld [vmem:[%s17 + $0x1a0] sm:$0xff]
    %v4817 = vld [vmem:[%s17 + $0x1a8] sm:$0xff]
    %v4818 = vld [vmem:[%s17 + $0x1b0] sm:$0xff]
    %v4819 = vld [vmem:[%s17 + $0x1b8] sm:$0xff]
    %v4820 = vld [vmem:[%s17 + $0x1c0] sm:$0xff]
    %v4821 = vld [vmem:[%s17 + $0x1c8] sm:$0xff]
    %v4822 = vld [vmem:[%s17 + $0x1d0] sm:$0xff]
    %v4823 = vld [vmem:[%s17 + $0x1d8] sm:$0xff]
    %v4824 = vld [vmem:[%s17 + $0x1e0] sm:$0xff]
    %v4825 = vld [vmem:[%s17 + $0x1e8] sm:$0xff]
    %v4826 = vld [vmem:[%s17 + $0x1f0] sm:$0xff]
    %v4827 = vld [vmem:[%s17 + $0x1f8] sm:$0xff]
    %v4828 = vld [vmem:[%s17 + $0x200] sm:$0xff]
    %v4829 = vld [vmem:[%s17 + $0x208] sm:$0xff]
    %v4830 = vld [vmem:[%s17 + $0x210] sm:$0xff]
    %v4831 = vld [vmem:[%s17 + $0x218] sm:$0xff]
    %v4832 = vld [vmem:[%s17 + $0x220] sm:$0xff]
    %v4833 = vld [vmem:[%s17 + $0x228] sm:$0xff]
    %v4834 = vld [vmem:[%s17 + $0x230] sm:$0xff]
    %v4835 = vld [vmem:[%s17 + $0x238] sm:$0xff]
    %v4836 = vld [vmem:[%s17 + $0x240] sm:$0xff]
    %v4837 = vld [vmem:[%s17 + $0x248] sm:$0xff]
    %v4838 = vld [vmem:[%s17 + $0x250] sm:$0xff]
    %v4839 = vld [vmem:[%s17 + $0x258] sm:$0xff]
    %v4840 = vld [vmem:[%s17 + $0x260] sm:$0xff]
    %v4841 = vld [vmem:[%s17 + $0x268] sm:$0xff]
    %v4842 = vld [vmem:[%s17 + $0x270] sm:$0xff]
    %v4843 = vld [vmem:[%s17 + $0x278] sm:$0xff]
    %v4844 = vld [vmem:[%s18] sm:$0x3]
    %v4846 = vlaneseq
    %v4847 = vshrl.u32 %v4846, 7
    %v4848 = vsub.s32 0, %v4847
    %v4849 = vrot.slane %v4844, %v4848
    %v4850 = vlaneseq
    %v4851 = vshrl.u32 %v4850, 7
    %v4852 = vsub.s32 1, %v4851
    %v4853 = vrot.slane %v4844, %v4852
    %v4857 = vsel %vm273, %v4763, 0
    %4859 = vmatprep.subr.mxu0 %v4795
    %4860 = vmatpush1.msra.mxu0 %v4794
    %4861 = vmatprep.subr.mxu0 %v4793
    %4862 = vmatpush1.msra.mxu0 %v4792
    %4863 = vmatprep.subr.mxu0 %v4791
    %4864 = vmatpush1.msra.mxu0 %v4790
    %4865 = vmatprep.subr.mxu0 %v4789
    %4866 = vmatpush1.msra.mxu0 %v4788
    %4867 = vmatprep.subr.mxu0 %v4787
    %4868 = vmatpush1.msra.mxu0 %v4786
    %4869 = vmatprep.subr.mxu0 %v4785
    %4870 = vmatpush1.msra.mxu0 %v4784
    %4871 = vmatprep.subr.mxu0 %v4783
    %4872 = vmatpush1.msra.mxu0 %v4782
    %4873 = vmatprep.subr.mxu0 %v4781
    %4874 = vmatpush1.msra.mxu0 %v4780
    %4875 = vmatprep.subr.mxu0 %v4779
    %4876 = vmatpush1.msra.mxu0 %v4778
    %4877 = vmatprep.subr.mxu0 %v4777
    %4878 = vmatpush1.msra.mxu0 %v4776
    %4879 = vmatprep.subr.mxu0 %v4775
    %4880 = vmatpush1.msra.mxu0 %v4774
    %4881 = vmatprep.subr.mxu0 %v4773
    %4882 = vmatpush1.msra.mxu0 %v4772
    %4883 = vmatprep.subr.mxu0 %v4771
    %4884 = vmatpush1.msra.mxu0 %v4770
    %4885 = vmatprep.subr.mxu0 %v4769
    %4886 = vmatpush1.msra.mxu0 %v4768
    %4887 = vmatprep.subr.mxu0 %v4767
    %4888 = vmatpush1.msra.mxu0 %v4766
    %4889 = vmatprep.subr.mxu0 %v4765
    %4890 = vmatpush1.msra.mxu0 %v4764
    %4891 = vmatprep.subr.mxu0 %v4827
    %4892 = vmatpush2.msra.mxu0 %v4826
    %4893 = vmatprep.subr.mxu0 %v4825
    %4894 = vmatpush2.msra.mxu0 %v4824
    %4895 = vmatprep.subr.mxu0 %v4823
    %4896 = vmatpush2.msra.mxu0 %v4822
    %4897 = vmatprep.subr.mxu0 %v4821
    %4898 = vmatpush2.msra.mxu0 %v4820
    %4899 = vmatprep.subr.mxu0 %v4819
    %4900 = vmatpush2.msra.mxu0 %v4818
    %4901 = vmatprep.subr.mxu0 %v4817
    %4902 = vmatpush2.msra.mxu0 %v4816
    %4903 = vmatprep.subr.mxu0 %v4815
    %4904 = vmatpush2.msra.mxu0 %v4814
    %4905 = vmatprep.subr.mxu0 %v4813
    %4906 = vmatpush2.msra.mxu0 %v4812
    %4907 = vmatprep.subr.mxu0 %v4811
    %4908 = vmatpush2.msra.mxu0 %v4810
    %4909 = vmatprep.subr.mxu0 %v4809
    %4910 = vmatpush2.msra.mxu0 %v4808
    %4911 = vmatprep.subr.mxu0 %v4807
    %4912 = vmatpush2.msra.mxu0 %v4806
    %4913 = vmatprep.subr.mxu0 %v4805
    %4914 = vmatpush2.msra.mxu0 %v4804
    %4915 = vmatprep.subr.mxu0 %v4803
    %4916 = vmatpush2.msra.mxu0 %v4802
    %4917 = vmatprep.subr.mxu0 %v4801
    %4918 = vmatpush2.msra.mxu0 %v4800
    %4919 = vmatprep.subr.mxu0 %v4799
    %4920 = vmatpush2.msra.mxu0 %v4798
    %4921 = vmatprep.subr.mxu0 %v4797
    %4922 = vmatpush2.msra.mxu0 %v4796
    %4923 = vmatprep.mubr.f32.mxu0 %v4762
    %4924 = vmatmul.mubr.f32.gmra.mxu0 %v4761
    %v4925 = vpop.f32.mrf.mxu0
    %v4926 = vadd.f32 %v4849, %v4925
    %v4927 = vpop.f32.mrf.mxu0
    %v4928 = vadd.f32 %v4853, %v4927
    %4929 = vdwg.mxu0
    %4930 = vmatprep.subr.mxu0 0.0
    %4931 = vmatpush1.msra.mxu0 0.0
    %4932 = vmatprep.subr.mxu0 0.0
    %4933 = vmatpush1.msra.mxu0 0.0
    %4934 = vmatprep.subr.mxu0 0.0
    %4935 = vmatpush1.msra.mxu0 0.0
    %4936 = vmatprep.subr.mxu0 0.0
    %4937 = vmatpush1.msra.mxu0 0.0
    %4938 = vmatprep.subr.mxu0 0.0
    %4939 = vmatpush1.msra.mxu0 0.0
    %4940 = vmatprep.subr.mxu0 0.0
    %4941 = vmatpush1.msra.mxu0 0.0
    %4942 = vmatprep.subr.mxu0 0.0
    %4943 = vmatpush1.msra.mxu0 0.0
    %4944 = vmatprep.subr.mxu0 0.0
    %4945 = vmatpush1.msra.mxu0 0.0
    %4946 = vmatprep.subr.mxu0 %v4843
    %4947 = vmatpush1.msra.mxu0 %v4842
    %4948 = vmatprep.subr.mxu0 %v4841
    %4949 = vmatpush1.msra.mxu0 %v4840
    %4950 = vmatprep.subr.mxu0 %v4839
    %4951 = vmatpush1.msra.mxu0 %v4838
    %4952 = vmatprep.subr.mxu0 %v4837
    %4953 = vmatpush1.msra.mxu0 %v4836
    %4954 = vmatprep.subr.mxu0 %v4835
    %4955 = vmatpush1.msra.mxu0 %v4834
    %4956 = vmatprep.subr.mxu0 %v4833
    %4957 = vmatpush1.msra.mxu0 %v4832
    %4958 = vmatprep.subr.mxu0 %v4831
    %4959 = vmatpush1.msra.mxu0 %v4830
    %4960 = vmatprep.subr.mxu0 %v4829
    %4961 = vmatpush1.msra.mxu0 %v4828
    %4962 = vmatprep.subr.mxu0 0.0
    %4963 = vmatpush2.msra.mxu0 0.0
    %4964 = vmatprep.subr.mxu0 0.0
    %4965 = vmatpush2.msra.mxu0 0.0
    %4966 = vmatprep.subr.mxu0 0.0
    %4967 = vmatpush2.msra.mxu0 0.0
    %4968 = vmatprep.subr.mxu0 0.0
    %4969 = vmatpush2.msra.mxu0 0.0
    %4970 = vmatprep.subr.mxu0 0.0
    %4971 = vmatpush2.msra.mxu0 0.0
    %4972 = vmatprep.subr.mxu0 0.0
    %4973 = vmatpush2.msra.mxu0 0.0
    %4974 = vmatprep.subr.mxu0 0.0
    %4975 = vmatpush2.msra.mxu0 0.0
    %4976 = vmatprep.subr.mxu0 0.0
    %4977 = vmatpush2.msra.mxu0 0.0
    %4978 = vmatprep.subr.mxu0 0.0
    %4979 = vmatpush2.msra.mxu0 0.0
    %4980 = vmatprep.subr.mxu0 0.0
    %4981 = vmatpush2.msra.mxu0 0.0
    %4982 = vmatprep.subr.mxu0 0.0
    %4983 = vmatpush2.msra.mxu0 0.0
    %4984 = vmatprep.subr.mxu0 0.0
    %4985 = vmatpush2.msra.mxu0 0.0
    %4986 = vmatprep.subr.mxu0 0.0
    %4987 = vmatpush2.msra.mxu0 0.0
    %4988 = vmatprep.subr.mxu0 0.0
    %4989 = vmatpush2.msra.mxu0 0.0
    %4990 = vmatprep.subr.mxu0 0.0
    %4991 = vmatpush2.msra.mxu0 0.0
    %4992 = vmatprep.subr.mxu0 0.0
    %4993 = vmatpush2.msra.mxu0 0.0
    %4994 = vmatprep.mubr.f32.mxu0 0.0
    %4995 = vmatmul.mubr.f32.gmra.mxu0 %v4857
    %v4996 = vpop.f32.mrf.mxu0
    %v4997 = vadd.f32 %v4926, %v4996
    %v4998 = vpop.f32.mrf.mxu0
    %v4999 = vadd.f32 %v4928, %v4998
    %5000 = vdwg.mxu0
    %v5001 = vmul.f32 %v4997, 0.4
    %v5002 = vmul.f32 %v4999, 0.4
    %v5003 = vmax.f32 %v4997, %v5001
    %v5004 = vmax.f32 %v4999, %v5002
    %v5005 = vld [vmem:[%s19] sm:$0xff]
    %v5006 = vld [vmem:[%s19 + $0x8] sm:$0xff]
    %v5007 = vld [vmem:[%s19 + $0x10] sm:$0xff]
    %v5008 = vld [vmem:[%s19 + $0x18] sm:$0xff]
    %v5009 = vld [vmem:[%s19 + $0x20] sm:$0xff]
    %v5010 = vld [vmem:[%s19 + $0x28] sm:$0xff]
    %v5011 = vld [vmem:[%s19 + $0x30] sm:$0xff]
    %v5012 = vld [vmem:[%s19 + $0x38] sm:$0xff]
    %v5013 = vld [vmem:[%s19 + $0x40] sm:$0xff]
    %v5014 = vld [vmem:[%s19 + $0x48] sm:$0xff]
    %v5015 = vld [vmem:[%s19 + $0x50] sm:$0xff]
    %v5016 = vld [vmem:[%s19 + $0x58] sm:$0xff]
    %v5017 = vld [vmem:[%s19 + $0x60] sm:$0xff]
    %v5018 = vld [vmem:[%s19 + $0x68] sm:$0xff]
    %v5019 = vld [vmem:[%s19 + $0x70] sm:$0xff]
    %v5020 = vld [vmem:[%s19 + $0x78] sm:$0xff]
    %v5021 = vld [vmem:[%s19 + $0x80] sm:$0xff]
    %v5022 = vld [vmem:[%s19 + $0x88] sm:$0xff]
    %v5023 = vld [vmem:[%s20] sm:$0x1]
    %v5025 = vlaneseq
    %v5026 = vshrl.u32 %v5025, 7
    %v5027 = vsub.s32 0, %v5026
    %v5028 = vrot.slane %v5023, %v5027
    %v5031 = vsel %vm86, %v5004, 0
    %5033 = vmatprep.subr.mxu0 0.0
    %5034 = vmatpush1.msra.mxu0 %v5020
    %5035 = vmatprep.subr.mxu0 0.0
    %5036 = vmatpush1.msra.mxu0 %v5019
    %5037 = vmatprep.subr.mxu0 0.0
    %5038 = vmatpush1.msra.mxu0 %v5018
    %5039 = vmatprep.subr.mxu0 0.0
    %5040 = vmatpush1.msra.mxu0 %v5017
    %5041 = vmatprep.subr.mxu0 0.0
    %5042 = vmatpush1.msra.mxu0 %v5016
    %5043 = vmatprep.subr.mxu0 0.0
    %5044 = vmatpush1.msra.mxu0 %v5015
    %5045 = vmatprep.subr.mxu0 0.0
    %5046 = vmatpush1.msra.mxu0 %v5014
    %5047 = vmatprep.subr.mxu0 0.0
    %5048 = vmatpush1.msra.mxu0 %v5013
    %5049 = vmatprep.subr.mxu0 0.0
    %5050 = vmatpush1.msra.mxu0 %v5012
    %5051 = vmatprep.subr.mxu0 0.0
    %5052 = vmatpush1.msra.mxu0 %v5011
    %5053 = vmatprep.subr.mxu0 0.0
    %5054 = vmatpush1.msra.mxu0 %v5010
    %5055 = vmatprep.subr.mxu0 0.0
    %5056 = vmatpush1.msra.mxu0 %v5009
    %5057 = vmatprep.subr.mxu0 0.0
    %5058 = vmatpush1.msra.mxu0 %v5008
    %5059 = vmatprep.subr.mxu0 0.0
    %5060 = vmatpush1.msra.mxu0 %v5007
    %5061 = vmatprep.subr.mxu0 0.0
    %5062 = vmatpush1.msra.mxu0 %v5006
    %5063 = vmatprep.subr.mxu0 0.0
    %5064 = vmatpush1.msra.mxu0 %v5005
    %5065 = vmatprep.subr.mxu0 0.0
    %5066 = vmatpush2.msra.mxu0 0.0
    %5067 = vmatprep.subr.mxu0 0.0
    %5068 = vmatpush2.msra.mxu0 0.0
    %5069 = vmatprep.subr.mxu0 0.0
    %5070 = vmatpush2.msra.mxu0 0.0
    %5071 = vmatprep.subr.mxu0 0.0
    %5072 = vmatpush2.msra.mxu0 0.0
    %5073 = vmatprep.subr.mxu0 0.0
    %5074 = vmatpush2.msra.mxu0 0.0
    %5075 = vmatprep.subr.mxu0 0.0
    %5076 = vmatpush2.msra.mxu0 0.0
    %5077 = vmatprep.subr.mxu0 0.0
    %5078 = vmatpush2.msra.mxu0 0.0
    %5079 = vmatprep.subr.mxu0 0.0
    %5080 = vmatpush2.msra.mxu0 0.0
    %5081 = vmatprep.subr.mxu0 0.0
    %5082 = vmatpush2.msra.mxu0 0.0
    %5083 = vmatprep.subr.mxu0 0.0
    %5084 = vmatpush2.msra.mxu0 0.0
    %5085 = vmatprep.subr.mxu0 0.0
    %5086 = vmatpush2.msra.mxu0 0.0
    %5087 = vmatprep.subr.mxu0 0.0
    %5088 = vmatpush2.msra.mxu0 0.0
    %5089 = vmatprep.subr.mxu0 0.0
    %5090 = vmatpush2.msra.mxu0 0.0
    %5091 = vmatprep.subr.mxu0 0.0
    %5092 = vmatpush2.msra.mxu0 0.0
    %5093 = vmatprep.subr.mxu0 0.0
    %5094 = vmatpush2.msra.mxu0 %v5022
    %5095 = vmatprep.subr.mxu0 0.0
    %5096 = vmatpush2.msra.mxu0 %v5021
    %5097 = vmatprep.mubr.f32.mxu0 %v5031
    %5098 = vmatmul.mubr.f32.gmra.mxu0 %v5003
    %v5099 = vpop.f32.mrf.mxu0
    %v5100 = vadd.f32 %v5028, %v5099
    %v5101 = vpop.f32.mrf.mxu0
    %5102 = vdwg.mxu0
    %5103 = vst.msk [vmem:[#allocation3] sm:$0xff] %vm86, %v5100
    // Predicated region
    $region86: #{tpu_custom_call.1} parent=1 // pred_check
      _
    $region87: #{tpu_custom_call.1} parent=1 // pred_check_branch
      %5105 = sbr.rel (0) target = $region89
    $region88: #{tpu_custom_call.1} parent=1 // pred_region
      %s5107 = ssub.s32 128, 128
      %5108 = vsyncadd [#allocation4], %s5107
      %s5110 = sshll.u32 [#allocation3], 4
      %s5111 = int_to_ptr.vmem [resolvable:$true] %s5110
      %5113 = dma.vmem_to_hbm [thread:$0]  %s5111, 128, %s21, [#allocation4]
    $region89: #{tpu_custom_call.1} parent=1 // pred_fallthru
      _
    // Predicated region
    $region90: #{tpu_custom_call.1} parent=1 // pred_check
      _
    $region91: #{tpu_custom_call.1} parent=1 // pred_check_branch
      %5115 = sbr.rel (0) target = $region93
    $region92: #{tpu_custom_call.1} parent=1 // pred_region
      %5116 = dma.done [#allocation4], 128
    $region93: #{tpu_custom_call.1} parent=1 // pred_fallthru
      _
    %5117 = vsyncpa [#allocation4], 1

</llo_original>
